<compile_context>
chip_gen: v6e
topology: v6e:2x2x1
jax: 0.10.0
libtpu: 0.0.40
codegen_flags: <defaults>
</compile_context>

<pallas_src>
import functools
import math

import jax
import jax.numpy as jnp
from jax.experimental import pallas as pl
from jax.experimental.pallas import tpu as pltpu

# ----------------------------- model config -----------------------------
BATCH = 2
SRC_LEN = 8
TGT_LEN = 8            # packing assumes SRC_LEN == TGT_LEN for the PE slab
VOCAB = 64
D_MODEL = 32
N_HEADS = 4
D_HEAD = D_MODEL // N_HEADS
D_FF = 64
PAD_IDX = 1
MAX_LEN = 32
LN_EPS = 1e-5
OUT_WIDTH = 128        # packed output: [0:64]=log-probs, [64:96]=pred, rest pad

# ---------------------- packed parameter slab layout ---------------------
# w_d: (D_MODEL, N_WCHUNK*128) — every weight matrix whose input dim is
# D_MODEL; each chunk starts at a 128-lane boundary so in-kernel slices stay
# lane-aligned (no lane rotates).
W_CHUNK = 128
W_ENC_QKV, W_ENC_O, W_ENC_FF1 = 0, 1, 2
W_DEC_QKV, W_DEC_XQ, W_DEC_XKV = 3, 4, 5
W_DEC_O, W_DEC_XO, W_DEC_FF1, W_VOCA = 6, 7, 8, 9
N_WCHUNK = 10

# bias_ln: (N_BROWS, 128) — one row per bias / LayerNorm parameter vector.
B_ENC_QKV, B_ENC_O, B_ENC_FF1, B_ENC_FF2 = 0, 1, 2, 3
B_DEC_QKV, B_DEC_XQ, B_DEC_XKV, B_DEC_O, B_DEC_XO = 4, 5, 6, 7, 8
B_DEC_FF1, B_DEC_FF2, B_VOCA = 9, 10, 11
LN_G_BASE, LN_B_BASE = 12, 17
N_BROWS = 24

# slab64: (VOCAB + B*S + D_FF, 64) — rows [0:VOCAB] embedding tables,
# rows [VOCAB:VOCAB+B*S] positional encodings (pre-tiled over batch),
# rows [VOCAB+B*S:] the two FFN down-projection weights; lanes [0:32] hold the
# src/encoder half, lanes [32:64] the tgt/decoder half.


# --------------------------- fused Pallas kernel -------------------------


def _fused_transformer_kernel(tok_col_ref, tok_row_ref, wd_ref, slab_ref, bl_ref,
                              out_ref, attn_ref, *, batch, s_src, s_tgt):
    f32 = jnp.float32
    D, Dh, H = D_MODEL, D_HEAD, N_HEADS
    n_src, n_tgt = batch * s_src, batch * s_tgt
    n_pe = max(n_src, n_tgt)

    tok_col = tok_col_ref[...]          # (n_src+n_tgt, 1) int32
    tok_row = tok_row_ref[...]          # (1, n_src+n_tgt) int32
    wd = wd_ref[...]
    slab = slab_ref[...]
    bl = bl_ref[...]

    def wchunk(idx, width):             # 128-aligned weight slice
        return wd[:, idx * W_CHUNK: idx * W_CHUNK + width]

    def brow(idx, width):               # (1, width) bias / LN row
        return bl[idx:idx + 1, :width]

    # ---- embeddings: one-hot matmul keeps the "gather" on the MXU ----------
    # TODO(synk): at realistic vocab sizes replace with a scalar-prefetch row
    # gather (PrefetchScalarGridSpec + pl.Element index_map).
    def embed(tok, emb, pe):
        n = tok.shape[0]
        onehot = (tok == jax.lax.broadcasted_iota(jnp.int32, (n, VOCAB), 1)
                  ).astype(f32)
        return jnp.dot(onehot, emb, preferred_element_type=f32) * math.sqrt(D) + pe

    x = embed(tok_col[:n_src, :], slab[0:VOCAB, 0:D],
              slab[VOCAB:VOCAB + n_src, 0:D])                       # (n_src, D)
    y = embed(tok_col[n_src:, :], slab[0:VOCAB, D:2 * D],
              slab[VOCAB:VOCAB + n_tgt, D:2 * D])                   # (n_tgt, D)
    enc_w2 = slab[VOCAB + n_pe:VOCAB + n_pe + D_FF, 0:D]
    dec_w2 = slab[VOCAB + n_pe:VOCAB + n_pe + D_FF, D:2 * D]

    # ---- additive attention masks, hoisted out of the MHA loops ------------
    src_qv = (tok_col[:n_src, :] != PAD_IDX).astype(f32)            # (n_src, 1)
    tgt_qv = (tok_col[n_src:, :] != PAD_IDX).astype(f32)            # (n_tgt, 1)
    src_kv = (tok_row[:, :n_src] != PAD_IDX).astype(f32)            # (1, n_src)
    tgt_kv = (tok_row[:, n_src:] != PAD_IDX).astype(f32)            # (1, n_tgt)
    causal = (jax.lax.broadcasted_iota(jnp.int32, (s_tgt, s_tgt), 0)
              >= jax.lax.broadcasted_iota(jnp.int32, (s_tgt, s_tgt), 1)
              ).astype(f32)

    def make_mask(qv, kv, b, sq, sk, tri=None):
        valid = qv[b * sq:(b + 1) * sq, :] * kv[:, b * sk:(b + 1) * sk]
        if tri is not None:
            valid = valid * tri
        return (valid - 1.0) * 1e9      # 0 where attended, -1e9 where masked

    enc_masks = [make_mask(src_qv, src_kv, b, s_src, s_src) for b in range(batch)]
    dec_masks = [make_mask(tgt_qv, tgt_kv, b, s_tgt, s_tgt, causal) for b in range(batch)]
    xat_masks = [make_mask(tgt_qv, src_kv, b, s_tgt, s_src) for b in range(batch)]

    # ---- multi-head attention ------------------------------------------------
    scale = 1.0 / math.sqrt(Dh)
    dn_qk = (((1,), (1,)), ((), ()))    # contract D_HEAD of Q and K: no K transpose

    def mha(q, k, v, masks, w_o, b_o, sq, sk):
        # (batch, head) tiles statically unrolled; head outputs are written
        # straight into the VMEM scratch (no lane/sublane concatenates).
        for b in range(batch):
            qb = q[b * sq:(b + 1) * sq, :]
            kb = k[b * sk:(b + 1) * sk, :]
            vb = v[b * sk:(b + 1) * sk, :]
            m = masks[b]
            for h in range(H):
                sl = slice(h * Dh, (h + 1) * Dh)
                s = jax.lax.dot_general(qb[:, sl], kb[:, sl], dn_qk,
                                        preferred_element_type=f32) * scale + m
                s = s - jnp.max(s, axis=-1, keepdims=True)
                p = jnp.exp(s)
                p = p * pl.reciprocal(jnp.sum(p, axis=-1, keepdims=True),
                                      approx=True)
                attn_ref[b * sq:(b + 1) * sq, sl] = jnp.dot(
                    p, vb[:, sl], preferred_element_type=f32)
        o = attn_ref[0:batch * sq, :]
        return jnp.dot(o, w_o, preferred_element_type=f32) + b_o

    def linear(t, w, b, relu=False):
        o = jnp.dot(t, w, preferred_element_type=f32) + b
        return jnp.maximum(o, 0.0) if relu else o

    def add_ln(res, upd, idx):
        z = res + upd
        mu = jnp.mean(z, axis=-1, keepdims=True)
        var = jnp.mean(jnp.square(z - mu), axis=-1, keepdims=True)
        return ((z - mu) * jax.lax.rsqrt(var + LN_EPS)
                * bl[LN_G_BASE + idx:LN_G_BASE + idx + 1, 0:D]
                + bl[LN_B_BASE + idx:LN_B_BASE + idx + 1, 0:D])

    # ---- encoder layer (post-LN) --------------------------------------------
    qkv = (jnp.dot(x, wchunk(W_ENC_QKV, 3 * D), preferred_element_type=f32)
           + brow(B_ENC_QKV, 3 * D))
    a = mha(qkv[:, :D], qkv[:, D:2 * D], qkv[:, 2 * D:], enc_masks,
            wchunk(W_ENC_O, D), brow(B_ENC_O, D), s_src, s_src)
    x = add_ln(x, a, 0)
    f = linear(linear(x, wchunk(W_ENC_FF1, D_FF), brow(B_ENC_FF1, D_FF), relu=True),
               enc_w2, brow(B_ENC_FF2, D))
    ctx = add_ln(x, f, 1)

    # ---- decoder layer (post-LN) --------------------------------------------
    qkv = (jnp.dot(y, wchunk(W_DEC_QKV, 3 * D), preferred_element_type=f32)
           + brow(B_DEC_QKV, 3 * D))
    a = mha(qkv[:, :D], qkv[:, D:2 * D], qkv[:, 2 * D:], dec_masks,
            wchunk(W_DEC_O, D), brow(B_DEC_O, D), s_tgt, s_tgt)
    y = add_ln(y, a, 2)

    # NOTE: the cross-attention query is projected from the *post-LN* output of
    # the self-attention sub-layer, so it cannot be fused into the self-QKV
    # matmul on the embedded target without changing the module semantics.
    qx = (jnp.dot(y, wchunk(W_DEC_XQ, D), preferred_element_type=f32)
          + brow(B_DEC_XQ, D))
    kvx = (jnp.dot(ctx, wchunk(W_DEC_XKV, 2 * D), preferred_element_type=f32)
           + brow(B_DEC_XKV, 2 * D))
    c = mha(qx, kvx[:, :D], kvx[:, D:], xat_masks,
            wchunk(W_DEC_XO, D), brow(B_DEC_XO, D), s_tgt, s_src)
    y = add_ln(y, c, 3)
    f = linear(linear(y, wchunk(W_DEC_FF1, D_FF), brow(B_DEC_FF1, D_FF), relu=True),
               dec_w2, brow(B_DEC_FF2, D))
    pred = add_ln(y, f, 4)

    # ---- vocab projection + log_softmax, single lane-dense output store ------
    logits = (jnp.dot(pred, wchunk(W_VOCA, VOCAB), preferred_element_type=f32)
              + brow(B_VOCA, VOCAB))
    z = logits - jnp.max(logits, axis=-1, keepdims=True)
    logprobs = z - jnp.log(jnp.sum(jnp.exp(z), axis=-1, keepdims=True))

    parts = [logprobs, pred]
    pad_w = OUT_WIDTH - VOCAB - D
    if pad_w:
        parts.append(jnp.zeros((n_tgt, pad_w), f32))
    out_ref[...] = jnp.concatenate(parts, axis=-1)


# ------------------------------ forward wrapper ---------------------------


def transformer_forward(params, src, tgt):
    B, Ss = src.shape
    Bt, St = tgt.shape
    assert B == Bt
    n_src, n_tgt = B * Ss, B * St

    # Trivial host-side layout prep for the token ids (ints only).
    tok_col = jnp.concatenate([src.reshape(-1, 1), tgt.reshape(-1, 1)],
                              axis=0).astype(jnp.int32)
    tok_row = jnp.concatenate([src.reshape(1, -1), tgt.reshape(1, -1)],
                              axis=1).astype(jnp.int32)

    inputs = (tok_col, tok_row, params["w_d"], params["slab64"], params["bias_ln"])

    in_bytes = sum(int(a.size) * a.dtype.itemsize for a in inputs)
    cost = pl.CostEstimate(flops=1_200_000, transcendentals=4_000,
                           bytes_accessed=in_bytes + n_tgt * OUT_WIDTH * 4)

    kernel = functools.partial(_fused_transformer_kernel,
                               batch=B, s_src=Ss, s_tgt=St)
    vmem = pltpu.MemorySpace.VMEM
    packed = pl.pallas_call(
        kernel,
        out_shape=jax.ShapeDtypeStruct((n_tgt, OUT_WIDTH), jnp.float32),
        in_specs=[pl.BlockSpec(memory_space=vmem)] * len(inputs),
        out_specs=pl.BlockSpec(memory_space=vmem),
        scratch_shapes=[pltpu.VMEM((max(n_src, n_tgt), D_MODEL), jnp.float32)],
        cost_estimate=cost,
    )(*inputs)

    out = packed[:, :VOCAB].reshape(B, St, VOCAB)
    prediction = packed[:, VOCAB:VOCAB + D_MODEL].reshape(B, St, D_MODEL)
    return out, prediction


# ------------------------------ init params ------------------------------


def sinusoidal_pe(max_len, d_model):
    pos = jnp.arange(max_len, dtype=jnp.float32)[:, None]
    div = jnp.exp(jnp.arange(0, d_model, 2, dtype=jnp.float32)
                  * (-math.log(10000.0) / d_model))
    pe = jnp.zeros((max_len, d_model), jnp.float32)
    pe = pe.at[:, 0::2].set(jnp.sin(pos * div))
    pe = pe.at[:, 1::2].set(jnp.cos(pos * div))
    return pe


def init_params(key):
    keys = iter(jax.random.split(key, 64))

    def w(din, dout):
        return jax.random.normal(next(keys), (din, dout), jnp.float32) * 0.02

    def b(dout):
        return jax.random.normal(next(keys), (1, dout), jnp.float32) * 0.02

    # --- raw parameters (natural shapes) -------------------------------------
    src_emb, tgt_emb = w(VOCAB, D_MODEL), w(VOCAB, D_MODEL)
    e_wqkv = jnp.concatenate([w(D_MODEL, D_MODEL) for _ in range(3)], axis=1)
    e_bqkv = b(3 * D_MODEL)
    e_wo, e_bo = w(D_MODEL, D_MODEL), b(D_MODEL)
    e_w1, e_b1 = w(D_MODEL, D_FF), b(D_FF)
    e_w2, e_b2 = w(D_FF, D_MODEL), b(D_MODEL)
    ds_wqkv = jnp.concatenate([w(D_MODEL, D_MODEL) for _ in range(3)], axis=1)
    ds_bqkv = b(3 * D_MODEL)
    ds_wo, ds_bo = w(D_MODEL, D_MODEL), b(D_MODEL)
    dx_wq, dx_bq = w(D_MODEL, D_MODEL), b(D_MODEL)
    dx_wkv = jnp.concatenate([w(D_MODEL, D_MODEL) for _ in range(2)], axis=1)
    dx_bkv = b(2 * D_MODEL)
    dx_wo, dx_bo = w(D_MODEL, D_MODEL), b(D_MODEL)
    d_w1, d_b1 = w(D_MODEL, D_FF), b(D_FF)
    d_w2, d_b2 = w(D_FF, D_MODEL), b(D_MODEL)
    voca_w, voca_b = w(D_MODEL, VOCAB), b(VOCAB)
    ln_g = jnp.ones((5, D_MODEL), jnp.float32)
    ln_b = jnp.zeros((5, D_MODEL), jnp.float32)

    # --- pack into lane-dense slabs once at init (≈31 input DMAs -> 5) --------
    def wpad(m):                        # (D_MODEL, k) -> (D_MODEL, 128)
        return jnp.pad(m, ((0, 0), (0, W_CHUNK - m.shape[1])))

    w_d = jnp.concatenate([wpad(m) for m in (
        e_wqkv, e_wo, e_w1, ds_wqkv, dx_wq, dx_wkv, ds_wo, dx_wo, d_w1, voca_w
    )], axis=1)                                                   # (32, 1280)
    assert w_d.shape == (D_MODEL, N_WCHUNK * W_CHUNK)

    def rpad(v):                        # any vector -> (1, 128) row
        v = v.reshape(1, -1)
        return jnp.pad(v, ((0, 0), (0, 128 - v.shape[1])))

    rows = [rpad(v) for v in (e_bqkv, e_bo, e_b1, e_b2, ds_bqkv, dx_bq, dx_bkv,
                              ds_bo, dx_bo, d_b1, d_b2, voca_b)]
    rows += [rpad(ln_g[i]) for i in range(5)]
    rows += [rpad(ln_b[i]) for i in range(5)]
    bias_ln = jnp.concatenate(rows, axis=0)
    bias_ln = jnp.pad(bias_ln, ((0, N_BROWS - bias_ln.shape[0]), (0, 0)))  # (24, 128)

    assert SRC_LEN == TGT_LEN, "PE slab packing assumes equal src/tgt lengths"
    pe = sinusoidal_pe(MAX_LEN, D_MODEL)
    pe_src = jnp.tile(pe[:SRC_LEN], (BATCH, 1))   # pre-tiled over batch: (B*S, D)
    pe_tgt = jnp.tile(pe[:TGT_LEN], (BATCH, 1))
    slab64 = jnp.concatenate([
        jnp.concatenate([src_emb, tgt_emb], axis=1),   # rows [0, VOCAB)
        jnp.concatenate([pe_src, pe_tgt], axis=1),     # rows [VOCAB, VOCAB+B*S)
        jnp.concatenate([e_w2, d_w2], axis=1),         # rows [VOCAB+B*S, +D_FF)
    ], axis=0)                                         # (144, 64)

    return dict(w_d=w_d, slab64=slab64, bias_ln=bias_ln)


# --------------------------------- main ----------------------------------

if __name__ == "__main__":
    key = jax.random.PRNGKey(0)
    kp, ks, kt = jax.random.split(key, 3)
    params = init_params(kp)

    src = jax.random.randint(ks, (BATCH, SRC_LEN), 2, VOCAB, dtype=jnp.int32)
    tgt = jax.random.randint(kt, (BATCH, TGT_LEN), 2, VOCAB, dtype=jnp.int32)
    # introduce some padding tokens (pad_idx == 1)
    src = src.at[:, -2:].set(PAD_IDX)
    tgt = tgt.at[:, -1:].set(PAD_IDX)

    fwd = jax.jit(transformer_forward)
    out, prediction = fwd(params, src, tgt)
    jax.block_until_ready((out, prediction))

    assert out.shape == (BATCH, TGT_LEN, VOCAB)
    assert prediction.shape == (BATCH, TGT_LEN, D_MODEL)
    assert bool(jnp.all(jnp.isfinite(out)))
    assert bool(jnp.all(jnp.isfinite(prediction)))
    # log_softmax rows must exponentiate-sum to ~1
    assert bool(jnp.all(jnp.abs(jnp.sum(jnp.exp(out), axis=-1) - 1.0) < 1e-3))
    print("KERNEL_OK")
</pallas_src>

<mosaic_0001>
module attributes {stable_mosaic.version = 11 : i64} {
  func.func @_fused_transformer_kernel(%arg0: memref<32x1xi32, #tpu.memory_space<vmem>>, %arg1: memref<1x32xi32, #tpu.memory_space<vmem>>, %arg2: memref<32x1280xf32, #tpu.memory_space<vmem>>, %arg3: memref<144x64xf32, #tpu.memory_space<vmem>>, %arg4: memref<24x128xf32, #tpu.memory_space<vmem>>, %arg5: memref<16x128xf32, #tpu.memory_space<vmem>>, %arg6: memref<16x32xf32, #tpu.memory_space<vmem>>) attributes {dimension_semantics = [], scalar_prefetch = 0 : i64, scratch_operands = 1 : i64, tpu.core_type = #tpu.core_type<tc>} {
    %c0 = arith.constant 0 : index
    %c0_0 = arith.constant 0 : index
    %0 = vector.load %arg0[%c0, %c0_0] : memref<32x1xi32, #tpu.memory_space<vmem>>, vector<32x1xi32>
    %c0_1 = arith.constant 0 : index
    %c0_2 = arith.constant 0 : index
    %1 = vector.load %arg1[%c0_1, %c0_2] : memref<1x32xi32, #tpu.memory_space<vmem>>, vector<1x32xi32>
    %c0_3 = arith.constant 0 : index
    %c0_4 = arith.constant 0 : index
    %2 = vector.load %arg2[%c0_3, %c0_4] : memref<32x1280xf32, #tpu.memory_space<vmem>>, vector<32x1280xf32>
    %c0_5 = arith.constant 0 : index
    %c0_6 = arith.constant 0 : index
    %3 = vector.load %arg3[%c0_5, %c0_6] : memref<144x64xf32, #tpu.memory_space<vmem>>, vector<144x64xf32>
    %c0_7 = arith.constant 0 : index
    %c0_8 = arith.constant 0 : index
    %4 = vector.load %arg4[%c0_7, %c0_8] : memref<24x128xf32, #tpu.memory_space<vmem>>, vector<24x128xf32>
    %5 = vector.extract_strided_slice %0 {offsets = [0, 0], sizes = [16, 1], strides = [1, 1]} : vector<32x1xi32> to vector<16x1xi32>
    %6 = vector.extract_strided_slice %3 {offsets = [0, 0], sizes = [64, 32], strides = [1, 1]} : vector<144x64xf32> to vector<64x32xf32>
    %7 = vector.extract_strided_slice %3 {offsets = [64, 0], sizes = [16, 32], strides = [1, 1]} : vector<144x64xf32> to vector<16x32xf32>
    %8 = tpu.iota {dimensions = array<i32: 1>} : vector<16x64xi32>
    %9 = vector.broadcast %5 : vector<16x1xi32> to vector<16x64xi32>
    %10 = arith.cmpi eq, %9, %8 : vector<16x64xi32>
    %11 = arith.extui %10 : vector<16x64xi1> to vector<16x64xi32>
    %12 = arith.sitofp %11 : vector<16x64xi32> to vector<16x64xf32>
    %cst = arith.constant dense<0.000000e+00> : vector<16x32xf32>
    %13 = tpu.matmul %12, %6, %cst {dimension_numbers = #tpu.dot_dimension_numbers<[1], [0], [0], [1], [0, 0, 1, 1], [], []>} : vector<16x64xf32>, vector<64x32xf32>, vector<16x32xf32> -> vector<16x32xf32>
    %cst_9 = arith.constant 5.65685415 : f32
    %14 = vector.broadcast %cst_9 : f32 to vector<16x32xf32>
    %15 = arith.mulf %13, %14 : vector<16x32xf32>
    %16 = arith.addf %15, %7 : vector<16x32xf32>
    %17 = vector.extract_strided_slice %0 {offsets = [16, 0], sizes = [16, 1], strides = [1, 1]} : vector<32x1xi32> to vector<16x1xi32>
    %18 = vector.extract_strided_slice %3 {offsets = [0, 32], sizes = [64, 32], strides = [1, 1]} : vector<144x64xf32> to vector<64x32xf32>
    %19 = vector.extract_strided_slice %3 {offsets = [64, 32], sizes = [16, 32], strides = [1, 1]} : vector<144x64xf32> to vector<16x32xf32>
    %20 = tpu.iota {dimensions = array<i32: 1>} : vector<16x64xi32>
    %21 = vector.broadcast %17 : vector<16x1xi32> to vector<16x64xi32>
    %22 = arith.cmpi eq, %21, %20 : vector<16x64xi32>
    %23 = arith.extui %22 : vector<16x64xi1> to vector<16x64xi32>
    %24 = arith.sitofp %23 : vector<16x64xi32> to vector<16x64xf32>
    %cst_10 = arith.constant dense<0.000000e+00> : vector<16x32xf32>
    %25 = tpu.matmul %24, %18, %cst_10 {dimension_numbers = #tpu.dot_dimension_numbers<[1], [0], [0], [1], [0, 0, 1, 1], [], []>} : vector<16x64xf32>, vector<64x32xf32>, vector<16x32xf32> -> vector<16x32xf32>
    %cst_11 = arith.constant 5.65685415 : f32
    %26 = vector.broadcast %cst_11 : f32 to vector<16x32xf32>
    %27 = arith.mulf %25, %26 : vector<16x32xf32>
    %28 = arith.addf %27, %19 : vector<16x32xf32>
    %29 = vector.extract_strided_slice %3 {offsets = [80, 0], sizes = [64, 32], strides = [1, 1]} : vector<144x64xf32> to vector<64x32xf32>
    %30 = vector.extract_strided_slice %3 {offsets = [80, 32], sizes = [64, 32], strides = [1, 1]} : vector<144x64xf32> to vector<64x32xf32>
    %31 = vector.extract_strided_slice %0 {offsets = [0, 0], sizes = [16, 1], strides = [1, 1]} : vector<32x1xi32> to vector<16x1xi32>
    %c1_i32 = arith.constant 1 : i32
    %32 = vector.broadcast %c1_i32 : i32 to vector<16x1xi32>
    %33 = arith.cmpi ne, %31, %32 : vector<16x1xi32>
    %34 = arith.extui %33 : vector<16x1xi1> to vector<16x1xi32>
    %35 = arith.sitofp %34 : vector<16x1xi32> to vector<16x1xf32>
    %36 = vector.extract_strided_slice %0 {offsets = [16, 0], sizes = [16, 1], strides = [1, 1]} : vector<32x1xi32> to vector<16x1xi32>
    %c1_i32_12 = arith.constant 1 : i32
    %37 = vector.broadcast %c1_i32_12 : i32 to vector<16x1xi32>
    %38 = arith.cmpi ne, %36, %37 : vector<16x1xi32>
    %39 = arith.extui %38 : vector<16x1xi1> to vector<16x1xi32>
    %40 = arith.sitofp %39 : vector<16x1xi32> to vector<16x1xf32>
    %41 = vector.extract_strided_slice %1 {offsets = [0, 0], sizes = [1, 16], strides = [1, 1]} : vector<1x32xi32> to vector<1x16xi32>
    %c1_i32_13 = arith.constant 1 : i32
    %42 = vector.broadcast %c1_i32_13 : i32 to vector<1x16xi32>
    %43 = arith.cmpi ne, %41, %42 : vector<1x16xi32>
    %44 = arith.extui %43 : vector<1x16xi1> to vector<1x16xi32>
    %45 = arith.sitofp %44 : vector<1x16xi32> to vector<1x16xf32>
    %46 = vector.extract_strided_slice %1 {offsets = [0, 16], sizes = [1, 16], strides = [1, 1]} : vector<1x32xi32> to vector<1x16xi32>
    %c1_i32_14 = arith.constant 1 : i32
    %47 = vector.broadcast %c1_i32_14 : i32 to vector<1x16xi32>
    %48 = arith.cmpi ne, %46, %47 : vector<1x16xi32>
    %49 = arith.extui %48 : vector<1x16xi1> to vector<1x16xi32>
    %50 = arith.sitofp %49 : vector<1x16xi32> to vector<1x16xf32>
    %51 = tpu.iota {dimensions = array<i32: 0>} : vector<8x8xi32>
    %52 = tpu.iota {dimensions = array<i32: 1>} : vector<8x8xi32>
    %53 = arith.cmpi sge, %51, %52 : vector<8x8xi32>
    %54 = arith.extui %53 : vector<8x8xi1> to vector<8x8xi32>
    %55 = arith.sitofp %54 : vector<8x8xi32> to vector<8x8xf32>
    %56 = vector.extract_strided_slice %35 {offsets = [0, 0], sizes = [8, 1], strides = [1, 1]} : vector<16x1xf32> to vector<8x1xf32>
    %57 = vector.extract_strided_slice %45 {offsets = [0, 0], sizes = [1, 8], strides = [1, 1]} : vector<1x16xf32> to vector<1x8xf32>
    %58 = vector.broadcast %56 : vector<8x1xf32> to vector<8x8xf32>
    %59 = vector.broadcast %57 : vector<1x8xf32> to vector<8x8xf32>
    %60 = arith.mulf %58, %59 : vector<8x8xf32>
    %cst_15 = arith.constant 1.000000e+00 : f32
    %61 = vector.broadcast %cst_15 : f32 to vector<8x8xf32>
    %62 = arith.subf %60, %61 : vector<8x8xf32>
    %cst_16 = arith.constant 1.000000e+09 : f32
    %63 = vector.broadcast %cst_16 : f32 to vector<8x8xf32>
    %64 = arith.mulf %62, %63 : vector<8x8xf32>
    %65 = vector.extract_strided_slice %35 {offsets = [8, 0], sizes = [8, 1], strides = [1, 1]} : vector<16x1xf32> to vector<8x1xf32>
    %66 = vector.extract_strided_slice %45 {offsets = [0, 8], sizes = [1, 8], strides = [1, 1]} : vector<1x16xf32> to vector<1x8xf32>
    %67 = vector.broadcast %65 : vector<8x1xf32> to vector<8x8xf32>
    %68 = vector.broadcast %66 : vector<1x8xf32> to vector<8x8xf32>
    %69 = arith.mulf %67, %68 : vector<8x8xf32>
    %cst_17 = arith.constant 1.000000e+00 : f32
    %70 = vector.broadcast %cst_17 : f32 to vector<8x8xf32>
    %71 = arith.subf %69, %70 : vector<8x8xf32>
    %cst_18 = arith.constant 1.000000e+09 : f32
    %72 = vector.broadcast %cst_18 : f32 to vector<8x8xf32>
    %73 = arith.mulf %71, %72 : vector<8x8xf32>
    %74 = vector.extract_strided_slice %40 {offsets = [0, 0], sizes = [8, 1], strides = [1, 1]} : vector<16x1xf32> to vector<8x1xf32>
    %75 = vector.extract_strided_slice %50 {offsets = [0, 0], sizes = [1, 8], strides = [1, 1]} : vector<1x16xf32> to vector<1x8xf32>
    %76 = vector.broadcast %74 : vector<8x1xf32> to vector<8x8xf32>
    %77 = vector.broadcast %75 : vector<1x8xf32> to vector<8x8xf32>
    %78 = arith.mulf %76, %77 : vector<8x8xf32>
    %79 = arith.mulf %78, %55 : vector<8x8xf32>
    %cst_19 = arith.constant 1.000000e+00 : f32
    %80 = vector.broadcast %cst_19 : f32 to vector<8x8xf32>
    %81 = arith.subf %79, %80 : vector<8x8xf32>
    %cst_20 = arith.constant 1.000000e+09 : f32
    %82 = vector.broadcast %cst_20 : f32 to vector<8x8xf32>
    %83 = arith.mulf %81, %82 : vector<8x8xf32>
    %84 = vector.extract_strided_slice %40 {offsets = [8, 0], sizes = [8, 1], strides = [1, 1]} : vector<16x1xf32> to vector<8x1xf32>
    %85 = vector.extract_strided_slice %50 {offsets = [0, 8], sizes = [1, 8], strides = [1, 1]} : vector<1x16xf32> to vector<1x8xf32>
    %86 = vector.broadcast %84 : vector<8x1xf32> to vector<8x8xf32>
    %87 = vector.broadcast %85 : vector<1x8xf32> to vector<8x8xf32>
    %88 = arith.mulf %86, %87 : vector<8x8xf32>
    %89 = arith.mulf %88, %55 : vector<8x8xf32>
    %cst_21 = arith.constant 1.000000e+00 : f32
    %90 = vector.broadcast %cst_21 : f32 to vector<8x8xf32>
    %91 = arith.subf %89, %90 : vector<8x8xf32>
    %cst_22 = arith.constant 1.000000e+09 : f32
    %92 = vector.broadcast %cst_22 : f32 to vector<8x8xf32>
    %93 = arith.mulf %91, %92 : vector<8x8xf32>
    %94 = vector.extract_strided_slice %40 {offsets = [0, 0], sizes = [8, 1], strides = [1, 1]} : vector<16x1xf32> to vector<8x1xf32>
    %95 = vector.extract_strided_slice %45 {offsets = [0, 0], sizes = [1, 8], strides = [1, 1]} : vector<1x16xf32> to vector<1x8xf32>
    %96 = vector.broadcast %94 : vector<8x1xf32> to vector<8x8xf32>
    %97 = vector.broadcast %95 : vector<1x8xf32> to vector<8x8xf32>
    %98 = arith.mulf %96, %97 : vector<8x8xf32>
    %cst_23 = arith.constant 1.000000e+00 : f32
    %99 = vector.broadcast %cst_23 : f32 to vector<8x8xf32>
    %100 = arith.subf %98, %99 : vector<8x8xf32>
    %cst_24 = arith.constant 1.000000e+09 : f32
    %101 = vector.broadcast %cst_24 : f32 to vector<8x8xf32>
    %102 = arith.mulf %100, %101 : vector<8x8xf32>
    %103 = vector.extract_strided_slice %40 {offsets = [8, 0], sizes = [8, 1], strides = [1, 1]} : vector<16x1xf32> to vector<8x1xf32>
    %104 = vector.extract_strided_slice %45 {offsets = [0, 8], sizes = [1, 8], strides = [1, 1]} : vector<1x16xf32> to vector<1x8xf32>
    %105 = vector.broadcast %103 : vector<8x1xf32> to vector<8x8xf32>
    %106 = vector.broadcast %104 : vector<1x8xf32> to vector<8x8xf32>
    %107 = arith.mulf %105, %106 : vector<8x8xf32>
    %cst_25 = arith.constant 1.000000e+00 : f32
    %108 = vector.broadcast %cst_25 : f32 to vector<8x8xf32>
    %109 = arith.subf %107, %108 : vector<8x8xf32>
    %cst_26 = arith.constant 1.000000e+09 : f32
    %110 = vector.broadcast %cst_26 : f32 to vector<8x8xf32>
    %111 = arith.mulf %109, %110 : vector<8x8xf32>
    %112 = vector.extract_strided_slice %2 {offsets = [0, 0], sizes = [32, 96], strides = [1, 1]} : vector<32x1280xf32> to vector<32x96xf32>
    %cst_27 = arith.constant dense<0.000000e+00> : vector<16x96xf32>
    %113 = tpu.matmul %16, %112, %cst_27 {dimension_numbers = #tpu.dot_dimension_numbers<[1], [0], [0], [1], [0, 0, 1, 1], [], []>} : vector<16x32xf32>, vector<32x96xf32>, vector<16x96xf32> -> vector<16x96xf32>
    %114 = vector.extract_strided_slice %4 {offsets = [0, 0], sizes = [1, 96], strides = [1, 1]} : vector<24x128xf32> to vector<1x96xf32>
    %115 = vector.broadcast %114 : vector<1x96xf32> to vector<16x96xf32>
    %116 = arith.addf %113, %115 : vector<16x96xf32>
    %117 = vector.extract_strided_slice %116 {offsets = [0, 0], sizes = [16, 32], strides = [1, 1]} : vector<16x96xf32> to vector<16x32xf32>
    %118 = vector.extract_strided_slice %116 {offsets = [0, 32], sizes = [16, 32], strides = [1, 1]} : vector<16x96xf32> to vector<16x32xf32>
    %119 = vector.extract_strided_slice %116 {offsets = [0, 64], sizes = [16, 32], strides = [1, 1]} : vector<16x96xf32> to vector<16x32xf32>
    %120 = vector.extract_strided_slice %2 {offsets = [0, 128], sizes = [32, 32], strides = [1, 1]} : vector<32x1280xf32> to vector<32x32xf32>
    %121 = vector.extract_strided_slice %4 {offsets = [1, 0], sizes = [1, 32], strides = [1, 1]} : vector<24x128xf32> to vector<1x32xf32>
    %122 = vector.extract_strided_slice %117 {offsets = [0, 0], sizes = [8, 32], strides = [1, 1]} : vector<16x32xf32> to vector<8x32xf32>
    %123 = vector.extract_strided_slice %118 {offsets = [0, 0], sizes = [8, 32], strides = [1, 1]} : vector<16x32xf32> to vector<8x32xf32>
    %124 = vector.extract_strided_slice %119 {offsets = [0, 0], sizes = [8, 32], strides = [1, 1]} : vector<16x32xf32> to vector<8x32xf32>
    %125 = vector.extract_strided_slice %122 {offsets = [0, 0], sizes = [8, 8], strides = [1, 1]} : vector<8x32xf32> to vector<8x8xf32>
    %126 = vector.extract_strided_slice %123 {offsets = [0, 0], sizes = [8, 8], strides = [1, 1]} : vector<8x32xf32> to vector<8x8xf32>
    %cst_28 = arith.constant dense<0.000000e+00> : vector<8x8xf32>
    %127 = tpu.matmul %125, %126, %cst_28 {dimension_numbers = #tpu.dot_dimension_numbers<[1], [1], [0], [0], [0, 0, 1, 0], [], []>} : vector<8x8xf32>, vector<8x8xf32>, vector<8x8xf32> -> vector<8x8xf32>
    %cst_29 = arith.constant 0.353553385 : f32
    %128 = vector.broadcast %cst_29 : f32 to vector<8x8xf32>
    %129 = arith.mulf %127, %128 : vector<8x8xf32>
    %130 = arith.addf %129, %64 : vector<8x8xf32>
    %cst_30 = arith.constant dense<0xFF800000> : vector<8xf32>
    %131 = vector.multi_reduction <maximumf>, %130, %cst_30 [1] : vector<8x8xf32> to vector<8xf32>
    %132 = vector.shape_cast %131 : vector<8xf32> to vector<8x1xf32>
    %133 = vector.broadcast %132 : vector<8x1xf32> to vector<8x8xf32>
    %134 = arith.subf %130, %133 : vector<8x8xf32>
    %135 = math.exp %134 : vector<8x8xf32>
    %cst_31 = arith.constant dense<0.000000e+00> : vector<8xf32>
    %136 = vector.multi_reduction <add>, %135, %cst_31 [1] : vector<8x8xf32> to vector<8xf32>
    %137 = vector.shape_cast %136 : vector<8xf32> to vector<8x1xf32>
    %138 = tpu.reciprocal %137 {approx = true} : vector<8x1xf32> -> vector<8x1xf32>
    %139 = vector.broadcast %138 : vector<8x1xf32> to vector<8x8xf32>
    %140 = arith.mulf %135, %139 : vector<8x8xf32>
    %141 = vector.extract_strided_slice %124 {offsets = [0, 0], sizes = [8, 8], strides = [1, 1]} : vector<8x32xf32> to vector<8x8xf32>
    %cst_32 = arith.constant dense<0.000000e+00> : vector<8x8xf32>
    %142 = tpu.matmul %140, %141, %cst_32 {dimension_numbers = #tpu.dot_dimension_numbers<[1], [0], [0], [1], [0, 0, 1, 1], [], []>} : vector<8x8xf32>, vector<8x8xf32>, vector<8x8xf32> -> vector<8x8xf32>
    %c0_33 = arith.constant 0 : index
    %c0_34 = arith.constant 0 : index
    %143 = vector.load %arg6[%c0_33, %c0_34] : memref<16x32xf32, #tpu.memory_space<vmem>>, vector<8x8xf32>
    tpu.vector_store %arg6[%c0_33, %c0_34], %142 {strides = array<i32>} : memref<16x32xf32, #tpu.memory_space<vmem>>, vector<8x8xf32>,
    %144 = vector.extract_strided_slice %122 {offsets = [0, 8], sizes = [8, 8], strides = [1, 1]} : vector<8x32xf32> to vector<8x8xf32>
    %145 = vector.extract_strided_slice %123 {offsets = [0, 8], sizes = [8, 8], strides = [1, 1]} : vector<8x32xf32> to vector<8x8xf32>
    %cst_35 = arith.constant dense<0.000000e+00> : vector<8x8xf32>
    %146 = tpu.matmul %144, %145, %cst_35 {dimension_numbers = #tpu.dot_dimension_numbers<[1], [1], [0], [0], [0, 0, 1, 0], [], []>} : vector<8x8xf32>, vector<8x8xf32>, vector<8x8xf32> -> vector<8x8xf32>
    %cst_36 = arith.constant 0.353553385 : f32
    %147 = vector.broadcast %cst_36 : f32 to vector<8x8xf32>
    %148 = arith.mulf %146, %147 : vector<8x8xf32>
    %149 = arith.addf %148, %64 : vector<8x8xf32>
    %cst_37 = arith.constant dense<0xFF800000> : vector<8xf32>
    %150 = vector.multi_reduction <maximumf>, %149, %cst_37 [1] : vector<8x8xf32> to vector<8xf32>
    %151 = vector.shape_cast %150 : vector<8xf32> to vector<8x1xf32>
    %152 = vector.broadcast %151 : vector<8x1xf32> to vector<8x8xf32>
    %153 = arith.subf %149, %152 : vector<8x8xf32>
    %154 = math.exp %153 : vector<8x8xf32>
    %cst_38 = arith.constant dense<0.000000e+00> : vector<8xf32>
    %155 = vector.multi_reduction <add>, %154, %cst_38 [1] : vector<8x8xf32> to vector<8xf32>
    %156 = vector.shape_cast %155 : vector<8xf32> to vector<8x1xf32>
    %157 = tpu.reciprocal %156 {approx = true} : vector<8x1xf32> -> vector<8x1xf32>
    %158 = vector.broadcast %157 : vector<8x1xf32> to vector<8x8xf32>
    %159 = arith.mulf %154, %158 : vector<8x8xf32>
    %160 = vector.extract_strided_slice %124 {offsets = [0, 8], sizes = [8, 8], strides = [1, 1]} : vector<8x32xf32> to vector<8x8xf32>
    %cst_39 = arith.constant dense<0.000000e+00> : vector<8x8xf32>
    %161 = tpu.matmul %159, %160, %cst_39 {dimension_numbers = #tpu.dot_dimension_numbers<[1], [0], [0], [1], [0, 0, 1, 1], [], []>} : vector<8x8xf32>, vector<8x8xf32>, vector<8x8xf32> -> vector<8x8xf32>
    %c0_40 = arith.constant 0 : index
    %c8 = arith.constant 8 : index
    %162 = vector.load %arg6[%c0_40, %c8] : memref<16x32xf32, #tpu.memory_space<vmem>>, vector<8x8xf32>
    tpu.vector_store %arg6[%c0_40, %c8], %161 {strides = array<i32>} : memref<16x32xf32, #tpu.memory_space<vmem>>, vector<8x8xf32>,
    %163 = vector.extract_strided_slice %122 {offsets = [0, 16], sizes = [8, 8], strides = [1, 1]} : vector<8x32xf32> to vector<8x8xf32>
    %164 = vector.extract_strided_slice %123 {offsets = [0, 16], sizes = [8, 8], strides = [1, 1]} : vector<8x32xf32> to vector<8x8xf32>
    %cst_41 = arith.constant dense<0.000000e+00> : vector<8x8xf32>
    %165 = tpu.matmul %163, %164, %cst_41 {dimension_numbers = #tpu.dot_dimension_numbers<[1], [1], [0], [0], [0, 0, 1, 0], [], []>} : vector<8x8xf32>, vector<8x8xf32>, vector<8x8xf32> -> vector<8x8xf32>
    %cst_42 = arith.constant 0.353553385 : f32
    %166 = vector.broadcast %cst_42 : f32 to vector<8x8xf32>
    %167 = arith.mulf %165, %166 : vector<8x8xf32>
    %168 = arith.addf %167, %64 : vector<8x8xf32>
    %cst_43 = arith.constant dense<0xFF800000> : vector<8xf32>
    %169 = vector.multi_reduction <maximumf>, %168, %cst_43 [1] : vector<8x8xf32> to vector<8xf32>
    %170 = vector.shape_cast %169 : vector<8xf32> to vector<8x1xf32>
    %171 = vector.broadcast %170 : vector<8x1xf32> to vector<8x8xf32>
    %172 = arith.subf %168, %171 : vector<8x8xf32>
    %173 = math.exp %172 : vector<8x8xf32>
    %cst_44 = arith.constant dense<0.000000e+00> : vector<8xf32>
    %174 = vector.multi_reduction <add>, %173, %cst_44 [1] : vector<8x8xf32> to vector<8xf32>
    %175 = vector.shape_cast %174 : vector<8xf32> to vector<8x1xf32>
    %176 = tpu.reciprocal %175 {approx = true} : vector<8x1xf32> -> vector<8x1xf32>
    %177 = vector.broadcast %176 : vector<8x1xf32> to vector<8x8xf32>
    %178 = arith.mulf %173, %177 : vector<8x8xf32>
    %179 = vector.extract_strided_slice %124 {offsets = [0, 16], sizes = [8, 8], strides = [1, 1]} : vector<8x32xf32> to vector<8x8xf32>
    %cst_45 = arith.constant dense<0.000000e+00> : vector<8x8xf32>
    %180 = tpu.matmul %178, %179, %cst_45 {dimension_numbers = #tpu.dot_dimension_numbers<[1], [0], [0], [1], [0, 0, 1, 1], [], []>} : vector<8x8xf32>, vector<8x8xf32>, vector<8x8xf32> -> vector<8x8xf32>
    %c0_46 = arith.constant 0 : index
    %c16 = arith.constant 16 : index
    %181 = vector.load %arg6[%c0_46, %c16] : memref<16x32xf32, #tpu.memory_space<vmem>>, vector<8x8xf32>
    tpu.vector_store %arg6[%c0_46, %c16], %180 {strides = array<i32>} : memref<16x32xf32, #tpu.memory_space<vmem>>, vector<8x8xf32>,
    %182 = vector.extract_strided_slice %122 {offsets = [0, 24], sizes = [8, 8], strides = [1, 1]} : vector<8x32xf32> to vector<8x8xf32>
    %183 = vector.extract_strided_slice %123 {offsets = [0, 24], sizes = [8, 8], strides = [1, 1]} : vector<8x32xf32> to vector<8x8xf32>
    %cst_47 = arith.constant dense<0.000000e+00> : vector<8x8xf32>
    %184 = tpu.matmul %182, %183, %cst_47 {dimension_numbers = #tpu.dot_dimension_numbers<[1], [1], [0], [0], [0, 0, 1, 0], [], []>} : vector<8x8xf32>, vector<8x8xf32>, vector<8x8xf32> -> vector<8x8xf32>
    %cst_48 = arith.constant 0.353553385 : f32
    %185 = vector.broadcast %cst_48 : f32 to vector<8x8xf32>
    %186 = arith.mulf %184, %185 : vector<8x8xf32>
    %187 = arith.addf %186, %64 : vector<8x8xf32>
    %cst_49 = arith.constant dense<0xFF800000> : vector<8xf32>
    %188 = vector.multi_reduction <maximumf>, %187, %cst_49 [1] : vector<8x8xf32> to vector<8xf32>
    %189 = vector.shape_cast %188 : vector<8xf32> to vector<8x1xf32>
    %190 = vector.broadcast %189 : vector<8x1xf32> to vector<8x8xf32>
    %191 = arith.subf %187, %190 : vector<8x8xf32>
    %192 = math.exp %191 : vector<8x8xf32>
    %cst_50 = arith.constant dense<0.000000e+00> : vector<8xf32>
    %193 = vector.multi_reduction <add>, %192, %cst_50 [1] : vector<8x8xf32> to vector<8xf32>
    %194 = vector.shape_cast %193 : vector<8xf32> to vector<8x1xf32>
    %195 = tpu.reciprocal %194 {approx = true} : vector<8x1xf32> -> vector<8x1xf32>
    %196 = vector.broadcast %195 : vector<8x1xf32> to vector<8x8xf32>
    %197 = arith.mulf %192, %196 : vector<8x8xf32>
    %198 = vector.extract_strided_slice %124 {offsets = [0, 24], sizes = [8, 8], strides = [1, 1]} : vector<8x32xf32> to vector<8x8xf32>
    %cst_51 = arith.constant dense<0.000000e+00> : vector<8x8xf32>
    %199 = tpu.matmul %197, %198, %cst_51 {dimension_numbers = #tpu.dot_dimension_numbers<[1], [0], [0], [1], [0, 0, 1, 1], [], []>} : vector<8x8xf32>, vector<8x8xf32>, vector<8x8xf32> -> vector<8x8xf32>
    %c0_52 = arith.constant 0 : index
    %c24 = arith.constant 24 : index
    %200 = vector.load %arg6[%c0_52, %c24] : memref<16x32xf32, #tpu.memory_space<vmem>>, vector<8x8xf32>
    tpu.vector_store %arg6[%c0_52, %c24], %199 {strides = array<i32>} : memref<16x32xf32, #tpu.memory_space<vmem>>, vector<8x8xf32>,
    %201 = vector.extract_strided_slice %117 {offsets = [8, 0], sizes = [8, 32], strides = [1, 1]} : vector<16x32xf32> to vector<8x32xf32>
    %202 = vector.extract_strided_slice %118 {offsets = [8, 0], sizes = [8, 32], strides = [1, 1]} : vector<16x32xf32> to vector<8x32xf32>
    %203 = vector.extract_strided_slice %119 {offsets = [8, 0], sizes = [8, 32], strides = [1, 1]} : vector<16x32xf32> to vector<8x32xf32>
    %204 = vector.extract_strided_slice %201 {offsets = [0, 0], sizes = [8, 8], strides = [1, 1]} : vector<8x32xf32> to vector<8x8xf32>
    %205 = vector.extract_strided_slice %202 {offsets = [0, 0], sizes = [8, 8], strides = [1, 1]} : vector<8x32xf32> to vector<8x8xf32>
    %cst_53 = arith.constant dense<0.000000e+00> : vector<8x8xf32>
    %206 = tpu.matmul %204, %205, %cst_53 {dimension_numbers = #tpu.dot_dimension_numbers<[1], [1], [0], [0], [0, 0, 1, 0], [], []>} : vector<8x8xf32>, vector<8x8xf32>, vector<8x8xf32> -> vector<8x8xf32>
    %cst_54 = arith.constant 0.353553385 : f32
    %207 = vector.broadcast %cst_54 : f32 to vector<8x8xf32>
    %208 = arith.mulf %206, %207 : vector<8x8xf32>
    %209 = arith.addf %208, %73 : vector<8x8xf32>
    %cst_55 = arith.constant dense<0xFF800000> : vector<8xf32>
    %210 = vector.multi_reduction <maximumf>, %209, %cst_55 [1] : vector<8x8xf32> to vector<8xf32>
    %211 = vector.shape_cast %210 : vector<8xf32> to vector<8x1xf32>
    %212 = vector.broadcast %211 : vector<8x1xf32> to vector<8x8xf32>
    %213 = arith.subf %209, %212 : vector<8x8xf32>
    %214 = math.exp %213 : vector<8x8xf32>
    %cst_56 = arith.constant dense<0.000000e+00> : vector<8xf32>
    %215 = vector.multi_reduction <add>, %214, %cst_56 [1] : vector<8x8xf32> to vector<8xf32>
    %216 = vector.shape_cast %215 : vector<8xf32> to vector<8x1xf32>
    %217 = tpu.reciprocal %216 {approx = true} : vector<8x1xf32> -> vector<8x1xf32>
    %218 = vector.broadcast %217 : vector<8x1xf32> to vector<8x8xf32>
    %219 = arith.mulf %214, %218 : vector<8x8xf32>
    %220 = vector.extract_strided_slice %203 {offsets = [0, 0], sizes = [8, 8], strides = [1, 1]} : vector<8x32xf32> to vector<8x8xf32>
    %cst_57 = arith.constant dense<0.000000e+00> : vector<8x8xf32>
    %221 = tpu.matmul %219, %220, %cst_57 {dimension_numbers = #tpu.dot_dimension_numbers<[1], [0], [0], [1], [0, 0, 1, 1], [], []>} : vector<8x8xf32>, vector<8x8xf32>, vector<8x8xf32> -> vector<8x8xf32>
    %c8_58 = arith.constant 8 : index
    %c0_59 = arith.constant 0 : index
    %222 = vector.load %arg6[%c8_58, %c0_59] : memref<16x32xf32, #tpu.memory_space<vmem>>, vector<8x8xf32>
    tpu.vector_store %arg6[%c8_58, %c0_59], %221 {strides = array<i32>} : memref<16x32xf32, #tpu.memory_space<vmem>>, vector<8x8xf32>,
    %223 = vector.extract_strided_slice %201 {offsets = [0, 8], sizes = [8, 8], strides = [1, 1]} : vector<8x32xf32> to vector<8x8xf32>
    %224 = vector.extract_strided_slice %202 {offsets = [0, 8], sizes = [8, 8], strides = [1, 1]} : vector<8x32xf32> to vector<8x8xf32>
    %cst_60 = arith.constant dense<0.000000e+00> : vector<8x8xf32>
    %225 = tpu.matmul %223, %224, %cst_60 {dimension_numbers = #tpu.dot_dimension_numbers<[1], [1], [0], [0], [0, 0, 1, 0], [], []>} : vector<8x8xf32>, vector<8x8xf32>, vector<8x8xf32> -> vector<8x8xf32>
    %cst_61 = arith.constant 0.353553385 : f32
    %226 = vector.broadcast %cst_61 : f32 to vector<8x8xf32>
    %227 = arith.mulf %225, %226 : vector<8x8xf32>
    %228 = arith.addf %227, %73 : vector<8x8xf32>
    %cst_62 = arith.constant dense<0xFF800000> : vector<8xf32>
    %229 = vector.multi_reduction <maximumf>, %228, %cst_62 [1] : vector<8x8xf32> to vector<8xf32>
    %230 = vector.shape_cast %229 : vector<8xf32> to vector<8x1xf32>
    %231 = vector.broadcast %230 : vector<8x1xf32> to vector<8x8xf32>
    %232 = arith.subf %228, %231 : vector<8x8xf32>
    %233 = math.exp %232 : vector<8x8xf32>
    %cst_63 = arith.constant dense<0.000000e+00> : vector<8xf32>
    %234 = vector.multi_reduction <add>, %233, %cst_63 [1] : vector<8x8xf32> to vector<8xf32>
    %235 = vector.shape_cast %234 : vector<8xf32> to vector<8x1xf32>
    %236 = tpu.reciprocal %235 {approx = true} : vector<8x1xf32> -> vector<8x1xf32>
    %237 = vector.broadcast %236 : vector<8x1xf32> to vector<8x8xf32>
    %238 = arith.mulf %233, %237 : vector<8x8xf32>
    %239 = vector.extract_strided_slice %203 {offsets = [0, 8], sizes = [8, 8], strides = [1, 1]} : vector<8x32xf32> to vector<8x8xf32>
    %cst_64 = arith.constant dense<0.000000e+00> : vector<8x8xf32>
    %240 = tpu.matmul %238, %239, %cst_64 {dimension_numbers = #tpu.dot_dimension_numbers<[1], [0], [0], [1], [0, 0, 1, 1], [], []>} : vector<8x8xf32>, vector<8x8xf32>, vector<8x8xf32> -> vector<8x8xf32>
    %c8_65 = arith.constant 8 : index
    %c8_66 = arith.constant 8 : index
    %241 = vector.load %arg6[%c8_65, %c8_66] : memref<16x32xf32, #tpu.memory_space<vmem>>, vector<8x8xf32>
    tpu.vector_store %arg6[%c8_65, %c8_66], %240 {strides = array<i32>} : memref<16x32xf32, #tpu.memory_space<vmem>>, vector<8x8xf32>,
    %242 = vector.extract_strided_slice %201 {offsets = [0, 16], sizes = [8, 8], strides = [1, 1]} : vector<8x32xf32> to vector<8x8xf32>
    %243 = vector.extract_strided_slice %202 {offsets = [0, 16], sizes = [8, 8], strides = [1, 1]} : vector<8x32xf32> to vector<8x8xf32>
    %cst_67 = arith.constant dense<0.000000e+00> : vector<8x8xf32>
    %244 = tpu.matmul %242, %243, %cst_67 {dimension_numbers = #tpu.dot_dimension_numbers<[1], [1], [0], [0], [0, 0, 1, 0], [], []>} : vector<8x8xf32>, vector<8x8xf32>, vector<8x8xf32> -> vector<8x8xf32>
    %cst_68 = arith.constant 0.353553385 : f32
    %245 = vector.broadcast %cst_68 : f32 to vector<8x8xf32>
    %246 = arith.mulf %244, %245 : vector<8x8xf32>
    %247 = arith.addf %246, %73 : vector<8x8xf32>
    %cst_69 = arith.constant dense<0xFF800000> : vector<8xf32>
    %248 = vector.multi_reduction <maximumf>, %247, %cst_69 [1] : vector<8x8xf32> to vector<8xf32>
    %249 = vector.shape_cast %248 : vector<8xf32> to vector<8x1xf32>
    %250 = vector.broadcast %249 : vector<8x1xf32> to vector<8x8xf32>
    %251 = arith.subf %247, %250 : vector<8x8xf32>
    %252 = math.exp %251 : vector<8x8xf32>
    %cst_70 = arith.constant dense<0.000000e+00> : vector<8xf32>
    %253 = vector.multi_reduction <add>, %252, %cst_70 [1] : vector<8x8xf32> to vector<8xf32>
    %254 = vector.shape_cast %253 : vector<8xf32> to vector<8x1xf32>
    %255 = tpu.reciprocal %254 {approx = true} : vector<8x1xf32> -> vector<8x1xf32>
    %256 = vector.broadcast %255 : vector<8x1xf32> to vector<8x8xf32>
    %257 = arith.mulf %252, %256 : vector<8x8xf32>
    %258 = vector.extract_strided_slice %203 {offsets = [0, 16], sizes = [8, 8], strides = [1, 1]} : vector<8x32xf32> to vector<8x8xf32>
    %cst_71 = arith.constant dense<0.000000e+00> : vector<8x8xf32>
    %259 = tpu.matmul %257, %258, %cst_71 {dimension_numbers = #tpu.dot_dimension_numbers<[1], [0], [0], [1], [0, 0, 1, 1], [], []>} : vector<8x8xf32>, vector<8x8xf32>, vector<8x8xf32> -> vector<8x8xf32>
    %c8_72 = arith.constant 8 : index
    %c16_73 = arith.constant 16 : index
    %260 = vector.load %arg6[%c8_72, %c16_73] : memref<16x32xf32, #tpu.memory_space<vmem>>, vector<8x8xf32>
    tpu.vector_store %arg6[%c8_72, %c16_73], %259 {strides = array<i32>} : memref<16x32xf32, #tpu.memory_space<vmem>>, vector<8x8xf32>,
    %261 = vector.extract_strided_slice %201 {offsets = [0, 24], sizes = [8, 8], strides = [1, 1]} : vector<8x32xf32> to vector<8x8xf32>
    %262 = vector.extract_strided_slice %202 {offsets = [0, 24], sizes = [8, 8], strides = [1, 1]} : vector<8x32xf32> to vector<8x8xf32>
    %cst_74 = arith.constant dense<0.000000e+00> : vector<8x8xf32>
    %263 = tpu.matmul %261, %262, %cst_74 {dimension_numbers = #tpu.dot_dimension_numbers<[1], [1], [0], [0], [0, 0, 1, 0], [], []>} : vector<8x8xf32>, vector<8x8xf32>, vector<8x8xf32> -> vector<8x8xf32>
    %cst_75 = arith.constant 0.353553385 : f32
    %264 = vector.broadcast %cst_75 : f32 to vector<8x8xf32>
    %265 = arith.mulf %263, %264 : vector<8x8xf32>
    %266 = arith.addf %265, %73 : vector<8x8xf32>
    %cst_76 = arith.constant dense<0xFF800000> : vector<8xf32>
    %267 = vector.multi_reduction <maximumf>, %266, %cst_76 [1] : vector<8x8xf32> to vector<8xf32>
    %268 = vector.shape_cast %267 : vector<8xf32> to vector<8x1xf32>
    %269 = vector.broadcast %268 : vector<8x1xf32> to vector<8x8xf32>
    %270 = arith.subf %266, %269 : vector<8x8xf32>
    %271 = math.exp %270 : vector<8x8xf32>
    %cst_77 = arith.constant dense<0.000000e+00> : vector<8xf32>
    %272 = vector.multi_reduction <add>, %271, %cst_77 [1] : vector<8x8xf32> to vector<8xf32>
    %273 = vector.shape_cast %272 : vector<8xf32> to vector<8x1xf32>
    %274 = tpu.reciprocal %273 {approx = true} : vector<8x1xf32> -> vector<8x1xf32>
    %275 = vector.broadcast %274 : vector<8x1xf32> to vector<8x8xf32>
    %276 = arith.mulf %271, %275 : vector<8x8xf32>
    %277 = vector.extract_strided_slice %203 {offsets = [0, 24], sizes = [8, 8], strides = [1, 1]} : vector<8x32xf32> to vector<8x8xf32>
    %cst_78 = arith.constant dense<0.000000e+00> : vector<8x8xf32>
    %278 = tpu.matmul %276, %277, %cst_78 {dimension_numbers = #tpu.dot_dimension_numbers<[1], [0], [0], [1], [0, 0, 1, 1], [], []>} : vector<8x8xf32>, vector<8x8xf32>, vector<8x8xf32> -> vector<8x8xf32>
    %c8_79 = arith.constant 8 : index
    %c24_80 = arith.constant 24 : index
    %279 = vector.load %arg6[%c8_79, %c24_80] : memref<16x32xf32, #tpu.memory_space<vmem>>, vector<8x8xf32>
    tpu.vector_store %arg6[%c8_79, %c24_80], %278 {strides = array<i32>} : memref<16x32xf32, #tpu.memory_space<vmem>>, vector<8x8xf32>,
    %c0_81 = arith.constant 0 : index
    %c0_82 = arith.constant 0 : index
    %280 = vector.load %arg6[%c0_81, %c0_82] : memref<16x32xf32, #tpu.memory_space<vmem>>, vector<16x32xf32>
    %cst_83 = arith.constant dense<0.000000e+00> : vector<16x32xf32>
    %281 = tpu.matmul %280, %120, %cst_83 {dimension_numbers = #tpu.dot_dimension_numbers<[1], [0], [0], [1], [0, 0, 1, 1], [], []>} : vector<16x32xf32>, vector<32x32xf32>, vector<16x32xf32> -> vector<16x32xf32>
    %282 = vector.broadcast %121 : vector<1x32xf32> to vector<16x32xf32>
    %283 = arith.addf %281, %282 : vector<16x32xf32>
    %284 = arith.addf %16, %283 : vector<16x32xf32>
    %cst_84 = arith.constant dense<0.000000e+00> : vector<16xf32>
    %285 = vector.multi_reduction <add>, %284, %cst_84 [1] : vector<16x32xf32> to vector<16xf32>
    %286 = vector.shape_cast %285 : vector<16xf32> to vector<16x1xf32>
    %cst_85 = arith.constant 3.200000e+01 : f32
    %287 = vector.broadcast %cst_85 : f32 to vector<16x1xf32>
    %288 = arith.divf %286, %287 : vector<16x1xf32>
    %289 = vector.broadcast %288 : vector<16x1xf32> to vector<16x32xf32>
    %290 = arith.subf %284, %289 : vector<16x32xf32>
    %291 = arith.mulf %290, %290 : vector<16x32xf32>
    %cst_86 = arith.constant dense<0.000000e+00> : vector<16xf32>
    %292 = vector.multi_reduction <add>, %291, %cst_86 [1] : vector<16x32xf32> to vector<16xf32>
    %293 = vector.shape_cast %292 : vector<16xf32> to vector<16x1xf32>
    %cst_87 = arith.constant 3.200000e+01 : f32
    %294 = vector.broadcast %cst_87 : f32 to vector<16x1xf32>
    %295 = arith.divf %293, %294 : vector<16x1xf32>
    %296 = vector.broadcast %288 : vector<16x1xf32> to vector<16x32xf32>
    %297 = arith.subf %284, %296 : vector<16x32xf32>
    %cst_88 = arith.constant 9.99999974E-6 : f32
    %298 = vector.broadcast %cst_88 : f32 to vector<16x1xf32>
    %299 = arith.addf %295, %298 : vector<16x1xf32>
    %300 = math.rsqrt %299 : vector<16x1xf32>
    %301 = vector.broadcast %300 : vector<16x1xf32> to vector<16x32xf32>
    %302 = arith.mulf %297, %301 : vector<16x32xf32>
    %303 = vector.extract_strided_slice %4 {offsets = [12, 0], sizes = [1, 32], strides = [1, 1]} : vector<24x128xf32> to vector<1x32xf32>
    %304 = vector.broadcast %303 : vector<1x32xf32> to vector<16x32xf32>
    %305 = arith.mulf %302, %304 : vector<16x32xf32>
    %306 = vector.extract_strided_slice %4 {offsets = [17, 0], sizes = [1, 32], strides = [1, 1]} : vector<24x128xf32> to vector<1x32xf32>
    %307 = vector.broadcast %306 : vector<1x32xf32> to vector<16x32xf32>
    %308 = arith.addf %305, %307 : vector<16x32xf32>
    %309 = vector.extract_strided_slice %2 {offsets = [0, 256], sizes = [32, 64], strides = [1, 1]} : vector<32x1280xf32> to vector<32x64xf32>
    %310 = vector.extract_strided_slice %4 {offsets = [2, 0], sizes = [1, 64], strides = [1, 1]} : vector<24x128xf32> to vector<1x64xf32>
    %cst_89 = arith.constant dense<0.000000e+00> : vector<16x64xf32>
    %311 = tpu.matmul %308, %309, %cst_89 {dimension_numbers = #tpu.dot_dimension_numbers<[1], [0], [0], [1], [0, 0, 1, 1], [], []>} : vector<16x32xf32>, vector<32x64xf32>, vector<16x64xf32> -> vector<16x64xf32>
    %312 = vector.broadcast %310 : vector<1x64xf32> to vector<16x64xf32>
    %313 = arith.addf %311, %312 : vector<16x64xf32>
    %cst_90 = arith.constant 0.000000e+00 : f32
    %314 = vector.broadcast %cst_90 : f32 to vector<16x64xf32>
    %315 = arith.maximumf %313, %314 : vector<16x64xf32>
    %316 = vector.extract_strided_slice %4 {offsets = [3, 0], sizes = [1, 32], strides = [1, 1]} : vector<24x128xf32> to vector<1x32xf32>
    %cst_91 = arith.constant dense<0.000000e+00> : vector<16x32xf32>
    %317 = tpu.matmul %315, %29, %cst_91 {dimension_numbers = #tpu.dot_dimension_numbers<[1], [0], [0], [1], [0, 0, 1, 1], [], []>} : vector<16x64xf32>, vector<64x32xf32>, vector<16x32xf32> -> vector<16x32xf32>
    %318 = vector.broadcast %316 : vector<1x32xf32> to vector<16x32xf32>
    %319 = arith.addf %317, %318 : vector<16x32xf32>
    %320 = arith.addf %308, %319 : vector<16x32xf32>
    %cst_92 = arith.constant dense<0.000000e+00> : vector<16xf32>
    %321 = vector.multi_reduction <add>, %320, %cst_92 [1] : vector<16x32xf32> to vector<16xf32>
    %322 = vector.shape_cast %321 : vector<16xf32> to vector<16x1xf32>
    %cst_93 = arith.constant 3.200000e+01 : f32
    %323 = vector.broadcast %cst_93 : f32 to vector<16x1xf32>
    %324 = arith.divf %322, %323 : vector<16x1xf32>
    %325 = vector.broadcast %324 : vector<16x1xf32> to vector<16x32xf32>
    %326 = arith.subf %320, %325 : vector<16x32xf32>
    %327 = arith.mulf %326, %326 : vector<16x32xf32>
    %cst_94 = arith.constant dense<0.000000e+00> : vector<16xf32>
    %328 = vector.multi_reduction <add>, %327, %cst_94 [1] : vector<16x32xf32> to vector<16xf32>
    %329 = vector.shape_cast %328 : vector<16xf32> to vector<16x1xf32>
    %cst_95 = arith.constant 3.200000e+01 : f32
    %330 = vector.broadcast %cst_95 : f32 to vector<16x1xf32>
    %331 = arith.divf %329, %330 : vector<16x1xf32>
    %332 = vector.broadcast %324 : vector<16x1xf32> to vector<16x32xf32>
    %333 = arith.subf %320, %332 : vector<16x32xf32>
    %cst_96 = arith.constant 9.99999974E-6 : f32
    %334 = vector.broadcast %cst_96 : f32 to vector<16x1xf32>
    %335 = arith.addf %331, %334 : vector<16x1xf32>
    %336 = math.rsqrt %335 : vector<16x1xf32>
    %337 = vector.broadcast %336 : vector<16x1xf32> to vector<16x32xf32>
    %338 = arith.mulf %333, %337 : vector<16x32xf32>
    %339 = vector.extract_strided_slice %4 {offsets = [13, 0], sizes = [1, 32], strides = [1, 1]} : vector<24x128xf32> to vector<1x32xf32>
    %340 = vector.broadcast %339 : vector<1x32xf32> to vector<16x32xf32>
    %341 = arith.mulf %338, %340 : vector<16x32xf32>
    %342 = vector.extract_strided_slice %4 {offsets = [18, 0], sizes = [1, 32], strides = [1, 1]} : vector<24x128xf32> to vector<1x32xf32>
    %343 = vector.broadcast %342 : vector<1x32xf32> to vector<16x32xf32>
    %344 = arith.addf %341, %343 : vector<16x32xf32>
    %345 = vector.extract_strided_slice %2 {offsets = [0, 384], sizes = [32, 96], strides = [1, 1]} : vector<32x1280xf32> to vector<32x96xf32>
    %cst_97 = arith.constant dense<0.000000e+00> : vector<16x96xf32>
    %346 = tpu.matmul %28, %345, %cst_97 {dimension_numbers = #tpu.dot_dimension_numbers<[1], [0], [0], [1], [0, 0, 1, 1], [], []>} : vector<16x32xf32>, vector<32x96xf32>, vector<16x96xf32> -> vector<16x96xf32>
    %347 = vector.extract_strided_slice %4 {offsets = [4, 0], sizes = [1, 96], strides = [1, 1]} : vector<24x128xf32> to vector<1x96xf32>
    %348 = vector.broadcast %347 : vector<1x96xf32> to vector<16x96xf32>
    %349 = arith.addf %346, %348 : vector<16x96xf32>
    %350 = vector.extract_strided_slice %349 {offsets = [0, 0], sizes = [16, 32], strides = [1, 1]} : vector<16x96xf32> to vector<16x32xf32>
    %351 = vector.extract_strided_slice %349 {offsets = [0, 32], sizes = [16, 32], strides = [1, 1]} : vector<16x96xf32> to vector<16x32xf32>
    %352 = vector.extract_strided_slice %349 {offsets = [0, 64], sizes = [16, 32], strides = [1, 1]} : vector<16x96xf32> to vector<16x32xf32>
    %353 = vector.extract_strided_slice %2 {offsets = [0, 768], sizes = [32, 32], strides = [1, 1]} : vector<32x1280xf32> to vector<32x32xf32>
    %354 = vector.extract_strided_slice %4 {offsets = [7, 0], sizes = [1, 32], strides = [1, 1]} : vector<24x128xf32> to vector<1x32xf32>
    %355 = vector.extract_strided_slice %350 {offsets = [0, 0], sizes = [8, 32], strides = [1, 1]} : vector<16x32xf32> to vector<8x32xf32>
    %356 = vector.extract_strided_slice %351 {offsets = [0, 0], sizes = [8, 32], strides = [1, 1]} : vector<16x32xf32> to vector<8x32xf32>
    %357 = vector.extract_strided_slice %352 {offsets = [0, 0], sizes = [8, 32], strides = [1, 1]} : vector<16x32xf32> to vector<8x32xf32>
    %358 = vector.extract_strided_slice %355 {offsets = [0, 0], sizes = [8, 8], strides = [1, 1]} : vector<8x32xf32> to vector<8x8xf32>
    %359 = vector.extract_strided_slice %356 {offsets = [0, 0], sizes = [8, 8], strides = [1, 1]} : vector<8x32xf32> to vector<8x8xf32>
    %cst_98 = arith.constant dense<0.000000e+00> : vector<8x8xf32>
    %360 = tpu.matmul %358, %359, %cst_98 {dimension_numbers = #tpu.dot_dimension_numbers<[1], [1], [0], [0], [0, 0, 1, 0], [], []>} : vector<8x8xf32>, vector<8x8xf32>, vector<8x8xf32> -> vector<8x8xf32>
    %cst_99 = arith.constant 0.353553385 : f32
    %361 = vector.broadcast %cst_99 : f32 to vector<8x8xf32>
    %362 = arith.mulf %360, %361 : vector<8x8xf32>
    %363 = arith.addf %362, %83 : vector<8x8xf32>
    %cst_100 = arith.constant dense<0xFF800000> : vector<8xf32>
    %364 = vector.multi_reduction <maximumf>, %363, %cst_100 [1] : vector<8x8xf32> to vector<8xf32>
    %365 = vector.shape_cast %364 : vector<8xf32> to vector<8x1xf32>
    %366 = vector.broadcast %365 : vector<8x1xf32> to vector<8x8xf32>
    %367 = arith.subf %363, %366 : vector<8x8xf32>
    %368 = math.exp %367 : vector<8x8xf32>
    %cst_101 = arith.constant dense<0.000000e+00> : vector<8xf32>
    %369 = vector.multi_reduction <add>, %368, %cst_101 [1] : vector<8x8xf32> to vector<8xf32>
    %370 = vector.shape_cast %369 : vector<8xf32> to vector<8x1xf32>
    %371 = tpu.reciprocal %370 {approx = true} : vector<8x1xf32> -> vector<8x1xf32>
    %372 = vector.broadcast %371 : vector<8x1xf32> to vector<8x8xf32>
    %373 = arith.mulf %368, %372 : vector<8x8xf32>
    %374 = vector.extract_strided_slice %357 {offsets = [0, 0], sizes = [8, 8], strides = [1, 1]} : vector<8x32xf32> to vector<8x8xf32>
    %cst_102 = arith.constant dense<0.000000e+00> : vector<8x8xf32>
    %375 = tpu.matmul %373, %374, %cst_102 {dimension_numbers = #tpu.dot_dimension_numbers<[1], [0], [0], [1], [0, 0, 1, 1], [], []>} : vector<8x8xf32>, vector<8x8xf32>, vector<8x8xf32> -> vector<8x8xf32>
    %c0_103 = arith.constant 0 : index
    %c0_104 = arith.constant 0 : index
    %376 = vector.load %arg6[%c0_103, %c0_104] : memref<16x32xf32, #tpu.memory_space<vmem>>, vector<8x8xf32>
    tpu.vector_store %arg6[%c0_103, %c0_104], %375 {strides = array<i32>} : memref<16x32xf32, #tpu.memory_space<vmem>>, vector<8x8xf32>,
    %377 = vector.extract_strided_slice %355 {offsets = [0, 8], sizes = [8, 8], strides = [1, 1]} : vector<8x32xf32> to vector<8x8xf32>
    %378 = vector.extract_strided_slice %356 {offsets = [0, 8], sizes = [8, 8], strides = [1, 1]} : vector<8x32xf32> to vector<8x8xf32>
    %cst_105 = arith.constant dense<0.000000e+00> : vector<8x8xf32>
    %379 = tpu.matmul %377, %378, %cst_105 {dimension_numbers = #tpu.dot_dimension_numbers<[1], [1], [0], [0], [0, 0, 1, 0], [], []>} : vector<8x8xf32>, vector<8x8xf32>, vector<8x8xf32> -> vector<8x8xf32>
    %cst_106 = arith.constant 0.353553385 : f32
    %380 = vector.broadcast %cst_106 : f32 to vector<8x8xf32>
    %381 = arith.mulf %379, %380 : vector<8x8xf32>
    %382 = arith.addf %381, %83 : vector<8x8xf32>
    %cst_107 = arith.constant dense<0xFF800000> : vector<8xf32>
    %383 = vector.multi_reduction <maximumf>, %382, %cst_107 [1] : vector<8x8xf32> to vector<8xf32>
    %384 = vector.shape_cast %383 : vector<8xf32> to vector<8x1xf32>
    %385 = vector.broadcast %384 : vector<8x1xf32> to vector<8x8xf32>
    %386 = arith.subf %382, %385 : vector<8x8xf32>
    %387 = math.exp %386 : vector<8x8xf32>
    %cst_108 = arith.constant dense<0.000000e+00> : vector<8xf32>
    %388 = vector.multi_reduction <add>, %387, %cst_108 [1] : vector<8x8xf32> to vector<8xf32>
    %389 = vector.shape_cast %388 : vector<8xf32> to vector<8x1xf32>
    %390 = tpu.reciprocal %389 {approx = true} : vector<8x1xf32> -> vector<8x1xf32>
    %391 = vector.broadcast %390 : vector<8x1xf32> to vector<8x8xf32>
    %392 = arith.mulf %387, %391 : vector<8x8xf32>
    %393 = vector.extract_strided_slice %357 {offsets = [0, 8], sizes = [8, 8], strides = [1, 1]} : vector<8x32xf32> to vector<8x8xf32>
    %cst_109 = arith.constant dense<0.000000e+00> : vector<8x8xf32>
    %394 = tpu.matmul %392, %393, %cst_109 {dimension_numbers = #tpu.dot_dimension_numbers<[1], [0], [0], [1], [0, 0, 1, 1], [], []>} : vector<8x8xf32>, vector<8x8xf32>, vector<8x8xf32> -> vector<8x8xf32>
    %c0_110 = arith.constant 0 : index
    %c8_111 = arith.constant 8 : index
    %395 = vector.load %arg6[%c0_110, %c8_111] : memref<16x32xf32, #tpu.memory_space<vmem>>, vector<8x8xf32>
    tpu.vector_store %arg6[%c0_110, %c8_111], %394 {strides = array<i32>} : memref<16x32xf32, #tpu.memory_space<vmem>>, vector<8x8xf32>,
    %396 = vector.extract_strided_slice %355 {offsets = [0, 16], sizes = [8, 8], strides = [1, 1]} : vector<8x32xf32> to vector<8x8xf32>
    %397 = vector.extract_strided_slice %356 {offsets = [0, 16], sizes = [8, 8], strides = [1, 1]} : vector<8x32xf32> to vector<8x8xf32>
    %cst_112 = arith.constant dense<0.000000e+00> : vector<8x8xf32>
    %398 = tpu.matmul %396, %397, %cst_112 {dimension_numbers = #tpu.dot_dimension_numbers<[1], [1], [0], [0], [0, 0, 1, 0], [], []>} : vector<8x8xf32>, vector<8x8xf32>, vector<8x8xf32> -> vector<8x8xf32>
    %cst_113 = arith.constant 0.353553385 : f32
    %399 = vector.broadcast %cst_113 : f32 to vector<8x8xf32>
    %400 = arith.mulf %398, %399 : vector<8x8xf32>
    %401 = arith.addf %400, %83 : vector<8x8xf32>
    %cst_114 = arith.constant dense<0xFF800000> : vector<8xf32>
    %402 = vector.multi_reduction <maximumf>, %401, %cst_114 [1] : vector<8x8xf32> to vector<8xf32>
    %403 = vector.shape_cast %402 : vector<8xf32> to vector<8x1xf32>
    %404 = vector.broadcast %403 : vector<8x1xf32> to vector<8x8xf32>
    %405 = arith.subf %401, %404 : vector<8x8xf32>
    %406 = math.exp %405 : vector<8x8xf32>
    %cst_115 = arith.constant dense<0.000000e+00> : vector<8xf32>
    %407 = vector.multi_reduction <add>, %406, %cst_115 [1] : vector<8x8xf32> to vector<8xf32>
    %408 = vector.shape_cast %407 : vector<8xf32> to vector<8x1xf32>
    %409 = tpu.reciprocal %408 {approx = true} : vector<8x1xf32> -> vector<8x1xf32>
    %410 = vector.broadcast %409 : vector<8x1xf32> to vector<8x8xf32>
    %411 = arith.mulf %406, %410 : vector<8x8xf32>
    %412 = vector.extract_strided_slice %357 {offsets = [0, 16], sizes = [8, 8], strides = [1, 1]} : vector<8x32xf32> to vector<8x8xf32>
    %cst_116 = arith.constant dense<0.000000e+00> : vector<8x8xf32>
    %413 = tpu.matmul %411, %412, %cst_116 {dimension_numbers = #tpu.dot_dimension_numbers<[1], [0], [0], [1], [0, 0, 1, 1], [], []>} : vector<8x8xf32>, vector<8x8xf32>, vector<8x8xf32> -> vector<8x8xf32>
    %c0_117 = arith.constant 0 : index
    %c16_118 = arith.constant 16 : index
    %414 = vector.load %arg6[%c0_117, %c16_118] : memref<16x32xf32, #tpu.memory_space<vmem>>, vector<8x8xf32>
    tpu.vector_store %arg6[%c0_117, %c16_118], %413 {strides = array<i32>} : memref<16x32xf32, #tpu.memory_space<vmem>>, vector<8x8xf32>,
    %415 = vector.extract_strided_slice %355 {offsets = [0, 24], sizes = [8, 8], strides = [1, 1]} : vector<8x32xf32> to vector<8x8xf32>
    %416 = vector.extract_strided_slice %356 {offsets = [0, 24], sizes = [8, 8], strides = [1, 1]} : vector<8x32xf32> to vector<8x8xf32>
    %cst_119 = arith.constant dense<0.000000e+00> : vector<8x8xf32>
    %417 = tpu.matmul %415, %416, %cst_119 {dimension_numbers = #tpu.dot_dimension_numbers<[1], [1], [0], [0], [0, 0, 1, 0], [], []>} : vector<8x8xf32>, vector<8x8xf32>, vector<8x8xf32> -> vector<8x8xf32>
    %cst_120 = arith.constant 0.353553385 : f32
    %418 = vector.broadcast %cst_120 : f32 to vector<8x8xf32>
    %419 = arith.mulf %417, %418 : vector<8x8xf32>
    %420 = arith.addf %419, %83 : vector<8x8xf32>
    %cst_121 = arith.constant dense<0xFF800000> : vector<8xf32>
    %421 = vector.multi_reduction <maximumf>, %420, %cst_121 [1] : vector<8x8xf32> to vector<8xf32>
    %422 = vector.shape_cast %421 : vector<8xf32> to vector<8x1xf32>
    %423 = vector.broadcast %422 : vector<8x1xf32> to vector<8x8xf32>
    %424 = arith.subf %420, %423 : vector<8x8xf32>
    %425 = math.exp %424 : vector<8x8xf32>
    %cst_122 = arith.constant dense<0.000000e+00> : vector<8xf32>
    %426 = vector.multi_reduction <add>, %425, %cst_122 [1] : vector<8x8xf32> to vector<8xf32>
    %427 = vector.shape_cast %426 : vector<8xf32> to vector<8x1xf32>
    %428 = tpu.reciprocal %427 {approx = true} : vector<8x1xf32> -> vector<8x1xf32>
    %429 = vector.broadcast %428 : vector<8x1xf32> to vector<8x8xf32>
    %430 = arith.mulf %425, %429 : vector<8x8xf32>
    %431 = vector.extract_strided_slice %357 {offsets = [0, 24], sizes = [8, 8], strides = [1, 1]} : vector<8x32xf32> to vector<8x8xf32>
    %cst_123 = arith.constant dense<0.000000e+00> : vector<8x8xf32>
    %432 = tpu.matmul %430, %431, %cst_123 {dimension_numbers = #tpu.dot_dimension_numbers<[1], [0], [0], [1], [0, 0, 1, 1], [], []>} : vector<8x8xf32>, vector<8x8xf32>, vector<8x8xf32> -> vector<8x8xf32>
    %c0_124 = arith.constant 0 : index
    %c24_125 = arith.constant 24 : index
    %433 = vector.load %arg6[%c0_124, %c24_125] : memref<16x32xf32, #tpu.memory_space<vmem>>, vector<8x8xf32>
    tpu.vector_store %arg6[%c0_124, %c24_125], %432 {strides = array<i32>} : memref<16x32xf32, #tpu.memory_space<vmem>>, vector<8x8xf32>,
    %434 = vector.extract_strided_slice %350 {offsets = [8, 0], sizes = [8, 32], strides = [1, 1]} : vector<16x32xf32> to vector<8x32xf32>
    %435 = vector.extract_strided_slice %351 {offsets = [8, 0], sizes = [8, 32], strides = [1, 1]} : vector<16x32xf32> to vector<8x32xf32>
    %436 = vector.extract_strided_slice %352 {offsets = [8, 0], sizes = [8, 32], strides = [1, 1]} : vector<16x32xf32> to vector<8x32xf32>
    %437 = vector.extract_strided_slice %434 {offsets = [0, 0], sizes = [8, 8], strides = [1, 1]} : vector<8x32xf32> to vector<8x8xf32>
    %438 = vector.extract_strided_slice %435 {offsets = [0, 0], sizes = [8, 8], strides = [1, 1]} : vector<8x32xf32> to vector<8x8xf32>
    %cst_126 = arith.constant dense<0.000000e+00> : vector<8x8xf32>
    %439 = tpu.matmul %437, %438, %cst_126 {dimension_numbers = #tpu.dot_dimension_numbers<[1], [1], [0], [0], [0, 0, 1, 0], [], []>} : vector<8x8xf32>, vector<8x8xf32>, vector<8x8xf32> -> vector<8x8xf32>
    %cst_127 = arith.constant 0.353553385 : f32
    %440 = vector.broadcast %cst_127 : f32 to vector<8x8xf32>
    %441 = arith.mulf %439, %440 : vector<8x8xf32>
    %442 = arith.addf %441, %93 : vector<8x8xf32>
    %cst_128 = arith.constant dense<0xFF800000> : vector<8xf32>
    %443 = vector.multi_reduction <maximumf>, %442, %cst_128 [1] : vector<8x8xf32> to vector<8xf32>
    %444 = vector.shape_cast %443 : vector<8xf32> to vector<8x1xf32>
    %445 = vector.broadcast %444 : vector<8x1xf32> to vector<8x8xf32>
    %446 = arith.subf %442, %445 : vector<8x8xf32>
    %447 = math.exp %446 : vector<8x8xf32>
    %cst_129 = arith.constant dense<0.000000e+00> : vector<8xf32>
    %448 = vector.multi_reduction <add>, %447, %cst_129 [1] : vector<8x8xf32> to vector<8xf32>
    %449 = vector.shape_cast %448 : vector<8xf32> to vector<8x1xf32>
    %450 = tpu.reciprocal %449 {approx = true} : vector<8x1xf32> -> vector<8x1xf32>
    %451 = vector.broadcast %450 : vector<8x1xf32> to vector<8x8xf32>
    %452 = arith.mulf %447, %451 : vector<8x8xf32>
    %453 = vector.extract_strided_slice %436 {offsets = [0, 0], sizes = [8, 8], strides = [1, 1]} : vector<8x32xf32> to vector<8x8xf32>
    %cst_130 = arith.constant dense<0.000000e+00> : vector<8x8xf32>
    %454 = tpu.matmul %452, %453, %cst_130 {dimension_numbers = #tpu.dot_dimension_numbers<[1], [0], [0], [1], [0, 0, 1, 1], [], []>} : vector<8x8xf32>, vector<8x8xf32>, vector<8x8xf32> -> vector<8x8xf32>
    %c8_131 = arith.constant 8 : index
    %c0_132 = arith.constant 0 : index
    %455 = vector.load %arg6[%c8_131, %c0_132] : memref<16x32xf32, #tpu.memory_space<vmem>>, vector<8x8xf32>
    tpu.vector_store %arg6[%c8_131, %c0_132], %454 {strides = array<i32>} : memref<16x32xf32, #tpu.memory_space<vmem>>, vector<8x8xf32>,
    %456 = vector.extract_strided_slice %434 {offsets = [0, 8], sizes = [8, 8], strides = [1, 1]} : vector<8x32xf32> to vector<8x8xf32>
    %457 = vector.extract_strided_slice %435 {offsets = [0, 8], sizes = [8, 8], strides = [1, 1]} : vector<8x32xf32> to vector<8x8xf32>
    %cst_133 = arith.constant dense<0.000000e+00> : vector<8x8xf32>
    %458 = tpu.matmul %456, %457, %cst_133 {dimension_numbers = #tpu.dot_dimension_numbers<[1], [1], [0], [0], [0, 0, 1, 0], [], []>} : vector<8x8xf32>, vector<8x8xf32>, vector<8x8xf32> -> vector<8x8xf32>
    %cst_134 = arith.constant 0.353553385 : f32
    %459 = vector.broadcast %cst_134 : f32 to vector<8x8xf32>
    %460 = arith.mulf %458, %459 : vector<8x8xf32>
    %461 = arith.addf %460, %93 : vector<8x8xf32>
    %cst_135 = arith.constant dense<0xFF800000> : vector<8xf32>
    %462 = vector.multi_reduction <maximumf>, %461, %cst_135 [1] : vector<8x8xf32> to vector<8xf32>
    %463 = vector.shape_cast %462 : vector<8xf32> to vector<8x1xf32>
    %464 = vector.broadcast %463 : vector<8x1xf32> to vector<8x8xf32>
    %465 = arith.subf %461, %464 : vector<8x8xf32>
    %466 = math.exp %465 : vector<8x8xf32>
    %cst_136 = arith.constant dense<0.000000e+00> : vector<8xf32>
    %467 = vector.multi_reduction <add>, %466, %cst_136 [1] : vector<8x8xf32> to vector<8xf32>
    %468 = vector.shape_cast %467 : vector<8xf32> to vector<8x1xf32>
    %469 = tpu.reciprocal %468 {approx = true} : vector<8x1xf32> -> vector<8x1xf32>
    %470 = vector.broadcast %469 : vector<8x1xf32> to vector<8x8xf32>
    %471 = arith.mulf %466, %470 : vector<8x8xf32>
    %472 = vector.extract_strided_slice %436 {offsets = [0, 8], sizes = [8, 8], strides = [1, 1]} : vector<8x32xf32> to vector<8x8xf32>
    %cst_137 = arith.constant dense<0.000000e+00> : vector<8x8xf32>
    %473 = tpu.matmul %471, %472, %cst_137 {dimension_numbers = #tpu.dot_dimension_numbers<[1], [0], [0], [1], [0, 0, 1, 1], [], []>} : vector<8x8xf32>, vector<8x8xf32>, vector<8x8xf32> -> vector<8x8xf32>
    %c8_138 = arith.constant 8 : index
    %c8_139 = arith.constant 8 : index
    %474 = vector.load %arg6[%c8_138, %c8_139] : memref<16x32xf32, #tpu.memory_space<vmem>>, vector<8x8xf32>
    tpu.vector_store %arg6[%c8_138, %c8_139], %473 {strides = array<i32>} : memref<16x32xf32, #tpu.memory_space<vmem>>, vector<8x8xf32>,
    %475 = vector.extract_strided_slice %434 {offsets = [0, 16], sizes = [8, 8], strides = [1, 1]} : vector<8x32xf32> to vector<8x8xf32>
    %476 = vector.extract_strided_slice %435 {offsets = [0, 16], sizes = [8, 8], strides = [1, 1]} : vector<8x32xf32> to vector<8x8xf32>
    %cst_140 = arith.constant dense<0.000000e+00> : vector<8x8xf32>
    %477 = tpu.matmul %475, %476, %cst_140 {dimension_numbers = #tpu.dot_dimension_numbers<[1], [1], [0], [0], [0, 0, 1, 0], [], []>} : vector<8x8xf32>, vector<8x8xf32>, vector<8x8xf32> -> vector<8x8xf32>
    %cst_141 = arith.constant 0.353553385 : f32
    %478 = vector.broadcast %cst_141 : f32 to vector<8x8xf32>
    %479 = arith.mulf %477, %478 : vector<8x8xf32>
    %480 = arith.addf %479, %93 : vector<8x8xf32>
    %cst_142 = arith.constant dense<0xFF800000> : vector<8xf32>
    %481 = vector.multi_reduction <maximumf>, %480, %cst_142 [1] : vector<8x8xf32> to vector<8xf32>
    %482 = vector.shape_cast %481 : vector<8xf32> to vector<8x1xf32>
    %483 = vector.broadcast %482 : vector<8x1xf32> to vector<8x8xf32>
    %484 = arith.subf %480, %483 : vector<8x8xf32>
    %485 = math.exp %484 : vector<8x8xf32>
    %cst_143 = arith.constant dense<0.000000e+00> : vector<8xf32>
    %486 = vector.multi_reduction <add>, %485, %cst_143 [1] : vector<8x8xf32> to vector<8xf32>
    %487 = vector.shape_cast %486 : vector<8xf32> to vector<8x1xf32>
    %488 = tpu.reciprocal %487 {approx = true} : vector<8x1xf32> -> vector<8x1xf32>
    %489 = vector.broadcast %488 : vector<8x1xf32> to vector<8x8xf32>
    %490 = arith.mulf %485, %489 : vector<8x8xf32>
    %491 = vector.extract_strided_slice %436 {offsets = [0, 16], sizes = [8, 8], strides = [1, 1]} : vector<8x32xf32> to vector<8x8xf32>
    %cst_144 = arith.constant dense<0.000000e+00> : vector<8x8xf32>
    %492 = tpu.matmul %490, %491, %cst_144 {dimension_numbers = #tpu.dot_dimension_numbers<[1], [0], [0], [1], [0, 0, 1, 1], [], []>} : vector<8x8xf32>, vector<8x8xf32>, vector<8x8xf32> -> vector<8x8xf32>
    %c8_145 = arith.constant 8 : index
    %c16_146 = arith.constant 16 : index
    %493 = vector.load %arg6[%c8_145, %c16_146] : memref<16x32xf32, #tpu.memory_space<vmem>>, vector<8x8xf32>
    tpu.vector_store %arg6[%c8_145, %c16_146], %492 {strides = array<i32>} : memref<16x32xf32, #tpu.memory_space<vmem>>, vector<8x8xf32>,
    %494 = vector.extract_strided_slice %434 {offsets = [0, 24], sizes = [8, 8], strides = [1, 1]} : vector<8x32xf32> to vector<8x8xf32>
    %495 = vector.extract_strided_slice %435 {offsets = [0, 24], sizes = [8, 8], strides = [1, 1]} : vector<8x32xf32> to vector<8x8xf32>
    %cst_147 = arith.constant dense<0.000000e+00> : vector<8x8xf32>
    %496 = tpu.matmul %494, %495, %cst_147 {dimension_numbers = #tpu.dot_dimension_numbers<[1], [1], [0], [0], [0, 0, 1, 0], [], []>} : vector<8x8xf32>, vector<8x8xf32>, vector<8x8xf32> -> vector<8x8xf32>
    %cst_148 = arith.constant 0.353553385 : f32
    %497 = vector.broadcast %cst_148 : f32 to vector<8x8xf32>
    %498 = arith.mulf %496, %497 : vector<8x8xf32>
    %499 = arith.addf %498, %93 : vector<8x8xf32>
    %cst_149 = arith.constant dense<0xFF800000> : vector<8xf32>
    %500 = vector.multi_reduction <maximumf>, %499, %cst_149 [1] : vector<8x8xf32> to vector<8xf32>
    %501 = vector.shape_cast %500 : vector<8xf32> to vector<8x1xf32>
    %502 = vector.broadcast %501 : vector<8x1xf32> to vector<8x8xf32>
    %503 = arith.subf %499, %502 : vector<8x8xf32>
    %504 = math.exp %503 : vector<8x8xf32>
    %cst_150 = arith.constant dense<0.000000e+00> : vector<8xf32>
    %505 = vector.multi_reduction <add>, %504, %cst_150 [1] : vector<8x8xf32> to vector<8xf32>
    %506 = vector.shape_cast %505 : vector<8xf32> to vector<8x1xf32>
    %507 = tpu.reciprocal %506 {approx = true} : vector<8x1xf32> -> vector<8x1xf32>
    %508 = vector.broadcast %507 : vector<8x1xf32> to vector<8x8xf32>
    %509 = arith.mulf %504, %508 : vector<8x8xf32>
    %510 = vector.extract_strided_slice %436 {offsets = [0, 24], sizes = [8, 8], strides = [1, 1]} : vector<8x32xf32> to vector<8x8xf32>
    %cst_151 = arith.constant dense<0.000000e+00> : vector<8x8xf32>
    %511 = tpu.matmul %509, %510, %cst_151 {dimension_numbers = #tpu.dot_dimension_numbers<[1], [0], [0], [1], [0, 0, 1, 1], [], []>} : vector<8x8xf32>, vector<8x8xf32>, vector<8x8xf32> -> vector<8x8xf32>
    %c8_152 = arith.constant 8 : index
    %c24_153 = arith.constant 24 : index
    %512 = vector.load %arg6[%c8_152, %c24_153] : memref<16x32xf32, #tpu.memory_space<vmem>>, vector<8x8xf32>
    tpu.vector_store %arg6[%c8_152, %c24_153], %511 {strides = array<i32>} : memref<16x32xf32, #tpu.memory_space<vmem>>, vector<8x8xf32>,
    %c0_154 = arith.constant 0 : index
    %c0_155 = arith.constant 0 : index
    %513 = vector.load %arg6[%c0_154, %c0_155] : memref<16x32xf32, #tpu.memory_space<vmem>>, vector<16x32xf32>
    %cst_156 = arith.constant dense<0.000000e+00> : vector<16x32xf32>
    %514 = tpu.matmul %513, %353, %cst_156 {dimension_numbers = #tpu.dot_dimension_numbers<[1], [0], [0], [1], [0, 0, 1, 1], [], []>} : vector<16x32xf32>, vector<32x32xf32>, vector<16x32xf32> -> vector<16x32xf32>
    %515 = vector.broadcast %354 : vector<1x32xf32> to vector<16x32xf32>
    %516 = arith.addf %514, %515 : vector<16x32xf32>
    %517 = arith.addf %28, %516 : vector<16x32xf32>
    %cst_157 = arith.constant dense<0.000000e+00> : vector<16xf32>
    %518 = vector.multi_reduction <add>, %517, %cst_157 [1] : vector<16x32xf32> to vector<16xf32>
    %519 = vector.shape_cast %518 : vector<16xf32> to vector<16x1xf32>
    %cst_158 = arith.constant 3.200000e+01 : f32
    %520 = vector.broadcast %cst_158 : f32 to vector<16x1xf32>
    %521 = arith.divf %519, %520 : vector<16x1xf32>
    %522 = vector.broadcast %521 : vector<16x1xf32> to vector<16x32xf32>
    %523 = arith.subf %517, %522 : vector<16x32xf32>
    %524 = arith.mulf %523, %523 : vector<16x32xf32>
    %cst_159 = arith.constant dense<0.000000e+00> : vector<16xf32>
    %525 = vector.multi_reduction <add>, %524, %cst_159 [1] : vector<16x32xf32> to vector<16xf32>
    %526 = vector.shape_cast %525 : vector<16xf32> to vector<16x1xf32>
    %cst_160 = arith.constant 3.200000e+01 : f32
    %527 = vector.broadcast %cst_160 : f32 to vector<16x1xf32>
    %528 = arith.divf %526, %527 : vector<16x1xf32>
    %529 = vector.broadcast %521 : vector<16x1xf32> to vector<16x32xf32>
    %530 = arith.subf %517, %529 : vector<16x32xf32>
    %cst_161 = arith.constant 9.99999974E-6 : f32
    %531 = vector.broadcast %cst_161 : f32 to vector<16x1xf32>
    %532 = arith.addf %528, %531 : vector<16x1xf32>
    %533 = math.rsqrt %532 : vector<16x1xf32>
    %534 = vector.broadcast %533 : vector<16x1xf32> to vector<16x32xf32>
    %535 = arith.mulf %530, %534 : vector<16x32xf32>
    %536 = vector.extract_strided_slice %4 {offsets = [14, 0], sizes = [1, 32], strides = [1, 1]} : vector<24x128xf32> to vector<1x32xf32>
    %537 = vector.broadcast %536 : vector<1x32xf32> to vector<16x32xf32>
    %538 = arith.mulf %535, %537 : vector<16x32xf32>
    %539 = vector.extract_strided_slice %4 {offsets = [19, 0], sizes = [1, 32], strides = [1, 1]} : vector<24x128xf32> to vector<1x32xf32>
    %540 = vector.broadcast %539 : vector<1x32xf32> to vector<16x32xf32>
    %541 = arith.addf %538, %540 : vector<16x32xf32>
    %542 = vector.extract_strided_slice %2 {offsets = [0, 512], sizes = [32, 32], strides = [1, 1]} : vector<32x1280xf32> to vector<32x32xf32>
    %cst_162 = arith.constant dense<0.000000e+00> : vector<16x32xf32>
    %543 = tpu.matmul %541, %542, %cst_162 {dimension_numbers = #tpu.dot_dimension_numbers<[1], [0], [0], [1], [0, 0, 1, 1], [], []>} : vector<16x32xf32>, vector<32x32xf32>, vector<16x32xf32> -> vector<16x32xf32>
    %544 = vector.extract_strided_slice %4 {offsets = [5, 0], sizes = [1, 32], strides = [1, 1]} : vector<24x128xf32> to vector<1x32xf32>
    %545 = vector.broadcast %544 : vector<1x32xf32> to vector<16x32xf32>
    %546 = arith.addf %543, %545 : vector<16x32xf32>
    %547 = vector.extract_strided_slice %2 {offsets = [0, 640], sizes = [32, 64], strides = [1, 1]} : vector<32x1280xf32> to vector<32x64xf32>
    %cst_163 = arith.constant dense<0.000000e+00> : vector<16x64xf32>
    %548 = tpu.matmul %344, %547, %cst_163 {dimension_numbers = #tpu.dot_dimension_numbers<[1], [0], [0], [1], [0, 0, 1, 1], [], []>} : vector<16x32xf32>, vector<32x64xf32>, vector<16x64xf32> -> vector<16x64xf32>
    %549 = vector.extract_strided_slice %4 {offsets = [6, 0], sizes = [1, 64], strides = [1, 1]} : vector<24x128xf32> to vector<1x64xf32>
    %550 = vector.broadcast %549 : vector<1x64xf32> to vector<16x64xf32>
    %551 = arith.addf %548, %550 : vector<16x64xf32>
    %552 = vector.extract_strided_slice %551 {offsets = [0, 0], sizes = [16, 32], strides = [1, 1]} : vector<16x64xf32> to vector<16x32xf32>
    %553 = vector.extract_strided_slice %551 {offsets = [0, 32], sizes = [16, 32], strides = [1, 1]} : vector<16x64xf32> to vector<16x32xf32>
    %554 = vector.extract_strided_slice %2 {offsets = [0, 896], sizes = [32, 32], strides = [1, 1]} : vector<32x1280xf32> to vector<32x32xf32>
    %555 = vector.extract_strided_slice %4 {offsets = [8, 0], sizes = [1, 32], strides = [1, 1]} : vector<24x128xf32> to vector<1x32xf32>
    %556 = vector.extract_strided_slice %546 {offsets = [0, 0], sizes = [8, 32], strides = [1, 1]} : vector<16x32xf32> to vector<8x32xf32>
    %557 = vector.extract_strided_slice %552 {offsets = [0, 0], sizes = [8, 32], strides = [1, 1]} : vector<16x32xf32> to vector<8x32xf32>
    %558 = vector.extract_strided_slice %553 {offsets = [0, 0], sizes = [8, 32], strides = [1, 1]} : vector<16x32xf32> to vector<8x32xf32>
    %559 = vector.extract_strided_slice %556 {offsets = [0, 0], sizes = [8, 8], strides = [1, 1]} : vector<8x32xf32> to vector<8x8xf32>
    %560 = vector.extract_strided_slice %557 {offsets = [0, 0], sizes = [8, 8], strides = [1, 1]} : vector<8x32xf32> to vector<8x8xf32>
    %cst_164 = arith.constant dense<0.000000e+00> : vector<8x8xf32>
    %561 = tpu.matmul %559, %560, %cst_164 {dimension_numbers = #tpu.dot_dimension_numbers<[1], [1], [0], [0], [0, 0, 1, 0], [], []>} : vector<8x8xf32>, vector<8x8xf32>, vector<8x8xf32> -> vector<8x8xf32>
    %cst_165 = arith.constant 0.353553385 : f32
    %562 = vector.broadcast %cst_165 : f32 to vector<8x8xf32>
    %563 = arith.mulf %561, %562 : vector<8x8xf32>
    %564 = arith.addf %563, %102 : vector<8x8xf32>
    %cst_166 = arith.constant dense<0xFF800000> : vector<8xf32>
    %565 = vector.multi_reduction <maximumf>, %564, %cst_166 [1] : vector<8x8xf32> to vector<8xf32>
    %566 = vector.shape_cast %565 : vector<8xf32> to vector<8x1xf32>
    %567 = vector.broadcast %566 : vector<8x1xf32> to vector<8x8xf32>
    %568 = arith.subf %564, %567 : vector<8x8xf32>
    %569 = math.exp %568 : vector<8x8xf32>
    %cst_167 = arith.constant dense<0.000000e+00> : vector<8xf32>
    %570 = vector.multi_reduction <add>, %569, %cst_167 [1] : vector<8x8xf32> to vector<8xf32>
    %571 = vector.shape_cast %570 : vector<8xf32> to vector<8x1xf32>
    %572 = tpu.reciprocal %571 {approx = true} : vector<8x1xf32> -> vector<8x1xf32>
    %573 = vector.broadcast %572 : vector<8x1xf32> to vector<8x8xf32>
    %574 = arith.mulf %569, %573 : vector<8x8xf32>
    %575 = vector.extract_strided_slice %558 {offsets = [0, 0], sizes = [8, 8], strides = [1, 1]} : vector<8x32xf32> to vector<8x8xf32>
    %cst_168 = arith.constant dense<0.000000e+00> : vector<8x8xf32>
    %576 = tpu.matmul %574, %575, %cst_168 {dimension_numbers = #tpu.dot_dimension_numbers<[1], [0], [0], [1], [0, 0, 1, 1], [], []>} : vector<8x8xf32>, vector<8x8xf32>, vector<8x8xf32> -> vector<8x8xf32>
    %c0_169 = arith.constant 0 : index
    %c0_170 = arith.constant 0 : index
    %577 = vector.load %arg6[%c0_169, %c0_170] : memref<16x32xf32, #tpu.memory_space<vmem>>, vector<8x8xf32>
    tpu.vector_store %arg6[%c0_169, %c0_170], %576 {strides = array<i32>} : memref<16x32xf32, #tpu.memory_space<vmem>>, vector<8x8xf32>,
    %578 = vector.extract_strided_slice %556 {offsets = [0, 8], sizes = [8, 8], strides = [1, 1]} : vector<8x32xf32> to vector<8x8xf32>
    %579 = vector.extract_strided_slice %557 {offsets = [0, 8], sizes = [8, 8], strides = [1, 1]} : vector<8x32xf32> to vector<8x8xf32>
    %cst_171 = arith.constant dense<0.000000e+00> : vector<8x8xf32>
    %580 = tpu.matmul %578, %579, %cst_171 {dimension_numbers = #tpu.dot_dimension_numbers<[1], [1], [0], [0], [0, 0, 1, 0], [], []>} : vector<8x8xf32>, vector<8x8xf32>, vector<8x8xf32> -> vector<8x8xf32>
    %cst_172 = arith.constant 0.353553385 : f32
    %581 = vector.broadcast %cst_172 : f32 to vector<8x8xf32>
    %582 = arith.mulf %580, %581 : vector<8x8xf32>
    %583 = arith.addf %582, %102 : vector<8x8xf32>
    %cst_173 = arith.constant dense<0xFF800000> : vector<8xf32>
    %584 = vector.multi_reduction <maximumf>, %583, %cst_173 [1] : vector<8x8xf32> to vector<8xf32>
    %585 = vector.shape_cast %584 : vector<8xf32> to vector<8x1xf32>
    %586 = vector.broadcast %585 : vector<8x1xf32> to vector<8x8xf32>
    %587 = arith.subf %583, %586 : vector<8x8xf32>
    %588 = math.exp %587 : vector<8x8xf32>
    %cst_174 = arith.constant dense<0.000000e+00> : vector<8xf32>
    %589 = vector.multi_reduction <add>, %588, %cst_174 [1] : vector<8x8xf32> to vector<8xf32>
    %590 = vector.shape_cast %589 : vector<8xf32> to vector<8x1xf32>
    %591 = tpu.reciprocal %590 {approx = true} : vector<8x1xf32> -> vector<8x1xf32>
    %592 = vector.broadcast %591 : vector<8x1xf32> to vector<8x8xf32>
    %593 = arith.mulf %588, %592 : vector<8x8xf32>
    %594 = vector.extract_strided_slice %558 {offsets = [0, 8], sizes = [8, 8], strides = [1, 1]} : vector<8x32xf32> to vector<8x8xf32>
    %cst_175 = arith.constant dense<0.000000e+00> : vector<8x8xf32>
    %595 = tpu.matmul %593, %594, %cst_175 {dimension_numbers = #tpu.dot_dimension_numbers<[1], [0], [0], [1], [0, 0, 1, 1], [], []>} : vector<8x8xf32>, vector<8x8xf32>, vector<8x8xf32> -> vector<8x8xf32>
    %c0_176 = arith.constant 0 : index
    %c8_177 = arith.constant 8 : index
    %596 = vector.load %arg6[%c0_176, %c8_177] : memref<16x32xf32, #tpu.memory_space<vmem>>, vector<8x8xf32>
    tpu.vector_store %arg6[%c0_176, %c8_177], %595 {strides = array<i32>} : memref<16x32xf32, #tpu.memory_space<vmem>>, vector<8x8xf32>,
    %597 = vector.extract_strided_slice %556 {offsets = [0, 16], sizes = [8, 8], strides = [1, 1]} : vector<8x32xf32> to vector<8x8xf32>
    %598 = vector.extract_strided_slice %557 {offsets = [0, 16], sizes = [8, 8], strides = [1, 1]} : vector<8x32xf32> to vector<8x8xf32>
    %cst_178 = arith.constant dense<0.000000e+00> : vector<8x8xf32>
    %599 = tpu.matmul %597, %598, %cst_178 {dimension_numbers = #tpu.dot_dimension_numbers<[1], [1], [0], [0], [0, 0, 1, 0], [], []>} : vector<8x8xf32>, vector<8x8xf32>, vector<8x8xf32> -> vector<8x8xf32>
    %cst_179 = arith.constant 0.353553385 : f32
    %600 = vector.broadcast %cst_179 : f32 to vector<8x8xf32>
    %601 = arith.mulf %599, %600 : vector<8x8xf32>
    %602 = arith.addf %601, %102 : vector<8x8xf32>
    %cst_180 = arith.constant dense<0xFF800000> : vector<8xf32>
    %603 = vector.multi_reduction <maximumf>, %602, %cst_180 [1] : vector<8x8xf32> to vector<8xf32>
    %604 = vector.shape_cast %603 : vector<8xf32> to vector<8x1xf32>
    %605 = vector.broadcast %604 : vector<8x1xf32> to vector<8x8xf32>
    %606 = arith.subf %602, %605 : vector<8x8xf32>
    %607 = math.exp %606 : vector<8x8xf32>
    %cst_181 = arith.constant dense<0.000000e+00> : vector<8xf32>
    %608 = vector.multi_reduction <add>, %607, %cst_181 [1] : vector<8x8xf32> to vector<8xf32>
    %609 = vector.shape_cast %608 : vector<8xf32> to vector<8x1xf32>
    %610 = tpu.reciprocal %609 {approx = true} : vector<8x1xf32> -> vector<8x1xf32>
    %611 = vector.broadcast %610 : vector<8x1xf32> to vector<8x8xf32>
    %612 = arith.mulf %607, %611 : vector<8x8xf32>
    %613 = vector.extract_strided_slice %558 {offsets = [0, 16], sizes = [8, 8], strides = [1, 1]} : vector<8x32xf32> to vector<8x8xf32>
    %cst_182 = arith.constant dense<0.000000e+00> : vector<8x8xf32>
    %614 = tpu.matmul %612, %613, %cst_182 {dimension_numbers = #tpu.dot_dimension_numbers<[1], [0], [0], [1], [0, 0, 1, 1], [], []>} : vector<8x8xf32>, vector<8x8xf32>, vector<8x8xf32> -> vector<8x8xf32>
    %c0_183 = arith.constant 0 : index
    %c16_184 = arith.constant 16 : index
    %615 = vector.load %arg6[%c0_183, %c16_184] : memref<16x32xf32, #tpu.memory_space<vmem>>, vector<8x8xf32>
    tpu.vector_store %arg6[%c0_183, %c16_184], %614 {strides = array<i32>} : memref<16x32xf32, #tpu.memory_space<vmem>>, vector<8x8xf32>,
    %616 = vector.extract_strided_slice %556 {offsets = [0, 24], sizes = [8, 8], strides = [1, 1]} : vector<8x32xf32> to vector<8x8xf32>
    %617 = vector.extract_strided_slice %557 {offsets = [0, 24], sizes = [8, 8], strides = [1, 1]} : vector<8x32xf32> to vector<8x8xf32>
    %cst_185 = arith.constant dense<0.000000e+00> : vector<8x8xf32>
    %618 = tpu.matmul %616, %617, %cst_185 {dimension_numbers = #tpu.dot_dimension_numbers<[1], [1], [0], [0], [0, 0, 1, 0], [], []>} : vector<8x8xf32>, vector<8x8xf32>, vector<8x8xf32> -> vector<8x8xf32>
    %cst_186 = arith.constant 0.353553385 : f32
    %619 = vector.broadcast %cst_186 : f32 to vector<8x8xf32>
    %620 = arith.mulf %618, %619 : vector<8x8xf32>
    %621 = arith.addf %620, %102 : vector<8x8xf32>
    %cst_187 = arith.constant dense<0xFF800000> : vector<8xf32>
    %622 = vector.multi_reduction <maximumf>, %621, %cst_187 [1] : vector<8x8xf32> to vector<8xf32>
    %623 = vector.shape_cast %622 : vector<8xf32> to vector<8x1xf32>
    %624 = vector.broadcast %623 : vector<8x1xf32> to vector<8x8xf32>
    %625 = arith.subf %621, %624 : vector<8x8xf32>
    %626 = math.exp %625 : vector<8x8xf32>
    %cst_188 = arith.constant dense<0.000000e+00> : vector<8xf32>
    %627 = vector.multi_reduction <add>, %626, %cst_188 [1] : vector<8x8xf32> to vector<8xf32>
    %628 = vector.shape_cast %627 : vector<8xf32> to vector<8x1xf32>
    %629 = tpu.reciprocal %628 {approx = true} : vector<8x1xf32> -> vector<8x1xf32>
    %630 = vector.broadcast %629 : vector<8x1xf32> to vector<8x8xf32>
    %631 = arith.mulf %626, %630 : vector<8x8xf32>
    %632 = vector.extract_strided_slice %558 {offsets = [0, 24], sizes = [8, 8], strides = [1, 1]} : vector<8x32xf32> to vector<8x8xf32>
    %cst_189 = arith.constant dense<0.000000e+00> : vector<8x8xf32>
    %633 = tpu.matmul %631, %632, %cst_189 {dimension_numbers = #tpu.dot_dimension_numbers<[1], [0], [0], [1], [0, 0, 1, 1], [], []>} : vector<8x8xf32>, vector<8x8xf32>, vector<8x8xf32> -> vector<8x8xf32>
    %c0_190 = arith.constant 0 : index
    %c24_191 = arith.constant 24 : index
    %634 = vector.load %arg6[%c0_190, %c24_191] : memref<16x32xf32, #tpu.memory_space<vmem>>, vector<8x8xf32>
    tpu.vector_store %arg6[%c0_190, %c24_191], %633 {strides = array<i32>} : memref<16x32xf32, #tpu.memory_space<vmem>>, vector<8x8xf32>,
    %635 = vector.extract_strided_slice %546 {offsets = [8, 0], sizes = [8, 32], strides = [1, 1]} : vector<16x32xf32> to vector<8x32xf32>
    %636 = vector.extract_strided_slice %552 {offsets = [8, 0], sizes = [8, 32], strides = [1, 1]} : vector<16x32xf32> to vector<8x32xf32>
    %637 = vector.extract_strided_slice %553 {offsets = [8, 0], sizes = [8, 32], strides = [1, 1]} : vector<16x32xf32> to vector<8x32xf32>
    %638 = vector.extract_strided_slice %635 {offsets = [0, 0], sizes = [8, 8], strides = [1, 1]} : vector<8x32xf32> to vector<8x8xf32>
    %639 = vector.extract_strided_slice %636 {offsets = [0, 0], sizes = [8, 8], strides = [1, 1]} : vector<8x32xf32> to vector<8x8xf32>
    %cst_192 = arith.constant dense<0.000000e+00> : vector<8x8xf32>
    %640 = tpu.matmul %638, %639, %cst_192 {dimension_numbers = #tpu.dot_dimension_numbers<[1], [1], [0], [0], [0, 0, 1, 0], [], []>} : vector<8x8xf32>, vector<8x8xf32>, vector<8x8xf32> -> vector<8x8xf32>
    %cst_193 = arith.constant 0.353553385 : f32
    %641 = vector.broadcast %cst_193 : f32 to vector<8x8xf32>
    %642 = arith.mulf %640, %641 : vector<8x8xf32>
    %643 = arith.addf %642, %111 : vector<8x8xf32>
    %cst_194 = arith.constant dense<0xFF800000> : vector<8xf32>
    %644 = vector.multi_reduction <maximumf>, %643, %cst_194 [1] : vector<8x8xf32> to vector<8xf32>
    %645 = vector.shape_cast %644 : vector<8xf32> to vector<8x1xf32>
    %646 = vector.broadcast %645 : vector<8x1xf32> to vector<8x8xf32>
    %647 = arith.subf %643, %646 : vector<8x8xf32>
    %648 = math.exp %647 : vector<8x8xf32>
    %cst_195 = arith.constant dense<0.000000e+00> : vector<8xf32>
    %649 = vector.multi_reduction <add>, %648, %cst_195 [1] : vector<8x8xf32> to vector<8xf32>
    %650 = vector.shape_cast %649 : vector<8xf32> to vector<8x1xf32>
    %651 = tpu.reciprocal %650 {approx = true} : vector<8x1xf32> -> vector<8x1xf32>
    %652 = vector.broadcast %651 : vector<8x1xf32> to vector<8x8xf32>
    %653 = arith.mulf %648, %652 : vector<8x8xf32>
    %654 = vector.extract_strided_slice %637 {offsets = [0, 0], sizes = [8, 8], strides = [1, 1]} : vector<8x32xf32> to vector<8x8xf32>
    %cst_196 = arith.constant dense<0.000000e+00> : vector<8x8xf32>
    %655 = tpu.matmul %653, %654, %cst_196 {dimension_numbers = #tpu.dot_dimension_numbers<[1], [0], [0], [1], [0, 0, 1, 1], [], []>} : vector<8x8xf32>, vector<8x8xf32>, vector<8x8xf32> -> vector<8x8xf32>
    %c8_197 = arith.constant 8 : index
    %c0_198 = arith.constant 0 : index
    %656 = vector.load %arg6[%c8_197, %c0_198] : memref<16x32xf32, #tpu.memory_space<vmem>>, vector<8x8xf32>
    tpu.vector_store %arg6[%c8_197, %c0_198], %655 {strides = array<i32>} : memref<16x32xf32, #tpu.memory_space<vmem>>, vector<8x8xf32>,
    %657 = vector.extract_strided_slice %635 {offsets = [0, 8], sizes = [8, 8], strides = [1, 1]} : vector<8x32xf32> to vector<8x8xf32>
    %658 = vector.extract_strided_slice %636 {offsets = [0, 8], sizes = [8, 8], strides = [1, 1]} : vector<8x32xf32> to vector<8x8xf32>
    %cst_199 = arith.constant dense<0.000000e+00> : vector<8x8xf32>
    %659 = tpu.matmul %657, %658, %cst_199 {dimension_numbers = #tpu.dot_dimension_numbers<[1], [1], [0], [0], [0, 0, 1, 0], [], []>} : vector<8x8xf32>, vector<8x8xf32>, vector<8x8xf32> -> vector<8x8xf32>
    %cst_200 = arith.constant 0.353553385 : f32
    %660 = vector.broadcast %cst_200 : f32 to vector<8x8xf32>
    %661 = arith.mulf %659, %660 : vector<8x8xf32>
    %662 = arith.addf %661, %111 : vector<8x8xf32>
    %cst_201 = arith.constant dense<0xFF800000> : vector<8xf32>
    %663 = vector.multi_reduction <maximumf>, %662, %cst_201 [1] : vector<8x8xf32> to vector<8xf32>
    %664 = vector.shape_cast %663 : vector<8xf32> to vector<8x1xf32>
    %665 = vector.broadcast %664 : vector<8x1xf32> to vector<8x8xf32>
    %666 = arith.subf %662, %665 : vector<8x8xf32>
    %667 = math.exp %666 : vector<8x8xf32>
    %cst_202 = arith.constant dense<0.000000e+00> : vector<8xf32>
    %668 = vector.multi_reduction <add>, %667, %cst_202 [1] : vector<8x8xf32> to vector<8xf32>
    %669 = vector.shape_cast %668 : vector<8xf32> to vector<8x1xf32>
    %670 = tpu.reciprocal %669 {approx = true} : vector<8x1xf32> -> vector<8x1xf32>
    %671 = vector.broadcast %670 : vector<8x1xf32> to vector<8x8xf32>
    %672 = arith.mulf %667, %671 : vector<8x8xf32>
    %673 = vector.extract_strided_slice %637 {offsets = [0, 8], sizes = [8, 8], strides = [1, 1]} : vector<8x32xf32> to vector<8x8xf32>
    %cst_203 = arith.constant dense<0.000000e+00> : vector<8x8xf32>
    %674 = tpu.matmul %672, %673, %cst_203 {dimension_numbers = #tpu.dot_dimension_numbers<[1], [0], [0], [1], [0, 0, 1, 1], [], []>} : vector<8x8xf32>, vector<8x8xf32>, vector<8x8xf32> -> vector<8x8xf32>
    %c8_204 = arith.constant 8 : index
    %c8_205 = arith.constant 8 : index
    %675 = vector.load %arg6[%c8_204, %c8_205] : memref<16x32xf32, #tpu.memory_space<vmem>>, vector<8x8xf32>
    tpu.vector_store %arg6[%c8_204, %c8_205], %674 {strides = array<i32>} : memref<16x32xf32, #tpu.memory_space<vmem>>, vector<8x8xf32>,
    %676 = vector.extract_strided_slice %635 {offsets = [0, 16], sizes = [8, 8], strides = [1, 1]} : vector<8x32xf32> to vector<8x8xf32>
    %677 = vector.extract_strided_slice %636 {offsets = [0, 16], sizes = [8, 8], strides = [1, 1]} : vector<8x32xf32> to vector<8x8xf32>
    %cst_206 = arith.constant dense<0.000000e+00> : vector<8x8xf32>
    %678 = tpu.matmul %676, %677, %cst_206 {dimension_numbers = #tpu.dot_dimension_numbers<[1], [1], [0], [0], [0, 0, 1, 0], [], []>} : vector<8x8xf32>, vector<8x8xf32>, vector<8x8xf32> -> vector<8x8xf32>
    %cst_207 = arith.constant 0.353553385 : f32
    %679 = vector.broadcast %cst_207 : f32 to vector<8x8xf32>
    %680 = arith.mulf %678, %679 : vector<8x8xf32>
    %681 = arith.addf %680, %111 : vector<8x8xf32>
    %cst_208 = arith.constant dense<0xFF800000> : vector<8xf32>
    %682 = vector.multi_reduction <maximumf>, %681, %cst_208 [1] : vector<8x8xf32> to vector<8xf32>
    %683 = vector.shape_cast %682 : vector<8xf32> to vector<8x1xf32>
    %684 = vector.broadcast %683 : vector<8x1xf32> to vector<8x8xf32>
    %685 = arith.subf %681, %684 : vector<8x8xf32>
    %686 = math.exp %685 : vector<8x8xf32>
    %cst_209 = arith.constant dense<0.000000e+00> : vector<8xf32>
    %687 = vector.multi_reduction <add>, %686, %cst_209 [1] : vector<8x8xf32> to vector<8xf32>
    %688 = vector.shape_cast %687 : vector<8xf32> to vector<8x1xf32>
    %689 = tpu.reciprocal %688 {approx = true} : vector<8x1xf32> -> vector<8x1xf32>
    %690 = vector.broadcast %689 : vector<8x1xf32> to vector<8x8xf32>
    %691 = arith.mulf %686, %690 : vector<8x8xf32>
    %692 = vector.extract_strided_slice %637 {offsets = [0, 16], sizes = [8, 8], strides = [1, 1]} : vector<8x32xf32> to vector<8x8xf32>
    %cst_210 = arith.constant dense<0.000000e+00> : vector<8x8xf32>
    %693 = tpu.matmul %691, %692, %cst_210 {dimension_numbers = #tpu.dot_dimension_numbers<[1], [0], [0], [1], [0, 0, 1, 1], [], []>} : vector<8x8xf32>, vector<8x8xf32>, vector<8x8xf32> -> vector<8x8xf32>
    %c8_211 = arith.constant 8 : index
    %c16_212 = arith.constant 16 : index
    %694 = vector.load %arg6[%c8_211, %c16_212] : memref<16x32xf32, #tpu.memory_space<vmem>>, vector<8x8xf32>
    tpu.vector_store %arg6[%c8_211, %c16_212], %693 {strides = array<i32>} : memref<16x32xf32, #tpu.memory_space<vmem>>, vector<8x8xf32>,
    %695 = vector.extract_strided_slice %635 {offsets = [0, 24], sizes = [8, 8], strides = [1, 1]} : vector<8x32xf32> to vector<8x8xf32>
    %696 = vector.extract_strided_slice %636 {offsets = [0, 24], sizes = [8, 8], strides = [1, 1]} : vector<8x32xf32> to vector<8x8xf32>
    %cst_213 = arith.constant dense<0.000000e+00> : vector<8x8xf32>
    %697 = tpu.matmul %695, %696, %cst_213 {dimension_numbers = #tpu.dot_dimension_numbers<[1], [1], [0], [0], [0, 0, 1, 0], [], []>} : vector<8x8xf32>, vector<8x8xf32>, vector<8x8xf32> -> vector<8x8xf32>
    %cst_214 = arith.constant 0.353553385 : f32
    %698 = vector.broadcast %cst_214 : f32 to vector<8x8xf32>
    %699 = arith.mulf %697, %698 : vector<8x8xf32>
    %700 = arith.addf %699, %111 : vector<8x8xf32>
    %cst_215 = arith.constant dense<0xFF800000> : vector<8xf32>
    %701 = vector.multi_reduction <maximumf>, %700, %cst_215 [1] : vector<8x8xf32> to vector<8xf32>
    %702 = vector.shape_cast %701 : vector<8xf32> to vector<8x1xf32>
    %703 = vector.broadcast %702 : vector<8x1xf32> to vector<8x8xf32>
    %704 = arith.subf %700, %703 : vector<8x8xf32>
    %705 = math.exp %704 : vector<8x8xf32>
    %cst_216 = arith.constant dense<0.000000e+00> : vector<8xf32>
    %706 = vector.multi_reduction <add>, %705, %cst_216 [1] : vector<8x8xf32> to vector<8xf32>
    %707 = vector.shape_cast %706 : vector<8xf32> to vector<8x1xf32>
    %708 = tpu.reciprocal %707 {approx = true} : vector<8x1xf32> -> vector<8x1xf32>
    %709 = vector.broadcast %708 : vector<8x1xf32> to vector<8x8xf32>
    %710 = arith.mulf %705, %709 : vector<8x8xf32>
    %711 = vector.extract_strided_slice %637 {offsets = [0, 24], sizes = [8, 8], strides = [1, 1]} : vector<8x32xf32> to vector<8x8xf32>
    %cst_217 = arith.constant dense<0.000000e+00> : vector<8x8xf32>
    %712 = tpu.matmul %710, %711, %cst_217 {dimension_numbers = #tpu.dot_dimension_numbers<[1], [0], [0], [1], [0, 0, 1, 1], [], []>} : vector<8x8xf32>, vector<8x8xf32>, vector<8x8xf32> -> vector<8x8xf32>
    %c8_218 = arith.constant 8 : index
    %c24_219 = arith.constant 24 : index
    %713 = vector.load %arg6[%c8_218, %c24_219] : memref<16x32xf32, #tpu.memory_space<vmem>>, vector<8x8xf32>
    tpu.vector_store %arg6[%c8_218, %c24_219], %712 {strides = array<i32>} : memref<16x32xf32, #tpu.memory_space<vmem>>, vector<8x8xf32>,
    %c0_220 = arith.constant 0 : index
    %c0_221 = arith.constant 0 : index
    %714 = vector.load %arg6[%c0_220, %c0_221] : memref<16x32xf32, #tpu.memory_space<vmem>>, vector<16x32xf32>
    %cst_222 = arith.constant dense<0.000000e+00> : vector<16x32xf32>
    %715 = tpu.matmul %714, %554, %cst_222 {dimension_numbers = #tpu.dot_dimension_numbers<[1], [0], [0], [1], [0, 0, 1, 1], [], []>} : vector<16x32xf32>, vector<32x32xf32>, vector<16x32xf32> -> vector<16x32xf32>
    %716 = vector.broadcast %555 : vector<1x32xf32> to vector<16x32xf32>
    %717 = arith.addf %715, %716 : vector<16x32xf32>
    %718 = arith.addf %541, %717 : vector<16x32xf32>
    %cst_223 = arith.constant dense<0.000000e+00> : vector<16xf32>
    %719 = vector.multi_reduction <add>, %718, %cst_223 [1] : vector<16x32xf32> to vector<16xf32>
    %720 = vector.shape_cast %719 : vector<16xf32> to vector<16x1xf32>
    %cst_224 = arith.constant 3.200000e+01 : f32
    %721 = vector.broadcast %cst_224 : f32 to vector<16x1xf32>
    %722 = arith.divf %720, %721 : vector<16x1xf32>
    %723 = vector.broadcast %722 : vector<16x1xf32> to vector<16x32xf32>
    %724 = arith.subf %718, %723 : vector<16x32xf32>
    %725 = arith.mulf %724, %724 : vector<16x32xf32>
    %cst_225 = arith.constant dense<0.000000e+00> : vector<16xf32>
    %726 = vector.multi_reduction <add>, %725, %cst_225 [1] : vector<16x32xf32> to vector<16xf32>
    %727 = vector.shape_cast %726 : vector<16xf32> to vector<16x1xf32>
    %cst_226 = arith.constant 3.200000e+01 : f32
    %728 = vector.broadcast %cst_226 : f32 to vector<16x1xf32>
    %729 = arith.divf %727, %728 : vector<16x1xf32>
    %730 = vector.broadcast %722 : vector<16x1xf32> to vector<16x32xf32>
    %731 = arith.subf %718, %730 : vector<16x32xf32>
    %cst_227 = arith.constant 9.99999974E-6 : f32
    %732 = vector.broadcast %cst_227 : f32 to vector<16x1xf32>
    %733 = arith.addf %729, %732 : vector<16x1xf32>
    %734 = math.rsqrt %733 : vector<16x1xf32>
    %735 = vector.broadcast %734 : vector<16x1xf32> to vector<16x32xf32>
    %736 = arith.mulf %731, %735 : vector<16x32xf32>
    %737 = vector.extract_strided_slice %4 {offsets = [15, 0], sizes = [1, 32], strides = [1, 1]} : vector<24x128xf32> to vector<1x32xf32>
    %738 = vector.broadcast %737 : vector<1x32xf32> to vector<16x32xf32>
    %739 = arith.mulf %736, %738 : vector<16x32xf32>
    %740 = vector.extract_strided_slice %4 {offsets = [20, 0], sizes = [1, 32], strides = [1, 1]} : vector<24x128xf32> to vector<1x32xf32>
    %741 = vector.broadcast %740 : vector<1x32xf32> to vector<16x32xf32>
    %742 = arith.addf %739, %741 : vector<16x32xf32>
    %743 = vector.extract_strided_slice %2 {offsets = [0, 1024], sizes = [32, 64], strides = [1, 1]} : vector<32x1280xf32> to vector<32x64xf32>
    %744 = vector.extract_strided_slice %4 {offsets = [9, 0], sizes = [1, 64], strides = [1, 1]} : vector<24x128xf32> to vector<1x64xf32>
    %cst_228 = arith.constant dense<0.000000e+00> : vector<16x64xf32>
    %745 = tpu.matmul %742, %743, %cst_228 {dimension_numbers = #tpu.dot_dimension_numbers<[1], [0], [0], [1], [0, 0, 1, 1], [], []>} : vector<16x32xf32>, vector<32x64xf32>, vector<16x64xf32> -> vector<16x64xf32>
    %746 = vector.broadcast %744 : vector<1x64xf32> to vector<16x64xf32>
    %747 = arith.addf %745, %746 : vector<16x64xf32>
    %cst_229 = arith.constant 0.000000e+00 : f32
    %748 = vector.broadcast %cst_229 : f32 to vector<16x64xf32>
    %749 = arith.maximumf %747, %748 : vector<16x64xf32>
    %750 = vector.extract_strided_slice %4 {offsets = [10, 0], sizes = [1, 32], strides = [1, 1]} : vector<24x128xf32> to vector<1x32xf32>
    %cst_230 = arith.constant dense<0.000000e+00> : vector<16x32xf32>
    %751 = tpu.matmul %749, %30, %cst_230 {dimension_numbers = #tpu.dot_dimension_numbers<[1], [0], [0], [1], [0, 0, 1, 1], [], []>} : vector<16x64xf32>, vector<64x32xf32>, vector<16x32xf32> -> vector<16x32xf32>
    %752 = vector.broadcast %750 : vector<1x32xf32> to vector<16x32xf32>
    %753 = arith.addf %751, %752 : vector<16x32xf32>
    %754 = arith.addf %742, %753 : vector<16x32xf32>
    %cst_231 = arith.constant dense<0.000000e+00> : vector<16xf32>
    %755 = vector.multi_reduction <add>, %754, %cst_231 [1] : vector<16x32xf32> to vector<16xf32>
    %756 = vector.shape_cast %755 : vector<16xf32> to vector<16x1xf32>
    %cst_232 = arith.constant 3.200000e+01 : f32
    %757 = vector.broadcast %cst_232 : f32 to vector<16x1xf32>
    %758 = arith.divf %756, %757 : vector<16x1xf32>
    %759 = vector.broadcast %758 : vector<16x1xf32> to vector<16x32xf32>
    %760 = arith.subf %754, %759 : vector<16x32xf32>
    %761 = arith.mulf %760, %760 : vector<16x32xf32>
    %cst_233 = arith.constant dense<0.000000e+00> : vector<16xf32>
    %762 = vector.multi_reduction <add>, %761, %cst_233 [1] : vector<16x32xf32> to vector<16xf32>
    %763 = vector.shape_cast %762 : vector<16xf32> to vector<16x1xf32>
    %cst_234 = arith.constant 3.200000e+01 : f32
    %764 = vector.broadcast %cst_234 : f32 to vector<16x1xf32>
    %765 = arith.divf %763, %764 : vector<16x1xf32>
    %766 = vector.broadcast %758 : vector<16x1xf32> to vector<16x32xf32>
    %767 = arith.subf %754, %766 : vector<16x32xf32>
    %cst_235 = arith.constant 9.99999974E-6 : f32
    %768 = vector.broadcast %cst_235 : f32 to vector<16x1xf32>
    %769 = arith.addf %765, %768 : vector<16x1xf32>
    %770 = math.rsqrt %769 : vector<16x1xf32>
    %771 = vector.broadcast %770 : vector<16x1xf32> to vector<16x32xf32>
    %772 = arith.mulf %767, %771 : vector<16x32xf32>
    %773 = vector.extract_strided_slice %4 {offsets = [16, 0], sizes = [1, 32], strides = [1, 1]} : vector<24x128xf32> to vector<1x32xf32>
    %774 = vector.broadcast %773 : vector<1x32xf32> to vector<16x32xf32>
    %775 = arith.mulf %772, %774 : vector<16x32xf32>
    %776 = vector.extract_strided_slice %4 {offsets = [21, 0], sizes = [1, 32], strides = [1, 1]} : vector<24x128xf32> to vector<1x32xf32>
    %777 = vector.broadcast %776 : vector<1x32xf32> to vector<16x32xf32>
    %778 = arith.addf %775, %777 : vector<16x32xf32>
    %779 = vector.extract_strided_slice %2 {offsets = [0, 1152], sizes = [32, 64], strides = [1, 1]} : vector<32x1280xf32> to vector<32x64xf32>
    %cst_236 = arith.constant dense<0.000000e+00> : vector<16x64xf32>
    %780 = tpu.matmul %778, %779, %cst_236 {dimension_numbers = #tpu.dot_dimension_numbers<[1], [0], [0], [1], [0, 0, 1, 1], [], []>} : vector<16x32xf32>, vector<32x64xf32>, vector<16x64xf32> -> vector<16x64xf32>
    %781 = vector.extract_strided_slice %4 {offsets = [11, 0], sizes = [1, 64], strides = [1, 1]} : vector<24x128xf32> to vector<1x64xf32>
    %782 = vector.broadcast %781 : vector<1x64xf32> to vector<16x64xf32>
    %783 = arith.addf %780, %782 : vector<16x64xf32>
    %cst_237 = arith.constant dense<0xFF800000> : vector<16xf32>
    %784 = vector.multi_reduction <maximumf>, %783, %cst_237 [1] : vector<16x64xf32> to vector<16xf32>
    %785 = vector.shape_cast %784 : vector<16xf32> to vector<16x1xf32>
    %786 = vector.broadcast %785 : vector<16x1xf32> to vector<16x64xf32>
    %787 = arith.subf %783, %786 : vector<16x64xf32>
    %788 = math.exp %787 : vector<16x64xf32>
    %cst_238 = arith.constant dense<0.000000e+00> : vector<16xf32>
    %789 = vector.multi_reduction <add>, %788, %cst_238 [1] : vector<16x64xf32> to vector<16xf32>
    %790 = vector.shape_cast %789 : vector<16xf32> to vector<16x1xf32>
    %791 = math.log %790 : vector<16x1xf32>
    %792 = vector.broadcast %791 : vector<16x1xf32> to vector<16x64xf32>
    %793 = arith.subf %787, %792 : vector<16x64xf32>
    %cst_239 = arith.constant 0.000000e+00 : f32
    %794 = vector.broadcast %cst_239 : f32 to vector<16x32xf32>
    %795 = tpu.concatenate %793, %778, %794 in 1 : vector<16x64xf32>, vector<16x32xf32>, vector<16x32xf32> -> vector<16x128xf32>
    %c0_240 = arith.constant 0 : index
    %c0_241 = arith.constant 0 : index
    %796 = vector.load %arg5[%c0_240, %c0_241] : memref<16x128xf32, #tpu.memory_space<vmem>>, vector<16x128xf32>
    tpu.vector_store %arg5[%c0_240, %c0_241], %795 {strides = array<i32>} : memref<16x128xf32, #tpu.memory_space<vmem>>, vector<16x128xf32>,
    return
  }
}

</mosaic_0001>

<llo_original>
// kernel: transformer_forward.1
$region0: #{transformer_forward.1}
  #allocation0 [shape = 'u32[]', space=smem, size = 0x4, offset = 0x4, fixed_abs, tag = 'smem constant byte address 0x4 - core index']
  #allocation1 [shape = 'u32[144,128]{1,0:T(1,128)}', space=vmem, size = 0x12000, scoped, tag = 'internal scratch']
  #allocation2 [shape = 'f32[16,32]{1,0:T(8,128)}', space=vmem, size = 0x2000, scoped, tag = 'scratch operand']
  %s0 = inlined_call_operand.vmem [shape: s32[32,1], index: 0, kind: input, shape index: {}]
  %s1 = inlined_call_operand.vmem [shape: s32[1,32], index: 1, kind: input, shape index: {}]
  %s2 = inlined_call_operand.vmem [shape: f32[32,1280], index: 2, kind: input, shape index: {}]
  %s3 = inlined_call_operand.vmem [shape: f32[144,64], index: 3, kind: input, shape index: {}]
  %s4 = inlined_call_operand.hbm [shape: f32[24,128], index: 4, kind: input, shape index: {}]
  %s5 = inlined_call_operand.vmem [shape: f32[16,128], index: 5, kind: output, shape index: {}]
  %s6 = sld [smem:[#allocation0]]
  $region34: #{transformer_forward.1} parent=0
    _
  %s8 = ssub.s32 1, %s6
  %s9 = scalar_select 0, %s8, %s6
  $region1: #{transformer_forward.1} parent=0
    #allocation3 [shape = 'u8[12288]{0}', space=vmem, size = 0x3000, scoped, tag = 'input window, operand 4, single buffered']
    #allocation4 [shape = 's32[1]{0}', space=sflag, size = 0x4, scoped, tag = 'scoped memory for transformer_forward.1']
    %10 = vsyncpa [#allocation4], 0
    // Predicated region
    $region2: #{transformer_forward.1} parent=1 // pred_check
      _
    $region3: #{transformer_forward.1} parent=1 // pred_check_branch
      %12 = sbr.rel (0) target = $region5
    $region4: #{transformer_forward.1} parent=1 // pred_region
      _
    $region5: #{transformer_forward.1} parent=1 // pred_fallthru
      _
    // Predicated region
    $region6: #{transformer_forward.1} parent=1 // pred_check
      _
    $region7: #{transformer_forward.1} parent=1 // pred_check_branch
      %14 = sbr.rel (0) target = $region9
    $region8: #{transformer_forward.1} parent=1 // pred_region
      _
    $region9: #{transformer_forward.1} parent=1 // pred_fallthru
      _
    // Predicated region
    $region10: #{transformer_forward.1} parent=1 // pred_check
      _
    $region11: #{transformer_forward.1} parent=1 // pred_check_branch
      %16 = sbr.rel (0) target = $region13
    $region12: #{transformer_forward.1} parent=1 // pred_region
      _
    $region13: #{transformer_forward.1} parent=1 // pred_fallthru
      _
    // Predicated region
    $region14: #{transformer_forward.1} parent=1 // pred_check
      _
    $region15: #{transformer_forward.1} parent=1 // pred_check_branch
      %18 = sbr.rel (0) target = $region17
    $region16: #{transformer_forward.1} parent=1 // pred_region
      _
    $region17: #{transformer_forward.1} parent=1 // pred_fallthru
      _
    // Predicated region
    $region18: #{transformer_forward.1} parent=1 // pred_check
      _
    $region19: #{transformer_forward.1} parent=1 // pred_check_branch
      %20 = sbr.rel (0) target = $region21
    $region20: #{transformer_forward.1} parent=1 // pred_region
      %s22 = ssub.s32 384, 384
      %23 = vsyncadd [#allocation4], %s22
      %s24 = sshll.u32 [#allocation3], 4
      %s25 = int_to_ptr.vmem [resolvable:$true] %s24
      %30 = dma.hbm_to_vmem [thread:$0]  %s4, 384, %s25, [#allocation4], 128, 128, 8
    $region21: #{transformer_forward.1} parent=1 // pred_fallthru
      _
    // Predicated region
    $region22: #{transformer_forward.1} parent=1 // pred_check
      _
    $region23: #{transformer_forward.1} parent=1 // pred_check_branch
      %32 = sbr.rel (0) target = $region25
    $region24: #{transformer_forward.1} parent=1 // pred_region
      %33 = dma.done [#allocation4], 384
    $region25: #{transformer_forward.1} parent=1 // pred_fallthru
      _
    %v34 = vld [vmem:[%s0] sm:$0xff]
    %v35 = vld [vmem:[%s0 + $0x8] sm:$0xff]
    %v36 = vld [vmem:[%s0 + $0x10] sm:$0xff]
    %v37 = vld [vmem:[%s0 + $0x18] sm:$0xff]
    %v38 = vld [vmem:[%s1] sm:$0x1]
    %v39 = vld [vmem:[%s2] sm:$0xff]
    %v40 = vld [vmem:[%s2 + $0x8] sm:$0xff]
    %v41 = vld [vmem:[%s2 + $0x10] sm:$0xff]
    %v42 = vld [vmem:[%s2 + $0x18] sm:$0xff]
    %v43 = vld [vmem:[%s2 + $0x20] sm:$0xff]
    %v44 = vld [vmem:[%s2 + $0x28] sm:$0xff]
    %v45 = vld [vmem:[%s2 + $0x30] sm:$0xff]
    %v46 = vld [vmem:[%s2 + $0x38] sm:$0xff]
    %v47 = vld [vmem:[%s2 + $0x40] sm:$0xff]
    %v48 = vld [vmem:[%s2 + $0x48] sm:$0xff]
    %v49 = vld [vmem:[%s2 + $0x50] sm:$0xff]
    %v50 = vld [vmem:[%s2 + $0x58] sm:$0xff]
    %v51 = vld [vmem:[%s2 + $0x60] sm:$0xff]
    %v52 = vld [vmem:[%s2 + $0x68] sm:$0xff]
    %v53 = vld [vmem:[%s2 + $0x70] sm:$0xff]
    %v54 = vld [vmem:[%s2 + $0x78] sm:$0xff]
    %v55 = vld [vmem:[%s2 + $0x80] sm:$0xff]
    %v56 = vld [vmem:[%s2 + $0x88] sm:$0xff]
    %v57 = vld [vmem:[%s2 + $0x90] sm:$0xff]
    %v58 = vld [vmem:[%s2 + $0x98] sm:$0xff]
    %v59 = vld [vmem:[%s2 + $0xa0] sm:$0xff]
    %v60 = vld [vmem:[%s2 + $0xa8] sm:$0xff]
    %v61 = vld [vmem:[%s2 + $0xb0] sm:$0xff]
    %v62 = vld [vmem:[%s2 + $0xb8] sm:$0xff]
    %v63 = vld [vmem:[%s2 + $0xc0] sm:$0xff]
    %v64 = vld [vmem:[%s2 + $0xc8] sm:$0xff]
    %v65 = vld [vmem:[%s2 + $0xd0] sm:$0xff]
    %v66 = vld [vmem:[%s2 + $0xd8] sm:$0xff]
    %v67 = vld [vmem:[%s2 + $0xe0] sm:$0xff]
    %v68 = vld [vmem:[%s2 + $0xe8] sm:$0xff]
    %v69 = vld [vmem:[%s2 + $0xf0] sm:$0xff]
    %v70 = vld [vmem:[%s2 + $0xf8] sm:$0xff]
    %v71 = vld [vmem:[%s2 + $0x100] sm:$0xff]
    %v72 = vld [vmem:[%s2 + $0x108] sm:$0xff]
    %v73 = vld [vmem:[%s2 + $0x110] sm:$0xff]
    %v74 = vld [vmem:[%s2 + $0x118] sm:$0xff]
    %v75 = vld [vmem:[%s2 + $0x120] sm:$0xff]
    %v76 = vld [vmem:[%s2 + $0x128] sm:$0xff]
    %v77 = vld [vmem:[%s2 + $0x130] sm:$0xff]
    %v78 = vld [vmem:[%s2 + $0x138] sm:$0xff]
    %v79 = vld [vmem:[%s3] sm:$0xff]
    %v80 = vld [vmem:[%s3 + $0x8] sm:$0xff]
    %v81 = vld [vmem:[%s3 + $0x10] sm:$0xff]
    %v82 = vld [vmem:[%s3 + $0x18] sm:$0xff]
    %v83 = vld [vmem:[%s3 + $0x20] sm:$0xff]
    %v84 = vld [vmem:[%s3 + $0x28] sm:$0xff]
    %v85 = vld [vmem:[%s3 + $0x30] sm:$0xff]
    %v86 = vld [vmem:[%s3 + $0x38] sm:$0xff]
    %v87 = vld [vmem:[%s3 + $0x40] sm:$0xff]
    %v88 = vld [vmem:[%s3 + $0x48] sm:$0xff]
    %v89 = vld [vmem:[%s3 + $0x50] sm:$0xff]
    %v90 = vld [vmem:[%s3 + $0x58] sm:$0xff]
    %v91 = vld [vmem:[%s3 + $0x60] sm:$0xff]
    %v92 = vld [vmem:[%s3 + $0x68] sm:$0xff]
    %v93 = vld [vmem:[%s3 + $0x70] sm:$0xff]
    %v94 = vld [vmem:[%s3 + $0x78] sm:$0xff]
    %v95 = vld [vmem:[%s3 + $0x80] sm:$0xff]
    %v96 = vld [vmem:[%s3 + $0x88] sm:$0xff]
    %v97 = vld [vmem:[#allocation3] sm:$0xff]
    %v98 = vld [vmem:[#allocation3 + $0x8] sm:$0xff]
    %v99 = vld [vmem:[#allocation3 + $0x10] sm:$0xff]
    %v100 = vlaneseq
    %v101 = vand.u32 %v100, 127
    %102 = vset.pattern.permute.xlu0 0
    %103 = vperm.xlu0 %102, %v34
    %v104 = vpop.permute.xlu0 %103
    %105 = vset.pattern.permute.xlu0 0
    %106 = vperm.xlu0 %105, %v35
    %v107 = vpop.permute.xlu0 %106
    %vm108 = vcmp.eq.s32.totalorder %v104, %v101
    %vm109 = vcmp.eq.s32.totalorder %v107, %v101
    %v110 = vsel %vm108, 1, 0
    %v111 = vsel %vm109, 1, 0
    %v112 = vcvt.s32.f32 %v110
    %v113 = vcvt.s32.f32 %v111
    %vm114 = vcmask 523264
    %v116 = vsel %vm114, %v112, 0
    %v119 = vsel %vm114, %v113, 0
    %121 = vmatprep.subr.mxu0 0.0
    %122 = vmatpush1.msra.mxu0 0.0
    %123 = vmatprep.subr.mxu0 0.0
    %124 = vmatpush1.msra.mxu0 0.0
    %125 = vmatprep.subr.mxu0 0.0
    %126 = vmatpush1.msra.mxu0 0.0
    %127 = vmatprep.subr.mxu0 0.0
    %128 = vmatpush1.msra.mxu0 0.0
    %129 = vmatprep.subr.mxu0 0.0
    %130 = vmatpush1.msra.mxu0 0.0
    %131 = vmatprep.subr.mxu0 0.0
    %132 = vmatpush1.msra.mxu0 0.0
    %133 = vmatprep.subr.mxu0 0.0
    %134 = vmatpush1.msra.mxu0 0.0
    %135 = vmatprep.subr.mxu0 0.0
    %136 = vmatpush1.msra.mxu0 0.0
    %137 = vmatprep.subr.mxu0 0.0
    %138 = vmatpush1.msra.mxu0 %v86
    %139 = vmatprep.subr.mxu0 0.0
    %140 = vmatpush1.msra.mxu0 %v85
    %141 = vmatprep.subr.mxu0 0.0
    %142 = vmatpush1.msra.mxu0 %v84
    %143 = vmatprep.subr.mxu0 0.0
    %144 = vmatpush1.msra.mxu0 %v83
    %145 = vmatprep.subr.mxu0 0.0
    %146 = vmatpush1.msra.mxu0 %v82
    %147 = vmatprep.subr.mxu0 0.0
    %148 = vmatpush1.msra.mxu0 %v81
    %149 = vmatprep.subr.mxu0 0.0
    %150 = vmatpush1.msra.mxu0 %v80
    %151 = vmatprep.subr.mxu0 0.0
    %152 = vmatpush1.msra.mxu0 %v79
    %153 = vmatprep.subr.mxu0 0.0
    %154 = vmatpush2.msra.mxu0 0.0
    %155 = vmatprep.subr.mxu0 0.0
    %156 = vmatpush2.msra.mxu0 0.0
    %157 = vmatprep.subr.mxu0 0.0
    %158 = vmatpush2.msra.mxu0 0.0
    %159 = vmatprep.subr.mxu0 0.0
    %160 = vmatpush2.msra.mxu0 0.0
    %161 = vmatprep.subr.mxu0 0.0
    %162 = vmatpush2.msra.mxu0 0.0
    %163 = vmatprep.subr.mxu0 0.0
    %164 = vmatpush2.msra.mxu0 0.0
    %165 = vmatprep.subr.mxu0 0.0
    %166 = vmatpush2.msra.mxu0 0.0
    %167 = vmatprep.subr.mxu0 0.0
    %168 = vmatpush2.msra.mxu0 0.0
    %169 = vmatprep.subr.mxu0 0.0
    %170 = vmatpush2.msra.mxu0 0.0
    %171 = vmatprep.subr.mxu0 0.0
    %172 = vmatpush2.msra.mxu0 0.0
    %173 = vmatprep.subr.mxu0 0.0
    %174 = vmatpush2.msra.mxu0 0.0
    %175 = vmatprep.subr.mxu0 0.0
    %176 = vmatpush2.msra.mxu0 0.0
    %177 = vmatprep.subr.mxu0 0.0
    %178 = vmatpush2.msra.mxu0 0.0
    %179 = vmatprep.subr.mxu0 0.0
    %180 = vmatpush2.msra.mxu0 0.0
    %181 = vmatprep.subr.mxu0 0.0
    %182 = vmatpush2.msra.mxu0 0.0
    %183 = vmatprep.subr.mxu0 0.0
    %184 = vmatpush2.msra.mxu0 0.0
    %185 = vmatprep.mubr.f32.mxu0 0.0
    %186 = vmatmul.mubr.f32.gmra.mxu0 %v116
    %v187 = vpop.f32.mrf.mxu0
    %v188 = vadd.f32 0.0, %v187
    %v189 = vpop.f32.mrf.mxu0
    %190 = vmatprep.mubr.f32.mxu0 0.0
    %191 = vmatmul.mubr.f32.gmra.mxu0 %v119
    %v192 = vpop.f32.mrf.mxu0
    %v193 = vadd.f32 0.0, %v192
    %v194 = vpop.f32.mrf.mxu0
    %195 = vdwg.mxu0
    %v196 = vmul.f32 %v188, 5.656854
    %v197 = vmul.f32 %v193, 5.656854
    %v198 = vadd.f32 %v196, %v87
    %v199 = vadd.f32 %v197, %v88
    %200 = vset.pattern.permute.xlu0 0
    %201 = vperm.xlu0 %200, %v36
    %v202 = vpop.permute.xlu0 %201
    %203 = vset.pattern.permute.xlu0 0
    %204 = vperm.xlu0 %203, %v37
    %v205 = vpop.permute.xlu0 %204
    %vm206 = vcmp.eq.s32.totalorder %v202, %v101
    %vm207 = vcmp.eq.s32.totalorder %v205, %v101
    %v208 = vsel %vm206, 1, 0
    %v209 = vsel %vm207, 1, 0
    %v210 = vcvt.s32.f32 %v208
    %v211 = vcvt.s32.f32 %v209
    %220 = vrot.lane.b32.xlu0 %v79, 96
    %v221 = vpop.permute.xlu0 %220
    %222 = vrot.lane.b32.xlu0 %v80, 96
    %v223 = vpop.permute.xlu0 %222
    %224 = vrot.lane.b32.xlu0 %v81, 96
    %v225 = vpop.permute.xlu0 %224
    %226 = vrot.lane.b32.xlu0 %v82, 96
    %v227 = vpop.permute.xlu0 %226
    %228 = vrot.lane.b32.xlu0 %v83, 96
    %v229 = vpop.permute.xlu0 %228
    %230 = vrot.lane.b32.xlu0 %v84, 96
    %v231 = vpop.permute.xlu0 %230
    %232 = vrot.lane.b32.xlu0 %v85, 96
    %v233 = vpop.permute.xlu0 %232
    %234 = vrot.lane.b32.xlu0 %v86, 96
    %v235 = vpop.permute.xlu0 %234
    %v245 = vsel %vm114, %v210, 0
    %v248 = vsel %vm114, %v211, 0
    %250 = vmatprep.subr.mxu0 0.0
    %251 = vmatpush1.msra.mxu0 0.0
    %252 = vmatprep.subr.mxu0 0.0
    %253 = vmatpush1.msra.mxu0 0.0
    %254 = vmatprep.subr.mxu0 0.0
    %255 = vmatpush1.msra.mxu0 0.0
    %256 = vmatprep.subr.mxu0 0.0
    %257 = vmatpush1.msra.mxu0 0.0
    %258 = vmatprep.subr.mxu0 0.0
    %259 = vmatpush1.msra.mxu0 0.0
    %260 = vmatprep.subr.mxu0 0.0
    %261 = vmatpush1.msra.mxu0 0.0
    %262 = vmatprep.subr.mxu0 0.0
    %263 = vmatpush1.msra.mxu0 0.0
    %264 = vmatprep.subr.mxu0 0.0
    %265 = vmatpush1.msra.mxu0 0.0
    %266 = vmatprep.subr.mxu0 0.0
    %267 = vmatpush1.msra.mxu0 %v235
    %268 = vmatprep.subr.mxu0 0.0
    %269 = vmatpush1.msra.mxu0 %v233
    %270 = vmatprep.subr.mxu0 0.0
    %271 = vmatpush1.msra.mxu0 %v231
    %272 = vmatprep.subr.mxu0 0.0
    %273 = vmatpush1.msra.mxu0 %v229
    %274 = vmatprep.subr.mxu0 0.0
    %275 = vmatpush1.msra.mxu0 %v227
    %276 = vmatprep.subr.mxu0 0.0
    %277 = vmatpush1.msra.mxu0 %v225
    %278 = vmatprep.subr.mxu0 0.0
    %279 = vmatpush1.msra.mxu0 %v223
    %280 = vmatprep.subr.mxu0 0.0
    %281 = vmatpush1.msra.mxu0 %v221
    %282 = vmatprep.subr.mxu0 0.0
    %283 = vmatpush2.msra.mxu0 0.0
    %284 = vmatprep.subr.mxu0 0.0
    %285 = vmatpush2.msra.mxu0 0.0
    %286 = vmatprep.subr.mxu0 0.0
    %287 = vmatpush2.msra.mxu0 0.0
    %288 = vmatprep.subr.mxu0 0.0
    %289 = vmatpush2.msra.mxu0 0.0
    %290 = vmatprep.subr.mxu0 0.0
    %291 = vmatpush2.msra.mxu0 0.0
    %292 = vmatprep.subr.mxu0 0.0
    %293 = vmatpush2.msra.mxu0 0.0
    %294 = vmatprep.subr.mxu0 0.0
    %295 = vmatpush2.msra.mxu0 0.0
    %296 = vmatprep.subr.mxu0 0.0
    %297 = vmatpush2.msra.mxu0 0.0
    %298 = vmatprep.subr.mxu0 0.0
    %299 = vmatpush2.msra.mxu0 0.0
    %300 = vmatprep.subr.mxu0 0.0
    %301 = vmatpush2.msra.mxu0 0.0
    %302 = vmatprep.subr.mxu0 0.0
    %303 = vmatpush2.msra.mxu0 0.0
    %304 = vmatprep.subr.mxu0 0.0
    %305 = vmatpush2.msra.mxu0 0.0
    %306 = vmatprep.subr.mxu0 0.0
    %307 = vmatpush2.msra.mxu0 0.0
    %308 = vmatprep.subr.mxu0 0.0
    %309 = vmatpush2.msra.mxu0 0.0
    %310 = vmatprep.subr.mxu0 0.0
    %311 = vmatpush2.msra.mxu0 0.0
    %312 = vmatprep.subr.mxu0 0.0
    %313 = vmatpush2.msra.mxu0 0.0
    %314 = vmatprep.mubr.f32.mxu0 0.0
    %315 = vmatmul.mubr.f32.gmra.mxu0 %v245
    %v316 = vpop.f32.mrf.mxu0
    %v317 = vadd.f32 0.0, %v316
    %v318 = vpop.f32.mrf.mxu0
    %319 = vmatprep.mubr.f32.mxu0 0.0
    %320 = vmatmul.mubr.f32.gmra.mxu0 %v248
    %v321 = vpop.f32.mrf.mxu0
    %v322 = vadd.f32 0.0, %v321
    %v323 = vpop.f32.mrf.mxu0
    %324 = vdwg.mxu0
    %v325 = vmul.f32 %v317, 5.656854
    %v326 = vmul.f32 %v322, 5.656854
    %329 = vrot.lane.b32.xlu0 %v87, 96
    %v330 = vpop.permute.xlu0 %329
    %331 = vrot.lane.b32.xlu0 %v88, 96
    %v332 = vpop.permute.xlu0 %331
    %v335 = vadd.f32 %v325, %v330
    %v336 = vadd.f32 %v326, %v332
    %vm337 = vcmp.ne.s32.totalorder %v34, 1
    %vm338 = vcmp.ne.s32.totalorder %v35, 1
    %v339 = vsel %vm337, 1, 0
    %v340 = vsel %vm338, 1, 0
    %v341 = vcvt.s32.f32 %v339
    %v342 = vcvt.s32.f32 %v340
    %vm343 = vcmp.ne.s32.totalorder %v36, 1
    %vm344 = vcmp.ne.s32.totalorder %v37, 1
    %v345 = vsel %vm343, 1, 0
    %v346 = vsel %vm344, 1, 0
    %v347 = vcvt.s32.f32 %v345
    %v348 = vcvt.s32.f32 %v346
    %vm349 = vcmp.ne.s32.totalorder %v38, 1
    %v350 = vsel %vm349, 1, 0
    %v351 = vcvt.s32.f32 %v350
    %v352 = vlaneseq
    %v353 = vshrl.u32 %v352, 7
    %vm354 = vcmp.ge.s32.totalorder %v353, %v101
    %v355 = vsel %vm354, 1, 0
    %v356 = vcvt.s32.f32 %v355
    %358 = vset.pattern.permute.xlu0 0
    %359 = vperm.xlu0 %358, %v341
    %v360 = vpop.permute.xlu0 %359
    %v363 = vlaneseq
    %v364 = vshrl.u32 %v363, 7
    %v365 = vsub.s32 0, %v364
    %v366 = vrot.slane %v351, %v365
    %v368 = vmul.f32 %v360, %v366
    %v369 = vsub.f32 %v368, 1.0
    %v370 = vmul.f32 %v369, 1e+09
    %372 = vset.pattern.permute.xlu0 0
    %373 = vperm.xlu0 %372, %v342
    %v374 = vpop.permute.xlu0 %373
    %v376 = vmul.f32 %v374, %v366
    %v377 = vsub.f32 %v376, 1.0
    %v378 = vmul.f32 %v377, 1e+09
    %380 = vset.pattern.permute.xlu0 0
    %381 = vperm.xlu0 %380, %v347
    %v382 = vpop.permute.xlu0 %381
    %v384 = vmul.f32 %v382, %v366
    %386 = vrot.lane.b32.xlu0 %v356, 16
    %v387 = vpop.permute.xlu0 %386
    %v389 = vmul.f32 %v384, %v387
    %v390 = vsub.f32 %v389, 1.0
    %v391 = vmul.f32 %v390, 1e+09
    %393 = vset.pattern.permute.xlu0 0
    %394 = vperm.xlu0 %393, %v348
    %v395 = vpop.permute.xlu0 %394
    %v397 = vmul.f32 %v395, %v366
    %398 = vrot.lane.b32.xlu0 %v356, 24
    %v399 = vpop.permute.xlu0 %398
    %v401 = vmul.f32 %v397, %v399
    %v402 = vsub.f32 %v401, 1.0
    %v403 = vmul.f32 %v402, 1e+09
    %v404 = vsub.f32 %v384, 1.0
    %v405 = vmul.f32 %v404, 1e+09
    %v406 = vsub.f32 %v397, 1.0
    %v407 = vmul.f32 %v406, 1e+09
    %v408 = vlaneseq
    %v409 = vshrl.u32 %v408, 7
    %v410 = vsub.s32 0, %v409
    %v411 = vrot.slane %v97, %v410
    %vm412 = vcmask 261120
    %v414 = vsel %vm412, %v198, 0
    %v417 = vsel %vm412, %v199, 0
    %419 = vmatprep.subr.mxu0 0.0
    %420 = vmatpush1.msra.mxu0 0.0
    %421 = vmatprep.subr.mxu0 0.0
    %422 = vmatpush1.msra.mxu0 0.0
    %423 = vmatprep.subr.mxu0 0.0
    %424 = vmatpush1.msra.mxu0 0.0
    %425 = vmatprep.subr.mxu0 0.0
    %426 = vmatpush1.msra.mxu0 0.0
    %427 = vmatprep.subr.mxu0 0.0
    %428 = vmatpush1.msra.mxu0 0.0
    %429 = vmatprep.subr.mxu0 0.0
    %430 = vmatpush1.msra.mxu0 0.0
    %431 = vmatprep.subr.mxu0 0.0
    %432 = vmatpush1.msra.mxu0 0.0
    %433 = vmatprep.subr.mxu0 0.0
    %434 = vmatpush1.msra.mxu0 0.0
    %435 = vmatprep.subr.mxu0 0.0
    %436 = vmatpush1.msra.mxu0 0.0
    %437 = vmatprep.subr.mxu0 0.0
    %438 = vmatpush1.msra.mxu0 0.0
    %439 = vmatprep.subr.mxu0 0.0
    %440 = vmatpush1.msra.mxu0 0.0
    %441 = vmatprep.subr.mxu0 0.0
    %442 = vmatpush1.msra.mxu0 0.0
    %443 = vmatprep.subr.mxu0 0.0
    %444 = vmatpush1.msra.mxu0 %v69
    %445 = vmatprep.subr.mxu0 0.0
    %446 = vmatpush1.msra.mxu0 %v59
    %447 = vmatprep.subr.mxu0 0.0
    %448 = vmatpush1.msra.mxu0 %v49
    %449 = vmatprep.subr.mxu0 0.0
    %450 = vmatpush1.msra.mxu0 %v39
    %451 = vmatprep.subr.mxu0 0.0
    %452 = vmatpush2.msra.mxu0 0.0
    %453 = vmatprep.subr.mxu0 0.0
    %454 = vmatpush2.msra.mxu0 0.0
    %455 = vmatprep.subr.mxu0 0.0
    %456 = vmatpush2.msra.mxu0 0.0
    %457 = vmatprep.subr.mxu0 0.0
    %458 = vmatpush2.msra.mxu0 0.0
    %459 = vmatprep.subr.mxu0 0.0
    %460 = vmatpush2.msra.mxu0 0.0
    %461 = vmatprep.subr.mxu0 0.0
    %462 = vmatpush2.msra.mxu0 0.0
    %463 = vmatprep.subr.mxu0 0.0
    %464 = vmatpush2.msra.mxu0 0.0
    %465 = vmatprep.subr.mxu0 0.0
    %466 = vmatpush2.msra.mxu0 0.0
    %467 = vmatprep.subr.mxu0 0.0
    %468 = vmatpush2.msra.mxu0 0.0
    %469 = vmatprep.subr.mxu0 0.0
    %470 = vmatpush2.msra.mxu0 0.0
    %471 = vmatprep.subr.mxu0 0.0
    %472 = vmatpush2.msra.mxu0 0.0
    %473 = vmatprep.subr.mxu0 0.0
    %474 = vmatpush2.msra.mxu0 0.0
    %475 = vmatprep.subr.mxu0 0.0
    %476 = vmatpush2.msra.mxu0 0.0
    %477 = vmatprep.subr.mxu0 0.0
    %478 = vmatpush2.msra.mxu0 0.0
    %479 = vmatprep.subr.mxu0 0.0
    %480 = vmatpush2.msra.mxu0 0.0
    %481 = vmatprep.subr.mxu0 0.0
    %482 = vmatpush2.msra.mxu0 0.0
    %483 = vmatprep.mubr.f32.mxu0 0.0
    %484 = vmatmul.mubr.f32.gmra.mxu0 %v414
    %v485 = vpop.f32.mrf.mxu0
    %v486 = vadd.f32 %v411, %v485
    %v487 = vpop.f32.mrf.mxu0
    %488 = vmatprep.mubr.f32.mxu0 0.0
    %489 = vmatmul.mubr.f32.gmra.mxu0 %v417
    %v490 = vpop.f32.mrf.mxu0
    %v491 = vadd.f32 %v411, %v490
    %v492 = vpop.f32.mrf.mxu0
    %493 = vdwg.mxu0
    %495 = vrot.lane.b32.xlu0 %v486, 96
    %v496 = vpop.permute.xlu0 %495
    %vm497 = vcmask 64512
    %v498 = vsel %vm497, %v486, 0
    %v500 = vsel %vm497, %v496, 0
    %502 = vmatprep.subr.mxu0 0.0
    %503 = vmatpush1.xpose.msra.mxu0 0.0
    %504 = vmatprep.subr.mxu0 0.0
    %505 = vmatpush1.xpose.msra.mxu0 0.0
    %506 = vmatprep.subr.mxu0 0.0
    %507 = vmatpush1.xpose.msra.mxu0 0.0
    %508 = vmatprep.subr.mxu0 0.0
    %509 = vmatpush1.xpose.msra.mxu0 0.0
    %510 = vmatprep.subr.mxu0 0.0
    %511 = vmatpush1.xpose.msra.mxu0 0.0
    %512 = vmatprep.subr.mxu0 0.0
    %513 = vmatpush1.xpose.msra.mxu0 0.0
    %514 = vmatprep.subr.mxu0 0.0
    %515 = vmatpush1.xpose.msra.mxu0 0.0
    %516 = vmatprep.subr.mxu0 0.0
    %517 = vmatpush1.xpose.msra.mxu0 0.0
    %518 = vmatprep.subr.mxu0 0.0
    %519 = vmatpush1.xpose.msra.mxu0 0.0
    %520 = vmatprep.subr.mxu0 0.0
    %521 = vmatpush1.xpose.msra.mxu0 0.0
    %522 = vmatprep.subr.mxu0 0.0
    %523 = vmatpush1.xpose.msra.mxu0 0.0
    %524 = vmatprep.subr.mxu0 0.0
    %525 = vmatpush1.xpose.msra.mxu0 0.0
    %526 = vmatprep.subr.mxu0 0.0
    %527 = vmatpush1.xpose.msra.mxu0 0.0
    %528 = vmatprep.subr.mxu0 0.0
    %529 = vmatpush1.xpose.msra.mxu0 0.0
    %530 = vmatprep.subr.mxu0 0.0
    %531 = vmatpush1.xpose.msra.mxu0 0.0
    %532 = vmatprep.subr.mxu0 0.0
    %533 = vmatpush1.xpose.msra.mxu0 %v500
    %534 = vmatprep.subr.mxu0 0.0
    %535 = vmatpush2.xpose.msra.mxu0 0.0
    %536 = vmatprep.subr.mxu0 0.0
    %537 = vmatpush2.xpose.msra.mxu0 0.0
    %538 = vmatprep.subr.mxu0 0.0
    %539 = vmatpush2.xpose.msra.mxu0 0.0
    %540 = vmatprep.subr.mxu0 0.0
    %541 = vmatpush2.xpose.msra.mxu0 0.0
    %542 = vmatprep.subr.mxu0 0.0
    %543 = vmatpush2.xpose.msra.mxu0 0.0
    %544 = vmatprep.subr.mxu0 0.0
    %545 = vmatpush2.xpose.msra.mxu0 0.0
    %546 = vmatprep.subr.mxu0 0.0
    %547 = vmatpush2.xpose.msra.mxu0 0.0
    %548 = vmatprep.subr.mxu0 0.0
    %549 = vmatpush2.xpose.msra.mxu0 0.0
    %550 = vmatprep.subr.mxu0 0.0
    %551 = vmatpush2.xpose.msra.mxu0 0.0
    %552 = vmatprep.subr.mxu0 0.0
    %553 = vmatpush2.xpose.msra.mxu0 0.0
    %554 = vmatprep.subr.mxu0 0.0
    %555 = vmatpush2.xpose.msra.mxu0 0.0
    %556 = vmatprep.subr.mxu0 0.0
    %557 = vmatpush2.xpose.msra.mxu0 0.0
    %558 = vmatprep.subr.mxu0 0.0
    %559 = vmatpush2.xpose.msra.mxu0 0.0
    %560 = vmatprep.subr.mxu0 0.0
    %561 = vmatpush2.xpose.msra.mxu0 0.0
    %562 = vmatprep.subr.mxu0 0.0
    %563 = vmatpush2.xpose.msra.mxu0 0.0
    %564 = vmatprep.subr.mxu0 0.0
    %565 = vmatpush2.xpose.msra.mxu0 0.0
    %566 = vmatprep.mubr.f32.mxu0 0.0
    %567 = vmatmul.mubr.f32.gmra.mxu0 %v498
    %v568 = vpop.f32.mrf.mxu0
    %v569 = vadd.f32 0.0, %v568
    %v570 = vpop.f32.mrf.mxu0
    %571 = vdwg.mxu0
    %v572 = vmul.f32 %v569, 0.35355338
    %v573 = vadd.f32 %v572, %v370
    %v574 = vsel %vm497, %v573, -inf
    %575 = vmax.xlane.f32.xlu0 %v574
    %v576 = vpop.xlane.xlu0 %575
    %v577 = vsub.f32 %v573, %v576
    %v578 = vmul.f32 %v577, 1.442695
    %v579 = vpow.pop %v578
    %v580 = vsel %vm497, %v579, 0.0
    %581 = vadd.xlane.f32.xlu0 %v580
    %v582 = vpop.xlane.xlu0 %581
    %v583 = vrcp.pop %v582
    %v584 = vmul.f32 %v579, %v583
    %585 = vrot.lane.b32.xlu0 %v486, 64
    %v586 = vpop.permute.xlu0 %585
    %v589 = vsel %vm497, %v584, 0
    %591 = vmatprep.subr.mxu0 0.0
    %592 = vmatpush1.msra.mxu0 0.0
    %593 = vmatprep.subr.mxu0 0.0
    %594 = vmatpush1.msra.mxu0 0.0
    %595 = vmatprep.subr.mxu0 0.0
    %596 = vmatpush1.msra.mxu0 0.0
    %597 = vmatprep.subr.mxu0 0.0
    %598 = vmatpush1.msra.mxu0 0.0
    %599 = vmatprep.subr.mxu0 0.0
    %600 = vmatpush1.msra.mxu0 0.0
    %601 = vmatprep.subr.mxu0 0.0
    %602 = vmatpush1.msra.mxu0 0.0
    %603 = vmatprep.subr.mxu0 0.0
    %604 = vmatpush1.msra.mxu0 0.0
    %605 = vmatprep.subr.mxu0 0.0
    %606 = vmatpush1.msra.mxu0 0.0
    %607 = vmatprep.subr.mxu0 0.0
    %608 = vmatpush1.msra.mxu0 0.0
    %609 = vmatprep.subr.mxu0 0.0
    %610 = vmatpush1.msra.mxu0 0.0
    %611 = vmatprep.subr.mxu0 0.0
    %612 = vmatpush1.msra.mxu0 0.0
    %613 = vmatprep.subr.mxu0 0.0
    %614 = vmatpush1.msra.mxu0 0.0
    %615 = vmatprep.subr.mxu0 0.0
    %616 = vmatpush1.msra.mxu0 0.0
    %617 = vmatprep.subr.mxu0 0.0
    %618 = vmatpush1.msra.mxu0 0.0
    %619 = vmatprep.subr.mxu0 0.0
    %620 = vmatpush1.msra.mxu0 0.0
    %621 = vmatprep.subr.mxu0 0.0
    %622 = vmatpush1.msra.mxu0 %v586
    %623 = vmatprep.subr.mxu0 0.0
    %624 = vmatpush2.msra.mxu0 0.0
    %625 = vmatprep.subr.mxu0 0.0
    %626 = vmatpush2.msra.mxu0 0.0
    %627 = vmatprep.subr.mxu0 0.0
    %628 = vmatpush2.msra.mxu0 0.0
    %629 = vmatprep.subr.mxu0 0.0
    %630 = vmatpush2.msra.mxu0 0.0
    %631 = vmatprep.subr.mxu0 0.0
    %632 = vmatpush2.msra.mxu0 0.0
    %633 = vmatprep.subr.mxu0 0.0
    %634 = vmatpush2.msra.mxu0 0.0
    %635 = vmatprep.subr.mxu0 0.0
    %636 = vmatpush2.msra.mxu0 0.0
    %637 = vmatprep.subr.mxu0 0.0
    %638 = vmatpush2.msra.mxu0 0.0
    %639 = vmatprep.subr.mxu0 0.0
    %640 = vmatpush2.msra.mxu0 0.0
    %641 = vmatprep.subr.mxu0 0.0
    %642 = vmatpush2.msra.mxu0 0.0
    %643 = vmatprep.subr.mxu0 0.0
    %644 = vmatpush2.msra.mxu0 0.0
    %645 = vmatprep.subr.mxu0 0.0
    %646 = vmatpush2.msra.mxu0 0.0
    %647 = vmatprep.subr.mxu0 0.0
    %648 = vmatpush2.msra.mxu0 0.0
    %649 = vmatprep.subr.mxu0 0.0
    %650 = vmatpush2.msra.mxu0 0.0
    %651 = vmatprep.subr.mxu0 0.0
    %652 = vmatpush2.msra.mxu0 0.0
    %653 = vmatprep.subr.mxu0 0.0
    %654 = vmatpush2.msra.mxu0 0.0
    %655 = vmatprep.mubr.f32.mxu0 0.0
    %656 = vmatmul.mubr.f32.gmra.mxu0 %v589
    %v657 = vpop.f32.mrf.mxu0
    %v658 = vadd.f32 0.0, %v657
    %v659 = vpop.f32.mrf.mxu0
    %660 = vdwg.mxu0
    %661 = vst.msk [vmem:[#allocation2] sm:$0xff] %vm497, %v658
    %662 = vrot.lane.b32.xlu0 %v486, 120
    %v663 = vpop.permute.xlu0 %662
    %664 = vrot.lane.b32.xlu0 %v486, 88
    %v665 = vpop.permute.xlu0 %664
    %v666 = vsel %vm497, %v663, 0
    %v668 = vsel %vm497, %v665, 0
    %670 = vmatprep.subr.mxu0 0.0
    %671 = vmatpush1.xpose.msra.mxu0 0.0
    %672 = vmatprep.subr.mxu0 0.0
    %673 = vmatpush1.xpose.msra.mxu0 0.0
    %674 = vmatprep.subr.mxu0 0.0
    %675 = vmatpush1.xpose.msra.mxu0 0.0
    %676 = vmatprep.subr.mxu0 0.0
    %677 = vmatpush1.xpose.msra.mxu0 0.0
    %678 = vmatprep.subr.mxu0 0.0
    %679 = vmatpush1.xpose.msra.mxu0 0.0
    %680 = vmatprep.subr.mxu0 0.0
    %681 = vmatpush1.xpose.msra.mxu0 0.0
    %682 = vmatprep.subr.mxu0 0.0
    %683 = vmatpush1.xpose.msra.mxu0 0.0
    %684 = vmatprep.subr.mxu0 0.0
    %685 = vmatpush1.xpose.msra.mxu0 0.0
    %686 = vmatprep.subr.mxu0 0.0
    %687 = vmatpush1.xpose.msra.mxu0 0.0
    %688 = vmatprep.subr.mxu0 0.0
    %689 = vmatpush1.xpose.msra.mxu0 0.0
    %690 = vmatprep.subr.mxu0 0.0
    %691 = vmatpush1.xpose.msra.mxu0 0.0
    %692 = vmatprep.subr.mxu0 0.0
    %693 = vmatpush1.xpose.msra.mxu0 0.0
    %694 = vmatprep.subr.mxu0 0.0
    %695 = vmatpush1.xpose.msra.mxu0 0.0
    %696 = vmatprep.subr.mxu0 0.0
    %697 = vmatpush1.xpose.msra.mxu0 0.0
    %698 = vmatprep.subr.mxu0 0.0
    %699 = vmatpush1.xpose.msra.mxu0 0.0
    %700 = vmatprep.subr.mxu0 0.0
    %701 = vmatpush1.xpose.msra.mxu0 %v668
    %702 = vmatprep.subr.mxu0 0.0
    %703 = vmatpush2.xpose.msra.mxu0 0.0
    %704 = vmatprep.subr.mxu0 0.0
    %705 = vmatpush2.xpose.msra.mxu0 0.0
    %706 = vmatprep.subr.mxu0 0.0
    %707 = vmatpush2.xpose.msra.mxu0 0.0
    %708 = vmatprep.subr.mxu0 0.0
    %709 = vmatpush2.xpose.msra.mxu0 0.0
    %710 = vmatprep.subr.mxu0 0.0
    %711 = vmatpush2.xpose.msra.mxu0 0.0
    %712 = vmatprep.subr.mxu0 0.0
    %713 = vmatpush2.xpose.msra.mxu0 0.0
    %714 = vmatprep.subr.mxu0 0.0
    %715 = vmatpush2.xpose.msra.mxu0 0.0
    %716 = vmatprep.subr.mxu0 0.0
    %717 = vmatpush2.xpose.msra.mxu0 0.0
    %718 = vmatprep.subr.mxu0 0.0
    %719 = vmatpush2.xpose.msra.mxu0 0.0
    %720 = vmatprep.subr.mxu0 0.0
    %721 = vmatpush2.xpose.msra.mxu0 0.0
    %722 = vmatprep.subr.mxu0 0.0
    %723 = vmatpush2.xpose.msra.mxu0 0.0
    %724 = vmatprep.subr.mxu0 0.0
    %725 = vmatpush2.xpose.msra.mxu0 0.0
    %726 = vmatprep.subr.mxu0 0.0
    %727 = vmatpush2.xpose.msra.mxu0 0.0
    %728 = vmatprep.subr.mxu0 0.0
    %729 = vmatpush2.xpose.msra.mxu0 0.0
    %730 = vmatprep.subr.mxu0 0.0
    %731 = vmatpush2.xpose.msra.mxu0 0.0
    %732 = vmatprep.subr.mxu0 0.0
    %733 = vmatpush2.xpose.msra.mxu0 0.0
    %734 = vmatprep.mubr.f32.mxu0 0.0
    %735 = vmatmul.mubr.f32.gmra.mxu0 %v666
    %v736 = vpop.f32.mrf.mxu0
    %v737 = vadd.f32 0.0, %v736
    %v738 = vpop.f32.mrf.mxu0
    %739 = vdwg.mxu0
    %v740 = vmul.f32 %v737, 0.35355338
    %v741 = vadd.f32 %v740, %v370
    %v742 = vsel %vm497, %v741, -inf
    %743 = vmax.xlane.f32.xlu0 %v742
    %v744 = vpop.xlane.xlu0 %743
    %v745 = vsub.f32 %v741, %v744
    %v746 = vmul.f32 %v745, 1.442695
    %v747 = vpow.pop %v746
    %v748 = vsel %vm497, %v747, 0.0
    %749 = vadd.xlane.f32.xlu0 %v748
    %v750 = vpop.xlane.xlu0 %749
    %v751 = vrcp.pop %v750
    %v752 = vmul.f32 %v747, %v751
    %753 = vrot.lane.b32.xlu0 %v486, 56
    %v754 = vpop.permute.xlu0 %753
    %v757 = vsel %vm497, %v752, 0
    %759 = vmatprep.subr.mxu0 0.0
    %760 = vmatpush1.msra.mxu0 0.0
    %761 = vmatprep.subr.mxu0 0.0
    %762 = vmatpush1.msra.mxu0 0.0
    %763 = vmatprep.subr.mxu0 0.0
    %764 = vmatpush1.msra.mxu0 0.0
    %765 = vmatprep.subr.mxu0 0.0
    %766 = vmatpush1.msra.mxu0 0.0
    %767 = vmatprep.subr.mxu0 0.0
    %768 = vmatpush1.msra.mxu0 0.0
    %769 = vmatprep.subr.mxu0 0.0
    %770 = vmatpush1.msra.mxu0 0.0
    %771 = vmatprep.subr.mxu0 0.0
    %772 = vmatpush1.msra.mxu0 0.0
    %773 = vmatprep.subr.mxu0 0.0
    %774 = vmatpush1.msra.mxu0 0.0
    %775 = vmatprep.subr.mxu0 0.0
    %776 = vmatpush1.msra.mxu0 0.0
    %777 = vmatprep.subr.mxu0 0.0
    %778 = vmatpush1.msra.mxu0 0.0
    %779 = vmatprep.subr.mxu0 0.0
    %780 = vmatpush1.msra.mxu0 0.0
    %781 = vmatprep.subr.mxu0 0.0
    %782 = vmatpush1.msra.mxu0 0.0
    %783 = vmatprep.subr.mxu0 0.0
    %784 = vmatpush1.msra.mxu0 0.0
    %785 = vmatprep.subr.mxu0 0.0
    %786 = vmatpush1.msra.mxu0 0.0
    %787 = vmatprep.subr.mxu0 0.0
    %788 = vmatpush1.msra.mxu0 0.0
    %789 = vmatprep.subr.mxu0 0.0
    %790 = vmatpush1.msra.mxu0 %v754
    %791 = vmatprep.subr.mxu0 0.0
    %792 = vmatpush2.msra.mxu0 0.0
    %793 = vmatprep.subr.mxu0 0.0
    %794 = vmatpush2.msra.mxu0 0.0
    %795 = vmatprep.subr.mxu0 0.0
    %796 = vmatpush2.msra.mxu0 0.0
    %797 = vmatprep.subr.mxu0 0.0
    %798 = vmatpush2.msra.mxu0 0.0
    %799 = vmatprep.subr.mxu0 0.0
    %800 = vmatpush2.msra.mxu0 0.0
    %801 = vmatprep.subr.mxu0 0.0
    %802 = vmatpush2.msra.mxu0 0.0
    %803 = vmatprep.subr.mxu0 0.0
    %804 = vmatpush2.msra.mxu0 0.0
    %805 = vmatprep.subr.mxu0 0.0
    %806 = vmatpush2.msra.mxu0 0.0
    %807 = vmatprep.subr.mxu0 0.0
    %808 = vmatpush2.msra.mxu0 0.0
    %809 = vmatprep.subr.mxu0 0.0
    %810 = vmatpush2.msra.mxu0 0.0
    %811 = vmatprep.subr.mxu0 0.0
    %812 = vmatpush2.msra.mxu0 0.0
    %813 = vmatprep.subr.mxu0 0.0
    %814 = vmatpush2.msra.mxu0 0.0
    %815 = vmatprep.subr.mxu0 0.0
    %816 = vmatpush2.msra.mxu0 0.0
    %817 = vmatprep.subr.mxu0 0.0
    %818 = vmatpush2.msra.mxu0 0.0
    %819 = vmatprep.subr.mxu0 0.0
    %820 = vmatpush2.msra.mxu0 0.0
    %821 = vmatprep.subr.mxu0 0.0
    %822 = vmatpush2.msra.mxu0 0.0
    %823 = vmatprep.mubr.f32.mxu0 0.0
    %824 = vmatmul.mubr.f32.gmra.mxu0 %v757
    %v825 = vpop.f32.mrf.mxu0
    %v826 = vadd.f32 0.0, %v825
    %v827 = vpop.f32.mrf.mxu0
    %828 = vdwg.mxu0
    %830 = vrot.lane.b32.xlu0 %v826, 8
    %v831 = vpop.permute.xlu0 %830
    %vm833 = vcmask 130112
    %834 = vst.msk [vmem:[#allocation2] sm:$0xff] %vm833, %v831
    %835 = vrot.lane.b32.xlu0 %v486, 112
    %v836 = vpop.permute.xlu0 %835
    %837 = vrot.lane.b32.xlu0 %v486, 80
    %v838 = vpop.permute.xlu0 %837
    %v839 = vsel %vm497, %v836, 0
    %v841 = vsel %vm497, %v838, 0
    %843 = vmatprep.subr.mxu0 0.0
    %844 = vmatpush1.xpose.msra.mxu0 0.0
    %845 = vmatprep.subr.mxu0 0.0
    %846 = vmatpush1.xpose.msra.mxu0 0.0
    %847 = vmatprep.subr.mxu0 0.0
    %848 = vmatpush1.xpose.msra.mxu0 0.0
    %849 = vmatprep.subr.mxu0 0.0
    %850 = vmatpush1.xpose.msra.mxu0 0.0
    %851 = vmatprep.subr.mxu0 0.0
    %852 = vmatpush1.xpose.msra.mxu0 0.0
    %853 = vmatprep.subr.mxu0 0.0
    %854 = vmatpush1.xpose.msra.mxu0 0.0
    %855 = vmatprep.subr.mxu0 0.0
    %856 = vmatpush1.xpose.msra.mxu0 0.0
    %857 = vmatprep.subr.mxu0 0.0
    %858 = vmatpush1.xpose.msra.mxu0 0.0
    %859 = vmatprep.subr.mxu0 0.0
    %860 = vmatpush1.xpose.msra.mxu0 0.0
    %861 = vmatprep.subr.mxu0 0.0
    %862 = vmatpush1.xpose.msra.mxu0 0.0
    %863 = vmatprep.subr.mxu0 0.0
    %864 = vmatpush1.xpose.msra.mxu0 0.0
    %865 = vmatprep.subr.mxu0 0.0
    %866 = vmatpush1.xpose.msra.mxu0 0.0
    %867 = vmatprep.subr.mxu0 0.0
    %868 = vmatpush1.xpose.msra.mxu0 0.0
    %869 = vmatprep.subr.mxu0 0.0
    %870 = vmatpush1.xpose.msra.mxu0 0.0
    %871 = vmatprep.subr.mxu0 0.0
    %872 = vmatpush1.xpose.msra.mxu0 0.0
    %873 = vmatprep.subr.mxu0 0.0
    %874 = vmatpush1.xpose.msra.mxu0 %v841
    %875 = vmatprep.subr.mxu0 0.0
    %876 = vmatpush2.xpose.msra.mxu0 0.0
    %877 = vmatprep.subr.mxu0 0.0
    %878 = vmatpush2.xpose.msra.mxu0 0.0
    %879 = vmatprep.subr.mxu0 0.0
    %880 = vmatpush2.xpose.msra.mxu0 0.0
    %881 = vmatprep.subr.mxu0 0.0
    %882 = vmatpush2.xpose.msra.mxu0 0.0
    %883 = vmatprep.subr.mxu0 0.0
    %884 = vmatpush2.xpose.msra.mxu0 0.0
    %885 = vmatprep.subr.mxu0 0.0
    %886 = vmatpush2.xpose.msra.mxu0 0.0
    %887 = vmatprep.subr.mxu0 0.0
    %888 = vmatpush2.xpose.msra.mxu0 0.0
    %889 = vmatprep.subr.mxu0 0.0
    %890 = vmatpush2.xpose.msra.mxu0 0.0
    %891 = vmatprep.subr.mxu0 0.0
    %892 = vmatpush2.xpose.msra.mxu0 0.0
    %893 = vmatprep.subr.mxu0 0.0
    %894 = vmatpush2.xpose.msra.mxu0 0.0
    %895 = vmatprep.subr.mxu0 0.0
    %896 = vmatpush2.xpose.msra.mxu0 0.0
    %897 = vmatprep.subr.mxu0 0.0
    %898 = vmatpush2.xpose.msra.mxu0 0.0
    %899 = vmatprep.subr.mxu0 0.0
    %900 = vmatpush2.xpose.msra.mxu0 0.0
    %901 = vmatprep.subr.mxu0 0.0
    %902 = vmatpush2.xpose.msra.mxu0 0.0
    %903 = vmatprep.subr.mxu0 0.0
    %904 = vmatpush2.xpose.msra.mxu0 0.0
    %905 = vmatprep.subr.mxu0 0.0
    %906 = vmatpush2.xpose.msra.mxu0 0.0
    %907 = vmatprep.mubr.f32.mxu0 0.0
    %908 = vmatmul.mubr.f32.gmra.mxu0 %v839
    %v909 = vpop.f32.mrf.mxu0
    %v910 = vadd.f32 0.0, %v909
    %v911 = vpop.f32.mrf.mxu0
    %912 = vdwg.mxu0
    %v913 = vmul.f32 %v910, 0.35355338
    %v914 = vadd.f32 %v913, %v370
    %v915 = vsel %vm497, %v914, -inf
    %916 = vmax.xlane.f32.xlu0 %v915
    %v917 = vpop.xlane.xlu0 %916
    %v918 = vsub.f32 %v914, %v917
    %v919 = vmul.f32 %v918, 1.442695
    %v920 = vpow.pop %v919
    %v921 = vsel %vm497, %v920, 0.0
    %922 = vadd.xlane.f32.xlu0 %v921
    %v923 = vpop.xlane.xlu0 %922
    %v924 = vrcp.pop %v923
    %v925 = vmul.f32 %v920, %v924
    %926 = vrot.lane.b32.xlu0 %v486, 48
    %v927 = vpop.permute.xlu0 %926
    %v930 = vsel %vm497, %v925, 0
    %932 = vmatprep.subr.mxu0 0.0
    %933 = vmatpush1.msra.mxu0 0.0
    %934 = vmatprep.subr.mxu0 0.0
    %935 = vmatpush1.msra.mxu0 0.0
    %936 = vmatprep.subr.mxu0 0.0
    %937 = vmatpush1.msra.mxu0 0.0
    %938 = vmatprep.subr.mxu0 0.0
    %939 = vmatpush1.msra.mxu0 0.0
    %940 = vmatprep.subr.mxu0 0.0
    %941 = vmatpush1.msra.mxu0 0.0
    %942 = vmatprep.subr.mxu0 0.0
    %943 = vmatpush1.msra.mxu0 0.0
    %944 = vmatprep.subr.mxu0 0.0
    %945 = vmatpush1.msra.mxu0 0.0
    %946 = vmatprep.subr.mxu0 0.0
    %947 = vmatpush1.msra.mxu0 0.0
    %948 = vmatprep.subr.mxu0 0.0
    %949 = vmatpush1.msra.mxu0 0.0
    %950 = vmatprep.subr.mxu0 0.0
    %951 = vmatpush1.msra.mxu0 0.0
    %952 = vmatprep.subr.mxu0 0.0
    %953 = vmatpush1.msra.mxu0 0.0
    %954 = vmatprep.subr.mxu0 0.0
    %955 = vmatpush1.msra.mxu0 0.0
    %956 = vmatprep.subr.mxu0 0.0
    %957 = vmatpush1.msra.mxu0 0.0
    %958 = vmatprep.subr.mxu0 0.0
    %959 = vmatpush1.msra.mxu0 0.0
    %960 = vmatprep.subr.mxu0 0.0
    %961 = vmatpush1.msra.mxu0 0.0
    %962 = vmatprep.subr.mxu0 0.0
    %963 = vmatpush1.msra.mxu0 %v927
    %964 = vmatprep.subr.mxu0 0.0
    %965 = vmatpush2.msra.mxu0 0.0
    %966 = vmatprep.subr.mxu0 0.0
    %967 = vmatpush2.msra.mxu0 0.0
    %968 = vmatprep.subr.mxu0 0.0
    %969 = vmatpush2.msra.mxu0 0.0
    %970 = vmatprep.subr.mxu0 0.0
    %971 = vmatpush2.msra.mxu0 0.0
    %972 = vmatprep.subr.mxu0 0.0
    %973 = vmatpush2.msra.mxu0 0.0
    %974 = vmatprep.subr.mxu0 0.0
    %975 = vmatpush2.msra.mxu0 0.0
    %976 = vmatprep.subr.mxu0 0.0
    %977 = vmatpush2.msra.mxu0 0.0
    %978 = vmatprep.subr.mxu0 0.0
    %979 = vmatpush2.msra.mxu0 0.0
    %980 = vmatprep.subr.mxu0 0.0
    %981 = vmatpush2.msra.mxu0 0.0
    %982 = vmatprep.subr.mxu0 0.0
    %983 = vmatpush2.msra.mxu0 0.0
    %984 = vmatprep.subr.mxu0 0.0
    %985 = vmatpush2.msra.mxu0 0.0
    %986 = vmatprep.subr.mxu0 0.0
    %987 = vmatpush2.msra.mxu0 0.0
    %988 = vmatprep.subr.mxu0 0.0
    %989 = vmatpush2.msra.mxu0 0.0
    %990 = vmatprep.subr.mxu0 0.0
    %991 = vmatpush2.msra.mxu0 0.0
    %992 = vmatprep.subr.mxu0 0.0
    %993 = vmatpush2.msra.mxu0 0.0
    %994 = vmatprep.subr.mxu0 0.0
    %995 = vmatpush2.msra.mxu0 0.0
    %996 = vmatprep.mubr.f32.mxu0 0.0
    %997 = vmatmul.mubr.f32.gmra.mxu0 %v930
    %v998 = vpop.f32.mrf.mxu0
    %v999 = vadd.f32 0.0, %v998
    %v1000 = vpop.f32.mrf.mxu0
    %1001 = vdwg.mxu0
    %1003 = vrot.lane.b32.xlu0 %v999, 16
    %v1004 = vpop.permute.xlu0 %1003
    %vm1006 = vcmask 195712
    %1007 = vst.msk [vmem:[#allocation2] sm:$0xff] %vm1006, %v1004
    %1008 = vrot.lane.b32.xlu0 %v486, 104
    %v1009 = vpop.permute.xlu0 %1008
    %1010 = vrot.lane.b32.xlu0 %v486, 72
    %v1011 = vpop.permute.xlu0 %1010
    %v1012 = vsel %vm497, %v1009, 0
    %v1014 = vsel %vm497, %v1011, 0
    %1016 = vmatprep.subr.mxu0 0.0
    %1017 = vmatpush1.xpose.msra.mxu0 0.0
    %1018 = vmatprep.subr.mxu0 0.0
    %1019 = vmatpush1.xpose.msra.mxu0 0.0
    %1020 = vmatprep.subr.mxu0 0.0
    %1021 = vmatpush1.xpose.msra.mxu0 0.0
    %1022 = vmatprep.subr.mxu0 0.0
    %1023 = vmatpush1.xpose.msra.mxu0 0.0
    %1024 = vmatprep.subr.mxu0 0.0
    %1025 = vmatpush1.xpose.msra.mxu0 0.0
    %1026 = vmatprep.subr.mxu0 0.0
    %1027 = vmatpush1.xpose.msra.mxu0 0.0
    %1028 = vmatprep.subr.mxu0 0.0
    %1029 = vmatpush1.xpose.msra.mxu0 0.0
    %1030 = vmatprep.subr.mxu0 0.0
    %1031 = vmatpush1.xpose.msra.mxu0 0.0
    %1032 = vmatprep.subr.mxu0 0.0
    %1033 = vmatpush1.xpose.msra.mxu0 0.0
    %1034 = vmatprep.subr.mxu0 0.0
    %1035 = vmatpush1.xpose.msra.mxu0 0.0
    %1036 = vmatprep.subr.mxu0 0.0
    %1037 = vmatpush1.xpose.msra.mxu0 0.0
    %1038 = vmatprep.subr.mxu0 0.0
    %1039 = vmatpush1.xpose.msra.mxu0 0.0
    %1040 = vmatprep.subr.mxu0 0.0
    %1041 = vmatpush1.xpose.msra.mxu0 0.0
    %1042 = vmatprep.subr.mxu0 0.0
    %1043 = vmatpush1.xpose.msra.mxu0 0.0
    %1044 = vmatprep.subr.mxu0 0.0
    %1045 = vmatpush1.xpose.msra.mxu0 0.0
    %1046 = vmatprep.subr.mxu0 0.0
    %1047 = vmatpush1.xpose.msra.mxu0 %v1014
    %1048 = vmatprep.subr.mxu0 0.0
    %1049 = vmatpush2.xpose.msra.mxu0 0.0
    %1050 = vmatprep.subr.mxu0 0.0
    %1051 = vmatpush2.xpose.msra.mxu0 0.0
    %1052 = vmatprep.subr.mxu0 0.0
    %1053 = vmatpush2.xpose.msra.mxu0 0.0
    %1054 = vmatprep.subr.mxu0 0.0
    %1055 = vmatpush2.xpose.msra.mxu0 0.0
    %1056 = vmatprep.subr.mxu0 0.0
    %1057 = vmatpush2.xpose.msra.mxu0 0.0
    %1058 = vmatprep.subr.mxu0 0.0
    %1059 = vmatpush2.xpose.msra.mxu0 0.0
    %1060 = vmatprep.subr.mxu0 0.0
    %1061 = vmatpush2.xpose.msra.mxu0 0.0
    %1062 = vmatprep.subr.mxu0 0.0
    %1063 = vmatpush2.xpose.msra.mxu0 0.0
    %1064 = vmatprep.subr.mxu0 0.0
    %1065 = vmatpush2.xpose.msra.mxu0 0.0
    %1066 = vmatprep.subr.mxu0 0.0
    %1067 = vmatpush2.xpose.msra.mxu0 0.0
    %1068 = vmatprep.subr.mxu0 0.0
    %1069 = vmatpush2.xpose.msra.mxu0 0.0
    %1070 = vmatprep.subr.mxu0 0.0
    %1071 = vmatpush2.xpose.msra.mxu0 0.0
    %1072 = vmatprep.subr.mxu0 0.0
    %1073 = vmatpush2.xpose.msra.mxu0 0.0
    %1074 = vmatprep.subr.mxu0 0.0
    %1075 = vmatpush2.xpose.msra.mxu0 0.0
    %1076 = vmatprep.subr.mxu0 0.0
    %1077 = vmatpush2.xpose.msra.mxu0 0.0
    %1078 = vmatprep.subr.mxu0 0.0
    %1079 = vmatpush2.xpose.msra.mxu0 0.0
    %1080 = vmatprep.mubr.f32.mxu0 0.0
    %1081 = vmatmul.mubr.f32.gmra.mxu0 %v1012
    %v1082 = vpop.f32.mrf.mxu0
    %v1083 = vadd.f32 0.0, %v1082
    %v1084 = vpop.f32.mrf.mxu0
    %1085 = vdwg.mxu0
    %v1086 = vmul.f32 %v1083, 0.35355338
    %v1087 = vadd.f32 %v1086, %v370
    %v1088 = vsel %vm497, %v1087, -inf
    %1089 = vmax.xlane.f32.xlu0 %v1088
    %v1090 = vpop.xlane.xlu0 %1089
    %v1091 = vsub.f32 %v1087, %v1090
    %v1092 = vmul.f32 %v1091, 1.442695
    %v1093 = vpow.pop %v1092
    %v1094 = vsel %vm497, %v1093, 0.0
    %1095 = vadd.xlane.f32.xlu0 %v1094
    %v1096 = vpop.xlane.xlu0 %1095
    %v1097 = vrcp.pop %v1096
    %v1098 = vmul.f32 %v1093, %v1097
    %1099 = vrot.lane.b32.xlu0 %v486, 40
    %v1100 = vpop.permute.xlu0 %1099
    %v1103 = vsel %vm497, %v1098, 0
    %1105 = vmatprep.subr.mxu0 0.0
    %1106 = vmatpush1.msra.mxu0 0.0
    %1107 = vmatprep.subr.mxu0 0.0
    %1108 = vmatpush1.msra.mxu0 0.0
    %1109 = vmatprep.subr.mxu0 0.0
    %1110 = vmatpush1.msra.mxu0 0.0
    %1111 = vmatprep.subr.mxu0 0.0
    %1112 = vmatpush1.msra.mxu0 0.0
    %1113 = vmatprep.subr.mxu0 0.0
    %1114 = vmatpush1.msra.mxu0 0.0
    %1115 = vmatprep.subr.mxu0 0.0
    %1116 = vmatpush1.msra.mxu0 0.0
    %1117 = vmatprep.subr.mxu0 0.0
    %1118 = vmatpush1.msra.mxu0 0.0
    %1119 = vmatprep.subr.mxu0 0.0
    %1120 = vmatpush1.msra.mxu0 0.0
    %1121 = vmatprep.subr.mxu0 0.0
    %1122 = vmatpush1.msra.mxu0 0.0
    %1123 = vmatprep.subr.mxu0 0.0
    %1124 = vmatpush1.msra.mxu0 0.0
    %1125 = vmatprep.subr.mxu0 0.0
    %1126 = vmatpush1.msra.mxu0 0.0
    %1127 = vmatprep.subr.mxu0 0.0
    %1128 = vmatpush1.msra.mxu0 0.0
    %1129 = vmatprep.subr.mxu0 0.0
    %1130 = vmatpush1.msra.mxu0 0.0
    %1131 = vmatprep.subr.mxu0 0.0
    %1132 = vmatpush1.msra.mxu0 0.0
    %1133 = vmatprep.subr.mxu0 0.0
    %1134 = vmatpush1.msra.mxu0 0.0
    %1135 = vmatprep.subr.mxu0 0.0
    %1136 = vmatpush1.msra.mxu0 %v1100
    %1137 = vmatprep.subr.mxu0 0.0
    %1138 = vmatpush2.msra.mxu0 0.0
    %1139 = vmatprep.subr.mxu0 0.0
    %1140 = vmatpush2.msra.mxu0 0.0
    %1141 = vmatprep.subr.mxu0 0.0
    %1142 = vmatpush2.msra.mxu0 0.0
    %1143 = vmatprep.subr.mxu0 0.0
    %1144 = vmatpush2.msra.mxu0 0.0
    %1145 = vmatprep.subr.mxu0 0.0
    %1146 = vmatpush2.msra.mxu0 0.0
    %1147 = vmatprep.subr.mxu0 0.0
    %1148 = vmatpush2.msra.mxu0 0.0
    %1149 = vmatprep.subr.mxu0 0.0
    %1150 = vmatpush2.msra.mxu0 0.0
    %1151 = vmatprep.subr.mxu0 0.0
    %1152 = vmatpush2.msra.mxu0 0.0
    %1153 = vmatprep.subr.mxu0 0.0
    %1154 = vmatpush2.msra.mxu0 0.0
    %1155 = vmatprep.subr.mxu0 0.0
    %1156 = vmatpush2.msra.mxu0 0.0
    %1157 = vmatprep.subr.mxu0 0.0
    %1158 = vmatpush2.msra.mxu0 0.0
    %1159 = vmatprep.subr.mxu0 0.0
    %1160 = vmatpush2.msra.mxu0 0.0
    %1161 = vmatprep.subr.mxu0 0.0
    %1162 = vmatpush2.msra.mxu0 0.0
    %1163 = vmatprep.subr.mxu0 0.0
    %1164 = vmatpush2.msra.mxu0 0.0
    %1165 = vmatprep.subr.mxu0 0.0
    %1166 = vmatpush2.msra.mxu0 0.0
    %1167 = vmatprep.subr.mxu0 0.0
    %1168 = vmatpush2.msra.mxu0 0.0
    %1169 = vmatprep.mubr.f32.mxu0 0.0
    %1170 = vmatmul.mubr.f32.gmra.mxu0 %v1103
    %v1171 = vpop.f32.mrf.mxu0
    %v1172 = vadd.f32 0.0, %v1171
    %v1173 = vpop.f32.mrf.mxu0
    %1174 = vdwg.mxu0
    %1176 = vrot.lane.b32.xlu0 %v1172, 24
    %v1177 = vpop.permute.xlu0 %1176
    %vm1179 = vcmask 261312
    %1180 = vst.msk [vmem:[#allocation2] sm:$0xff] %vm1179, %v1177
    %1182 = vrot.lane.b32.xlu0 %v491, 96
    %v1183 = vpop.permute.xlu0 %1182
    %v1184 = vsel %vm497, %v491, 0
    %v1186 = vsel %vm497, %v1183, 0
    %1188 = vmatprep.subr.mxu0 0.0
    %1189 = vmatpush1.xpose.msra.mxu0 0.0
    %1190 = vmatprep.subr.mxu0 0.0
    %1191 = vmatpush1.xpose.msra.mxu0 0.0
    %1192 = vmatprep.subr.mxu0 0.0
    %1193 = vmatpush1.xpose.msra.mxu0 0.0
    %1194 = vmatprep.subr.mxu0 0.0
    %1195 = vmatpush1.xpose.msra.mxu0 0.0
    %1196 = vmatprep.subr.mxu0 0.0
    %1197 = vmatpush1.xpose.msra.mxu0 0.0
    %1198 = vmatprep.subr.mxu0 0.0
    %1199 = vmatpush1.xpose.msra.mxu0 0.0
    %1200 = vmatprep.subr.mxu0 0.0
    %1201 = vmatpush1.xpose.msra.mxu0 0.0
    %1202 = vmatprep.subr.mxu0 0.0
    %1203 = vmatpush1.xpose.msra.mxu0 0.0
    %1204 = vmatprep.subr.mxu0 0.0
    %1205 = vmatpush1.xpose.msra.mxu0 0.0
    %1206 = vmatprep.subr.mxu0 0.0
    %1207 = vmatpush1.xpose.msra.mxu0 0.0
    %1208 = vmatprep.subr.mxu0 0.0
    %1209 = vmatpush1.xpose.msra.mxu0 0.0
    %1210 = vmatprep.subr.mxu0 0.0
    %1211 = vmatpush1.xpose.msra.mxu0 0.0
    %1212 = vmatprep.subr.mxu0 0.0
    %1213 = vmatpush1.xpose.msra.mxu0 0.0
    %1214 = vmatprep.subr.mxu0 0.0
    %1215 = vmatpush1.xpose.msra.mxu0 0.0
    %1216 = vmatprep.subr.mxu0 0.0
    %1217 = vmatpush1.xpose.msra.mxu0 0.0
    %1218 = vmatprep.subr.mxu0 0.0
    %1219 = vmatpush1.xpose.msra.mxu0 %v1186
    %1220 = vmatprep.subr.mxu0 0.0
    %1221 = vmatpush2.xpose.msra.mxu0 0.0
    %1222 = vmatprep.subr.mxu0 0.0
    %1223 = vmatpush2.xpose.msra.mxu0 0.0
    %1224 = vmatprep.subr.mxu0 0.0
    %1225 = vmatpush2.xpose.msra.mxu0 0.0
    %1226 = vmatprep.subr.mxu0 0.0
    %1227 = vmatpush2.xpose.msra.mxu0 0.0
    %1228 = vmatprep.subr.mxu0 0.0
    %1229 = vmatpush2.xpose.msra.mxu0 0.0
    %1230 = vmatprep.subr.mxu0 0.0
    %1231 = vmatpush2.xpose.msra.mxu0 0.0
    %1232 = vmatprep.subr.mxu0 0.0
    %1233 = vmatpush2.xpose.msra.mxu0 0.0
    %1234 = vmatprep.subr.mxu0 0.0
    %1235 = vmatpush2.xpose.msra.mxu0 0.0
    %1236 = vmatprep.subr.mxu0 0.0
    %1237 = vmatpush2.xpose.msra.mxu0 0.0
    %1238 = vmatprep.subr.mxu0 0.0
    %1239 = vmatpush2.xpose.msra.mxu0 0.0
    %1240 = vmatprep.subr.mxu0 0.0
    %1241 = vmatpush2.xpose.msra.mxu0 0.0
    %1242 = vmatprep.subr.mxu0 0.0
    %1243 = vmatpush2.xpose.msra.mxu0 0.0
    %1244 = vmatprep.subr.mxu0 0.0
    %1245 = vmatpush2.xpose.msra.mxu0 0.0
    %1246 = vmatprep.subr.mxu0 0.0
    %1247 = vmatpush2.xpose.msra.mxu0 0.0
    %1248 = vmatprep.subr.mxu0 0.0
    %1249 = vmatpush2.xpose.msra.mxu0 0.0
    %1250 = vmatprep.subr.mxu0 0.0
    %1251 = vmatpush2.xpose.msra.mxu0 0.0
    %1252 = vmatprep.mubr.f32.mxu0 0.0
    %1253 = vmatmul.mubr.f32.gmra.mxu0 %v1184
    %v1254 = vpop.f32.mrf.mxu0
    %v1255 = vadd.f32 0.0, %v1254
    %v1256 = vpop.f32.mrf.mxu0
    %1257 = vdwg.mxu0
    %v1258 = vmul.f32 %v1255, 0.35355338
    %1260 = vrot.lane.b32.xlu0 %v378, 120
    %v1261 = vpop.permute.xlu0 %1260
    %v1263 = vadd.f32 %v1258, %v1261
    %v1264 = vsel %vm497, %v1263, -inf
    %1265 = vmax.xlane.f32.xlu0 %v1264
    %v1266 = vpop.xlane.xlu0 %1265
    %v1267 = vsub.f32 %v1263, %v1266
    %v1268 = vmul.f32 %v1267, 1.442695
    %v1269 = vpow.pop %v1268
    %v1270 = vsel %vm497, %v1269, 0.0
    %1271 = vadd.xlane.f32.xlu0 %v1270
    %v1272 = vpop.xlane.xlu0 %1271
    %v1273 = vrcp.pop %v1272
    %v1274 = vmul.f32 %v1269, %v1273
    %1275 = vrot.lane.b32.xlu0 %v491, 64
    %v1276 = vpop.permute.xlu0 %1275
    %v1279 = vsel %vm497, %v1274, 0
    %1281 = vmatprep.subr.mxu0 0.0
    %1282 = vmatpush1.msra.mxu0 0.0
    %1283 = vmatprep.subr.mxu0 0.0
    %1284 = vmatpush1.msra.mxu0 0.0
    %1285 = vmatprep.subr.mxu0 0.0
    %1286 = vmatpush1.msra.mxu0 0.0
    %1287 = vmatprep.subr.mxu0 0.0
    %1288 = vmatpush1.msra.mxu0 0.0
    %1289 = vmatprep.subr.mxu0 0.0
    %1290 = vmatpush1.msra.mxu0 0.0
    %1291 = vmatprep.subr.mxu0 0.0
    %1292 = vmatpush1.msra.mxu0 0.0
    %1293 = vmatprep.subr.mxu0 0.0
    %1294 = vmatpush1.msra.mxu0 0.0
    %1295 = vmatprep.subr.mxu0 0.0
    %1296 = vmatpush1.msra.mxu0 0.0
    %1297 = vmatprep.subr.mxu0 0.0
    %1298 = vmatpush1.msra.mxu0 0.0
    %1299 = vmatprep.subr.mxu0 0.0
    %1300 = vmatpush1.msra.mxu0 0.0
    %1301 = vmatprep.subr.mxu0 0.0
    %1302 = vmatpush1.msra.mxu0 0.0
    %1303 = vmatprep.subr.mxu0 0.0
    %1304 = vmatpush1.msra.mxu0 0.0
    %1305 = vmatprep.subr.mxu0 0.0
    %1306 = vmatpush1.msra.mxu0 0.0
    %1307 = vmatprep.subr.mxu0 0.0
    %1308 = vmatpush1.msra.mxu0 0.0
    %1309 = vmatprep.subr.mxu0 0.0
    %1310 = vmatpush1.msra.mxu0 0.0
    %1311 = vmatprep.subr.mxu0 0.0
    %1312 = vmatpush1.msra.mxu0 %v1276
    %1313 = vmatprep.subr.mxu0 0.0
    %1314 = vmatpush2.msra.mxu0 0.0
    %1315 = vmatprep.subr.mxu0 0.0
    %1316 = vmatpush2.msra.mxu0 0.0
    %1317 = vmatprep.subr.mxu0 0.0
    %1318 = vmatpush2.msra.mxu0 0.0
    %1319 = vmatprep.subr.mxu0 0.0
    %1320 = vmatpush2.msra.mxu0 0.0
    %1321 = vmatprep.subr.mxu0 0.0
    %1322 = vmatpush2.msra.mxu0 0.0
    %1323 = vmatprep.subr.mxu0 0.0
    %1324 = vmatpush2.msra.mxu0 0.0
    %1325 = vmatprep.subr.mxu0 0.0
    %1326 = vmatpush2.msra.mxu0 0.0
    %1327 = vmatprep.subr.mxu0 0.0
    %1328 = vmatpush2.msra.mxu0 0.0
    %1329 = vmatprep.subr.mxu0 0.0
    %1330 = vmatpush2.msra.mxu0 0.0
    %1331 = vmatprep.subr.mxu0 0.0
    %1332 = vmatpush2.msra.mxu0 0.0
    %1333 = vmatprep.subr.mxu0 0.0
    %1334 = vmatpush2.msra.mxu0 0.0
    %1335 = vmatprep.subr.mxu0 0.0
    %1336 = vmatpush2.msra.mxu0 0.0
    %1337 = vmatprep.subr.mxu0 0.0
    %1338 = vmatpush2.msra.mxu0 0.0
    %1339 = vmatprep.subr.mxu0 0.0
    %1340 = vmatpush2.msra.mxu0 0.0
    %1341 = vmatprep.subr.mxu0 0.0
    %1342 = vmatpush2.msra.mxu0 0.0
    %1343 = vmatprep.subr.mxu0 0.0
    %1344 = vmatpush2.msra.mxu0 0.0
    %1345 = vmatprep.mubr.f32.mxu0 0.0
    %1346 = vmatmul.mubr.f32.gmra.mxu0 %v1279
    %v1347 = vpop.f32.mrf.mxu0
    %v1348 = vadd.f32 0.0, %v1347
    %v1349 = vpop.f32.mrf.mxu0
    %1350 = vdwg.mxu0
    %1351 = vst.msk [vmem:[#allocation2 + $0x8] sm:$0xff] %vm497, %v1348
    %1352 = vrot.lane.b32.xlu0 %v491, 120
    %v1353 = vpop.permute.xlu0 %1352
    %1354 = vrot.lane.b32.xlu0 %v491, 88
    %v1355 = vpop.permute.xlu0 %1354
    %v1356 = vsel %vm497, %v1353, 0
    %v1358 = vsel %vm497, %v1355, 0
    %1360 = vmatprep.subr.mxu0 0.0
    %1361 = vmatpush1.xpose.msra.mxu0 0.0
    %1362 = vmatprep.subr.mxu0 0.0
    %1363 = vmatpush1.xpose.msra.mxu0 0.0
    %1364 = vmatprep.subr.mxu0 0.0
    %1365 = vmatpush1.xpose.msra.mxu0 0.0
    %1366 = vmatprep.subr.mxu0 0.0
    %1367 = vmatpush1.xpose.msra.mxu0 0.0
    %1368 = vmatprep.subr.mxu0 0.0
    %1369 = vmatpush1.xpose.msra.mxu0 0.0
    %1370 = vmatprep.subr.mxu0 0.0
    %1371 = vmatpush1.xpose.msra.mxu0 0.0
    %1372 = vmatprep.subr.mxu0 0.0
    %1373 = vmatpush1.xpose.msra.mxu0 0.0
    %1374 = vmatprep.subr.mxu0 0.0
    %1375 = vmatpush1.xpose.msra.mxu0 0.0
    %1376 = vmatprep.subr.mxu0 0.0
    %1377 = vmatpush1.xpose.msra.mxu0 0.0
    %1378 = vmatprep.subr.mxu0 0.0
    %1379 = vmatpush1.xpose.msra.mxu0 0.0
    %1380 = vmatprep.subr.mxu0 0.0
    %1381 = vmatpush1.xpose.msra.mxu0 0.0
    %1382 = vmatprep.subr.mxu0 0.0
    %1383 = vmatpush1.xpose.msra.mxu0 0.0
    %1384 = vmatprep.subr.mxu0 0.0
    %1385 = vmatpush1.xpose.msra.mxu0 0.0
    %1386 = vmatprep.subr.mxu0 0.0
    %1387 = vmatpush1.xpose.msra.mxu0 0.0
    %1388 = vmatprep.subr.mxu0 0.0
    %1389 = vmatpush1.xpose.msra.mxu0 0.0
    %1390 = vmatprep.subr.mxu0 0.0
    %1391 = vmatpush1.xpose.msra.mxu0 %v1358
    %1392 = vmatprep.subr.mxu0 0.0
    %1393 = vmatpush2.xpose.msra.mxu0 0.0
    %1394 = vmatprep.subr.mxu0 0.0
    %1395 = vmatpush2.xpose.msra.mxu0 0.0
    %1396 = vmatprep.subr.mxu0 0.0
    %1397 = vmatpush2.xpose.msra.mxu0 0.0
    %1398 = vmatprep.subr.mxu0 0.0
    %1399 = vmatpush2.xpose.msra.mxu0 0.0
    %1400 = vmatprep.subr.mxu0 0.0
    %1401 = vmatpush2.xpose.msra.mxu0 0.0
    %1402 = vmatprep.subr.mxu0 0.0
    %1403 = vmatpush2.xpose.msra.mxu0 0.0
    %1404 = vmatprep.subr.mxu0 0.0
    %1405 = vmatpush2.xpose.msra.mxu0 0.0
    %1406 = vmatprep.subr.mxu0 0.0
    %1407 = vmatpush2.xpose.msra.mxu0 0.0
    %1408 = vmatprep.subr.mxu0 0.0
    %1409 = vmatpush2.xpose.msra.mxu0 0.0
    %1410 = vmatprep.subr.mxu0 0.0
    %1411 = vmatpush2.xpose.msra.mxu0 0.0
    %1412 = vmatprep.subr.mxu0 0.0
    %1413 = vmatpush2.xpose.msra.mxu0 0.0
    %1414 = vmatprep.subr.mxu0 0.0
    %1415 = vmatpush2.xpose.msra.mxu0 0.0
    %1416 = vmatprep.subr.mxu0 0.0
    %1417 = vmatpush2.xpose.msra.mxu0 0.0
    %1418 = vmatprep.subr.mxu0 0.0
    %1419 = vmatpush2.xpose.msra.mxu0 0.0
    %1420 = vmatprep.subr.mxu0 0.0
    %1421 = vmatpush2.xpose.msra.mxu0 0.0
    %1422 = vmatprep.subr.mxu0 0.0
    %1423 = vmatpush2.xpose.msra.mxu0 0.0
    %1424 = vmatprep.mubr.f32.mxu0 0.0
    %1425 = vmatmul.mubr.f32.gmra.mxu0 %v1356
    %v1426 = vpop.f32.mrf.mxu0
    %v1427 = vadd.f32 0.0, %v1426
    %v1428 = vpop.f32.mrf.mxu0
    %1429 = vdwg.mxu0
    %v1430 = vmul.f32 %v1427, 0.35355338
    %v1431 = vadd.f32 %v1430, %v1261
    %v1432 = vsel %vm497, %v1431, -inf
    %1433 = vmax.xlane.f32.xlu0 %v1432
    %v1434 = vpop.xlane.xlu0 %1433
    %v1435 = vsub.f32 %v1431, %v1434
    %v1436 = vmul.f32 %v1435, 1.442695
    %v1437 = vpow.pop %v1436
    %v1438 = vsel %vm497, %v1437, 0.0
    %1439 = vadd.xlane.f32.xlu0 %v1438
    %v1440 = vpop.xlane.xlu0 %1439
    %v1441 = vrcp.pop %v1440
    %v1442 = vmul.f32 %v1437, %v1441
    %1443 = vrot.lane.b32.xlu0 %v491, 56
    %v1444 = vpop.permute.xlu0 %1443
    %v1447 = vsel %vm497, %v1442, 0
    %1449 = vmatprep.subr.mxu0 0.0
    %1450 = vmatpush1.msra.mxu0 0.0
    %1451 = vmatprep.subr.mxu0 0.0
    %1452 = vmatpush1.msra.mxu0 0.0
    %1453 = vmatprep.subr.mxu0 0.0
    %1454 = vmatpush1.msra.mxu0 0.0
    %1455 = vmatprep.subr.mxu0 0.0
    %1456 = vmatpush1.msra.mxu0 0.0
    %1457 = vmatprep.subr.mxu0 0.0
    %1458 = vmatpush1.msra.mxu0 0.0
    %1459 = vmatprep.subr.mxu0 0.0
    %1460 = vmatpush1.msra.mxu0 0.0
    %1461 = vmatprep.subr.mxu0 0.0
    %1462 = vmatpush1.msra.mxu0 0.0
    %1463 = vmatprep.subr.mxu0 0.0
    %1464 = vmatpush1.msra.mxu0 0.0
    %1465 = vmatprep.subr.mxu0 0.0
    %1466 = vmatpush1.msra.mxu0 0.0
    %1467 = vmatprep.subr.mxu0 0.0
    %1468 = vmatpush1.msra.mxu0 0.0
    %1469 = vmatprep.subr.mxu0 0.0
    %1470 = vmatpush1.msra.mxu0 0.0
    %1471 = vmatprep.subr.mxu0 0.0
    %1472 = vmatpush1.msra.mxu0 0.0
    %1473 = vmatprep.subr.mxu0 0.0
    %1474 = vmatpush1.msra.mxu0 0.0
    %1475 = vmatprep.subr.mxu0 0.0
    %1476 = vmatpush1.msra.mxu0 0.0
    %1477 = vmatprep.subr.mxu0 0.0
    %1478 = vmatpush1.msra.mxu0 0.0
    %1479 = vmatprep.subr.mxu0 0.0
    %1480 = vmatpush1.msra.mxu0 %v1444
    %1481 = vmatprep.subr.mxu0 0.0
    %1482 = vmatpush2.msra.mxu0 0.0
    %1483 = vmatprep.subr.mxu0 0.0
    %1484 = vmatpush2.msra.mxu0 0.0
    %1485 = vmatprep.subr.mxu0 0.0
    %1486 = vmatpush2.msra.mxu0 0.0
    %1487 = vmatprep.subr.mxu0 0.0
    %1488 = vmatpush2.msra.mxu0 0.0
    %1489 = vmatprep.subr.mxu0 0.0
    %1490 = vmatpush2.msra.mxu0 0.0
    %1491 = vmatprep.subr.mxu0 0.0
    %1492 = vmatpush2.msra.mxu0 0.0
    %1493 = vmatprep.subr.mxu0 0.0
    %1494 = vmatpush2.msra.mxu0 0.0
    %1495 = vmatprep.subr.mxu0 0.0
    %1496 = vmatpush2.msra.mxu0 0.0
    %1497 = vmatprep.subr.mxu0 0.0
    %1498 = vmatpush2.msra.mxu0 0.0
    %1499 = vmatprep.subr.mxu0 0.0
    %1500 = vmatpush2.msra.mxu0 0.0
    %1501 = vmatprep.subr.mxu0 0.0
    %1502 = vmatpush2.msra.mxu0 0.0
    %1503 = vmatprep.subr.mxu0 0.0
    %1504 = vmatpush2.msra.mxu0 0.0
    %1505 = vmatprep.subr.mxu0 0.0
    %1506 = vmatpush2.msra.mxu0 0.0
    %1507 = vmatprep.subr.mxu0 0.0
    %1508 = vmatpush2.msra.mxu0 0.0
    %1509 = vmatprep.subr.mxu0 0.0
    %1510 = vmatpush2.msra.mxu0 0.0
    %1511 = vmatprep.subr.mxu0 0.0
    %1512 = vmatpush2.msra.mxu0 0.0
    %1513 = vmatprep.mubr.f32.mxu0 0.0
    %1514 = vmatmul.mubr.f32.gmra.mxu0 %v1447
    %v1515 = vpop.f32.mrf.mxu0
    %v1516 = vadd.f32 0.0, %v1515
    %v1517 = vpop.f32.mrf.mxu0
    %1518 = vdwg.mxu0
    %1520 = vrot.lane.b32.xlu0 %v1516, 8
    %v1521 = vpop.permute.xlu0 %1520
    %1523 = vst.msk [vmem:[#allocation2 + $0x8] sm:$0xff] %vm833, %v1521
    %1524 = vrot.lane.b32.xlu0 %v491, 112
    %v1525 = vpop.permute.xlu0 %1524
    %1526 = vrot.lane.b32.xlu0 %v491, 80
    %v1527 = vpop.permute.xlu0 %1526
    %v1528 = vsel %vm497, %v1525, 0
    %v1530 = vsel %vm497, %v1527, 0
    %1532 = vmatprep.subr.mxu0 0.0
    %1533 = vmatpush1.xpose.msra.mxu0 0.0
    %1534 = vmatprep.subr.mxu0 0.0
    %1535 = vmatpush1.xpose.msra.mxu0 0.0
    %1536 = vmatprep.subr.mxu0 0.0
    %1537 = vmatpush1.xpose.msra.mxu0 0.0
    %1538 = vmatprep.subr.mxu0 0.0
    %1539 = vmatpush1.xpose.msra.mxu0 0.0
    %1540 = vmatprep.subr.mxu0 0.0
    %1541 = vmatpush1.xpose.msra.mxu0 0.0
    %1542 = vmatprep.subr.mxu0 0.0
    %1543 = vmatpush1.xpose.msra.mxu0 0.0
    %1544 = vmatprep.subr.mxu0 0.0
    %1545 = vmatpush1.xpose.msra.mxu0 0.0
    %1546 = vmatprep.subr.mxu0 0.0
    %1547 = vmatpush1.xpose.msra.mxu0 0.0
    %1548 = vmatprep.subr.mxu0 0.0
    %1549 = vmatpush1.xpose.msra.mxu0 0.0
    %1550 = vmatprep.subr.mxu0 0.0
    %1551 = vmatpush1.xpose.msra.mxu0 0.0
    %1552 = vmatprep.subr.mxu0 0.0
    %1553 = vmatpush1.xpose.msra.mxu0 0.0
    %1554 = vmatprep.subr.mxu0 0.0
    %1555 = vmatpush1.xpose.msra.mxu0 0.0
    %1556 = vmatprep.subr.mxu0 0.0
    %1557 = vmatpush1.xpose.msra.mxu0 0.0
    %1558 = vmatprep.subr.mxu0 0.0
    %1559 = vmatpush1.xpose.msra.mxu0 0.0
    %1560 = vmatprep.subr.mxu0 0.0
    %1561 = vmatpush1.xpose.msra.mxu0 0.0
    %1562 = vmatprep.subr.mxu0 0.0
    %1563 = vmatpush1.xpose.msra.mxu0 %v1530
    %1564 = vmatprep.subr.mxu0 0.0
    %1565 = vmatpush2.xpose.msra.mxu0 0.0
    %1566 = vmatprep.subr.mxu0 0.0
    %1567 = vmatpush2.xpose.msra.mxu0 0.0
    %1568 = vmatprep.subr.mxu0 0.0
    %1569 = vmatpush2.xpose.msra.mxu0 0.0
    %1570 = vmatprep.subr.mxu0 0.0
    %1571 = vmatpush2.xpose.msra.mxu0 0.0
    %1572 = vmatprep.subr.mxu0 0.0
    %1573 = vmatpush2.xpose.msra.mxu0 0.0
    %1574 = vmatprep.subr.mxu0 0.0
    %1575 = vmatpush2.xpose.msra.mxu0 0.0
    %1576 = vmatprep.subr.mxu0 0.0
    %1577 = vmatpush2.xpose.msra.mxu0 0.0
    %1578 = vmatprep.subr.mxu0 0.0
    %1579 = vmatpush2.xpose.msra.mxu0 0.0
    %1580 = vmatprep.subr.mxu0 0.0
    %1581 = vmatpush2.xpose.msra.mxu0 0.0
    %1582 = vmatprep.subr.mxu0 0.0
    %1583 = vmatpush2.xpose.msra.mxu0 0.0
    %1584 = vmatprep.subr.mxu0 0.0
    %1585 = vmatpush2.xpose.msra.mxu0 0.0
    %1586 = vmatprep.subr.mxu0 0.0
    %1587 = vmatpush2.xpose.msra.mxu0 0.0
    %1588 = vmatprep.subr.mxu0 0.0
    %1589 = vmatpush2.xpose.msra.mxu0 0.0
    %1590 = vmatprep.subr.mxu0 0.0
    %1591 = vmatpush2.xpose.msra.mxu0 0.0
    %1592 = vmatprep.subr.mxu0 0.0
    %1593 = vmatpush2.xpose.msra.mxu0 0.0
    %1594 = vmatprep.subr.mxu0 0.0
    %1595 = vmatpush2.xpose.msra.mxu0 0.0
    %1596 = vmatprep.mubr.f32.mxu0 0.0
    %1597 = vmatmul.mubr.f32.gmra.mxu0 %v1528
    %v1598 = vpop.f32.mrf.mxu0
    %v1599 = vadd.f32 0.0, %v1598
    %v1600 = vpop.f32.mrf.mxu0
    %1601 = vdwg.mxu0
    %v1602 = vmul.f32 %v1599, 0.35355338
    %v1603 = vadd.f32 %v1602, %v1261
    %v1604 = vsel %vm497, %v1603, -inf
    %1605 = vmax.xlane.f32.xlu0 %v1604
    %v1606 = vpop.xlane.xlu0 %1605
    %v1607 = vsub.f32 %v1603, %v1606
    %v1608 = vmul.f32 %v1607, 1.442695
    %v1609 = vpow.pop %v1608
    %v1610 = vsel %vm497, %v1609, 0.0
    %1611 = vadd.xlane.f32.xlu0 %v1610
    %v1612 = vpop.xlane.xlu0 %1611
    %v1613 = vrcp.pop %v1612
    %v1614 = vmul.f32 %v1609, %v1613
    %1615 = vrot.lane.b32.xlu0 %v491, 48
    %v1616 = vpop.permute.xlu0 %1615
    %v1619 = vsel %vm497, %v1614, 0
    %1621 = vmatprep.subr.mxu0 0.0
    %1622 = vmatpush1.msra.mxu0 0.0
    %1623 = vmatprep.subr.mxu0 0.0
    %1624 = vmatpush1.msra.mxu0 0.0
    %1625 = vmatprep.subr.mxu0 0.0
    %1626 = vmatpush1.msra.mxu0 0.0
    %1627 = vmatprep.subr.mxu0 0.0
    %1628 = vmatpush1.msra.mxu0 0.0
    %1629 = vmatprep.subr.mxu0 0.0
    %1630 = vmatpush1.msra.mxu0 0.0
    %1631 = vmatprep.subr.mxu0 0.0
    %1632 = vmatpush1.msra.mxu0 0.0
    %1633 = vmatprep.subr.mxu0 0.0
    %1634 = vmatpush1.msra.mxu0 0.0
    %1635 = vmatprep.subr.mxu0 0.0
    %1636 = vmatpush1.msra.mxu0 0.0
    %1637 = vmatprep.subr.mxu0 0.0
    %1638 = vmatpush1.msra.mxu0 0.0
    %1639 = vmatprep.subr.mxu0 0.0
    %1640 = vmatpush1.msra.mxu0 0.0
    %1641 = vmatprep.subr.mxu0 0.0
    %1642 = vmatpush1.msra.mxu0 0.0
    %1643 = vmatprep.subr.mxu0 0.0
    %1644 = vmatpush1.msra.mxu0 0.0
    %1645 = vmatprep.subr.mxu0 0.0
    %1646 = vmatpush1.msra.mxu0 0.0
    %1647 = vmatprep.subr.mxu0 0.0
    %1648 = vmatpush1.msra.mxu0 0.0
    %1649 = vmatprep.subr.mxu0 0.0
    %1650 = vmatpush1.msra.mxu0 0.0
    %1651 = vmatprep.subr.mxu0 0.0
    %1652 = vmatpush1.msra.mxu0 %v1616
    %1653 = vmatprep.subr.mxu0 0.0
    %1654 = vmatpush2.msra.mxu0 0.0
    %1655 = vmatprep.subr.mxu0 0.0
    %1656 = vmatpush2.msra.mxu0 0.0
    %1657 = vmatprep.subr.mxu0 0.0
    %1658 = vmatpush2.msra.mxu0 0.0
    %1659 = vmatprep.subr.mxu0 0.0
    %1660 = vmatpush2.msra.mxu0 0.0
    %1661 = vmatprep.subr.mxu0 0.0
    %1662 = vmatpush2.msra.mxu0 0.0
    %1663 = vmatprep.subr.mxu0 0.0
    %1664 = vmatpush2.msra.mxu0 0.0
    %1665 = vmatprep.subr.mxu0 0.0
    %1666 = vmatpush2.msra.mxu0 0.0
    %1667 = vmatprep.subr.mxu0 0.0
    %1668 = vmatpush2.msra.mxu0 0.0
    %1669 = vmatprep.subr.mxu0 0.0
    %1670 = vmatpush2.msra.mxu0 0.0
    %1671 = vmatprep.subr.mxu0 0.0
    %1672 = vmatpush2.msra.mxu0 0.0
    %1673 = vmatprep.subr.mxu0 0.0
    %1674 = vmatpush2.msra.mxu0 0.0
    %1675 = vmatprep.subr.mxu0 0.0
    %1676 = vmatpush2.msra.mxu0 0.0
    %1677 = vmatprep.subr.mxu0 0.0
    %1678 = vmatpush2.msra.mxu0 0.0
    %1679 = vmatprep.subr.mxu0 0.0
    %1680 = vmatpush2.msra.mxu0 0.0
    %1681 = vmatprep.subr.mxu0 0.0
    %1682 = vmatpush2.msra.mxu0 0.0
    %1683 = vmatprep.subr.mxu0 0.0
    %1684 = vmatpush2.msra.mxu0 0.0
    %1685 = vmatprep.mubr.f32.mxu0 0.0
    %1686 = vmatmul.mubr.f32.gmra.mxu0 %v1619
    %v1687 = vpop.f32.mrf.mxu0
    %v1688 = vadd.f32 0.0, %v1687
    %v1689 = vpop.f32.mrf.mxu0
    %1690 = vdwg.mxu0
    %1692 = vrot.lane.b32.xlu0 %v1688, 16
    %v1693 = vpop.permute.xlu0 %1692
    %1695 = vst.msk [vmem:[#allocation2 + $0x8] sm:$0xff] %vm1006, %v1693
    %1696 = vrot.lane.b32.xlu0 %v491, 104
    %v1697 = vpop.permute.xlu0 %1696
    %1698 = vrot.lane.b32.xlu0 %v491, 72
    %v1699 = vpop.permute.xlu0 %1698
    %v1700 = vsel %vm497, %v1697, 0
    %v1702 = vsel %vm497, %v1699, 0
    %1704 = vmatprep.subr.mxu0 0.0
    %1705 = vmatpush1.xpose.msra.mxu0 0.0
    %1706 = vmatprep.subr.mxu0 0.0
    %1707 = vmatpush1.xpose.msra.mxu0 0.0
    %1708 = vmatprep.subr.mxu0 0.0
    %1709 = vmatpush1.xpose.msra.mxu0 0.0
    %1710 = vmatprep.subr.mxu0 0.0
    %1711 = vmatpush1.xpose.msra.mxu0 0.0
    %1712 = vmatprep.subr.mxu0 0.0
    %1713 = vmatpush1.xpose.msra.mxu0 0.0
    %1714 = vmatprep.subr.mxu0 0.0
    %1715 = vmatpush1.xpose.msra.mxu0 0.0
    %1716 = vmatprep.subr.mxu0 0.0
    %1717 = vmatpush1.xpose.msra.mxu0 0.0
    %1718 = vmatprep.subr.mxu0 0.0
    %1719 = vmatpush1.xpose.msra.mxu0 0.0
    %1720 = vmatprep.subr.mxu0 0.0
    %1721 = vmatpush1.xpose.msra.mxu0 0.0
    %1722 = vmatprep.subr.mxu0 0.0
    %1723 = vmatpush1.xpose.msra.mxu0 0.0
    %1724 = vmatprep.subr.mxu0 0.0
    %1725 = vmatpush1.xpose.msra.mxu0 0.0
    %1726 = vmatprep.subr.mxu0 0.0
    %1727 = vmatpush1.xpose.msra.mxu0 0.0
    %1728 = vmatprep.subr.mxu0 0.0
    %1729 = vmatpush1.xpose.msra.mxu0 0.0
    %1730 = vmatprep.subr.mxu0 0.0
    %1731 = vmatpush1.xpose.msra.mxu0 0.0
    %1732 = vmatprep.subr.mxu0 0.0
    %1733 = vmatpush1.xpose.msra.mxu0 0.0
    %1734 = vmatprep.subr.mxu0 0.0
    %1735 = vmatpush1.xpose.msra.mxu0 %v1702
    %1736 = vmatprep.subr.mxu0 0.0
    %1737 = vmatpush2.xpose.msra.mxu0 0.0
    %1738 = vmatprep.subr.mxu0 0.0
    %1739 = vmatpush2.xpose.msra.mxu0 0.0
    %1740 = vmatprep.subr.mxu0 0.0
    %1741 = vmatpush2.xpose.msra.mxu0 0.0
    %1742 = vmatprep.subr.mxu0 0.0
    %1743 = vmatpush2.xpose.msra.mxu0 0.0
    %1744 = vmatprep.subr.mxu0 0.0
    %1745 = vmatpush2.xpose.msra.mxu0 0.0
    %1746 = vmatprep.subr.mxu0 0.0
    %1747 = vmatpush2.xpose.msra.mxu0 0.0
    %1748 = vmatprep.subr.mxu0 0.0
    %1749 = vmatpush2.xpose.msra.mxu0 0.0
    %1750 = vmatprep.subr.mxu0 0.0
    %1751 = vmatpush2.xpose.msra.mxu0 0.0
    %1752 = vmatprep.subr.mxu0 0.0
    %1753 = vmatpush2.xpose.msra.mxu0 0.0
    %1754 = vmatprep.subr.mxu0 0.0
    %1755 = vmatpush2.xpose.msra.mxu0 0.0
    %1756 = vmatprep.subr.mxu0 0.0
    %1757 = vmatpush2.xpose.msra.mxu0 0.0
    %1758 = vmatprep.subr.mxu0 0.0
    %1759 = vmatpush2.xpose.msra.mxu0 0.0
    %1760 = vmatprep.subr.mxu0 0.0
    %1761 = vmatpush2.xpose.msra.mxu0 0.0
    %1762 = vmatprep.subr.mxu0 0.0
    %1763 = vmatpush2.xpose.msra.mxu0 0.0
    %1764 = vmatprep.subr.mxu0 0.0
    %1765 = vmatpush2.xpose.msra.mxu0 0.0
    %1766 = vmatprep.subr.mxu0 0.0
    %1767 = vmatpush2.xpose.msra.mxu0 0.0
    %1768 = vmatprep.mubr.f32.mxu0 0.0
    %1769 = vmatmul.mubr.f32.gmra.mxu0 %v1700
    %v1770 = vpop.f32.mrf.mxu0
    %v1771 = vadd.f32 0.0, %v1770
    %v1772 = vpop.f32.mrf.mxu0
    %1773 = vdwg.mxu0
    %v1774 = vmul.f32 %v1771, 0.35355338
    %v1775 = vadd.f32 %v1774, %v1261
    %v1776 = vsel %vm497, %v1775, -inf
    %1777 = vmax.xlane.f32.xlu0 %v1776
    %v1778 = vpop.xlane.xlu0 %1777
    %v1779 = vsub.f32 %v1775, %v1778
    %v1780 = vmul.f32 %v1779, 1.442695
    %v1781 = vpow.pop %v1780
    %v1782 = vsel %vm497, %v1781, 0.0
    %1783 = vadd.xlane.f32.xlu0 %v1782
    %v1784 = vpop.xlane.xlu0 %1783
    %v1785 = vrcp.pop %v1784
    %v1786 = vmul.f32 %v1781, %v1785
    %1787 = vrot.lane.b32.xlu0 %v491, 40
    %v1788 = vpop.permute.xlu0 %1787
    %v1791 = vsel %vm497, %v1786, 0
    %1793 = vmatprep.subr.mxu0 0.0
    %1794 = vmatpush1.msra.mxu0 0.0
    %1795 = vmatprep.subr.mxu0 0.0
    %1796 = vmatpush1.msra.mxu0 0.0
    %1797 = vmatprep.subr.mxu0 0.0
    %1798 = vmatpush1.msra.mxu0 0.0
    %1799 = vmatprep.subr.mxu0 0.0
    %1800 = vmatpush1.msra.mxu0 0.0
    %1801 = vmatprep.subr.mxu0 0.0
    %1802 = vmatpush1.msra.mxu0 0.0
    %1803 = vmatprep.subr.mxu0 0.0
    %1804 = vmatpush1.msra.mxu0 0.0
    %1805 = vmatprep.subr.mxu0 0.0
    %1806 = vmatpush1.msra.mxu0 0.0
    %1807 = vmatprep.subr.mxu0 0.0
    %1808 = vmatpush1.msra.mxu0 0.0
    %1809 = vmatprep.subr.mxu0 0.0
    %1810 = vmatpush1.msra.mxu0 0.0
    %1811 = vmatprep.subr.mxu0 0.0
    %1812 = vmatpush1.msra.mxu0 0.0
    %1813 = vmatprep.subr.mxu0 0.0
    %1814 = vmatpush1.msra.mxu0 0.0
    %1815 = vmatprep.subr.mxu0 0.0
    %1816 = vmatpush1.msra.mxu0 0.0
    %1817 = vmatprep.subr.mxu0 0.0
    %1818 = vmatpush1.msra.mxu0 0.0
    %1819 = vmatprep.subr.mxu0 0.0
    %1820 = vmatpush1.msra.mxu0 0.0
    %1821 = vmatprep.subr.mxu0 0.0
    %1822 = vmatpush1.msra.mxu0 0.0
    %1823 = vmatprep.subr.mxu0 0.0
    %1824 = vmatpush1.msra.mxu0 %v1788
    %1825 = vmatprep.subr.mxu0 0.0
    %1826 = vmatpush2.msra.mxu0 0.0
    %1827 = vmatprep.subr.mxu0 0.0
    %1828 = vmatpush2.msra.mxu0 0.0
    %1829 = vmatprep.subr.mxu0 0.0
    %1830 = vmatpush2.msra.mxu0 0.0
    %1831 = vmatprep.subr.mxu0 0.0
    %1832 = vmatpush2.msra.mxu0 0.0
    %1833 = vmatprep.subr.mxu0 0.0
    %1834 = vmatpush2.msra.mxu0 0.0
    %1835 = vmatprep.subr.mxu0 0.0
    %1836 = vmatpush2.msra.mxu0 0.0
    %1837 = vmatprep.subr.mxu0 0.0
    %1838 = vmatpush2.msra.mxu0 0.0
    %1839 = vmatprep.subr.mxu0 0.0
    %1840 = vmatpush2.msra.mxu0 0.0
    %1841 = vmatprep.subr.mxu0 0.0
    %1842 = vmatpush2.msra.mxu0 0.0
    %1843 = vmatprep.subr.mxu0 0.0
    %1844 = vmatpush2.msra.mxu0 0.0
    %1845 = vmatprep.subr.mxu0 0.0
    %1846 = vmatpush2.msra.mxu0 0.0
    %1847 = vmatprep.subr.mxu0 0.0
    %1848 = vmatpush2.msra.mxu0 0.0
    %1849 = vmatprep.subr.mxu0 0.0
    %1850 = vmatpush2.msra.mxu0 0.0
    %1851 = vmatprep.subr.mxu0 0.0
    %1852 = vmatpush2.msra.mxu0 0.0
    %1853 = vmatprep.subr.mxu0 0.0
    %1854 = vmatpush2.msra.mxu0 0.0
    %1855 = vmatprep.subr.mxu0 0.0
    %1856 = vmatpush2.msra.mxu0 0.0
    %1857 = vmatprep.mubr.f32.mxu0 0.0
    %1858 = vmatmul.mubr.f32.gmra.mxu0 %v1791
    %v1859 = vpop.f32.mrf.mxu0
    %v1860 = vadd.f32 0.0, %v1859
    %v1861 = vpop.f32.mrf.mxu0
    %1862 = vdwg.mxu0
    %1864 = vrot.lane.b32.xlu0 %v1860, 24
    %v1865 = vpop.permute.xlu0 %1864
    %1867 = vst.msk [vmem:[#allocation2 + $0x8] sm:$0xff] %vm1179, %v1865
    %v1868 = vld [vmem:[#allocation2] sm:$0xff]
    %v1869 = vld [vmem:[#allocation2 + $0x8] sm:$0xff]
    %v1870 = vlaneseq
    %v1871 = vshrl.u32 %v1870, 7
    %v1872 = vsub.s32 1, %v1871
    %v1873 = vrot.slane %v97, %v1872
    %v1875 = vsel %vm412, %v1868, 0
    %v1878 = vsel %vm412, %v1869, 0
    %1880 = vmatprep.subr.mxu0 0.0
    %1881 = vmatpush1.msra.mxu0 0.0
    %1882 = vmatprep.subr.mxu0 0.0
    %1883 = vmatpush1.msra.mxu0 0.0
    %1884 = vmatprep.subr.mxu0 0.0
    %1885 = vmatpush1.msra.mxu0 0.0
    %1886 = vmatprep.subr.mxu0 0.0
    %1887 = vmatpush1.msra.mxu0 0.0
    %1888 = vmatprep.subr.mxu0 0.0
    %1889 = vmatpush1.msra.mxu0 0.0
    %1890 = vmatprep.subr.mxu0 0.0
    %1891 = vmatpush1.msra.mxu0 0.0
    %1892 = vmatprep.subr.mxu0 0.0
    %1893 = vmatpush1.msra.mxu0 0.0
    %1894 = vmatprep.subr.mxu0 0.0
    %1895 = vmatpush1.msra.mxu0 0.0
    %1896 = vmatprep.subr.mxu0 0.0
    %1897 = vmatpush1.msra.mxu0 0.0
    %1898 = vmatprep.subr.mxu0 0.0
    %1899 = vmatpush1.msra.mxu0 0.0
    %1900 = vmatprep.subr.mxu0 0.0
    %1901 = vmatpush1.msra.mxu0 0.0
    %1902 = vmatprep.subr.mxu0 0.0
    %1903 = vmatpush1.msra.mxu0 0.0
    %1904 = vmatprep.subr.mxu0 0.0
    %1905 = vmatpush1.msra.mxu0 %v70
    %1906 = vmatprep.subr.mxu0 0.0
    %1907 = vmatpush1.msra.mxu0 %v60
    %1908 = vmatprep.subr.mxu0 0.0
    %1909 = vmatpush1.msra.mxu0 %v50
    %1910 = vmatprep.subr.mxu0 0.0
    %1911 = vmatpush1.msra.mxu0 %v40
    %1912 = vmatprep.subr.mxu0 0.0
    %1913 = vmatpush2.msra.mxu0 0.0
    %1914 = vmatprep.subr.mxu0 0.0
    %1915 = vmatpush2.msra.mxu0 0.0
    %1916 = vmatprep.subr.mxu0 0.0
    %1917 = vmatpush2.msra.mxu0 0.0
    %1918 = vmatprep.subr.mxu0 0.0
    %1919 = vmatpush2.msra.mxu0 0.0
    %1920 = vmatprep.subr.mxu0 0.0
    %1921 = vmatpush2.msra.mxu0 0.0
    %1922 = vmatprep.subr.mxu0 0.0
    %1923 = vmatpush2.msra.mxu0 0.0
    %1924 = vmatprep.subr.mxu0 0.0
    %1925 = vmatpush2.msra.mxu0 0.0
    %1926 = vmatprep.subr.mxu0 0.0
    %1927 = vmatpush2.msra.mxu0 0.0
    %1928 = vmatprep.subr.mxu0 0.0
    %1929 = vmatpush2.msra.mxu0 0.0
    %1930 = vmatprep.subr.mxu0 0.0
    %1931 = vmatpush2.msra.mxu0 0.0
    %1932 = vmatprep.subr.mxu0 0.0
    %1933 = vmatpush2.msra.mxu0 0.0
    %1934 = vmatprep.subr.mxu0 0.0
    %1935 = vmatpush2.msra.mxu0 0.0
    %1936 = vmatprep.subr.mxu0 0.0
    %1937 = vmatpush2.msra.mxu0 0.0
    %1938 = vmatprep.subr.mxu0 0.0
    %1939 = vmatpush2.msra.mxu0 0.0
    %1940 = vmatprep.subr.mxu0 0.0
    %1941 = vmatpush2.msra.mxu0 0.0
    %1942 = vmatprep.subr.mxu0 0.0
    %1943 = vmatpush2.msra.mxu0 0.0
    %1944 = vmatprep.mubr.f32.mxu0 0.0
    %1945 = vmatmul.mubr.f32.gmra.mxu0 %v1875
    %v1946 = vpop.f32.mrf.mxu0
    %v1947 = vadd.f32 %v1873, %v1946
    %v1948 = vpop.f32.mrf.mxu0
    %1949 = vmatprep.mubr.f32.mxu0 0.0
    %1950 = vmatmul.mubr.f32.gmra.mxu0 %v1878
    %v1951 = vpop.f32.mrf.mxu0
    %v1952 = vadd.f32 %v1873, %v1951
    %v1953 = vpop.f32.mrf.mxu0
    %1954 = vdwg.mxu0
    %v1955 = vadd.f32 %v198, %v1947
    %v1956 = vadd.f32 %v199, %v1952
    %v1957 = vsel %vm412, %v1955, 0.0
    %1958 = vadd.xlane.f32.xlu0 %v1957
    %v1959 = vpop.xlane.xlu0 %1958
    %v1960 = vsel %vm412, %v1956, 0.0
    %1961 = vadd.xlane.f32.xlu0 %v1960
    %v1962 = vpop.xlane.xlu0 %1961
    %v1963 = vrcp.pop 32.0
    %v1964 = vmul.f32 %v1959, %v1963
    %v1965 = vmul.f32 %v1962, %v1963
    %v1966 = vsub.f32 %v1955, %v1964
    %v1967 = vsub.f32 %v1956, %v1965
    %v1968 = vmul.f32 %v1966, %v1966
    %v1969 = vmul.f32 %v1967, %v1967
    %v1970 = vsel %vm412, %v1968, 0.0
    %1971 = vadd.xlane.f32.xlu0 %v1970
    %v1972 = vpop.xlane.xlu0 %1971
    %v1973 = vsel %vm412, %v1969, 0.0
    %1974 = vadd.xlane.f32.xlu0 %v1973
    %v1975 = vpop.xlane.xlu0 %1974
    %v1976 = vmul.f32 %v1972, %v1963
    %v1977 = vmul.f32 %v1975, %v1963
    %v1978 = vadd.f32 %v1976, 1e-05
    %v1979 = vadd.f32 %v1977, 1e-05
    %v1980 = vrsqrt.pop %v1978
    %v1981 = vrsqrt.pop %v1979
    %v1982 = vmul.f32 %v1966, %v1980
    %v1983 = vmul.f32 %v1967, %v1981
    %v1984 = vlaneseq
    %v1985 = vshrl.u32 %v1984, 7
    %v1986 = vsub.s32 4, %v1985
    %v1987 = vrot.slane %v98, %v1986
    %v1988 = vmul.f32 %v1982, %v1987
    %v1989 = vmul.f32 %v1983, %v1987
    %v1990 = vlaneseq
    %v1991 = vshrl.u32 %v1990, 7
    %v1992 = vsub.s32 1, %v1991
    %v1993 = vrot.slane %v99, %v1992
    %v1994 = vadd.f32 %v1988, %v1993
    %v1995 = vadd.f32 %v1989, %v1993
    %v1996 = vlaneseq
    %v1997 = vshrl.u32 %v1996, 7
    %v1998 = vsub.s32 2, %v1997
    %v1999 = vrot.slane %v97, %v1998
    %v2001 = vsel %vm412, %v1994, 0
    %v2004 = vsel %vm412, %v1995, 0
    %2006 = vmatprep.subr.mxu0 0.0
    %2007 = vmatpush1.msra.mxu0 0.0
    %2008 = vmatprep.subr.mxu0 0.0
    %2009 = vmatpush1.msra.mxu0 0.0
    %2010 = vmatprep.subr.mxu0 0.0
    %2011 = vmatpush1.msra.mxu0 0.0
    %2012 = vmatprep.subr.mxu0 0.0
    %2013 = vmatpush1.msra.mxu0 0.0
    %2014 = vmatprep.subr.mxu0 0.0
    %2015 = vmatpush1.msra.mxu0 0.0
    %2016 = vmatprep.subr.mxu0 0.0
    %2017 = vmatpush1.msra.mxu0 0.0
    %2018 = vmatprep.subr.mxu0 0.0
    %2019 = vmatpush1.msra.mxu0 0.0
    %2020 = vmatprep.subr.mxu0 0.0
    %2021 = vmatpush1.msra.mxu0 0.0
    %2022 = vmatprep.subr.mxu0 0.0
    %2023 = vmatpush1.msra.mxu0 0.0
    %2024 = vmatprep.subr.mxu0 0.0
    %2025 = vmatpush1.msra.mxu0 0.0
    %2026 = vmatprep.subr.mxu0 0.0
    %2027 = vmatpush1.msra.mxu0 0.0
    %2028 = vmatprep.subr.mxu0 0.0
    %2029 = vmatpush1.msra.mxu0 0.0
    %2030 = vmatprep.subr.mxu0 0.0
    %2031 = vmatpush1.msra.mxu0 %v71
    %2032 = vmatprep.subr.mxu0 0.0
    %2033 = vmatpush1.msra.mxu0 %v61
    %2034 = vmatprep.subr.mxu0 0.0
    %2035 = vmatpush1.msra.mxu0 %v51
    %2036 = vmatprep.subr.mxu0 0.0
    %2037 = vmatpush1.msra.mxu0 %v41
    %2038 = vmatprep.subr.mxu0 0.0
    %2039 = vmatpush2.msra.mxu0 0.0
    %2040 = vmatprep.subr.mxu0 0.0
    %2041 = vmatpush2.msra.mxu0 0.0
    %2042 = vmatprep.subr.mxu0 0.0
    %2043 = vmatpush2.msra.mxu0 0.0
    %2044 = vmatprep.subr.mxu0 0.0
    %2045 = vmatpush2.msra.mxu0 0.0
    %2046 = vmatprep.subr.mxu0 0.0
    %2047 = vmatpush2.msra.mxu0 0.0
    %2048 = vmatprep.subr.mxu0 0.0
    %2049 = vmatpush2.msra.mxu0 0.0
    %2050 = vmatprep.subr.mxu0 0.0
    %2051 = vmatpush2.msra.mxu0 0.0
    %2052 = vmatprep.subr.mxu0 0.0
    %2053 = vmatpush2.msra.mxu0 0.0
    %2054 = vmatprep.subr.mxu0 0.0
    %2055 = vmatpush2.msra.mxu0 0.0
    %2056 = vmatprep.subr.mxu0 0.0
    %2057 = vmatpush2.msra.mxu0 0.0
    %2058 = vmatprep.subr.mxu0 0.0
    %2059 = vmatpush2.msra.mxu0 0.0
    %2060 = vmatprep.subr.mxu0 0.0
    %2061 = vmatpush2.msra.mxu0 0.0
    %2062 = vmatprep.subr.mxu0 0.0
    %2063 = vmatpush2.msra.mxu0 0.0
    %2064 = vmatprep.subr.mxu0 0.0
    %2065 = vmatpush2.msra.mxu0 0.0
    %2066 = vmatprep.subr.mxu0 0.0
    %2067 = vmatpush2.msra.mxu0 0.0
    %2068 = vmatprep.subr.mxu0 0.0
    %2069 = vmatpush2.msra.mxu0 0.0
    %2070 = vmatprep.mubr.f32.mxu0 0.0
    %2071 = vmatmul.mubr.f32.gmra.mxu0 %v2001
    %v2072 = vpop.f32.mrf.mxu0
    %v2073 = vadd.f32 %v1999, %v2072
    %v2074 = vpop.f32.mrf.mxu0
    %2075 = vmatprep.mubr.f32.mxu0 0.0
    %2076 = vmatmul.mubr.f32.gmra.mxu0 %v2004
    %v2077 = vpop.f32.mrf.mxu0
    %v2078 = vadd.f32 %v1999, %v2077
    %v2079 = vpop.f32.mrf.mxu0
    %2080 = vdwg.mxu0
    %v2081 = vmax.f32 %v2073, 0.0
    %v2082 = vmax.f32 %v2078, 0.0
    %v2083 = vlaneseq
    %v2084 = vshrl.u32 %v2083, 7
    %v2085 = vsub.s32 3, %v2084
    %v2086 = vrot.slane %v97, %v2085
    %v2088 = vsel %vm114, %v2081, 0
    %v2091 = vsel %vm114, %v2082, 0
    %2093 = vmatprep.subr.mxu0 0.0
    %2094 = vmatpush1.msra.mxu0 0.0
    %2095 = vmatprep.subr.mxu0 0.0
    %2096 = vmatpush1.msra.mxu0 0.0
    %2097 = vmatprep.subr.mxu0 0.0
    %2098 = vmatpush1.msra.mxu0 0.0
    %2099 = vmatprep.subr.mxu0 0.0
    %2100 = vmatpush1.msra.mxu0 0.0
    %2101 = vmatprep.subr.mxu0 0.0
    %2102 = vmatpush1.msra.mxu0 0.0
    %2103 = vmatprep.subr.mxu0 0.0
    %2104 = vmatpush1.msra.mxu0 0.0
    %2105 = vmatprep.subr.mxu0 0.0
    %2106 = vmatpush1.msra.mxu0 0.0
    %2107 = vmatprep.subr.mxu0 0.0
    %2108 = vmatpush1.msra.mxu0 0.0
    %2109 = vmatprep.subr.mxu0 0.0
    %2110 = vmatpush1.msra.mxu0 %v96
    %2111 = vmatprep.subr.mxu0 0.0
    %2112 = vmatpush1.msra.mxu0 %v95
    %2113 = vmatprep.subr.mxu0 0.0
    %2114 = vmatpush1.msra.mxu0 %v94
    %2115 = vmatprep.subr.mxu0 0.0
    %2116 = vmatpush1.msra.mxu0 %v93
    %2117 = vmatprep.subr.mxu0 0.0
    %2118 = vmatpush1.msra.mxu0 %v92
    %2119 = vmatprep.subr.mxu0 0.0
    %2120 = vmatpush1.msra.mxu0 %v91
    %2121 = vmatprep.subr.mxu0 0.0
    %2122 = vmatpush1.msra.mxu0 %v90
    %2123 = vmatprep.subr.mxu0 0.0
    %2124 = vmatpush1.msra.mxu0 %v89
    %2125 = vmatprep.subr.mxu0 0.0
    %2126 = vmatpush2.msra.mxu0 0.0
    %2127 = vmatprep.subr.mxu0 0.0
    %2128 = vmatpush2.msra.mxu0 0.0
    %2129 = vmatprep.subr.mxu0 0.0
    %2130 = vmatpush2.msra.mxu0 0.0
    %2131 = vmatprep.subr.mxu0 0.0
    %2132 = vmatpush2.msra.mxu0 0.0
    %2133 = vmatprep.subr.mxu0 0.0
    %2134 = vmatpush2.msra.mxu0 0.0
    %2135 = vmatprep.subr.mxu0 0.0
    %2136 = vmatpush2.msra.mxu0 0.0
    %2137 = vmatprep.subr.mxu0 0.0
    %2138 = vmatpush2.msra.mxu0 0.0
    %2139 = vmatprep.subr.mxu0 0.0
    %2140 = vmatpush2.msra.mxu0 0.0
    %2141 = vmatprep.subr.mxu0 0.0
    %2142 = vmatpush2.msra.mxu0 0.0
    %2143 = vmatprep.subr.mxu0 0.0
    %2144 = vmatpush2.msra.mxu0 0.0
    %2145 = vmatprep.subr.mxu0 0.0
    %2146 = vmatpush2.msra.mxu0 0.0
    %2147 = vmatprep.subr.mxu0 0.0
    %2148 = vmatpush2.msra.mxu0 0.0
    %2149 = vmatprep.subr.mxu0 0.0
    %2150 = vmatpush2.msra.mxu0 0.0
    %2151 = vmatprep.subr.mxu0 0.0
    %2152 = vmatpush2.msra.mxu0 0.0
    %2153 = vmatprep.subr.mxu0 0.0
    %2154 = vmatpush2.msra.mxu0 0.0
    %2155 = vmatprep.subr.mxu0 0.0
    %2156 = vmatpush2.msra.mxu0 0.0
    %2157 = vmatprep.mubr.f32.mxu0 0.0
    %2158 = vmatmul.mubr.f32.gmra.mxu0 %v2088
    %v2159 = vpop.f32.mrf.mxu0
    %v2160 = vadd.f32 %v2086, %v2159
    %v2161 = vpop.f32.mrf.mxu0
    %2162 = vmatprep.mubr.f32.mxu0 0.0
    %2163 = vmatmul.mubr.f32.gmra.mxu0 %v2091
    %v2164 = vpop.f32.mrf.mxu0
    %v2165 = vadd.f32 %v2086, %v2164
    %v2166 = vpop.f32.mrf.mxu0
    %2167 = vdwg.mxu0
    %v2168 = vadd.f32 %v1994, %v2160
    %v2169 = vadd.f32 %v1995, %v2165
    %v2170 = vsel %vm412, %v2168, 0.0
    %2171 = vadd.xlane.f32.xlu0 %v2170
    %v2172 = vpop.xlane.xlu0 %2171
    %v2173 = vsel %vm412, %v2169, 0.0
    %2174 = vadd.xlane.f32.xlu0 %v2173
    %v2175 = vpop.xlane.xlu0 %2174
    %v2176 = vmul.f32 %v2172, %v1963
    %v2177 = vmul.f32 %v2175, %v1963
    %v2178 = vsub.f32 %v2168, %v2176
    %v2179 = vsub.f32 %v2169, %v2177
    %v2180 = vmul.f32 %v2178, %v2178
    %v2181 = vmul.f32 %v2179, %v2179
    %v2182 = vsel %vm412, %v2180, 0.0
    %2183 = vadd.xlane.f32.xlu0 %v2182
    %v2184 = vpop.xlane.xlu0 %2183
    %v2185 = vsel %vm412, %v2181, 0.0
    %2186 = vadd.xlane.f32.xlu0 %v2185
    %v2187 = vpop.xlane.xlu0 %2186
    %v2188 = vmul.f32 %v2184, %v1963
    %v2189 = vmul.f32 %v2187, %v1963
    %v2190 = vadd.f32 %v2188, 1e-05
    %v2191 = vadd.f32 %v2189, 1e-05
    %v2192 = vrsqrt.pop %v2190
    %v2193 = vrsqrt.pop %v2191
    %v2194 = vmul.f32 %v2178, %v2192
    %v2195 = vmul.f32 %v2179, %v2193
    %v2196 = vlaneseq
    %v2197 = vshrl.u32 %v2196, 7
    %v2198 = vsub.s32 5, %v2197
    %v2199 = vrot.slane %v98, %v2198
    %v2200 = vmul.f32 %v2194, %v2199
    %v2201 = vmul.f32 %v2195, %v2199
    %v2202 = vlaneseq
    %v2203 = vshrl.u32 %v2202, 7
    %v2204 = vsub.s32 2, %v2203
    %v2205 = vrot.slane %v99, %v2204
    %v2206 = vadd.f32 %v2200, %v2205
    %v2207 = vadd.f32 %v2201, %v2205
    %v2208 = vlaneseq
    %v2209 = vshrl.u32 %v2208, 7
    %v2210 = vsub.s32 4, %v2209
    %v2211 = vrot.slane %v97, %v2210
    %v2213 = vsel %vm412, %v335, 0
    %v2216 = vsel %vm412, %v336, 0
    %2218 = vmatprep.subr.mxu0 0.0
    %2219 = vmatpush1.msra.mxu0 0.0
    %2220 = vmatprep.subr.mxu0 0.0
    %2221 = vmatpush1.msra.mxu0 0.0
    %2222 = vmatprep.subr.mxu0 0.0
    %2223 = vmatpush1.msra.mxu0 0.0
    %2224 = vmatprep.subr.mxu0 0.0
    %2225 = vmatpush1.msra.mxu0 0.0
    %2226 = vmatprep.subr.mxu0 0.0
    %2227 = vmatpush1.msra.mxu0 0.0
    %2228 = vmatprep.subr.mxu0 0.0
    %2229 = vmatpush1.msra.mxu0 0.0
    %2230 = vmatprep.subr.mxu0 0.0
    %2231 = vmatpush1.msra.mxu0 0.0
    %2232 = vmatprep.subr.mxu0 0.0
    %2233 = vmatpush1.msra.mxu0 0.0
    %2234 = vmatprep.subr.mxu0 0.0
    %2235 = vmatpush1.msra.mxu0 0.0
    %2236 = vmatprep.subr.mxu0 0.0
    %2237 = vmatpush1.msra.mxu0 0.0
    %2238 = vmatprep.subr.mxu0 0.0
    %2239 = vmatpush1.msra.mxu0 0.0
    %2240 = vmatprep.subr.mxu0 0.0
    %2241 = vmatpush1.msra.mxu0 0.0
    %2242 = vmatprep.subr.mxu0 0.0
    %2243 = vmatpush1.msra.mxu0 %v72
    %2244 = vmatprep.subr.mxu0 0.0
    %2245 = vmatpush1.msra.mxu0 %v62
    %2246 = vmatprep.subr.mxu0 0.0
    %2247 = vmatpush1.msra.mxu0 %v52
    %2248 = vmatprep.subr.mxu0 0.0
    %2249 = vmatpush1.msra.mxu0 %v42
    %2250 = vmatprep.subr.mxu0 0.0
    %2251 = vmatpush2.msra.mxu0 0.0
    %2252 = vmatprep.subr.mxu0 0.0
    %2253 = vmatpush2.msra.mxu0 0.0
    %2254 = vmatprep.subr.mxu0 0.0
    %2255 = vmatpush2.msra.mxu0 0.0
    %2256 = vmatprep.subr.mxu0 0.0
    %2257 = vmatpush2.msra.mxu0 0.0
    %2258 = vmatprep.subr.mxu0 0.0
    %2259 = vmatpush2.msra.mxu0 0.0
    %2260 = vmatprep.subr.mxu0 0.0
    %2261 = vmatpush2.msra.mxu0 0.0
    %2262 = vmatprep.subr.mxu0 0.0
    %2263 = vmatpush2.msra.mxu0 0.0
    %2264 = vmatprep.subr.mxu0 0.0
    %2265 = vmatpush2.msra.mxu0 0.0
    %2266 = vmatprep.subr.mxu0 0.0
    %2267 = vmatpush2.msra.mxu0 0.0
    %2268 = vmatprep.subr.mxu0 0.0
    %2269 = vmatpush2.msra.mxu0 0.0
    %2270 = vmatprep.subr.mxu0 0.0
    %2271 = vmatpush2.msra.mxu0 0.0
    %2272 = vmatprep.subr.mxu0 0.0
    %2273 = vmatpush2.msra.mxu0 0.0
    %2274 = vmatprep.subr.mxu0 0.0
    %2275 = vmatpush2.msra.mxu0 0.0
    %2276 = vmatprep.subr.mxu0 0.0
    %2277 = vmatpush2.msra.mxu0 0.0
    %2278 = vmatprep.subr.mxu0 0.0
    %2279 = vmatpush2.msra.mxu0 0.0
    %2280 = vmatprep.subr.mxu0 0.0
    %2281 = vmatpush2.msra.mxu0 0.0
    %2282 = vmatprep.mubr.f32.mxu0 0.0
    %2283 = vmatmul.mubr.f32.gmra.mxu0 %v2213
    %v2284 = vpop.f32.mrf.mxu0
    %v2285 = vadd.f32 %v2211, %v2284
    %v2286 = vpop.f32.mrf.mxu0
    %2287 = vmatprep.mubr.f32.mxu0 0.0
    %2288 = vmatmul.mubr.f32.gmra.mxu0 %v2216
    %v2289 = vpop.f32.mrf.mxu0
    %v2290 = vadd.f32 %v2211, %v2289
    %v2291 = vpop.f32.mrf.mxu0
    %2292 = vdwg.mxu0
    %2294 = vrot.lane.b32.xlu0 %v2285, 96
    %v2295 = vpop.permute.xlu0 %2294
    %v2296 = vsel %vm497, %v2285, 0
    %v2298 = vsel %vm497, %v2295, 0
    %2300 = vmatprep.subr.mxu0 0.0
    %2301 = vmatpush1.xpose.msra.mxu0 0.0
    %2302 = vmatprep.subr.mxu0 0.0
    %2303 = vmatpush1.xpose.msra.mxu0 0.0
    %2304 = vmatprep.subr.mxu0 0.0
    %2305 = vmatpush1.xpose.msra.mxu0 0.0
    %2306 = vmatprep.subr.mxu0 0.0
    %2307 = vmatpush1.xpose.msra.mxu0 0.0
    %2308 = vmatprep.subr.mxu0 0.0
    %2309 = vmatpush1.xpose.msra.mxu0 0.0
    %2310 = vmatprep.subr.mxu0 0.0
    %2311 = vmatpush1.xpose.msra.mxu0 0.0
    %2312 = vmatprep.subr.mxu0 0.0
    %2313 = vmatpush1.xpose.msra.mxu0 0.0
    %2314 = vmatprep.subr.mxu0 0.0
    %2315 = vmatpush1.xpose.msra.mxu0 0.0
    %2316 = vmatprep.subr.mxu0 0.0
    %2317 = vmatpush1.xpose.msra.mxu0 0.0
    %2318 = vmatprep.subr.mxu0 0.0
    %2319 = vmatpush1.xpose.msra.mxu0 0.0
    %2320 = vmatprep.subr.mxu0 0.0
    %2321 = vmatpush1.xpose.msra.mxu0 0.0
    %2322 = vmatprep.subr.mxu0 0.0
    %2323 = vmatpush1.xpose.msra.mxu0 0.0
    %2324 = vmatprep.subr.mxu0 0.0
    %2325 = vmatpush1.xpose.msra.mxu0 0.0
    %2326 = vmatprep.subr.mxu0 0.0
    %2327 = vmatpush1.xpose.msra.mxu0 0.0
    %2328 = vmatprep.subr.mxu0 0.0
    %2329 = vmatpush1.xpose.msra.mxu0 0.0
    %2330 = vmatprep.subr.mxu0 0.0
    %2331 = vmatpush1.xpose.msra.mxu0 %v2298
    %2332 = vmatprep.subr.mxu0 0.0
    %2333 = vmatpush2.xpose.msra.mxu0 0.0
    %2334 = vmatprep.subr.mxu0 0.0
    %2335 = vmatpush2.xpose.msra.mxu0 0.0
    %2336 = vmatprep.subr.mxu0 0.0
    %2337 = vmatpush2.xpose.msra.mxu0 0.0
    %2338 = vmatprep.subr.mxu0 0.0
    %2339 = vmatpush2.xpose.msra.mxu0 0.0
    %2340 = vmatprep.subr.mxu0 0.0
    %2341 = vmatpush2.xpose.msra.mxu0 0.0
    %2342 = vmatprep.subr.mxu0 0.0
    %2343 = vmatpush2.xpose.msra.mxu0 0.0
    %2344 = vmatprep.subr.mxu0 0.0
    %2345 = vmatpush2.xpose.msra.mxu0 0.0
    %2346 = vmatprep.subr.mxu0 0.0
    %2347 = vmatpush2.xpose.msra.mxu0 0.0
    %2348 = vmatprep.subr.mxu0 0.0
    %2349 = vmatpush2.xpose.msra.mxu0 0.0
    %2350 = vmatprep.subr.mxu0 0.0
    %2351 = vmatpush2.xpose.msra.mxu0 0.0
    %2352 = vmatprep.subr.mxu0 0.0
    %2353 = vmatpush2.xpose.msra.mxu0 0.0
    %2354 = vmatprep.subr.mxu0 0.0
    %2355 = vmatpush2.xpose.msra.mxu0 0.0
    %2356 = vmatprep.subr.mxu0 0.0
    %2357 = vmatpush2.xpose.msra.mxu0 0.0
    %2358 = vmatprep.subr.mxu0 0.0
    %2359 = vmatpush2.xpose.msra.mxu0 0.0
    %2360 = vmatprep.subr.mxu0 0.0
    %2361 = vmatpush2.xpose.msra.mxu0 0.0
    %2362 = vmatprep.subr.mxu0 0.0
    %2363 = vmatpush2.xpose.msra.mxu0 0.0
    %2364 = vmatprep.mubr.f32.mxu0 0.0
    %2365 = vmatmul.mubr.f32.gmra.mxu0 %v2296
    %v2366 = vpop.f32.mrf.mxu0
    %v2367 = vadd.f32 0.0, %v2366
    %v2368 = vpop.f32.mrf.mxu0
    %2369 = vdwg.mxu0
    %v2370 = vmul.f32 %v2367, 0.35355338
    %2372 = vrot.lane.b32.xlu0 %v391, 112
    %v2373 = vpop.permute.xlu0 %2372
    %v2375 = vadd.f32 %v2370, %v2373
    %v2376 = vsel %vm497, %v2375, -inf
    %2377 = vmax.xlane.f32.xlu0 %v2376
    %v2378 = vpop.xlane.xlu0 %2377
    %v2379 = vsub.f32 %v2375, %v2378
    %v2380 = vmul.f32 %v2379, 1.442695
    %v2381 = vpow.pop %v2380
    %v2382 = vsel %vm497, %v2381, 0.0
    %2383 = vadd.xlane.f32.xlu0 %v2382
    %v2384 = vpop.xlane.xlu0 %2383
    %v2385 = vrcp.pop %v2384
    %v2386 = vmul.f32 %v2381, %v2385
    %2387 = vrot.lane.b32.xlu0 %v2285, 64
    %v2388 = vpop.permute.xlu0 %2387
    %v2391 = vsel %vm497, %v2386, 0
    %2393 = vmatprep.subr.mxu0 0.0
    %2394 = vmatpush1.msra.mxu0 0.0
    %2395 = vmatprep.subr.mxu0 0.0
    %2396 = vmatpush1.msra.mxu0 0.0
    %2397 = vmatprep.subr.mxu0 0.0
    %2398 = vmatpush1.msra.mxu0 0.0
    %2399 = vmatprep.subr.mxu0 0.0
    %2400 = vmatpush1.msra.mxu0 0.0
    %2401 = vmatprep.subr.mxu0 0.0
    %2402 = vmatpush1.msra.mxu0 0.0
    %2403 = vmatprep.subr.mxu0 0.0
    %2404 = vmatpush1.msra.mxu0 0.0
    %2405 = vmatprep.subr.mxu0 0.0
    %2406 = vmatpush1.msra.mxu0 0.0
    %2407 = vmatprep.subr.mxu0 0.0
    %2408 = vmatpush1.msra.mxu0 0.0
    %2409 = vmatprep.subr.mxu0 0.0
    %2410 = vmatpush1.msra.mxu0 0.0
    %2411 = vmatprep.subr.mxu0 0.0
    %2412 = vmatpush1.msra.mxu0 0.0
    %2413 = vmatprep.subr.mxu0 0.0
    %2414 = vmatpush1.msra.mxu0 0.0
    %2415 = vmatprep.subr.mxu0 0.0
    %2416 = vmatpush1.msra.mxu0 0.0
    %2417 = vmatprep.subr.mxu0 0.0
    %2418 = vmatpush1.msra.mxu0 0.0
    %2419 = vmatprep.subr.mxu0 0.0
    %2420 = vmatpush1.msra.mxu0 0.0
    %2421 = vmatprep.subr.mxu0 0.0
    %2422 = vmatpush1.msra.mxu0 0.0
    %2423 = vmatprep.subr.mxu0 0.0
    %2424 = vmatpush1.msra.mxu0 %v2388
    %2425 = vmatprep.subr.mxu0 0.0
    %2426 = vmatpush2.msra.mxu0 0.0
    %2427 = vmatprep.subr.mxu0 0.0
    %2428 = vmatpush2.msra.mxu0 0.0
    %2429 = vmatprep.subr.mxu0 0.0
    %2430 = vmatpush2.msra.mxu0 0.0
    %2431 = vmatprep.subr.mxu0 0.0
    %2432 = vmatpush2.msra.mxu0 0.0
    %2433 = vmatprep.subr.mxu0 0.0
    %2434 = vmatpush2.msra.mxu0 0.0
    %2435 = vmatprep.subr.mxu0 0.0
    %2436 = vmatpush2.msra.mxu0 0.0
    %2437 = vmatprep.subr.mxu0 0.0
    %2438 = vmatpush2.msra.mxu0 0.0
    %2439 = vmatprep.subr.mxu0 0.0
    %2440 = vmatpush2.msra.mxu0 0.0
    %2441 = vmatprep.subr.mxu0 0.0
    %2442 = vmatpush2.msra.mxu0 0.0
    %2443 = vmatprep.subr.mxu0 0.0
    %2444 = vmatpush2.msra.mxu0 0.0
    %2445 = vmatprep.subr.mxu0 0.0
    %2446 = vmatpush2.msra.mxu0 0.0
    %2447 = vmatprep.subr.mxu0 0.0
    %2448 = vmatpush2.msra.mxu0 0.0
    %2449 = vmatprep.subr.mxu0 0.0
    %2450 = vmatpush2.msra.mxu0 0.0
    %2451 = vmatprep.subr.mxu0 0.0
    %2452 = vmatpush2.msra.mxu0 0.0
    %2453 = vmatprep.subr.mxu0 0.0
    %2454 = vmatpush2.msra.mxu0 0.0
    %2455 = vmatprep.subr.mxu0 0.0
    %2456 = vmatpush2.msra.mxu0 0.0
    %2457 = vmatprep.mubr.f32.mxu0 0.0
    %2458 = vmatmul.mubr.f32.gmra.mxu0 %v2391
    %v2459 = vpop.f32.mrf.mxu0
    %v2460 = vadd.f32 0.0, %v2459
    %v2461 = vpop.f32.mrf.mxu0
    %2462 = vdwg.mxu0
    %2463 = vst.msk [vmem:[#allocation2] sm:$0xff] %vm497, %v2460
    %2464 = vrot.lane.b32.xlu0 %v2285, 120
    %v2465 = vpop.permute.xlu0 %2464
    %2466 = vrot.lane.b32.xlu0 %v2285, 88
    %v2467 = vpop.permute.xlu0 %2466
    %v2468 = vsel %vm497, %v2465, 0
    %v2470 = vsel %vm497, %v2467, 0
    %2472 = vmatprep.subr.mxu0 0.0
    %2473 = vmatpush1.xpose.msra.mxu0 0.0
    %2474 = vmatprep.subr.mxu0 0.0
    %2475 = vmatpush1.xpose.msra.mxu0 0.0
    %2476 = vmatprep.subr.mxu0 0.0
    %2477 = vmatpush1.xpose.msra.mxu0 0.0
    %2478 = vmatprep.subr.mxu0 0.0
    %2479 = vmatpush1.xpose.msra.mxu0 0.0
    %2480 = vmatprep.subr.mxu0 0.0
    %2481 = vmatpush1.xpose.msra.mxu0 0.0
    %2482 = vmatprep.subr.mxu0 0.0
    %2483 = vmatpush1.xpose.msra.mxu0 0.0
    %2484 = vmatprep.subr.mxu0 0.0
    %2485 = vmatpush1.xpose.msra.mxu0 0.0
    %2486 = vmatprep.subr.mxu0 0.0
    %2487 = vmatpush1.xpose.msra.mxu0 0.0
    %2488 = vmatprep.subr.mxu0 0.0
    %2489 = vmatpush1.xpose.msra.mxu0 0.0
    %2490 = vmatprep.subr.mxu0 0.0
    %2491 = vmatpush1.xpose.msra.mxu0 0.0
    %2492 = vmatprep.subr.mxu0 0.0
    %2493 = vmatpush1.xpose.msra.mxu0 0.0
    %2494 = vmatprep.subr.mxu0 0.0
    %2495 = vmatpush1.xpose.msra.mxu0 0.0
    %2496 = vmatprep.subr.mxu0 0.0
    %2497 = vmatpush1.xpose.msra.mxu0 0.0
    %2498 = vmatprep.subr.mxu0 0.0
    %2499 = vmatpush1.xpose.msra.mxu0 0.0
    %2500 = vmatprep.subr.mxu0 0.0
    %2501 = vmatpush1.xpose.msra.mxu0 0.0
    %2502 = vmatprep.subr.mxu0 0.0
    %2503 = vmatpush1.xpose.msra.mxu0 %v2470
    %2504 = vmatprep.subr.mxu0 0.0
    %2505 = vmatpush2.xpose.msra.mxu0 0.0
    %2506 = vmatprep.subr.mxu0 0.0
    %2507 = vmatpush2.xpose.msra.mxu0 0.0
    %2508 = vmatprep.subr.mxu0 0.0
    %2509 = vmatpush2.xpose.msra.mxu0 0.0
    %2510 = vmatprep.subr.mxu0 0.0
    %2511 = vmatpush2.xpose.msra.mxu0 0.0
    %2512 = vmatprep.subr.mxu0 0.0
    %2513 = vmatpush2.xpose.msra.mxu0 0.0
    %2514 = vmatprep.subr.mxu0 0.0
    %2515 = vmatpush2.xpose.msra.mxu0 0.0
    %2516 = vmatprep.subr.mxu0 0.0
    %2517 = vmatpush2.xpose.msra.mxu0 0.0
    %2518 = vmatprep.subr.mxu0 0.0
    %2519 = vmatpush2.xpose.msra.mxu0 0.0
    %2520 = vmatprep.subr.mxu0 0.0
    %2521 = vmatpush2.xpose.msra.mxu0 0.0
    %2522 = vmatprep.subr.mxu0 0.0
    %2523 = vmatpush2.xpose.msra.mxu0 0.0
    %2524 = vmatprep.subr.mxu0 0.0
    %2525 = vmatpush2.xpose.msra.mxu0 0.0
    %2526 = vmatprep.subr.mxu0 0.0
    %2527 = vmatpush2.xpose.msra.mxu0 0.0
    %2528 = vmatprep.subr.mxu0 0.0
    %2529 = vmatpush2.xpose.msra.mxu0 0.0
    %2530 = vmatprep.subr.mxu0 0.0
    %2531 = vmatpush2.xpose.msra.mxu0 0.0
    %2532 = vmatprep.subr.mxu0 0.0
    %2533 = vmatpush2.xpose.msra.mxu0 0.0
    %2534 = vmatprep.subr.mxu0 0.0
    %2535 = vmatpush2.xpose.msra.mxu0 0.0
    %2536 = vmatprep.mubr.f32.mxu0 0.0
    %2537 = vmatmul.mubr.f32.gmra.mxu0 %v2468
    %v2538 = vpop.f32.mrf.mxu0
    %v2539 = vadd.f32 0.0, %v2538
    %v2540 = vpop.f32.mrf.mxu0
    %2541 = vdwg.mxu0
    %v2542 = vmul.f32 %v2539, 0.35355338
    %v2543 = vadd.f32 %v2542, %v2373
    %v2544 = vsel %vm497, %v2543, -inf
    %2545 = vmax.xlane.f32.xlu0 %v2544
    %v2546 = vpop.xlane.xlu0 %2545
    %v2547 = vsub.f32 %v2543, %v2546
    %v2548 = vmul.f32 %v2547, 1.442695
    %v2549 = vpow.pop %v2548
    %v2550 = vsel %vm497, %v2549, 0.0
    %2551 = vadd.xlane.f32.xlu0 %v2550
    %v2552 = vpop.xlane.xlu0 %2551
    %v2553 = vrcp.pop %v2552
    %v2554 = vmul.f32 %v2549, %v2553
    %2555 = vrot.lane.b32.xlu0 %v2285, 56
    %v2556 = vpop.permute.xlu0 %2555
    %v2559 = vsel %vm497, %v2554, 0
    %2561 = vmatprep.subr.mxu0 0.0
    %2562 = vmatpush1.msra.mxu0 0.0
    %2563 = vmatprep.subr.mxu0 0.0
    %2564 = vmatpush1.msra.mxu0 0.0
    %2565 = vmatprep.subr.mxu0 0.0
    %2566 = vmatpush1.msra.mxu0 0.0
    %2567 = vmatprep.subr.mxu0 0.0
    %2568 = vmatpush1.msra.mxu0 0.0
    %2569 = vmatprep.subr.mxu0 0.0
    %2570 = vmatpush1.msra.mxu0 0.0
    %2571 = vmatprep.subr.mxu0 0.0
    %2572 = vmatpush1.msra.mxu0 0.0
    %2573 = vmatprep.subr.mxu0 0.0
    %2574 = vmatpush1.msra.mxu0 0.0
    %2575 = vmatprep.subr.mxu0 0.0
    %2576 = vmatpush1.msra.mxu0 0.0
    %2577 = vmatprep.subr.mxu0 0.0
    %2578 = vmatpush1.msra.mxu0 0.0
    %2579 = vmatprep.subr.mxu0 0.0
    %2580 = vmatpush1.msra.mxu0 0.0
    %2581 = vmatprep.subr.mxu0 0.0
    %2582 = vmatpush1.msra.mxu0 0.0
    %2583 = vmatprep.subr.mxu0 0.0
    %2584 = vmatpush1.msra.mxu0 0.0
    %2585 = vmatprep.subr.mxu0 0.0
    %2586 = vmatpush1.msra.mxu0 0.0
    %2587 = vmatprep.subr.mxu0 0.0
    %2588 = vmatpush1.msra.mxu0 0.0
    %2589 = vmatprep.subr.mxu0 0.0
    %2590 = vmatpush1.msra.mxu0 0.0
    %2591 = vmatprep.subr.mxu0 0.0
    %2592 = vmatpush1.msra.mxu0 %v2556
    %2593 = vmatprep.subr.mxu0 0.0
    %2594 = vmatpush2.msra.mxu0 0.0
    %2595 = vmatprep.subr.mxu0 0.0
    %2596 = vmatpush2.msra.mxu0 0.0
    %2597 = vmatprep.subr.mxu0 0.0
    %2598 = vmatpush2.msra.mxu0 0.0
    %2599 = vmatprep.subr.mxu0 0.0
    %2600 = vmatpush2.msra.mxu0 0.0
    %2601 = vmatprep.subr.mxu0 0.0
    %2602 = vmatpush2.msra.mxu0 0.0
    %2603 = vmatprep.subr.mxu0 0.0
    %2604 = vmatpush2.msra.mxu0 0.0
    %2605 = vmatprep.subr.mxu0 0.0
    %2606 = vmatpush2.msra.mxu0 0.0
    %2607 = vmatprep.subr.mxu0 0.0
    %2608 = vmatpush2.msra.mxu0 0.0
    %2609 = vmatprep.subr.mxu0 0.0
    %2610 = vmatpush2.msra.mxu0 0.0
    %2611 = vmatprep.subr.mxu0 0.0
    %2612 = vmatpush2.msra.mxu0 0.0
    %2613 = vmatprep.subr.mxu0 0.0
    %2614 = vmatpush2.msra.mxu0 0.0
    %2615 = vmatprep.subr.mxu0 0.0
    %2616 = vmatpush2.msra.mxu0 0.0
    %2617 = vmatprep.subr.mxu0 0.0
    %2618 = vmatpush2.msra.mxu0 0.0
    %2619 = vmatprep.subr.mxu0 0.0
    %2620 = vmatpush2.msra.mxu0 0.0
    %2621 = vmatprep.subr.mxu0 0.0
    %2622 = vmatpush2.msra.mxu0 0.0
    %2623 = vmatprep.subr.mxu0 0.0
    %2624 = vmatpush2.msra.mxu0 0.0
    %2625 = vmatprep.mubr.f32.mxu0 0.0
    %2626 = vmatmul.mubr.f32.gmra.mxu0 %v2559
    %v2627 = vpop.f32.mrf.mxu0
    %v2628 = vadd.f32 0.0, %v2627
    %v2629 = vpop.f32.mrf.mxu0
    %2630 = vdwg.mxu0
    %2632 = vrot.lane.b32.xlu0 %v2628, 8
    %v2633 = vpop.permute.xlu0 %2632
    %2635 = vst.msk [vmem:[#allocation2] sm:$0xff] %vm833, %v2633
    %2636 = vrot.lane.b32.xlu0 %v2285, 112
    %v2637 = vpop.permute.xlu0 %2636
    %2638 = vrot.lane.b32.xlu0 %v2285, 80
    %v2639 = vpop.permute.xlu0 %2638
    %v2640 = vsel %vm497, %v2637, 0
    %v2642 = vsel %vm497, %v2639, 0
    %2644 = vmatprep.subr.mxu0 0.0
    %2645 = vmatpush1.xpose.msra.mxu0 0.0
    %2646 = vmatprep.subr.mxu0 0.0
    %2647 = vmatpush1.xpose.msra.mxu0 0.0
    %2648 = vmatprep.subr.mxu0 0.0
    %2649 = vmatpush1.xpose.msra.mxu0 0.0
    %2650 = vmatprep.subr.mxu0 0.0
    %2651 = vmatpush1.xpose.msra.mxu0 0.0
    %2652 = vmatprep.subr.mxu0 0.0
    %2653 = vmatpush1.xpose.msra.mxu0 0.0
    %2654 = vmatprep.subr.mxu0 0.0
    %2655 = vmatpush1.xpose.msra.mxu0 0.0
    %2656 = vmatprep.subr.mxu0 0.0
    %2657 = vmatpush1.xpose.msra.mxu0 0.0
    %2658 = vmatprep.subr.mxu0 0.0
    %2659 = vmatpush1.xpose.msra.mxu0 0.0
    %2660 = vmatprep.subr.mxu0 0.0
    %2661 = vmatpush1.xpose.msra.mxu0 0.0
    %2662 = vmatprep.subr.mxu0 0.0
    %2663 = vmatpush1.xpose.msra.mxu0 0.0
    %2664 = vmatprep.subr.mxu0 0.0
    %2665 = vmatpush1.xpose.msra.mxu0 0.0
    %2666 = vmatprep.subr.mxu0 0.0
    %2667 = vmatpush1.xpose.msra.mxu0 0.0
    %2668 = vmatprep.subr.mxu0 0.0
    %2669 = vmatpush1.xpose.msra.mxu0 0.0
    %2670 = vmatprep.subr.mxu0 0.0
    %2671 = vmatpush1.xpose.msra.mxu0 0.0
    %2672 = vmatprep.subr.mxu0 0.0
    %2673 = vmatpush1.xpose.msra.mxu0 0.0
    %2674 = vmatprep.subr.mxu0 0.0
    %2675 = vmatpush1.xpose.msra.mxu0 %v2642
    %2676 = vmatprep.subr.mxu0 0.0
    %2677 = vmatpush2.xpose.msra.mxu0 0.0
    %2678 = vmatprep.subr.mxu0 0.0
    %2679 = vmatpush2.xpose.msra.mxu0 0.0
    %2680 = vmatprep.subr.mxu0 0.0
    %2681 = vmatpush2.xpose.msra.mxu0 0.0
    %2682 = vmatprep.subr.mxu0 0.0
    %2683 = vmatpush2.xpose.msra.mxu0 0.0
    %2684 = vmatprep.subr.mxu0 0.0
    %2685 = vmatpush2.xpose.msra.mxu0 0.0
    %2686 = vmatprep.subr.mxu0 0.0
    %2687 = vmatpush2.xpose.msra.mxu0 0.0
    %2688 = vmatprep.subr.mxu0 0.0
    %2689 = vmatpush2.xpose.msra.mxu0 0.0
    %2690 = vmatprep.subr.mxu0 0.0
    %2691 = vmatpush2.xpose.msra.mxu0 0.0
    %2692 = vmatprep.subr.mxu0 0.0
    %2693 = vmatpush2.xpose.msra.mxu0 0.0
    %2694 = vmatprep.subr.mxu0 0.0
    %2695 = vmatpush2.xpose.msra.mxu0 0.0
    %2696 = vmatprep.subr.mxu0 0.0
    %2697 = vmatpush2.xpose.msra.mxu0 0.0
    %2698 = vmatprep.subr.mxu0 0.0
    %2699 = vmatpush2.xpose.msra.mxu0 0.0
    %2700 = vmatprep.subr.mxu0 0.0
    %2701 = vmatpush2.xpose.msra.mxu0 0.0
    %2702 = vmatprep.subr.mxu0 0.0
    %2703 = vmatpush2.xpose.msra.mxu0 0.0
    %2704 = vmatprep.subr.mxu0 0.0
    %2705 = vmatpush2.xpose.msra.mxu0 0.0
    %2706 = vmatprep.subr.mxu0 0.0
    %2707 = vmatpush2.xpose.msra.mxu0 0.0
    %2708 = vmatprep.mubr.f32.mxu0 0.0
    %2709 = vmatmul.mubr.f32.gmra.mxu0 %v2640
    %v2710 = vpop.f32.mrf.mxu0
    %v2711 = vadd.f32 0.0, %v2710
    %v2712 = vpop.f32.mrf.mxu0
    %2713 = vdwg.mxu0
    %v2714 = vmul.f32 %v2711, 0.35355338
    %v2715 = vadd.f32 %v2714, %v2373
    %v2716 = vsel %vm497, %v2715, -inf
    %2717 = vmax.xlane.f32.xlu0 %v2716
    %v2718 = vpop.xlane.xlu0 %2717
    %v2719 = vsub.f32 %v2715, %v2718
    %v2720 = vmul.f32 %v2719, 1.442695
    %v2721 = vpow.pop %v2720
    %v2722 = vsel %vm497, %v2721, 0.0
    %2723 = vadd.xlane.f32.xlu0 %v2722
    %v2724 = vpop.xlane.xlu0 %2723
    %v2725 = vrcp.pop %v2724
    %v2726 = vmul.f32 %v2721, %v2725
    %2727 = vrot.lane.b32.xlu0 %v2285, 48
    %v2728 = vpop.permute.xlu0 %2727
    %v2731 = vsel %vm497, %v2726, 0
    %2733 = vmatprep.subr.mxu0 0.0
    %2734 = vmatpush1.msra.mxu0 0.0
    %2735 = vmatprep.subr.mxu0 0.0
    %2736 = vmatpush1.msra.mxu0 0.0
    %2737 = vmatprep.subr.mxu0 0.0
    %2738 = vmatpush1.msra.mxu0 0.0
    %2739 = vmatprep.subr.mxu0 0.0
    %2740 = vmatpush1.msra.mxu0 0.0
    %2741 = vmatprep.subr.mxu0 0.0
    %2742 = vmatpush1.msra.mxu0 0.0
    %2743 = vmatprep.subr.mxu0 0.0
    %2744 = vmatpush1.msra.mxu0 0.0
    %2745 = vmatprep.subr.mxu0 0.0
    %2746 = vmatpush1.msra.mxu0 0.0
    %2747 = vmatprep.subr.mxu0 0.0
    %2748 = vmatpush1.msra.mxu0 0.0
    %2749 = vmatprep.subr.mxu0 0.0
    %2750 = vmatpush1.msra.mxu0 0.0
    %2751 = vmatprep.subr.mxu0 0.0
    %2752 = vmatpush1.msra.mxu0 0.0
    %2753 = vmatprep.subr.mxu0 0.0
    %2754 = vmatpush1.msra.mxu0 0.0
    %2755 = vmatprep.subr.mxu0 0.0
    %2756 = vmatpush1.msra.mxu0 0.0
    %2757 = vmatprep.subr.mxu0 0.0
    %2758 = vmatpush1.msra.mxu0 0.0
    %2759 = vmatprep.subr.mxu0 0.0
    %2760 = vmatpush1.msra.mxu0 0.0
    %2761 = vmatprep.subr.mxu0 0.0
    %2762 = vmatpush1.msra.mxu0 0.0
    %2763 = vmatprep.subr.mxu0 0.0
    %2764 = vmatpush1.msra.mxu0 %v2728
    %2765 = vmatprep.subr.mxu0 0.0
    %2766 = vmatpush2.msra.mxu0 0.0
    %2767 = vmatprep.subr.mxu0 0.0
    %2768 = vmatpush2.msra.mxu0 0.0
    %2769 = vmatprep.subr.mxu0 0.0
    %2770 = vmatpush2.msra.mxu0 0.0
    %2771 = vmatprep.subr.mxu0 0.0
    %2772 = vmatpush2.msra.mxu0 0.0
    %2773 = vmatprep.subr.mxu0 0.0
    %2774 = vmatpush2.msra.mxu0 0.0
    %2775 = vmatprep.subr.mxu0 0.0
    %2776 = vmatpush2.msra.mxu0 0.0
    %2777 = vmatprep.subr.mxu0 0.0
    %2778 = vmatpush2.msra.mxu0 0.0
    %2779 = vmatprep.subr.mxu0 0.0
    %2780 = vmatpush2.msra.mxu0 0.0
    %2781 = vmatprep.subr.mxu0 0.0
    %2782 = vmatpush2.msra.mxu0 0.0
    %2783 = vmatprep.subr.mxu0 0.0
    %2784 = vmatpush2.msra.mxu0 0.0
    %2785 = vmatprep.subr.mxu0 0.0
    %2786 = vmatpush2.msra.mxu0 0.0
    %2787 = vmatprep.subr.mxu0 0.0
    %2788 = vmatpush2.msra.mxu0 0.0
    %2789 = vmatprep.subr.mxu0 0.0
    %2790 = vmatpush2.msra.mxu0 0.0
    %2791 = vmatprep.subr.mxu0 0.0
    %2792 = vmatpush2.msra.mxu0 0.0
    %2793 = vmatprep.subr.mxu0 0.0
    %2794 = vmatpush2.msra.mxu0 0.0
    %2795 = vmatprep.subr.mxu0 0.0
    %2796 = vmatpush2.msra.mxu0 0.0
    %2797 = vmatprep.mubr.f32.mxu0 0.0
    %2798 = vmatmul.mubr.f32.gmra.mxu0 %v2731
    %v2799 = vpop.f32.mrf.mxu0
    %v2800 = vadd.f32 0.0, %v2799
    %v2801 = vpop.f32.mrf.mxu0
    %2802 = vdwg.mxu0
    %2804 = vrot.lane.b32.xlu0 %v2800, 16
    %v2805 = vpop.permute.xlu0 %2804
    %2807 = vst.msk [vmem:[#allocation2] sm:$0xff] %vm1006, %v2805
    %2808 = vrot.lane.b32.xlu0 %v2285, 104
    %v2809 = vpop.permute.xlu0 %2808
    %2810 = vrot.lane.b32.xlu0 %v2285, 72
    %v2811 = vpop.permute.xlu0 %2810
    %v2812 = vsel %vm497, %v2809, 0
    %v2814 = vsel %vm497, %v2811, 0
    %2816 = vmatprep.subr.mxu0 0.0
    %2817 = vmatpush1.xpose.msra.mxu0 0.0
    %2818 = vmatprep.subr.mxu0 0.0
    %2819 = vmatpush1.xpose.msra.mxu0 0.0
    %2820 = vmatprep.subr.mxu0 0.0
    %2821 = vmatpush1.xpose.msra.mxu0 0.0
    %2822 = vmatprep.subr.mxu0 0.0
    %2823 = vmatpush1.xpose.msra.mxu0 0.0
    %2824 = vmatprep.subr.mxu0 0.0
    %2825 = vmatpush1.xpose.msra.mxu0 0.0
    %2826 = vmatprep.subr.mxu0 0.0
    %2827 = vmatpush1.xpose.msra.mxu0 0.0
    %2828 = vmatprep.subr.mxu0 0.0
    %2829 = vmatpush1.xpose.msra.mxu0 0.0
    %2830 = vmatprep.subr.mxu0 0.0
    %2831 = vmatpush1.xpose.msra.mxu0 0.0
    %2832 = vmatprep.subr.mxu0 0.0
    %2833 = vmatpush1.xpose.msra.mxu0 0.0
    %2834 = vmatprep.subr.mxu0 0.0
    %2835 = vmatpush1.xpose.msra.mxu0 0.0
    %2836 = vmatprep.subr.mxu0 0.0
    %2837 = vmatpush1.xpose.msra.mxu0 0.0
    %2838 = vmatprep.subr.mxu0 0.0
    %2839 = vmatpush1.xpose.msra.mxu0 0.0
    %2840 = vmatprep.subr.mxu0 0.0
    %2841 = vmatpush1.xpose.msra.mxu0 0.0
    %2842 = vmatprep.subr.mxu0 0.0
    %2843 = vmatpush1.xpose.msra.mxu0 0.0
    %2844 = vmatprep.subr.mxu0 0.0
    %2845 = vmatpush1.xpose.msra.mxu0 0.0
    %2846 = vmatprep.subr.mxu0 0.0
    %2847 = vmatpush1.xpose.msra.mxu0 %v2814
    %2848 = vmatprep.subr.mxu0 0.0
    %2849 = vmatpush2.xpose.msra.mxu0 0.0
    %2850 = vmatprep.subr.mxu0 0.0
    %2851 = vmatpush2.xpose.msra.mxu0 0.0
    %2852 = vmatprep.subr.mxu0 0.0
    %2853 = vmatpush2.xpose.msra.mxu0 0.0
    %2854 = vmatprep.subr.mxu0 0.0
    %2855 = vmatpush2.xpose.msra.mxu0 0.0
    %2856 = vmatprep.subr.mxu0 0.0
    %2857 = vmatpush2.xpose.msra.mxu0 0.0
    %2858 = vmatprep.subr.mxu0 0.0
    %2859 = vmatpush2.xpose.msra.mxu0 0.0
    %2860 = vmatprep.subr.mxu0 0.0
    %2861 = vmatpush2.xpose.msra.mxu0 0.0
    %2862 = vmatprep.subr.mxu0 0.0
    %2863 = vmatpush2.xpose.msra.mxu0 0.0
    %2864 = vmatprep.subr.mxu0 0.0
    %2865 = vmatpush2.xpose.msra.mxu0 0.0
    %2866 = vmatprep.subr.mxu0 0.0
    %2867 = vmatpush2.xpose.msra.mxu0 0.0
    %2868 = vmatprep.subr.mxu0 0.0
    %2869 = vmatpush2.xpose.msra.mxu0 0.0
    %2870 = vmatprep.subr.mxu0 0.0
    %2871 = vmatpush2.xpose.msra.mxu0 0.0
    %2872 = vmatprep.subr.mxu0 0.0
    %2873 = vmatpush2.xpose.msra.mxu0 0.0
    %2874 = vmatprep.subr.mxu0 0.0
    %2875 = vmatpush2.xpose.msra.mxu0 0.0
    %2876 = vmatprep.subr.mxu0 0.0
    %2877 = vmatpush2.xpose.msra.mxu0 0.0
    %2878 = vmatprep.subr.mxu0 0.0
    %2879 = vmatpush2.xpose.msra.mxu0 0.0
    %2880 = vmatprep.mubr.f32.mxu0 0.0
    %2881 = vmatmul.mubr.f32.gmra.mxu0 %v2812
    %v2882 = vpop.f32.mrf.mxu0
    %v2883 = vadd.f32 0.0, %v2882
    %v2884 = vpop.f32.mrf.mxu0
    %2885 = vdwg.mxu0
    %v2886 = vmul.f32 %v2883, 0.35355338
    %v2887 = vadd.f32 %v2886, %v2373
    %v2888 = vsel %vm497, %v2887, -inf
    %2889 = vmax.xlane.f32.xlu0 %v2888
    %v2890 = vpop.xlane.xlu0 %2889
    %v2891 = vsub.f32 %v2887, %v2890
    %v2892 = vmul.f32 %v2891, 1.442695
    %v2893 = vpow.pop %v2892
    %v2894 = vsel %vm497, %v2893, 0.0
    %2895 = vadd.xlane.f32.xlu0 %v2894
    %v2896 = vpop.xlane.xlu0 %2895
    %v2897 = vrcp.pop %v2896
    %v2898 = vmul.f32 %v2893, %v2897
    %2899 = vrot.lane.b32.xlu0 %v2285, 40
    %v2900 = vpop.permute.xlu0 %2899
    %v2903 = vsel %vm497, %v2898, 0
    %2905 = vmatprep.subr.mxu0 0.0
    %2906 = vmatpush1.msra.mxu0 0.0
    %2907 = vmatprep.subr.mxu0 0.0
    %2908 = vmatpush1.msra.mxu0 0.0
    %2909 = vmatprep.subr.mxu0 0.0
    %2910 = vmatpush1.msra.mxu0 0.0
    %2911 = vmatprep.subr.mxu0 0.0
    %2912 = vmatpush1.msra.mxu0 0.0
    %2913 = vmatprep.subr.mxu0 0.0
    %2914 = vmatpush1.msra.mxu0 0.0
    %2915 = vmatprep.subr.mxu0 0.0
    %2916 = vmatpush1.msra.mxu0 0.0
    %2917 = vmatprep.subr.mxu0 0.0
    %2918 = vmatpush1.msra.mxu0 0.0
    %2919 = vmatprep.subr.mxu0 0.0
    %2920 = vmatpush1.msra.mxu0 0.0
    %2921 = vmatprep.subr.mxu0 0.0
    %2922 = vmatpush1.msra.mxu0 0.0
    %2923 = vmatprep.subr.mxu0 0.0
    %2924 = vmatpush1.msra.mxu0 0.0
    %2925 = vmatprep.subr.mxu0 0.0
    %2926 = vmatpush1.msra.mxu0 0.0
    %2927 = vmatprep.subr.mxu0 0.0
    %2928 = vmatpush1.msra.mxu0 0.0
    %2929 = vmatprep.subr.mxu0 0.0
    %2930 = vmatpush1.msra.mxu0 0.0
    %2931 = vmatprep.subr.mxu0 0.0
    %2932 = vmatpush1.msra.mxu0 0.0
    %2933 = vmatprep.subr.mxu0 0.0
    %2934 = vmatpush1.msra.mxu0 0.0
    %2935 = vmatprep.subr.mxu0 0.0
    %2936 = vmatpush1.msra.mxu0 %v2900
    %2937 = vmatprep.subr.mxu0 0.0
    %2938 = vmatpush2.msra.mxu0 0.0
    %2939 = vmatprep.subr.mxu0 0.0
    %2940 = vmatpush2.msra.mxu0 0.0
    %2941 = vmatprep.subr.mxu0 0.0
    %2942 = vmatpush2.msra.mxu0 0.0
    %2943 = vmatprep.subr.mxu0 0.0
    %2944 = vmatpush2.msra.mxu0 0.0
    %2945 = vmatprep.subr.mxu0 0.0
    %2946 = vmatpush2.msra.mxu0 0.0
    %2947 = vmatprep.subr.mxu0 0.0
    %2948 = vmatpush2.msra.mxu0 0.0
    %2949 = vmatprep.subr.mxu0 0.0
    %2950 = vmatpush2.msra.mxu0 0.0
    %2951 = vmatprep.subr.mxu0 0.0
    %2952 = vmatpush2.msra.mxu0 0.0
    %2953 = vmatprep.subr.mxu0 0.0
    %2954 = vmatpush2.msra.mxu0 0.0
    %2955 = vmatprep.subr.mxu0 0.0
    %2956 = vmatpush2.msra.mxu0 0.0
    %2957 = vmatprep.subr.mxu0 0.0
    %2958 = vmatpush2.msra.mxu0 0.0
    %2959 = vmatprep.subr.mxu0 0.0
    %2960 = vmatpush2.msra.mxu0 0.0
    %2961 = vmatprep.subr.mxu0 0.0
    %2962 = vmatpush2.msra.mxu0 0.0
    %2963 = vmatprep.subr.mxu0 0.0
    %2964 = vmatpush2.msra.mxu0 0.0
    %2965 = vmatprep.subr.mxu0 0.0
    %2966 = vmatpush2.msra.mxu0 0.0
    %2967 = vmatprep.subr.mxu0 0.0
    %2968 = vmatpush2.msra.mxu0 0.0
    %2969 = vmatprep.mubr.f32.mxu0 0.0
    %2970 = vmatmul.mubr.f32.gmra.mxu0 %v2903
    %v2971 = vpop.f32.mrf.mxu0
    %v2972 = vadd.f32 0.0, %v2971
    %v2973 = vpop.f32.mrf.mxu0
    %2974 = vdwg.mxu0
    %2976 = vrot.lane.b32.xlu0 %v2972, 24
    %v2977 = vpop.permute.xlu0 %2976
    %2979 = vst.msk [vmem:[#allocation2] sm:$0xff] %vm1179, %v2977
    %2981 = vrot.lane.b32.xlu0 %v2290, 96
    %v2982 = vpop.permute.xlu0 %2981
    %v2983 = vsel %vm497, %v2290, 0
    %v2985 = vsel %vm497, %v2982, 0
    %2987 = vmatprep.subr.mxu0 0.0
    %2988 = vmatpush1.xpose.msra.mxu0 0.0
    %2989 = vmatprep.subr.mxu0 0.0
    %2990 = vmatpush1.xpose.msra.mxu0 0.0
    %2991 = vmatprep.subr.mxu0 0.0
    %2992 = vmatpush1.xpose.msra.mxu0 0.0
    %2993 = vmatprep.subr.mxu0 0.0
    %2994 = vmatpush1.xpose.msra.mxu0 0.0
    %2995 = vmatprep.subr.mxu0 0.0
    %2996 = vmatpush1.xpose.msra.mxu0 0.0
    %2997 = vmatprep.subr.mxu0 0.0
    %2998 = vmatpush1.xpose.msra.mxu0 0.0
    %2999 = vmatprep.subr.mxu0 0.0
    %3000 = vmatpush1.xpose.msra.mxu0 0.0
    %3001 = vmatprep.subr.mxu0 0.0
    %3002 = vmatpush1.xpose.msra.mxu0 0.0
    %3003 = vmatprep.subr.mxu0 0.0
    %3004 = vmatpush1.xpose.msra.mxu0 0.0
    %3005 = vmatprep.subr.mxu0 0.0
    %3006 = vmatpush1.xpose.msra.mxu0 0.0
    %3007 = vmatprep.subr.mxu0 0.0
    %3008 = vmatpush1.xpose.msra.mxu0 0.0
    %3009 = vmatprep.subr.mxu0 0.0
    %3010 = vmatpush1.xpose.msra.mxu0 0.0
    %3011 = vmatprep.subr.mxu0 0.0
    %3012 = vmatpush1.xpose.msra.mxu0 0.0
    %3013 = vmatprep.subr.mxu0 0.0
    %3014 = vmatpush1.xpose.msra.mxu0 0.0
    %3015 = vmatprep.subr.mxu0 0.0
    %3016 = vmatpush1.xpose.msra.mxu0 0.0
    %3017 = vmatprep.subr.mxu0 0.0
    %3018 = vmatpush1.xpose.msra.mxu0 %v2985
    %3019 = vmatprep.subr.mxu0 0.0
    %3020 = vmatpush2.xpose.msra.mxu0 0.0
    %3021 = vmatprep.subr.mxu0 0.0
    %3022 = vmatpush2.xpose.msra.mxu0 0.0
    %3023 = vmatprep.subr.mxu0 0.0
    %3024 = vmatpush2.xpose.msra.mxu0 0.0
    %3025 = vmatprep.subr.mxu0 0.0
    %3026 = vmatpush2.xpose.msra.mxu0 0.0
    %3027 = vmatprep.subr.mxu0 0.0
    %3028 = vmatpush2.xpose.msra.mxu0 0.0
    %3029 = vmatprep.subr.mxu0 0.0
    %3030 = vmatpush2.xpose.msra.mxu0 0.0
    %3031 = vmatprep.subr.mxu0 0.0
    %3032 = vmatpush2.xpose.msra.mxu0 0.0
    %3033 = vmatprep.subr.mxu0 0.0
    %3034 = vmatpush2.xpose.msra.mxu0 0.0
    %3035 = vmatprep.subr.mxu0 0.0
    %3036 = vmatpush2.xpose.msra.mxu0 0.0
    %3037 = vmatprep.subr.mxu0 0.0
    %3038 = vmatpush2.xpose.msra.mxu0 0.0
    %3039 = vmatprep.subr.mxu0 0.0
    %3040 = vmatpush2.xpose.msra.mxu0 0.0
    %3041 = vmatprep.subr.mxu0 0.0
    %3042 = vmatpush2.xpose.msra.mxu0 0.0
    %3043 = vmatprep.subr.mxu0 0.0
    %3044 = vmatpush2.xpose.msra.mxu0 0.0
    %3045 = vmatprep.subr.mxu0 0.0
    %3046 = vmatpush2.xpose.msra.mxu0 0.0
    %3047 = vmatprep.subr.mxu0 0.0
    %3048 = vmatpush2.xpose.msra.mxu0 0.0
    %3049 = vmatprep.subr.mxu0 0.0
    %3050 = vmatpush2.xpose.msra.mxu0 0.0
    %3051 = vmatprep.mubr.f32.mxu0 0.0
    %3052 = vmatmul.mubr.f32.gmra.mxu0 %v2983
    %v3053 = vpop.f32.mrf.mxu0
    %v3054 = vadd.f32 0.0, %v3053
    %v3055 = vpop.f32.mrf.mxu0
    %3056 = vdwg.mxu0
    %v3057 = vmul.f32 %v3054, 0.35355338
    %3059 = vrot.lane.b32.xlu0 %v403, 104
    %v3060 = vpop.permute.xlu0 %3059
    %v3062 = vadd.f32 %v3057, %v3060
    %v3063 = vsel %vm497, %v3062, -inf
    %3064 = vmax.xlane.f32.xlu0 %v3063
    %v3065 = vpop.xlane.xlu0 %3064
    %v3066 = vsub.f32 %v3062, %v3065
    %v3067 = vmul.f32 %v3066, 1.442695
    %v3068 = vpow.pop %v3067
    %v3069 = vsel %vm497, %v3068, 0.0
    %3070 = vadd.xlane.f32.xlu0 %v3069
    %v3071 = vpop.xlane.xlu0 %3070
    %v3072 = vrcp.pop %v3071
    %v3073 = vmul.f32 %v3068, %v3072
    %3074 = vrot.lane.b32.xlu0 %v2290, 64
    %v3075 = vpop.permute.xlu0 %3074
    %v3078 = vsel %vm497, %v3073, 0
    %3080 = vmatprep.subr.mxu0 0.0
    %3081 = vmatpush1.msra.mxu0 0.0
    %3082 = vmatprep.subr.mxu0 0.0
    %3083 = vmatpush1.msra.mxu0 0.0
    %3084 = vmatprep.subr.mxu0 0.0
    %3085 = vmatpush1.msra.mxu0 0.0
    %3086 = vmatprep.subr.mxu0 0.0
    %3087 = vmatpush1.msra.mxu0 0.0
    %3088 = vmatprep.subr.mxu0 0.0
    %3089 = vmatpush1.msra.mxu0 0.0
    %3090 = vmatprep.subr.mxu0 0.0
    %3091 = vmatpush1.msra.mxu0 0.0
    %3092 = vmatprep.subr.mxu0 0.0
    %3093 = vmatpush1.msra.mxu0 0.0
    %3094 = vmatprep.subr.mxu0 0.0
    %3095 = vmatpush1.msra.mxu0 0.0
    %3096 = vmatprep.subr.mxu0 0.0
    %3097 = vmatpush1.msra.mxu0 0.0
    %3098 = vmatprep.subr.mxu0 0.0
    %3099 = vmatpush1.msra.mxu0 0.0
    %3100 = vmatprep.subr.mxu0 0.0
    %3101 = vmatpush1.msra.mxu0 0.0
    %3102 = vmatprep.subr.mxu0 0.0
    %3103 = vmatpush1.msra.mxu0 0.0
    %3104 = vmatprep.subr.mxu0 0.0
    %3105 = vmatpush1.msra.mxu0 0.0
    %3106 = vmatprep.subr.mxu0 0.0
    %3107 = vmatpush1.msra.mxu0 0.0
    %3108 = vmatprep.subr.mxu0 0.0
    %3109 = vmatpush1.msra.mxu0 0.0
    %3110 = vmatprep.subr.mxu0 0.0
    %3111 = vmatpush1.msra.mxu0 %v3075
    %3112 = vmatprep.subr.mxu0 0.0
    %3113 = vmatpush2.msra.mxu0 0.0
    %3114 = vmatprep.subr.mxu0 0.0
    %3115 = vmatpush2.msra.mxu0 0.0
    %3116 = vmatprep.subr.mxu0 0.0
    %3117 = vmatpush2.msra.mxu0 0.0
    %3118 = vmatprep.subr.mxu0 0.0
    %3119 = vmatpush2.msra.mxu0 0.0
    %3120 = vmatprep.subr.mxu0 0.0
    %3121 = vmatpush2.msra.mxu0 0.0
    %3122 = vmatprep.subr.mxu0 0.0
    %3123 = vmatpush2.msra.mxu0 0.0
    %3124 = vmatprep.subr.mxu0 0.0
    %3125 = vmatpush2.msra.mxu0 0.0
    %3126 = vmatprep.subr.mxu0 0.0
    %3127 = vmatpush2.msra.mxu0 0.0
    %3128 = vmatprep.subr.mxu0 0.0
    %3129 = vmatpush2.msra.mxu0 0.0
    %3130 = vmatprep.subr.mxu0 0.0
    %3131 = vmatpush2.msra.mxu0 0.0
    %3132 = vmatprep.subr.mxu0 0.0
    %3133 = vmatpush2.msra.mxu0 0.0
    %3134 = vmatprep.subr.mxu0 0.0
    %3135 = vmatpush2.msra.mxu0 0.0
    %3136 = vmatprep.subr.mxu0 0.0
    %3137 = vmatpush2.msra.mxu0 0.0
    %3138 = vmatprep.subr.mxu0 0.0
    %3139 = vmatpush2.msra.mxu0 0.0
    %3140 = vmatprep.subr.mxu0 0.0
    %3141 = vmatpush2.msra.mxu0 0.0
    %3142 = vmatprep.subr.mxu0 0.0
    %3143 = vmatpush2.msra.mxu0 0.0
    %3144 = vmatprep.mubr.f32.mxu0 0.0
    %3145 = vmatmul.mubr.f32.gmra.mxu0 %v3078
    %v3146 = vpop.f32.mrf.mxu0
    %v3147 = vadd.f32 0.0, %v3146
    %v3148 = vpop.f32.mrf.mxu0
    %3149 = vdwg.mxu0
    %3150 = vst.msk [vmem:[#allocation2 + $0x8] sm:$0xff] %vm497, %v3147
    %3151 = vrot.lane.b32.xlu0 %v2290, 120
    %v3152 = vpop.permute.xlu0 %3151
    %3153 = vrot.lane.b32.xlu0 %v2290, 88
    %v3154 = vpop.permute.xlu0 %3153
    %v3155 = vsel %vm497, %v3152, 0
    %v3157 = vsel %vm497, %v3154, 0
    %3159 = vmatprep.subr.mxu0 0.0
    %3160 = vmatpush1.xpose.msra.mxu0 0.0
    %3161 = vmatprep.subr.mxu0 0.0
    %3162 = vmatpush1.xpose.msra.mxu0 0.0
    %3163 = vmatprep.subr.mxu0 0.0
    %3164 = vmatpush1.xpose.msra.mxu0 0.0
    %3165 = vmatprep.subr.mxu0 0.0
    %3166 = vmatpush1.xpose.msra.mxu0 0.0
    %3167 = vmatprep.subr.mxu0 0.0
    %3168 = vmatpush1.xpose.msra.mxu0 0.0
    %3169 = vmatprep.subr.mxu0 0.0
    %3170 = vmatpush1.xpose.msra.mxu0 0.0
    %3171 = vmatprep.subr.mxu0 0.0
    %3172 = vmatpush1.xpose.msra.mxu0 0.0
    %3173 = vmatprep.subr.mxu0 0.0
    %3174 = vmatpush1.xpose.msra.mxu0 0.0
    %3175 = vmatprep.subr.mxu0 0.0
    %3176 = vmatpush1.xpose.msra.mxu0 0.0
    %3177 = vmatprep.subr.mxu0 0.0
    %3178 = vmatpush1.xpose.msra.mxu0 0.0
    %3179 = vmatprep.subr.mxu0 0.0
    %3180 = vmatpush1.xpose.msra.mxu0 0.0
    %3181 = vmatprep.subr.mxu0 0.0
    %3182 = vmatpush1.xpose.msra.mxu0 0.0
    %3183 = vmatprep.subr.mxu0 0.0
    %3184 = vmatpush1.xpose.msra.mxu0 0.0
    %3185 = vmatprep.subr.mxu0 0.0
    %3186 = vmatpush1.xpose.msra.mxu0 0.0
    %3187 = vmatprep.subr.mxu0 0.0
    %3188 = vmatpush1.xpose.msra.mxu0 0.0
    %3189 = vmatprep.subr.mxu0 0.0
    %3190 = vmatpush1.xpose.msra.mxu0 %v3157
    %3191 = vmatprep.subr.mxu0 0.0
    %3192 = vmatpush2.xpose.msra.mxu0 0.0
    %3193 = vmatprep.subr.mxu0 0.0
    %3194 = vmatpush2.xpose.msra.mxu0 0.0
    %3195 = vmatprep.subr.mxu0 0.0
    %3196 = vmatpush2.xpose.msra.mxu0 0.0
    %3197 = vmatprep.subr.mxu0 0.0
    %3198 = vmatpush2.xpose.msra.mxu0 0.0
    %3199 = vmatprep.subr.mxu0 0.0
    %3200 = vmatpush2.xpose.msra.mxu0 0.0
    %3201 = vmatprep.subr.mxu0 0.0
    %3202 = vmatpush2.xpose.msra.mxu0 0.0
    %3203 = vmatprep.subr.mxu0 0.0
    %3204 = vmatpush2.xpose.msra.mxu0 0.0
    %3205 = vmatprep.subr.mxu0 0.0
    %3206 = vmatpush2.xpose.msra.mxu0 0.0
    %3207 = vmatprep.subr.mxu0 0.0
    %3208 = vmatpush2.xpose.msra.mxu0 0.0
    %3209 = vmatprep.subr.mxu0 0.0
    %3210 = vmatpush2.xpose.msra.mxu0 0.0
    %3211 = vmatprep.subr.mxu0 0.0
    %3212 = vmatpush2.xpose.msra.mxu0 0.0
    %3213 = vmatprep.subr.mxu0 0.0
    %3214 = vmatpush2.xpose.msra.mxu0 0.0
    %3215 = vmatprep.subr.mxu0 0.0
    %3216 = vmatpush2.xpose.msra.mxu0 0.0
    %3217 = vmatprep.subr.mxu0 0.0
    %3218 = vmatpush2.xpose.msra.mxu0 0.0
    %3219 = vmatprep.subr.mxu0 0.0
    %3220 = vmatpush2.xpose.msra.mxu0 0.0
    %3221 = vmatprep.subr.mxu0 0.0
    %3222 = vmatpush2.xpose.msra.mxu0 0.0
    %3223 = vmatprep.mubr.f32.mxu0 0.0
    %3224 = vmatmul.mubr.f32.gmra.mxu0 %v3155
    %v3225 = vpop.f32.mrf.mxu0
    %v3226 = vadd.f32 0.0, %v3225
    %v3227 = vpop.f32.mrf.mxu0
    %3228 = vdwg.mxu0
    %v3229 = vmul.f32 %v3226, 0.35355338
    %v3230 = vadd.f32 %v3229, %v3060
    %v3231 = vsel %vm497, %v3230, -inf
    %3232 = vmax.xlane.f32.xlu0 %v3231
    %v3233 = vpop.xlane.xlu0 %3232
    %v3234 = vsub.f32 %v3230, %v3233
    %v3235 = vmul.f32 %v3234, 1.442695
    %v3236 = vpow.pop %v3235
    %v3237 = vsel %vm497, %v3236, 0.0
    %3238 = vadd.xlane.f32.xlu0 %v3237
    %v3239 = vpop.xlane.xlu0 %3238
    %v3240 = vrcp.pop %v3239
    %v3241 = vmul.f32 %v3236, %v3240
    %3242 = vrot.lane.b32.xlu0 %v2290, 56
    %v3243 = vpop.permute.xlu0 %3242
    %v3246 = vsel %vm497, %v3241, 0
    %3248 = vmatprep.subr.mxu0 0.0
    %3249 = vmatpush1.msra.mxu0 0.0
    %3250 = vmatprep.subr.mxu0 0.0
    %3251 = vmatpush1.msra.mxu0 0.0
    %3252 = vmatprep.subr.mxu0 0.0
    %3253 = vmatpush1.msra.mxu0 0.0
    %3254 = vmatprep.subr.mxu0 0.0
    %3255 = vmatpush1.msra.mxu0 0.0
    %3256 = vmatprep.subr.mxu0 0.0
    %3257 = vmatpush1.msra.mxu0 0.0
    %3258 = vmatprep.subr.mxu0 0.0
    %3259 = vmatpush1.msra.mxu0 0.0
    %3260 = vmatprep.subr.mxu0 0.0
    %3261 = vmatpush1.msra.mxu0 0.0
    %3262 = vmatprep.subr.mxu0 0.0
    %3263 = vmatpush1.msra.mxu0 0.0
    %3264 = vmatprep.subr.mxu0 0.0
    %3265 = vmatpush1.msra.mxu0 0.0
    %3266 = vmatprep.subr.mxu0 0.0
    %3267 = vmatpush1.msra.mxu0 0.0
    %3268 = vmatprep.subr.mxu0 0.0
    %3269 = vmatpush1.msra.mxu0 0.0
    %3270 = vmatprep.subr.mxu0 0.0
    %3271 = vmatpush1.msra.mxu0 0.0
    %3272 = vmatprep.subr.mxu0 0.0
    %3273 = vmatpush1.msra.mxu0 0.0
    %3274 = vmatprep.subr.mxu0 0.0
    %3275 = vmatpush1.msra.mxu0 0.0
    %3276 = vmatprep.subr.mxu0 0.0
    %3277 = vmatpush1.msra.mxu0 0.0
    %3278 = vmatprep.subr.mxu0 0.0
    %3279 = vmatpush1.msra.mxu0 %v3243
    %3280 = vmatprep.subr.mxu0 0.0
    %3281 = vmatpush2.msra.mxu0 0.0
    %3282 = vmatprep.subr.mxu0 0.0
    %3283 = vmatpush2.msra.mxu0 0.0
    %3284 = vmatprep.subr.mxu0 0.0
    %3285 = vmatpush2.msra.mxu0 0.0
    %3286 = vmatprep.subr.mxu0 0.0
    %3287 = vmatpush2.msra.mxu0 0.0
    %3288 = vmatprep.subr.mxu0 0.0
    %3289 = vmatpush2.msra.mxu0 0.0
    %3290 = vmatprep.subr.mxu0 0.0
    %3291 = vmatpush2.msra.mxu0 0.0
    %3292 = vmatprep.subr.mxu0 0.0
    %3293 = vmatpush2.msra.mxu0 0.0
    %3294 = vmatprep.subr.mxu0 0.0
    %3295 = vmatpush2.msra.mxu0 0.0
    %3296 = vmatprep.subr.mxu0 0.0
    %3297 = vmatpush2.msra.mxu0 0.0
    %3298 = vmatprep.subr.mxu0 0.0
    %3299 = vmatpush2.msra.mxu0 0.0
    %3300 = vmatprep.subr.mxu0 0.0
    %3301 = vmatpush2.msra.mxu0 0.0
    %3302 = vmatprep.subr.mxu0 0.0
    %3303 = vmatpush2.msra.mxu0 0.0
    %3304 = vmatprep.subr.mxu0 0.0
    %3305 = vmatpush2.msra.mxu0 0.0
    %3306 = vmatprep.subr.mxu0 0.0
    %3307 = vmatpush2.msra.mxu0 0.0
    %3308 = vmatprep.subr.mxu0 0.0
    %3309 = vmatpush2.msra.mxu0 0.0
    %3310 = vmatprep.subr.mxu0 0.0
    %3311 = vmatpush2.msra.mxu0 0.0
    %3312 = vmatprep.mubr.f32.mxu0 0.0
    %3313 = vmatmul.mubr.f32.gmra.mxu0 %v3246
    %v3314 = vpop.f32.mrf.mxu0
    %v3315 = vadd.f32 0.0, %v3314
    %v3316 = vpop.f32.mrf.mxu0
    %3317 = vdwg.mxu0
    %3319 = vrot.lane.b32.xlu0 %v3315, 8
    %v3320 = vpop.permute.xlu0 %3319
    %3322 = vst.msk [vmem:[#allocation2 + $0x8] sm:$0xff] %vm833, %v3320
    %3323 = vrot.lane.b32.xlu0 %v2290, 112
    %v3324 = vpop.permute.xlu0 %3323
    %3325 = vrot.lane.b32.xlu0 %v2290, 80
    %v3326 = vpop.permute.xlu0 %3325
    %v3327 = vsel %vm497, %v3324, 0
    %v3329 = vsel %vm497, %v3326, 0
    %3331 = vmatprep.subr.mxu0 0.0
    %3332 = vmatpush1.xpose.msra.mxu0 0.0
    %3333 = vmatprep.subr.mxu0 0.0
    %3334 = vmatpush1.xpose.msra.mxu0 0.0
    %3335 = vmatprep.subr.mxu0 0.0
    %3336 = vmatpush1.xpose.msra.mxu0 0.0
    %3337 = vmatprep.subr.mxu0 0.0
    %3338 = vmatpush1.xpose.msra.mxu0 0.0
    %3339 = vmatprep.subr.mxu0 0.0
    %3340 = vmatpush1.xpose.msra.mxu0 0.0
    %3341 = vmatprep.subr.mxu0 0.0
    %3342 = vmatpush1.xpose.msra.mxu0 0.0
    %3343 = vmatprep.subr.mxu0 0.0
    %3344 = vmatpush1.xpose.msra.mxu0 0.0
    %3345 = vmatprep.subr.mxu0 0.0
    %3346 = vmatpush1.xpose.msra.mxu0 0.0
    %3347 = vmatprep.subr.mxu0 0.0
    %3348 = vmatpush1.xpose.msra.mxu0 0.0
    %3349 = vmatprep.subr.mxu0 0.0
    %3350 = vmatpush1.xpose.msra.mxu0 0.0
    %3351 = vmatprep.subr.mxu0 0.0
    %3352 = vmatpush1.xpose.msra.mxu0 0.0
    %3353 = vmatprep.subr.mxu0 0.0
    %3354 = vmatpush1.xpose.msra.mxu0 0.0
    %3355 = vmatprep.subr.mxu0 0.0
    %3356 = vmatpush1.xpose.msra.mxu0 0.0
    %3357 = vmatprep.subr.mxu0 0.0
    %3358 = vmatpush1.xpose.msra.mxu0 0.0
    %3359 = vmatprep.subr.mxu0 0.0
    %3360 = vmatpush1.xpose.msra.mxu0 0.0
    %3361 = vmatprep.subr.mxu0 0.0
    %3362 = vmatpush1.xpose.msra.mxu0 %v3329
    %3363 = vmatprep.subr.mxu0 0.0
    %3364 = vmatpush2.xpose.msra.mxu0 0.0
    %3365 = vmatprep.subr.mxu0 0.0
    %3366 = vmatpush2.xpose.msra.mxu0 0.0
    %3367 = vmatprep.subr.mxu0 0.0
    %3368 = vmatpush2.xpose.msra.mxu0 0.0
    %3369 = vmatprep.subr.mxu0 0.0
    %3370 = vmatpush2.xpose.msra.mxu0 0.0
    %3371 = vmatprep.subr.mxu0 0.0
    %3372 = vmatpush2.xpose.msra.mxu0 0.0
    %3373 = vmatprep.subr.mxu0 0.0
    %3374 = vmatpush2.xpose.msra.mxu0 0.0
    %3375 = vmatprep.subr.mxu0 0.0
    %3376 = vmatpush2.xpose.msra.mxu0 0.0
    %3377 = vmatprep.subr.mxu0 0.0
    %3378 = vmatpush2.xpose.msra.mxu0 0.0
    %3379 = vmatprep.subr.mxu0 0.0
    %3380 = vmatpush2.xpose.msra.mxu0 0.0
    %3381 = vmatprep.subr.mxu0 0.0
    %3382 = vmatpush2.xpose.msra.mxu0 0.0
    %3383 = vmatprep.subr.mxu0 0.0
    %3384 = vmatpush2.xpose.msra.mxu0 0.0
    %3385 = vmatprep.subr.mxu0 0.0
    %3386 = vmatpush2.xpose.msra.mxu0 0.0
    %3387 = vmatprep.subr.mxu0 0.0
    %3388 = vmatpush2.xpose.msra.mxu0 0.0
    %3389 = vmatprep.subr.mxu0 0.0
    %3390 = vmatpush2.xpose.msra.mxu0 0.0
    %3391 = vmatprep.subr.mxu0 0.0
    %3392 = vmatpush2.xpose.msra.mxu0 0.0
    %3393 = vmatprep.subr.mxu0 0.0
    %3394 = vmatpush2.xpose.msra.mxu0 0.0
    %3395 = vmatprep.mubr.f32.mxu0 0.0
    %3396 = vmatmul.mubr.f32.gmra.mxu0 %v3327
    %v3397 = vpop.f32.mrf.mxu0
    %v3398 = vadd.f32 0.0, %v3397
    %v3399 = vpop.f32.mrf.mxu0
    %3400 = vdwg.mxu0
    %v3401 = vmul.f32 %v3398, 0.35355338
    %v3402 = vadd.f32 %v3401, %v3060
    %v3403 = vsel %vm497, %v3402, -inf
    %3404 = vmax.xlane.f32.xlu0 %v3403
    %v3405 = vpop.xlane.xlu0 %3404
    %v3406 = vsub.f32 %v3402, %v3405
    %v3407 = vmul.f32 %v3406, 1.442695
    %v3408 = vpow.pop %v3407
    %v3409 = vsel %vm497, %v3408, 0.0
    %3410 = vadd.xlane.f32.xlu0 %v3409
    %v3411 = vpop.xlane.xlu0 %3410
    %v3412 = vrcp.pop %v3411
    %v3413 = vmul.f32 %v3408, %v3412
    %3414 = vrot.lane.b32.xlu0 %v2290, 48
    %v3415 = vpop.permute.xlu0 %3414
    %v3418 = vsel %vm497, %v3413, 0
    %3420 = vmatprep.subr.mxu0 0.0
    %3421 = vmatpush1.msra.mxu0 0.0
    %3422 = vmatprep.subr.mxu0 0.0
    %3423 = vmatpush1.msra.mxu0 0.0
    %3424 = vmatprep.subr.mxu0 0.0
    %3425 = vmatpush1.msra.mxu0 0.0
    %3426 = vmatprep.subr.mxu0 0.0
    %3427 = vmatpush1.msra.mxu0 0.0
    %3428 = vmatprep.subr.mxu0 0.0
    %3429 = vmatpush1.msra.mxu0 0.0
    %3430 = vmatprep.subr.mxu0 0.0
    %3431 = vmatpush1.msra.mxu0 0.0
    %3432 = vmatprep.subr.mxu0 0.0
    %3433 = vmatpush1.msra.mxu0 0.0
    %3434 = vmatprep.subr.mxu0 0.0
    %3435 = vmatpush1.msra.mxu0 0.0
    %3436 = vmatprep.subr.mxu0 0.0
    %3437 = vmatpush1.msra.mxu0 0.0
    %3438 = vmatprep.subr.mxu0 0.0
    %3439 = vmatpush1.msra.mxu0 0.0
    %3440 = vmatprep.subr.mxu0 0.0
    %3441 = vmatpush1.msra.mxu0 0.0
    %3442 = vmatprep.subr.mxu0 0.0
    %3443 = vmatpush1.msra.mxu0 0.0
    %3444 = vmatprep.subr.mxu0 0.0
    %3445 = vmatpush1.msra.mxu0 0.0
    %3446 = vmatprep.subr.mxu0 0.0
    %3447 = vmatpush1.msra.mxu0 0.0
    %3448 = vmatprep.subr.mxu0 0.0
    %3449 = vmatpush1.msra.mxu0 0.0
    %3450 = vmatprep.subr.mxu0 0.0
    %3451 = vmatpush1.msra.mxu0 %v3415
    %3452 = vmatprep.subr.mxu0 0.0
    %3453 = vmatpush2.msra.mxu0 0.0
    %3454 = vmatprep.subr.mxu0 0.0
    %3455 = vmatpush2.msra.mxu0 0.0
    %3456 = vmatprep.subr.mxu0 0.0
    %3457 = vmatpush2.msra.mxu0 0.0
    %3458 = vmatprep.subr.mxu0 0.0
    %3459 = vmatpush2.msra.mxu0 0.0
    %3460 = vmatprep.subr.mxu0 0.0
    %3461 = vmatpush2.msra.mxu0 0.0
    %3462 = vmatprep.subr.mxu0 0.0
    %3463 = vmatpush2.msra.mxu0 0.0
    %3464 = vmatprep.subr.mxu0 0.0
    %3465 = vmatpush2.msra.mxu0 0.0
    %3466 = vmatprep.subr.mxu0 0.0
    %3467 = vmatpush2.msra.mxu0 0.0
    %3468 = vmatprep.subr.mxu0 0.0
    %3469 = vmatpush2.msra.mxu0 0.0
    %3470 = vmatprep.subr.mxu0 0.0
    %3471 = vmatpush2.msra.mxu0 0.0
    %3472 = vmatprep.subr.mxu0 0.0
    %3473 = vmatpush2.msra.mxu0 0.0
    %3474 = vmatprep.subr.mxu0 0.0
    %3475 = vmatpush2.msra.mxu0 0.0
    %3476 = vmatprep.subr.mxu0 0.0
    %3477 = vmatpush2.msra.mxu0 0.0
    %3478 = vmatprep.subr.mxu0 0.0
    %3479 = vmatpush2.msra.mxu0 0.0
    %3480 = vmatprep.subr.mxu0 0.0
    %3481 = vmatpush2.msra.mxu0 0.0
    %3482 = vmatprep.subr.mxu0 0.0
    %3483 = vmatpush2.msra.mxu0 0.0
    %3484 = vmatprep.mubr.f32.mxu0 0.0
    %3485 = vmatmul.mubr.f32.gmra.mxu0 %v3418
    %v3486 = vpop.f32.mrf.mxu0
    %v3487 = vadd.f32 0.0, %v3486
    %v3488 = vpop.f32.mrf.mxu0
    %3489 = vdwg.mxu0
    %3491 = vrot.lane.b32.xlu0 %v3487, 16
    %v3492 = vpop.permute.xlu0 %3491
    %3494 = vst.msk [vmem:[#allocation2 + $0x8] sm:$0xff] %vm1006, %v3492
    %3495 = vrot.lane.b32.xlu0 %v2290, 104
    %v3496 = vpop.permute.xlu0 %3495
    %3497 = vrot.lane.b32.xlu0 %v2290, 72
    %v3498 = vpop.permute.xlu0 %3497
    %v3499 = vsel %vm497, %v3496, 0
    %v3501 = vsel %vm497, %v3498, 0
    %3503 = vmatprep.subr.mxu0 0.0
    %3504 = vmatpush1.xpose.msra.mxu0 0.0
    %3505 = vmatprep.subr.mxu0 0.0
    %3506 = vmatpush1.xpose.msra.mxu0 0.0
    %3507 = vmatprep.subr.mxu0 0.0
    %3508 = vmatpush1.xpose.msra.mxu0 0.0
    %3509 = vmatprep.subr.mxu0 0.0
    %3510 = vmatpush1.xpose.msra.mxu0 0.0
    %3511 = vmatprep.subr.mxu0 0.0
    %3512 = vmatpush1.xpose.msra.mxu0 0.0
    %3513 = vmatprep.subr.mxu0 0.0
    %3514 = vmatpush1.xpose.msra.mxu0 0.0
    %3515 = vmatprep.subr.mxu0 0.0
    %3516 = vmatpush1.xpose.msra.mxu0 0.0
    %3517 = vmatprep.subr.mxu0 0.0
    %3518 = vmatpush1.xpose.msra.mxu0 0.0
    %3519 = vmatprep.subr.mxu0 0.0
    %3520 = vmatpush1.xpose.msra.mxu0 0.0
    %3521 = vmatprep.subr.mxu0 0.0
    %3522 = vmatpush1.xpose.msra.mxu0 0.0
    %3523 = vmatprep.subr.mxu0 0.0
    %3524 = vmatpush1.xpose.msra.mxu0 0.0
    %3525 = vmatprep.subr.mxu0 0.0
    %3526 = vmatpush1.xpose.msra.mxu0 0.0
    %3527 = vmatprep.subr.mxu0 0.0
    %3528 = vmatpush1.xpose.msra.mxu0 0.0
    %3529 = vmatprep.subr.mxu0 0.0
    %3530 = vmatpush1.xpose.msra.mxu0 0.0
    %3531 = vmatprep.subr.mxu0 0.0
    %3532 = vmatpush1.xpose.msra.mxu0 0.0
    %3533 = vmatprep.subr.mxu0 0.0
    %3534 = vmatpush1.xpose.msra.mxu0 %v3501
    %3535 = vmatprep.subr.mxu0 0.0
    %3536 = vmatpush2.xpose.msra.mxu0 0.0
    %3537 = vmatprep.subr.mxu0 0.0
    %3538 = vmatpush2.xpose.msra.mxu0 0.0
    %3539 = vmatprep.subr.mxu0 0.0
    %3540 = vmatpush2.xpose.msra.mxu0 0.0
    %3541 = vmatprep.subr.mxu0 0.0
    %3542 = vmatpush2.xpose.msra.mxu0 0.0
    %3543 = vmatprep.subr.mxu0 0.0
    %3544 = vmatpush2.xpose.msra.mxu0 0.0
    %3545 = vmatprep.subr.mxu0 0.0
    %3546 = vmatpush2.xpose.msra.mxu0 0.0
    %3547 = vmatprep.subr.mxu0 0.0
    %3548 = vmatpush2.xpose.msra.mxu0 0.0
    %3549 = vmatprep.subr.mxu0 0.0
    %3550 = vmatpush2.xpose.msra.mxu0 0.0
    %3551 = vmatprep.subr.mxu0 0.0
    %3552 = vmatpush2.xpose.msra.mxu0 0.0
    %3553 = vmatprep.subr.mxu0 0.0
    %3554 = vmatpush2.xpose.msra.mxu0 0.0
    %3555 = vmatprep.subr.mxu0 0.0
    %3556 = vmatpush2.xpose.msra.mxu0 0.0
    %3557 = vmatprep.subr.mxu0 0.0
    %3558 = vmatpush2.xpose.msra.mxu0 0.0
    %3559 = vmatprep.subr.mxu0 0.0
    %3560 = vmatpush2.xpose.msra.mxu0 0.0
    %3561 = vmatprep.subr.mxu0 0.0
    %3562 = vmatpush2.xpose.msra.mxu0 0.0
    %3563 = vmatprep.subr.mxu0 0.0
    %3564 = vmatpush2.xpose.msra.mxu0 0.0
    %3565 = vmatprep.subr.mxu0 0.0
    %3566 = vmatpush2.xpose.msra.mxu0 0.0
    %3567 = vmatprep.mubr.f32.mxu0 0.0
    %3568 = vmatmul.mubr.f32.gmra.mxu0 %v3499
    %v3569 = vpop.f32.mrf.mxu0
    %v3570 = vadd.f32 0.0, %v3569
    %v3571 = vpop.f32.mrf.mxu0
    %3572 = vdwg.mxu0
    %v3573 = vmul.f32 %v3570, 0.35355338
    %v3574 = vadd.f32 %v3573, %v3060
    %v3575 = vsel %vm497, %v3574, -inf
    %3576 = vmax.xlane.f32.xlu0 %v3575
    %v3577 = vpop.xlane.xlu0 %3576
    %v3578 = vsub.f32 %v3574, %v3577
    %v3579 = vmul.f32 %v3578, 1.442695
    %v3580 = vpow.pop %v3579
    %v3581 = vsel %vm497, %v3580, 0.0
    %3582 = vadd.xlane.f32.xlu0 %v3581
    %v3583 = vpop.xlane.xlu0 %3582
    %v3584 = vrcp.pop %v3583
    %v3585 = vmul.f32 %v3580, %v3584
    %3586 = vrot.lane.b32.xlu0 %v2290, 40
    %v3587 = vpop.permute.xlu0 %3586
    %v3590 = vsel %vm497, %v3585, 0
    %3592 = vmatprep.subr.mxu0 0.0
    %3593 = vmatpush1.msra.mxu0 0.0
    %3594 = vmatprep.subr.mxu0 0.0
    %3595 = vmatpush1.msra.mxu0 0.0
    %3596 = vmatprep.subr.mxu0 0.0
    %3597 = vmatpush1.msra.mxu0 0.0
    %3598 = vmatprep.subr.mxu0 0.0
    %3599 = vmatpush1.msra.mxu0 0.0
    %3600 = vmatprep.subr.mxu0 0.0
    %3601 = vmatpush1.msra.mxu0 0.0
    %3602 = vmatprep.subr.mxu0 0.0
    %3603 = vmatpush1.msra.mxu0 0.0
    %3604 = vmatprep.subr.mxu0 0.0
    %3605 = vmatpush1.msra.mxu0 0.0
    %3606 = vmatprep.subr.mxu0 0.0
    %3607 = vmatpush1.msra.mxu0 0.0
    %3608 = vmatprep.subr.mxu0 0.0
    %3609 = vmatpush1.msra.mxu0 0.0
    %3610 = vmatprep.subr.mxu0 0.0
    %3611 = vmatpush1.msra.mxu0 0.0
    %3612 = vmatprep.subr.mxu0 0.0
    %3613 = vmatpush1.msra.mxu0 0.0
    %3614 = vmatprep.subr.mxu0 0.0
    %3615 = vmatpush1.msra.mxu0 0.0
    %3616 = vmatprep.subr.mxu0 0.0
    %3617 = vmatpush1.msra.mxu0 0.0
    %3618 = vmatprep.subr.mxu0 0.0
    %3619 = vmatpush1.msra.mxu0 0.0
    %3620 = vmatprep.subr.mxu0 0.0
    %3621 = vmatpush1.msra.mxu0 0.0
    %3622 = vmatprep.subr.mxu0 0.0
    %3623 = vmatpush1.msra.mxu0 %v3587
    %3624 = vmatprep.subr.mxu0 0.0
    %3625 = vmatpush2.msra.mxu0 0.0
    %3626 = vmatprep.subr.mxu0 0.0
    %3627 = vmatpush2.msra.mxu0 0.0
    %3628 = vmatprep.subr.mxu0 0.0
    %3629 = vmatpush2.msra.mxu0 0.0
    %3630 = vmatprep.subr.mxu0 0.0
    %3631 = vmatpush2.msra.mxu0 0.0
    %3632 = vmatprep.subr.mxu0 0.0
    %3633 = vmatpush2.msra.mxu0 0.0
    %3634 = vmatprep.subr.mxu0 0.0
    %3635 = vmatpush2.msra.mxu0 0.0
    %3636 = vmatprep.subr.mxu0 0.0
    %3637 = vmatpush2.msra.mxu0 0.0
    %3638 = vmatprep.subr.mxu0 0.0
    %3639 = vmatpush2.msra.mxu0 0.0
    %3640 = vmatprep.subr.mxu0 0.0
    %3641 = vmatpush2.msra.mxu0 0.0
    %3642 = vmatprep.subr.mxu0 0.0
    %3643 = vmatpush2.msra.mxu0 0.0
    %3644 = vmatprep.subr.mxu0 0.0
    %3645 = vmatpush2.msra.mxu0 0.0
    %3646 = vmatprep.subr.mxu0 0.0
    %3647 = vmatpush2.msra.mxu0 0.0
    %3648 = vmatprep.subr.mxu0 0.0
    %3649 = vmatpush2.msra.mxu0 0.0
    %3650 = vmatprep.subr.mxu0 0.0
    %3651 = vmatpush2.msra.mxu0 0.0
    %3652 = vmatprep.subr.mxu0 0.0
    %3653 = vmatpush2.msra.mxu0 0.0
    %3654 = vmatprep.subr.mxu0 0.0
    %3655 = vmatpush2.msra.mxu0 0.0
    %3656 = vmatprep.mubr.f32.mxu0 0.0
    %3657 = vmatmul.mubr.f32.gmra.mxu0 %v3590
    %v3658 = vpop.f32.mrf.mxu0
    %v3659 = vadd.f32 0.0, %v3658
    %v3660 = vpop.f32.mrf.mxu0
    %3661 = vdwg.mxu0
    %3663 = vrot.lane.b32.xlu0 %v3659, 24
    %v3664 = vpop.permute.xlu0 %3663
    %3666 = vst.msk [vmem:[#allocation2 + $0x8] sm:$0xff] %vm1179, %v3664
    %v3667 = vld [vmem:[#allocation2] sm:$0xff]
    %v3668 = vld [vmem:[#allocation2 + $0x8] sm:$0xff]
    %v3669 = vlaneseq
    %v3670 = vshrl.u32 %v3669, 7
    %v3671 = vsub.s32 7, %v3670
    %v3672 = vrot.slane %v97, %v3671
    %v3674 = vsel %vm412, %v3667, 0
    %v3677 = vsel %vm412, %v3668, 0
    %3679 = vmatprep.subr.mxu0 0.0
    %3680 = vmatpush1.msra.mxu0 0.0
    %3681 = vmatprep.subr.mxu0 0.0
    %3682 = vmatpush1.msra.mxu0 0.0
    %3683 = vmatprep.subr.mxu0 0.0
    %3684 = vmatpush1.msra.mxu0 0.0
    %3685 = vmatprep.subr.mxu0 0.0
    %3686 = vmatpush1.msra.mxu0 0.0
    %3687 = vmatprep.subr.mxu0 0.0
    %3688 = vmatpush1.msra.mxu0 0.0
    %3689 = vmatprep.subr.mxu0 0.0
    %3690 = vmatpush1.msra.mxu0 0.0
    %3691 = vmatprep.subr.mxu0 0.0
    %3692 = vmatpush1.msra.mxu0 0.0
    %3693 = vmatprep.subr.mxu0 0.0
    %3694 = vmatpush1.msra.mxu0 0.0
    %3695 = vmatprep.subr.mxu0 0.0
    %3696 = vmatpush1.msra.mxu0 0.0
    %3697 = vmatprep.subr.mxu0 0.0
    %3698 = vmatpush1.msra.mxu0 0.0
    %3699 = vmatprep.subr.mxu0 0.0
    %3700 = vmatpush1.msra.mxu0 0.0
    %3701 = vmatprep.subr.mxu0 0.0
    %3702 = vmatpush1.msra.mxu0 0.0
    %3703 = vmatprep.subr.mxu0 0.0
    %3704 = vmatpush1.msra.mxu0 %v75
    %3705 = vmatprep.subr.mxu0 0.0
    %3706 = vmatpush1.msra.mxu0 %v65
    %3707 = vmatprep.subr.mxu0 0.0
    %3708 = vmatpush1.msra.mxu0 %v55
    %3709 = vmatprep.subr.mxu0 0.0
    %3710 = vmatpush1.msra.mxu0 %v45
    %3711 = vmatprep.subr.mxu0 0.0
    %3712 = vmatpush2.msra.mxu0 0.0
    %3713 = vmatprep.subr.mxu0 0.0
    %3714 = vmatpush2.msra.mxu0 0.0
    %3715 = vmatprep.subr.mxu0 0.0
    %3716 = vmatpush2.msra.mxu0 0.0
    %3717 = vmatprep.subr.mxu0 0.0
    %3718 = vmatpush2.msra.mxu0 0.0
    %3719 = vmatprep.subr.mxu0 0.0
    %3720 = vmatpush2.msra.mxu0 0.0
    %3721 = vmatprep.subr.mxu0 0.0
    %3722 = vmatpush2.msra.mxu0 0.0
    %3723 = vmatprep.subr.mxu0 0.0
    %3724 = vmatpush2.msra.mxu0 0.0
    %3725 = vmatprep.subr.mxu0 0.0
    %3726 = vmatpush2.msra.mxu0 0.0
    %3727 = vmatprep.subr.mxu0 0.0
    %3728 = vmatpush2.msra.mxu0 0.0
    %3729 = vmatprep.subr.mxu0 0.0
    %3730 = vmatpush2.msra.mxu0 0.0
    %3731 = vmatprep.subr.mxu0 0.0
    %3732 = vmatpush2.msra.mxu0 0.0
    %3733 = vmatprep.subr.mxu0 0.0
    %3734 = vmatpush2.msra.mxu0 0.0
    %3735 = vmatprep.subr.mxu0 0.0
    %3736 = vmatpush2.msra.mxu0 0.0
    %3737 = vmatprep.subr.mxu0 0.0
    %3738 = vmatpush2.msra.mxu0 0.0
    %3739 = vmatprep.subr.mxu0 0.0
    %3740 = vmatpush2.msra.mxu0 0.0
    %3741 = vmatprep.subr.mxu0 0.0
    %3742 = vmatpush2.msra.mxu0 0.0
    %3743 = vmatprep.mubr.f32.mxu0 0.0
    %3744 = vmatmul.mubr.f32.gmra.mxu0 %v3674
    %v3745 = vpop.f32.mrf.mxu0
    %v3746 = vadd.f32 %v3672, %v3745
    %v3747 = vpop.f32.mrf.mxu0
    %3748 = vmatprep.mubr.f32.mxu0 0.0
    %3749 = vmatmul.mubr.f32.gmra.mxu0 %v3677
    %v3750 = vpop.f32.mrf.mxu0
    %v3751 = vadd.f32 %v3672, %v3750
    %v3752 = vpop.f32.mrf.mxu0
    %3753 = vdwg.mxu0
    %v3754 = vadd.f32 %v335, %v3746
    %v3755 = vadd.f32 %v336, %v3751
    %v3756 = vsel %vm412, %v3754, 0.0
    %3757 = vadd.xlane.f32.xlu0 %v3756
    %v3758 = vpop.xlane.xlu0 %3757
    %v3759 = vsel %vm412, %v3755, 0.0
    %3760 = vadd.xlane.f32.xlu0 %v3759
    %v3761 = vpop.xlane.xlu0 %3760
    %v3762 = vmul.f32 %v3758, %v1963
    %v3763 = vmul.f32 %v3761, %v1963
    %v3764 = vsub.f32 %v3754, %v3762
    %v3765 = vsub.f32 %v3755, %v3763
    %v3766 = vmul.f32 %v3764, %v3764
    %v3767 = vmul.f32 %v3765, %v3765
    %v3768 = vsel %vm412, %v3766, 0.0
    %3769 = vadd.xlane.f32.xlu0 %v3768
    %v3770 = vpop.xlane.xlu0 %3769
    %v3771 = vsel %vm412, %v3767, 0.0
    %3772 = vadd.xlane.f32.xlu0 %v3771
    %v3773 = vpop.xlane.xlu0 %3772
    %v3774 = vmul.f32 %v3770, %v1963
    %v3775 = vmul.f32 %v3773, %v1963
    %v3776 = vadd.f32 %v3774, 1e-05
    %v3777 = vadd.f32 %v3775, 1e-05
    %v3778 = vrsqrt.pop %v3776
    %v3779 = vrsqrt.pop %v3777
    %v3780 = vmul.f32 %v3764, %v3778
    %v3781 = vmul.f32 %v3765, %v3779
    %v3782 = vlaneseq
    %v3783 = vshrl.u32 %v3782, 7
    %v3784 = vsub.s32 6, %v3783
    %v3785 = vrot.slane %v98, %v3784
    %v3786 = vmul.f32 %v3780, %v3785
    %v3787 = vmul.f32 %v3781, %v3785
    %v3788 = vlaneseq
    %v3789 = vshrl.u32 %v3788, 7
    %v3790 = vsub.s32 3, %v3789
    %v3791 = vrot.slane %v99, %v3790
    %v3792 = vadd.f32 %v3786, %v3791
    %v3793 = vadd.f32 %v3787, %v3791
    %v3794 = vlaneseq
    %v3795 = vshrl.u32 %v3794, 7
    %v3796 = vsub.s32 5, %v3795
    %v3797 = vrot.slane %v97, %v3796
    %v3799 = vsel %vm412, %v3792, 0
    %v3802 = vsel %vm412, %v3793, 0
    %3804 = vmatprep.subr.mxu0 0.0
    %3805 = vmatpush1.msra.mxu0 0.0
    %3806 = vmatprep.subr.mxu0 0.0
    %3807 = vmatpush1.msra.mxu0 0.0
    %3808 = vmatprep.subr.mxu0 0.0
    %3809 = vmatpush1.msra.mxu0 0.0
    %3810 = vmatprep.subr.mxu0 0.0
    %3811 = vmatpush1.msra.mxu0 0.0
    %3812 = vmatprep.subr.mxu0 0.0
    %3813 = vmatpush1.msra.mxu0 0.0
    %3814 = vmatprep.subr.mxu0 0.0
    %3815 = vmatpush1.msra.mxu0 0.0
    %3816 = vmatprep.subr.mxu0 0.0
    %3817 = vmatpush1.msra.mxu0 0.0
    %3818 = vmatprep.subr.mxu0 0.0
    %3819 = vmatpush1.msra.mxu0 0.0
    %3820 = vmatprep.subr.mxu0 0.0
    %3821 = vmatpush1.msra.mxu0 0.0
    %3822 = vmatprep.subr.mxu0 0.0
    %3823 = vmatpush1.msra.mxu0 0.0
    %3824 = vmatprep.subr.mxu0 0.0
    %3825 = vmatpush1.msra.mxu0 0.0
    %3826 = vmatprep.subr.mxu0 0.0
    %3827 = vmatpush1.msra.mxu0 0.0
    %3828 = vmatprep.subr.mxu0 0.0
    %3829 = vmatpush1.msra.mxu0 %v73
    %3830 = vmatprep.subr.mxu0 0.0
    %3831 = vmatpush1.msra.mxu0 %v63
    %3832 = vmatprep.subr.mxu0 0.0
    %3833 = vmatpush1.msra.mxu0 %v53
    %3834 = vmatprep.subr.mxu0 0.0
    %3835 = vmatpush1.msra.mxu0 %v43
    %3836 = vmatprep.subr.mxu0 0.0
    %3837 = vmatpush2.msra.mxu0 0.0
    %3838 = vmatprep.subr.mxu0 0.0
    %3839 = vmatpush2.msra.mxu0 0.0
    %3840 = vmatprep.subr.mxu0 0.0
    %3841 = vmatpush2.msra.mxu0 0.0
    %3842 = vmatprep.subr.mxu0 0.0
    %3843 = vmatpush2.msra.mxu0 0.0
    %3844 = vmatprep.subr.mxu0 0.0
    %3845 = vmatpush2.msra.mxu0 0.0
    %3846 = vmatprep.subr.mxu0 0.0
    %3847 = vmatpush2.msra.mxu0 0.0
    %3848 = vmatprep.subr.mxu0 0.0
    %3849 = vmatpush2.msra.mxu0 0.0
    %3850 = vmatprep.subr.mxu0 0.0
    %3851 = vmatpush2.msra.mxu0 0.0
    %3852 = vmatprep.subr.mxu0 0.0
    %3853 = vmatpush2.msra.mxu0 0.0
    %3854 = vmatprep.subr.mxu0 0.0
    %3855 = vmatpush2.msra.mxu0 0.0
    %3856 = vmatprep.subr.mxu0 0.0
    %3857 = vmatpush2.msra.mxu0 0.0
    %3858 = vmatprep.subr.mxu0 0.0
    %3859 = vmatpush2.msra.mxu0 0.0
    %3860 = vmatprep.subr.mxu0 0.0
    %3861 = vmatpush2.msra.mxu0 0.0
    %3862 = vmatprep.subr.mxu0 0.0
    %3863 = vmatpush2.msra.mxu0 0.0
    %3864 = vmatprep.subr.mxu0 0.0
    %3865 = vmatpush2.msra.mxu0 0.0
    %3866 = vmatprep.subr.mxu0 0.0
    %3867 = vmatpush2.msra.mxu0 0.0
    %3868 = vmatprep.mubr.f32.mxu0 0.0
    %3869 = vmatmul.mubr.f32.gmra.mxu0 %v3799
    %v3870 = vpop.f32.mrf.mxu0
    %v3871 = vadd.f32 %v3797, %v3870
    %v3872 = vpop.f32.mrf.mxu0
    %3873 = vmatprep.mubr.f32.mxu0 0.0
    %3874 = vmatmul.mubr.f32.gmra.mxu0 %v3802
    %v3875 = vpop.f32.mrf.mxu0
    %v3876 = vadd.f32 %v3797, %v3875
    %v3877 = vpop.f32.mrf.mxu0
    %3878 = vdwg.mxu0
    %v3879 = vlaneseq
    %v3880 = vshrl.u32 %v3879, 7
    %v3881 = vsub.s32 6, %v3880
    %v3882 = vrot.slane %v97, %v3881
    %v3884 = vsel %vm412, %v2206, 0
    %v3887 = vsel %vm412, %v2207, 0
    %3889 = vmatprep.subr.mxu0 0.0
    %3890 = vmatpush1.msra.mxu0 0.0
    %3891 = vmatprep.subr.mxu0 0.0
    %3892 = vmatpush1.msra.mxu0 0.0
    %3893 = vmatprep.subr.mxu0 0.0
    %3894 = vmatpush1.msra.mxu0 0.0
    %3895 = vmatprep.subr.mxu0 0.0
    %3896 = vmatpush1.msra.mxu0 0.0
    %3897 = vmatprep.subr.mxu0 0.0
    %3898 = vmatpush1.msra.mxu0 0.0
    %3899 = vmatprep.subr.mxu0 0.0
    %3900 = vmatpush1.msra.mxu0 0.0
    %3901 = vmatprep.subr.mxu0 0.0
    %3902 = vmatpush1.msra.mxu0 0.0
    %3903 = vmatprep.subr.mxu0 0.0
    %3904 = vmatpush1.msra.mxu0 0.0
    %3905 = vmatprep.subr.mxu0 0.0
    %3906 = vmatpush1.msra.mxu0 0.0
    %3907 = vmatprep.subr.mxu0 0.0
    %3908 = vmatpush1.msra.mxu0 0.0
    %3909 = vmatprep.subr.mxu0 0.0
    %3910 = vmatpush1.msra.mxu0 0.0
    %3911 = vmatprep.subr.mxu0 0.0
    %3912 = vmatpush1.msra.mxu0 0.0
    %3913 = vmatprep.subr.mxu0 0.0
    %3914 = vmatpush1.msra.mxu0 %v74
    %3915 = vmatprep.subr.mxu0 0.0
    %3916 = vmatpush1.msra.mxu0 %v64
    %3917 = vmatprep.subr.mxu0 0.0
    %3918 = vmatpush1.msra.mxu0 %v54
    %3919 = vmatprep.subr.mxu0 0.0
    %3920 = vmatpush1.msra.mxu0 %v44
    %3921 = vmatprep.subr.mxu0 0.0
    %3922 = vmatpush2.msra.mxu0 0.0
    %3923 = vmatprep.subr.mxu0 0.0
    %3924 = vmatpush2.msra.mxu0 0.0
    %3925 = vmatprep.subr.mxu0 0.0
    %3926 = vmatpush2.msra.mxu0 0.0
    %3927 = vmatprep.subr.mxu0 0.0
    %3928 = vmatpush2.msra.mxu0 0.0
    %3929 = vmatprep.subr.mxu0 0.0
    %3930 = vmatpush2.msra.mxu0 0.0
    %3931 = vmatprep.subr.mxu0 0.0
    %3932 = vmatpush2.msra.mxu0 0.0
    %3933 = vmatprep.subr.mxu0 0.0
    %3934 = vmatpush2.msra.mxu0 0.0
    %3935 = vmatprep.subr.mxu0 0.0
    %3936 = vmatpush2.msra.mxu0 0.0
    %3937 = vmatprep.subr.mxu0 0.0
    %3938 = vmatpush2.msra.mxu0 0.0
    %3939 = vmatprep.subr.mxu0 0.0
    %3940 = vmatpush2.msra.mxu0 0.0
    %3941 = vmatprep.subr.mxu0 0.0
    %3942 = vmatpush2.msra.mxu0 0.0
    %3943 = vmatprep.subr.mxu0 0.0
    %3944 = vmatpush2.msra.mxu0 0.0
    %3945 = vmatprep.subr.mxu0 0.0
    %3946 = vmatpush2.msra.mxu0 0.0
    %3947 = vmatprep.subr.mxu0 0.0
    %3948 = vmatpush2.msra.mxu0 0.0
    %3949 = vmatprep.subr.mxu0 0.0
    %3950 = vmatpush2.msra.mxu0 0.0
    %3951 = vmatprep.subr.mxu0 0.0
    %3952 = vmatpush2.msra.mxu0 0.0
    %3953 = vmatprep.mubr.f32.mxu0 0.0
    %3954 = vmatmul.mubr.f32.gmra.mxu0 %v3884
    %v3955 = vpop.f32.mrf.mxu0
    %v3956 = vadd.f32 %v3882, %v3955
    %v3957 = vpop.f32.mrf.mxu0
    %3958 = vmatprep.mubr.f32.mxu0 0.0
    %3959 = vmatmul.mubr.f32.gmra.mxu0 %v3887
    %v3960 = vpop.f32.mrf.mxu0
    %v3961 = vadd.f32 %v3882, %v3960
    %v3962 = vpop.f32.mrf.mxu0
    %3963 = vdwg.mxu0
    %v3965 = vsel %vm497, %v3871, 0
    %v3968 = vsel %vm497, %v3956, 0
    %3970 = vmatprep.subr.mxu0 0.0
    %3971 = vmatpush1.xpose.msra.mxu0 0.0
    %3972 = vmatprep.subr.mxu0 0.0
    %3973 = vmatpush1.xpose.msra.mxu0 0.0
    %3974 = vmatprep.subr.mxu0 0.0
    %3975 = vmatpush1.xpose.msra.mxu0 0.0
    %3976 = vmatprep.subr.mxu0 0.0
    %3977 = vmatpush1.xpose.msra.mxu0 0.0
    %3978 = vmatprep.subr.mxu0 0.0
    %3979 = vmatpush1.xpose.msra.mxu0 0.0
    %3980 = vmatprep.subr.mxu0 0.0
    %3981 = vmatpush1.xpose.msra.mxu0 0.0
    %3982 = vmatprep.subr.mxu0 0.0
    %3983 = vmatpush1.xpose.msra.mxu0 0.0
    %3984 = vmatprep.subr.mxu0 0.0
    %3985 = vmatpush1.xpose.msra.mxu0 0.0
    %3986 = vmatprep.subr.mxu0 0.0
    %3987 = vmatpush1.xpose.msra.mxu0 0.0
    %3988 = vmatprep.subr.mxu0 0.0
    %3989 = vmatpush1.xpose.msra.mxu0 0.0
    %3990 = vmatprep.subr.mxu0 0.0
    %3991 = vmatpush1.xpose.msra.mxu0 0.0
    %3992 = vmatprep.subr.mxu0 0.0
    %3993 = vmatpush1.xpose.msra.mxu0 0.0
    %3994 = vmatprep.subr.mxu0 0.0
    %3995 = vmatpush1.xpose.msra.mxu0 0.0
    %3996 = vmatprep.subr.mxu0 0.0
    %3997 = vmatpush1.xpose.msra.mxu0 0.0
    %3998 = vmatprep.subr.mxu0 0.0
    %3999 = vmatpush1.xpose.msra.mxu0 0.0
    %4000 = vmatprep.subr.mxu0 0.0
    %4001 = vmatpush1.xpose.msra.mxu0 %v3968
    %4002 = vmatprep.subr.mxu0 0.0
    %4003 = vmatpush2.xpose.msra.mxu0 0.0
    %4004 = vmatprep.subr.mxu0 0.0
    %4005 = vmatpush2.xpose.msra.mxu0 0.0
    %4006 = vmatprep.subr.mxu0 0.0
    %4007 = vmatpush2.xpose.msra.mxu0 0.0
    %4008 = vmatprep.subr.mxu0 0.0
    %4009 = vmatpush2.xpose.msra.mxu0 0.0
    %4010 = vmatprep.subr.mxu0 0.0
    %4011 = vmatpush2.xpose.msra.mxu0 0.0
    %4012 = vmatprep.subr.mxu0 0.0
    %4013 = vmatpush2.xpose.msra.mxu0 0.0
    %4014 = vmatprep.subr.mxu0 0.0
    %4015 = vmatpush2.xpose.msra.mxu0 0.0
    %4016 = vmatprep.subr.mxu0 0.0
    %4017 = vmatpush2.xpose.msra.mxu0 0.0
    %4018 = vmatprep.subr.mxu0 0.0
    %4019 = vmatpush2.xpose.msra.mxu0 0.0
    %4020 = vmatprep.subr.mxu0 0.0
    %4021 = vmatpush2.xpose.msra.mxu0 0.0
    %4022 = vmatprep.subr.mxu0 0.0
    %4023 = vmatpush2.xpose.msra.mxu0 0.0
    %4024 = vmatprep.subr.mxu0 0.0
    %4025 = vmatpush2.xpose.msra.mxu0 0.0
    %4026 = vmatprep.subr.mxu0 0.0
    %4027 = vmatpush2.xpose.msra.mxu0 0.0
    %4028 = vmatprep.subr.mxu0 0.0
    %4029 = vmatpush2.xpose.msra.mxu0 0.0
    %4030 = vmatprep.subr.mxu0 0.0
    %4031 = vmatpush2.xpose.msra.mxu0 0.0
    %4032 = vmatprep.subr.mxu0 0.0
    %4033 = vmatpush2.xpose.msra.mxu0 0.0
    %4034 = vmatprep.mubr.f32.mxu0 0.0
    %4035 = vmatmul.mubr.f32.gmra.mxu0 %v3965
    %v4036 = vpop.f32.mrf.mxu0
    %v4037 = vadd.f32 0.0, %v4036
    %v4038 = vpop.f32.mrf.mxu0
    %4039 = vdwg.mxu0
    %v4040 = vmul.f32 %v4037, 0.35355338
    %v4041 = vadd.f32 %v4040, %v405
    %v4042 = vsel %vm497, %v4041, -inf
    %4043 = vmax.xlane.f32.xlu0 %v4042
    %v4044 = vpop.xlane.xlu0 %4043
    %v4045 = vsub.f32 %v4041, %v4044
    %v4046 = vmul.f32 %v4045, 1.442695
    %v4047 = vpow.pop %v4046
    %v4048 = vsel %vm497, %v4047, 0.0
    %4049 = vadd.xlane.f32.xlu0 %v4048
    %v4050 = vpop.xlane.xlu0 %4049
    %v4051 = vrcp.pop %v4050
    %v4052 = vmul.f32 %v4047, %v4051
    %4053 = vrot.lane.b32.xlu0 %v3956, 96
    %v4054 = vpop.permute.xlu0 %4053
    %v4057 = vsel %vm497, %v4052, 0
    %4059 = vmatprep.subr.mxu0 0.0
    %4060 = vmatpush1.msra.mxu0 0.0
    %4061 = vmatprep.subr.mxu0 0.0
    %4062 = vmatpush1.msra.mxu0 0.0
    %4063 = vmatprep.subr.mxu0 0.0
    %4064 = vmatpush1.msra.mxu0 0.0
    %4065 = vmatprep.subr.mxu0 0.0
    %4066 = vmatpush1.msra.mxu0 0.0
    %4067 = vmatprep.subr.mxu0 0.0
    %4068 = vmatpush1.msra.mxu0 0.0
    %4069 = vmatprep.subr.mxu0 0.0
    %4070 = vmatpush1.msra.mxu0 0.0
    %4071 = vmatprep.subr.mxu0 0.0
    %4072 = vmatpush1.msra.mxu0 0.0
    %4073 = vmatprep.subr.mxu0 0.0
    %4074 = vmatpush1.msra.mxu0 0.0
    %4075 = vmatprep.subr.mxu0 0.0
    %4076 = vmatpush1.msra.mxu0 0.0
    %4077 = vmatprep.subr.mxu0 0.0
    %4078 = vmatpush1.msra.mxu0 0.0
    %4079 = vmatprep.subr.mxu0 0.0
    %4080 = vmatpush1.msra.mxu0 0.0
    %4081 = vmatprep.subr.mxu0 0.0
    %4082 = vmatpush1.msra.mxu0 0.0
    %4083 = vmatprep.subr.mxu0 0.0
    %4084 = vmatpush1.msra.mxu0 0.0
    %4085 = vmatprep.subr.mxu0 0.0
    %4086 = vmatpush1.msra.mxu0 0.0
    %4087 = vmatprep.subr.mxu0 0.0
    %4088 = vmatpush1.msra.mxu0 0.0
    %4089 = vmatprep.subr.mxu0 0.0
    %4090 = vmatpush1.msra.mxu0 %v4054
    %4091 = vmatprep.subr.mxu0 0.0
    %4092 = vmatpush2.msra.mxu0 0.0
    %4093 = vmatprep.subr.mxu0 0.0
    %4094 = vmatpush2.msra.mxu0 0.0
    %4095 = vmatprep.subr.mxu0 0.0
    %4096 = vmatpush2.msra.mxu0 0.0
    %4097 = vmatprep.subr.mxu0 0.0
    %4098 = vmatpush2.msra.mxu0 0.0
    %4099 = vmatprep.subr.mxu0 0.0
    %4100 = vmatpush2.msra.mxu0 0.0
    %4101 = vmatprep.subr.mxu0 0.0
    %4102 = vmatpush2.msra.mxu0 0.0
    %4103 = vmatprep.subr.mxu0 0.0
    %4104 = vmatpush2.msra.mxu0 0.0
    %4105 = vmatprep.subr.mxu0 0.0
    %4106 = vmatpush2.msra.mxu0 0.0
    %4107 = vmatprep.subr.mxu0 0.0
    %4108 = vmatpush2.msra.mxu0 0.0
    %4109 = vmatprep.subr.mxu0 0.0
    %4110 = vmatpush2.msra.mxu0 0.0
    %4111 = vmatprep.subr.mxu0 0.0
    %4112 = vmatpush2.msra.mxu0 0.0
    %4113 = vmatprep.subr.mxu0 0.0
    %4114 = vmatpush2.msra.mxu0 0.0
    %4115 = vmatprep.subr.mxu0 0.0
    %4116 = vmatpush2.msra.mxu0 0.0
    %4117 = vmatprep.subr.mxu0 0.0
    %4118 = vmatpush2.msra.mxu0 0.0
    %4119 = vmatprep.subr.mxu0 0.0
    %4120 = vmatpush2.msra.mxu0 0.0
    %4121 = vmatprep.subr.mxu0 0.0
    %4122 = vmatpush2.msra.mxu0 0.0
    %4123 = vmatprep.mubr.f32.mxu0 0.0
    %4124 = vmatmul.mubr.f32.gmra.mxu0 %v4057
    %v4125 = vpop.f32.mrf.mxu0
    %v4126 = vadd.f32 0.0, %v4125
    %v4127 = vpop.f32.mrf.mxu0
    %4128 = vdwg.mxu0
    %4129 = vst.msk [vmem:[#allocation2] sm:$0xff] %vm497, %v4126
    %4130 = vrot.lane.b32.xlu0 %v3871, 120
    %v4131 = vpop.permute.xlu0 %4130
    %4132 = vrot.lane.b32.xlu0 %v3956, 120
    %v4133 = vpop.permute.xlu0 %4132
    %v4134 = vsel %vm497, %v4131, 0
    %v4136 = vsel %vm497, %v4133, 0
    %4138 = vmatprep.subr.mxu0 0.0
    %4139 = vmatpush1.xpose.msra.mxu0 0.0
    %4140 = vmatprep.subr.mxu0 0.0
    %4141 = vmatpush1.xpose.msra.mxu0 0.0
    %4142 = vmatprep.subr.mxu0 0.0
    %4143 = vmatpush1.xpose.msra.mxu0 0.0
    %4144 = vmatprep.subr.mxu0 0.0
    %4145 = vmatpush1.xpose.msra.mxu0 0.0
    %4146 = vmatprep.subr.mxu0 0.0
    %4147 = vmatpush1.xpose.msra.mxu0 0.0
    %4148 = vmatprep.subr.mxu0 0.0
    %4149 = vmatpush1.xpose.msra.mxu0 0.0
    %4150 = vmatprep.subr.mxu0 0.0
    %4151 = vmatpush1.xpose.msra.mxu0 0.0
    %4152 = vmatprep.subr.mxu0 0.0
    %4153 = vmatpush1.xpose.msra.mxu0 0.0
    %4154 = vmatprep.subr.mxu0 0.0
    %4155 = vmatpush1.xpose.msra.mxu0 0.0
    %4156 = vmatprep.subr.mxu0 0.0
    %4157 = vmatpush1.xpose.msra.mxu0 0.0
    %4158 = vmatprep.subr.mxu0 0.0
    %4159 = vmatpush1.xpose.msra.mxu0 0.0
    %4160 = vmatprep.subr.mxu0 0.0
    %4161 = vmatpush1.xpose.msra.mxu0 0.0
    %4162 = vmatprep.subr.mxu0 0.0
    %4163 = vmatpush1.xpose.msra.mxu0 0.0
    %4164 = vmatprep.subr.mxu0 0.0
    %4165 = vmatpush1.xpose.msra.mxu0 0.0
    %4166 = vmatprep.subr.mxu0 0.0
    %4167 = vmatpush1.xpose.msra.mxu0 0.0
    %4168 = vmatprep.subr.mxu0 0.0
    %4169 = vmatpush1.xpose.msra.mxu0 %v4136
    %4170 = vmatprep.subr.mxu0 0.0
    %4171 = vmatpush2.xpose.msra.mxu0 0.0
    %4172 = vmatprep.subr.mxu0 0.0
    %4173 = vmatpush2.xpose.msra.mxu0 0.0
    %4174 = vmatprep.subr.mxu0 0.0
    %4175 = vmatpush2.xpose.msra.mxu0 0.0
    %4176 = vmatprep.subr.mxu0 0.0
    %4177 = vmatpush2.xpose.msra.mxu0 0.0
    %4178 = vmatprep.subr.mxu0 0.0
    %4179 = vmatpush2.xpose.msra.mxu0 0.0
    %4180 = vmatprep.subr.mxu0 0.0
    %4181 = vmatpush2.xpose.msra.mxu0 0.0
    %4182 = vmatprep.subr.mxu0 0.0
    %4183 = vmatpush2.xpose.msra.mxu0 0.0
    %4184 = vmatprep.subr.mxu0 0.0
    %4185 = vmatpush2.xpose.msra.mxu0 0.0
    %4186 = vmatprep.subr.mxu0 0.0
    %4187 = vmatpush2.xpose.msra.mxu0 0.0
    %4188 = vmatprep.subr.mxu0 0.0
    %4189 = vmatpush2.xpose.msra.mxu0 0.0
    %4190 = vmatprep.subr.mxu0 0.0
    %4191 = vmatpush2.xpose.msra.mxu0 0.0
    %4192 = vmatprep.subr.mxu0 0.0
    %4193 = vmatpush2.xpose.msra.mxu0 0.0
    %4194 = vmatprep.subr.mxu0 0.0
    %4195 = vmatpush2.xpose.msra.mxu0 0.0
    %4196 = vmatprep.subr.mxu0 0.0
    %4197 = vmatpush2.xpose.msra.mxu0 0.0
    %4198 = vmatprep.subr.mxu0 0.0
    %4199 = vmatpush2.xpose.msra.mxu0 0.0
    %4200 = vmatprep.subr.mxu0 0.0
    %4201 = vmatpush2.xpose.msra.mxu0 0.0
    %4202 = vmatprep.mubr.f32.mxu0 0.0
    %4203 = vmatmul.mubr.f32.gmra.mxu0 %v4134
    %v4204 = vpop.f32.mrf.mxu0
    %v4205 = vadd.f32 0.0, %v4204
    %v4206 = vpop.f32.mrf.mxu0
    %4207 = vdwg.mxu0
    %v4208 = vmul.f32 %v4205, 0.35355338
    %v4209 = vadd.f32 %v4208, %v405
    %v4210 = vsel %vm497, %v4209, -inf
    %4211 = vmax.xlane.f32.xlu0 %v4210
    %v4212 = vpop.xlane.xlu0 %4211
    %v4213 = vsub.f32 %v4209, %v4212
    %v4214 = vmul.f32 %v4213, 1.442695
    %v4215 = vpow.pop %v4214
    %v4216 = vsel %vm497, %v4215, 0.0
    %4217 = vadd.xlane.f32.xlu0 %v4216
    %v4218 = vpop.xlane.xlu0 %4217
    %v4219 = vrcp.pop %v4218
    %v4220 = vmul.f32 %v4215, %v4219
    %4221 = vrot.lane.b32.xlu0 %v3956, 88
    %v4222 = vpop.permute.xlu0 %4221
    %v4225 = vsel %vm497, %v4220, 0
    %4227 = vmatprep.subr.mxu0 0.0
    %4228 = vmatpush1.msra.mxu0 0.0
    %4229 = vmatprep.subr.mxu0 0.0
    %4230 = vmatpush1.msra.mxu0 0.0
    %4231 = vmatprep.subr.mxu0 0.0
    %4232 = vmatpush1.msra.mxu0 0.0
    %4233 = vmatprep.subr.mxu0 0.0
    %4234 = vmatpush1.msra.mxu0 0.0
    %4235 = vmatprep.subr.mxu0 0.0
    %4236 = vmatpush1.msra.mxu0 0.0
    %4237 = vmatprep.subr.mxu0 0.0
    %4238 = vmatpush1.msra.mxu0 0.0
    %4239 = vmatprep.subr.mxu0 0.0
    %4240 = vmatpush1.msra.mxu0 0.0
    %4241 = vmatprep.subr.mxu0 0.0
    %4242 = vmatpush1.msra.mxu0 0.0
    %4243 = vmatprep.subr.mxu0 0.0
    %4244 = vmatpush1.msra.mxu0 0.0
    %4245 = vmatprep.subr.mxu0 0.0
    %4246 = vmatpush1.msra.mxu0 0.0
    %4247 = vmatprep.subr.mxu0 0.0
    %4248 = vmatpush1.msra.mxu0 0.0
    %4249 = vmatprep.subr.mxu0 0.0
    %4250 = vmatpush1.msra.mxu0 0.0
    %4251 = vmatprep.subr.mxu0 0.0
    %4252 = vmatpush1.msra.mxu0 0.0
    %4253 = vmatprep.subr.mxu0 0.0
    %4254 = vmatpush1.msra.mxu0 0.0
    %4255 = vmatprep.subr.mxu0 0.0
    %4256 = vmatpush1.msra.mxu0 0.0
    %4257 = vmatprep.subr.mxu0 0.0
    %4258 = vmatpush1.msra.mxu0 %v4222
    %4259 = vmatprep.subr.mxu0 0.0
    %4260 = vmatpush2.msra.mxu0 0.0
    %4261 = vmatprep.subr.mxu0 0.0
    %4262 = vmatpush2.msra.mxu0 0.0
    %4263 = vmatprep.subr.mxu0 0.0
    %4264 = vmatpush2.msra.mxu0 0.0
    %4265 = vmatprep.subr.mxu0 0.0
    %4266 = vmatpush2.msra.mxu0 0.0
    %4267 = vmatprep.subr.mxu0 0.0
    %4268 = vmatpush2.msra.mxu0 0.0
    %4269 = vmatprep.subr.mxu0 0.0
    %4270 = vmatpush2.msra.mxu0 0.0
    %4271 = vmatprep.subr.mxu0 0.0
    %4272 = vmatpush2.msra.mxu0 0.0
    %4273 = vmatprep.subr.mxu0 0.0
    %4274 = vmatpush2.msra.mxu0 0.0
    %4275 = vmatprep.subr.mxu0 0.0
    %4276 = vmatpush2.msra.mxu0 0.0
    %4277 = vmatprep.subr.mxu0 0.0
    %4278 = vmatpush2.msra.mxu0 0.0
    %4279 = vmatprep.subr.mxu0 0.0
    %4280 = vmatpush2.msra.mxu0 0.0
    %4281 = vmatprep.subr.mxu0 0.0
    %4282 = vmatpush2.msra.mxu0 0.0
    %4283 = vmatprep.subr.mxu0 0.0
    %4284 = vmatpush2.msra.mxu0 0.0
    %4285 = vmatprep.subr.mxu0 0.0
    %4286 = vmatpush2.msra.mxu0 0.0
    %4287 = vmatprep.subr.mxu0 0.0
    %4288 = vmatpush2.msra.mxu0 0.0
    %4289 = vmatprep.subr.mxu0 0.0
    %4290 = vmatpush2.msra.mxu0 0.0
    %4291 = vmatprep.mubr.f32.mxu0 0.0
    %4292 = vmatmul.mubr.f32.gmra.mxu0 %v4225
    %v4293 = vpop.f32.mrf.mxu0
    %v4294 = vadd.f32 0.0, %v4293
    %v4295 = vpop.f32.mrf.mxu0
    %4296 = vdwg.mxu0
    %4298 = vrot.lane.b32.xlu0 %v4294, 8
    %v4299 = vpop.permute.xlu0 %4298
    %4301 = vst.msk [vmem:[#allocation2] sm:$0xff] %vm833, %v4299
    %4302 = vrot.lane.b32.xlu0 %v3871, 112
    %v4303 = vpop.permute.xlu0 %4302
    %4304 = vrot.lane.b32.xlu0 %v3956, 112
    %v4305 = vpop.permute.xlu0 %4304
    %v4306 = vsel %vm497, %v4303, 0
    %v4308 = vsel %vm497, %v4305, 0
    %4310 = vmatprep.subr.mxu0 0.0
    %4311 = vmatpush1.xpose.msra.mxu0 0.0
    %4312 = vmatprep.subr.mxu0 0.0
    %4313 = vmatpush1.xpose.msra.mxu0 0.0
    %4314 = vmatprep.subr.mxu0 0.0
    %4315 = vmatpush1.xpose.msra.mxu0 0.0
    %4316 = vmatprep.subr.mxu0 0.0
    %4317 = vmatpush1.xpose.msra.mxu0 0.0
    %4318 = vmatprep.subr.mxu0 0.0
    %4319 = vmatpush1.xpose.msra.mxu0 0.0
    %4320 = vmatprep.subr.mxu0 0.0
    %4321 = vmatpush1.xpose.msra.mxu0 0.0
    %4322 = vmatprep.subr.mxu0 0.0
    %4323 = vmatpush1.xpose.msra.mxu0 0.0
    %4324 = vmatprep.subr.mxu0 0.0
    %4325 = vmatpush1.xpose.msra.mxu0 0.0
    %4326 = vmatprep.subr.mxu0 0.0
    %4327 = vmatpush1.xpose.msra.mxu0 0.0
    %4328 = vmatprep.subr.mxu0 0.0
    %4329 = vmatpush1.xpose.msra.mxu0 0.0
    %4330 = vmatprep.subr.mxu0 0.0
    %4331 = vmatpush1.xpose.msra.mxu0 0.0
    %4332 = vmatprep.subr.mxu0 0.0
    %4333 = vmatpush1.xpose.msra.mxu0 0.0
    %4334 = vmatprep.subr.mxu0 0.0
    %4335 = vmatpush1.xpose.msra.mxu0 0.0
    %4336 = vmatprep.subr.mxu0 0.0
    %4337 = vmatpush1.xpose.msra.mxu0 0.0
    %4338 = vmatprep.subr.mxu0 0.0
    %4339 = vmatpush1.xpose.msra.mxu0 0.0
    %4340 = vmatprep.subr.mxu0 0.0
    %4341 = vmatpush1.xpose.msra.mxu0 %v4308
    %4342 = vmatprep.subr.mxu0 0.0
    %4343 = vmatpush2.xpose.msra.mxu0 0.0
    %4344 = vmatprep.subr.mxu0 0.0
    %4345 = vmatpush2.xpose.msra.mxu0 0.0
    %4346 = vmatprep.subr.mxu0 0.0
    %4347 = vmatpush2.xpose.msra.mxu0 0.0
    %4348 = vmatprep.subr.mxu0 0.0
    %4349 = vmatpush2.xpose.msra.mxu0 0.0
    %4350 = vmatprep.subr.mxu0 0.0
    %4351 = vmatpush2.xpose.msra.mxu0 0.0
    %4352 = vmatprep.subr.mxu0 0.0
    %4353 = vmatpush2.xpose.msra.mxu0 0.0
    %4354 = vmatprep.subr.mxu0 0.0
    %4355 = vmatpush2.xpose.msra.mxu0 0.0
    %4356 = vmatprep.subr.mxu0 0.0
    %4357 = vmatpush2.xpose.msra.mxu0 0.0
    %4358 = vmatprep.subr.mxu0 0.0
    %4359 = vmatpush2.xpose.msra.mxu0 0.0
    %4360 = vmatprep.subr.mxu0 0.0
    %4361 = vmatpush2.xpose.msra.mxu0 0.0
    %4362 = vmatprep.subr.mxu0 0.0
    %4363 = vmatpush2.xpose.msra.mxu0 0.0
    %4364 = vmatprep.subr.mxu0 0.0
    %4365 = vmatpush2.xpose.msra.mxu0 0.0
    %4366 = vmatprep.subr.mxu0 0.0
    %4367 = vmatpush2.xpose.msra.mxu0 0.0
    %4368 = vmatprep.subr.mxu0 0.0
    %4369 = vmatpush2.xpose.msra.mxu0 0.0
    %4370 = vmatprep.subr.mxu0 0.0
    %4371 = vmatpush2.xpose.msra.mxu0 0.0
    %4372 = vmatprep.subr.mxu0 0.0
    %4373 = vmatpush2.xpose.msra.mxu0 0.0
    %4374 = vmatprep.mubr.f32.mxu0 0.0
    %4375 = vmatmul.mubr.f32.gmra.mxu0 %v4306
    %v4376 = vpop.f32.mrf.mxu0
    %v4377 = vadd.f32 0.0, %v4376
    %v4378 = vpop.f32.mrf.mxu0
    %4379 = vdwg.mxu0
    %v4380 = vmul.f32 %v4377, 0.35355338
    %v4381 = vadd.f32 %v4380, %v405
    %v4382 = vsel %vm497, %v4381, -inf
    %4383 = vmax.xlane.f32.xlu0 %v4382
    %v4384 = vpop.xlane.xlu0 %4383
    %v4385 = vsub.f32 %v4381, %v4384
    %v4386 = vmul.f32 %v4385, 1.442695
    %v4387 = vpow.pop %v4386
    %v4388 = vsel %vm497, %v4387, 0.0
    %4389 = vadd.xlane.f32.xlu0 %v4388
    %v4390 = vpop.xlane.xlu0 %4389
    %v4391 = vrcp.pop %v4390
    %v4392 = vmul.f32 %v4387, %v4391
    %4393 = vrot.lane.b32.xlu0 %v3956, 80
    %v4394 = vpop.permute.xlu0 %4393
    %v4397 = vsel %vm497, %v4392, 0
    %4399 = vmatprep.subr.mxu0 0.0
    %4400 = vmatpush1.msra.mxu0 0.0
    %4401 = vmatprep.subr.mxu0 0.0
    %4402 = vmatpush1.msra.mxu0 0.0
    %4403 = vmatprep.subr.mxu0 0.0
    %4404 = vmatpush1.msra.mxu0 0.0
    %4405 = vmatprep.subr.mxu0 0.0
    %4406 = vmatpush1.msra.mxu0 0.0
    %4407 = vmatprep.subr.mxu0 0.0
    %4408 = vmatpush1.msra.mxu0 0.0
    %4409 = vmatprep.subr.mxu0 0.0
    %4410 = vmatpush1.msra.mxu0 0.0
    %4411 = vmatprep.subr.mxu0 0.0
    %4412 = vmatpush1.msra.mxu0 0.0
    %4413 = vmatprep.subr.mxu0 0.0
    %4414 = vmatpush1.msra.mxu0 0.0
    %4415 = vmatprep.subr.mxu0 0.0
    %4416 = vmatpush1.msra.mxu0 0.0
    %4417 = vmatprep.subr.mxu0 0.0
    %4418 = vmatpush1.msra.mxu0 0.0
    %4419 = vmatprep.subr.mxu0 0.0
    %4420 = vmatpush1.msra.mxu0 0.0
    %4421 = vmatprep.subr.mxu0 0.0
    %4422 = vmatpush1.msra.mxu0 0.0
    %4423 = vmatprep.subr.mxu0 0.0
    %4424 = vmatpush1.msra.mxu0 0.0
    %4425 = vmatprep.subr.mxu0 0.0
    %4426 = vmatpush1.msra.mxu0 0.0
    %4427 = vmatprep.subr.mxu0 0.0
    %4428 = vmatpush1.msra.mxu0 0.0
    %4429 = vmatprep.subr.mxu0 0.0
    %4430 = vmatpush1.msra.mxu0 %v4394
    %4431 = vmatprep.subr.mxu0 0.0
    %4432 = vmatpush2.msra.mxu0 0.0
    %4433 = vmatprep.subr.mxu0 0.0
    %4434 = vmatpush2.msra.mxu0 0.0
    %4435 = vmatprep.subr.mxu0 0.0
    %4436 = vmatpush2.msra.mxu0 0.0
    %4437 = vmatprep.subr.mxu0 0.0
    %4438 = vmatpush2.msra.mxu0 0.0
    %4439 = vmatprep.subr.mxu0 0.0
    %4440 = vmatpush2.msra.mxu0 0.0
    %4441 = vmatprep.subr.mxu0 0.0
    %4442 = vmatpush2.msra.mxu0 0.0
    %4443 = vmatprep.subr.mxu0 0.0
    %4444 = vmatpush2.msra.mxu0 0.0
    %4445 = vmatprep.subr.mxu0 0.0
    %4446 = vmatpush2.msra.mxu0 0.0
    %4447 = vmatprep.subr.mxu0 0.0
    %4448 = vmatpush2.msra.mxu0 0.0
    %4449 = vmatprep.subr.mxu0 0.0
    %4450 = vmatpush2.msra.mxu0 0.0
    %4451 = vmatprep.subr.mxu0 0.0
    %4452 = vmatpush2.msra.mxu0 0.0
    %4453 = vmatprep.subr.mxu0 0.0
    %4454 = vmatpush2.msra.mxu0 0.0
    %4455 = vmatprep.subr.mxu0 0.0
    %4456 = vmatpush2.msra.mxu0 0.0
    %4457 = vmatprep.subr.mxu0 0.0
    %4458 = vmatpush2.msra.mxu0 0.0
    %4459 = vmatprep.subr.mxu0 0.0
    %4460 = vmatpush2.msra.mxu0 0.0
    %4461 = vmatprep.subr.mxu0 0.0
    %4462 = vmatpush2.msra.mxu0 0.0
    %4463 = vmatprep.mubr.f32.mxu0 0.0
    %4464 = vmatmul.mubr.f32.gmra.mxu0 %v4397
    %v4465 = vpop.f32.mrf.mxu0
    %v4466 = vadd.f32 0.0, %v4465
    %v4467 = vpop.f32.mrf.mxu0
    %4468 = vdwg.mxu0
    %4470 = vrot.lane.b32.xlu0 %v4466, 16
    %v4471 = vpop.permute.xlu0 %4470
    %4473 = vst.msk [vmem:[#allocation2] sm:$0xff] %vm1006, %v4471
    %4474 = vrot.lane.b32.xlu0 %v3871, 104
    %v4475 = vpop.permute.xlu0 %4474
    %4476 = vrot.lane.b32.xlu0 %v3956, 104
    %v4477 = vpop.permute.xlu0 %4476
    %v4478 = vsel %vm497, %v4475, 0
    %v4480 = vsel %vm497, %v4477, 0
    %4482 = vmatprep.subr.mxu0 0.0
    %4483 = vmatpush1.xpose.msra.mxu0 0.0
    %4484 = vmatprep.subr.mxu0 0.0
    %4485 = vmatpush1.xpose.msra.mxu0 0.0
    %4486 = vmatprep.subr.mxu0 0.0
    %4487 = vmatpush1.xpose.msra.mxu0 0.0
    %4488 = vmatprep.subr.mxu0 0.0
    %4489 = vmatpush1.xpose.msra.mxu0 0.0
    %4490 = vmatprep.subr.mxu0 0.0
    %4491 = vmatpush1.xpose.msra.mxu0 0.0
    %4492 = vmatprep.subr.mxu0 0.0
    %4493 = vmatpush1.xpose.msra.mxu0 0.0
    %4494 = vmatprep.subr.mxu0 0.0
    %4495 = vmatpush1.xpose.msra.mxu0 0.0
    %4496 = vmatprep.subr.mxu0 0.0
    %4497 = vmatpush1.xpose.msra.mxu0 0.0
    %4498 = vmatprep.subr.mxu0 0.0
    %4499 = vmatpush1.xpose.msra.mxu0 0.0
    %4500 = vmatprep.subr.mxu0 0.0
    %4501 = vmatpush1.xpose.msra.mxu0 0.0
    %4502 = vmatprep.subr.mxu0 0.0
    %4503 = vmatpush1.xpose.msra.mxu0 0.0
    %4504 = vmatprep.subr.mxu0 0.0
    %4505 = vmatpush1.xpose.msra.mxu0 0.0
    %4506 = vmatprep.subr.mxu0 0.0
    %4507 = vmatpush1.xpose.msra.mxu0 0.0
    %4508 = vmatprep.subr.mxu0 0.0
    %4509 = vmatpush1.xpose.msra.mxu0 0.0
    %4510 = vmatprep.subr.mxu0 0.0
    %4511 = vmatpush1.xpose.msra.mxu0 0.0
    %4512 = vmatprep.subr.mxu0 0.0
    %4513 = vmatpush1.xpose.msra.mxu0 %v4480
    %4514 = vmatprep.subr.mxu0 0.0
    %4515 = vmatpush2.xpose.msra.mxu0 0.0
    %4516 = vmatprep.subr.mxu0 0.0
    %4517 = vmatpush2.xpose.msra.mxu0 0.0
    %4518 = vmatprep.subr.mxu0 0.0
    %4519 = vmatpush2.xpose.msra.mxu0 0.0
    %4520 = vmatprep.subr.mxu0 0.0
    %4521 = vmatpush2.xpose.msra.mxu0 0.0
    %4522 = vmatprep.subr.mxu0 0.0
    %4523 = vmatpush2.xpose.msra.mxu0 0.0
    %4524 = vmatprep.subr.mxu0 0.0
    %4525 = vmatpush2.xpose.msra.mxu0 0.0
    %4526 = vmatprep.subr.mxu0 0.0
    %4527 = vmatpush2.xpose.msra.mxu0 0.0
    %4528 = vmatprep.subr.mxu0 0.0
    %4529 = vmatpush2.xpose.msra.mxu0 0.0
    %4530 = vmatprep.subr.mxu0 0.0
    %4531 = vmatpush2.xpose.msra.mxu0 0.0
    %4532 = vmatprep.subr.mxu0 0.0
    %4533 = vmatpush2.xpose.msra.mxu0 0.0
    %4534 = vmatprep.subr.mxu0 0.0
    %4535 = vmatpush2.xpose.msra.mxu0 0.0
    %4536 = vmatprep.subr.mxu0 0.0
    %4537 = vmatpush2.xpose.msra.mxu0 0.0
    %4538 = vmatprep.subr.mxu0 0.0
    %4539 = vmatpush2.xpose.msra.mxu0 0.0
    %4540 = vmatprep.subr.mxu0 0.0
    %4541 = vmatpush2.xpose.msra.mxu0 0.0
    %4542 = vmatprep.subr.mxu0 0.0
    %4543 = vmatpush2.xpose.msra.mxu0 0.0
    %4544 = vmatprep.subr.mxu0 0.0
    %4545 = vmatpush2.xpose.msra.mxu0 0.0
    %4546 = vmatprep.mubr.f32.mxu0 0.0
    %4547 = vmatmul.mubr.f32.gmra.mxu0 %v4478
    %v4548 = vpop.f32.mrf.mxu0
    %v4549 = vadd.f32 0.0, %v4548
    %v4550 = vpop.f32.mrf.mxu0
    %4551 = vdwg.mxu0
    %v4552 = vmul.f32 %v4549, 0.35355338
    %v4553 = vadd.f32 %v4552, %v405
    %v4554 = vsel %vm497, %v4553, -inf
    %4555 = vmax.xlane.f32.xlu0 %v4554
    %v4556 = vpop.xlane.xlu0 %4555
    %v4557 = vsub.f32 %v4553, %v4556
    %v4558 = vmul.f32 %v4557, 1.442695
    %v4559 = vpow.pop %v4558
    %v4560 = vsel %vm497, %v4559, 0.0
    %4561 = vadd.xlane.f32.xlu0 %v4560
    %v4562 = vpop.xlane.xlu0 %4561
    %v4563 = vrcp.pop %v4562
    %v4564 = vmul.f32 %v4559, %v4563
    %4565 = vrot.lane.b32.xlu0 %v3956, 72
    %v4566 = vpop.permute.xlu0 %4565
    %v4569 = vsel %vm497, %v4564, 0
    %4571 = vmatprep.subr.mxu0 0.0
    %4572 = vmatpush1.msra.mxu0 0.0
    %4573 = vmatprep.subr.mxu0 0.0
    %4574 = vmatpush1.msra.mxu0 0.0
    %4575 = vmatprep.subr.mxu0 0.0
    %4576 = vmatpush1.msra.mxu0 0.0
    %4577 = vmatprep.subr.mxu0 0.0
    %4578 = vmatpush1.msra.mxu0 0.0
    %4579 = vmatprep.subr.mxu0 0.0
    %4580 = vmatpush1.msra.mxu0 0.0
    %4581 = vmatprep.subr.mxu0 0.0
    %4582 = vmatpush1.msra.mxu0 0.0
    %4583 = vmatprep.subr.mxu0 0.0
    %4584 = vmatpush1.msra.mxu0 0.0
    %4585 = vmatprep.subr.mxu0 0.0
    %4586 = vmatpush1.msra.mxu0 0.0
    %4587 = vmatprep.subr.mxu0 0.0
    %4588 = vmatpush1.msra.mxu0 0.0
    %4589 = vmatprep.subr.mxu0 0.0
    %4590 = vmatpush1.msra.mxu0 0.0
    %4591 = vmatprep.subr.mxu0 0.0
    %4592 = vmatpush1.msra.mxu0 0.0
    %4593 = vmatprep.subr.mxu0 0.0
    %4594 = vmatpush1.msra.mxu0 0.0
    %4595 = vmatprep.subr.mxu0 0.0
    %4596 = vmatpush1.msra.mxu0 0.0
    %4597 = vmatprep.subr.mxu0 0.0
    %4598 = vmatpush1.msra.mxu0 0.0
    %4599 = vmatprep.subr.mxu0 0.0
    %4600 = vmatpush1.msra.mxu0 0.0
    %4601 = vmatprep.subr.mxu0 0.0
    %4602 = vmatpush1.msra.mxu0 %v4566
    %4603 = vmatprep.subr.mxu0 0.0
    %4604 = vmatpush2.msra.mxu0 0.0
    %4605 = vmatprep.subr.mxu0 0.0
    %4606 = vmatpush2.msra.mxu0 0.0
    %4607 = vmatprep.subr.mxu0 0.0
    %4608 = vmatpush2.msra.mxu0 0.0
    %4609 = vmatprep.subr.mxu0 0.0
    %4610 = vmatpush2.msra.mxu0 0.0
    %4611 = vmatprep.subr.mxu0 0.0
    %4612 = vmatpush2.msra.mxu0 0.0
    %4613 = vmatprep.subr.mxu0 0.0
    %4614 = vmatpush2.msra.mxu0 0.0
    %4615 = vmatprep.subr.mxu0 0.0
    %4616 = vmatpush2.msra.mxu0 0.0
    %4617 = vmatprep.subr.mxu0 0.0
    %4618 = vmatpush2.msra.mxu0 0.0
    %4619 = vmatprep.subr.mxu0 0.0
    %4620 = vmatpush2.msra.mxu0 0.0
    %4621 = vmatprep.subr.mxu0 0.0
    %4622 = vmatpush2.msra.mxu0 0.0
    %4623 = vmatprep.subr.mxu0 0.0
    %4624 = vmatpush2.msra.mxu0 0.0
    %4625 = vmatprep.subr.mxu0 0.0
    %4626 = vmatpush2.msra.mxu0 0.0
    %4627 = vmatprep.subr.mxu0 0.0
    %4628 = vmatpush2.msra.mxu0 0.0
    %4629 = vmatprep.subr.mxu0 0.0
    %4630 = vmatpush2.msra.mxu0 0.0
    %4631 = vmatprep.subr.mxu0 0.0
    %4632 = vmatpush2.msra.mxu0 0.0
    %4633 = vmatprep.subr.mxu0 0.0
    %4634 = vmatpush2.msra.mxu0 0.0
    %4635 = vmatprep.mubr.f32.mxu0 0.0
    %4636 = vmatmul.mubr.f32.gmra.mxu0 %v4569
    %v4637 = vpop.f32.mrf.mxu0
    %v4638 = vadd.f32 0.0, %v4637
    %v4639 = vpop.f32.mrf.mxu0
    %4640 = vdwg.mxu0
    %4642 = vrot.lane.b32.xlu0 %v4638, 24
    %v4643 = vpop.permute.xlu0 %4642
    %4645 = vst.msk [vmem:[#allocation2] sm:$0xff] %vm1179, %v4643
    %v4647 = vsel %vm497, %v3876, 0
    %v4650 = vsel %vm497, %v3961, 0
    %4652 = vmatprep.subr.mxu0 0.0
    %4653 = vmatpush1.xpose.msra.mxu0 0.0
    %4654 = vmatprep.subr.mxu0 0.0
    %4655 = vmatpush1.xpose.msra.mxu0 0.0
    %4656 = vmatprep.subr.mxu0 0.0
    %4657 = vmatpush1.xpose.msra.mxu0 0.0
    %4658 = vmatprep.subr.mxu0 0.0
    %4659 = vmatpush1.xpose.msra.mxu0 0.0
    %4660 = vmatprep.subr.mxu0 0.0
    %4661 = vmatpush1.xpose.msra.mxu0 0.0
    %4662 = vmatprep.subr.mxu0 0.0
    %4663 = vmatpush1.xpose.msra.mxu0 0.0
    %4664 = vmatprep.subr.mxu0 0.0
    %4665 = vmatpush1.xpose.msra.mxu0 0.0
    %4666 = vmatprep.subr.mxu0 0.0
    %4667 = vmatpush1.xpose.msra.mxu0 0.0
    %4668 = vmatprep.subr.mxu0 0.0
    %4669 = vmatpush1.xpose.msra.mxu0 0.0
    %4670 = vmatprep.subr.mxu0 0.0
    %4671 = vmatpush1.xpose.msra.mxu0 0.0
    %4672 = vmatprep.subr.mxu0 0.0
    %4673 = vmatpush1.xpose.msra.mxu0 0.0
    %4674 = vmatprep.subr.mxu0 0.0
    %4675 = vmatpush1.xpose.msra.mxu0 0.0
    %4676 = vmatprep.subr.mxu0 0.0
    %4677 = vmatpush1.xpose.msra.mxu0 0.0
    %4678 = vmatprep.subr.mxu0 0.0
    %4679 = vmatpush1.xpose.msra.mxu0 0.0
    %4680 = vmatprep.subr.mxu0 0.0
    %4681 = vmatpush1.xpose.msra.mxu0 0.0
    %4682 = vmatprep.subr.mxu0 0.0
    %4683 = vmatpush1.xpose.msra.mxu0 %v4650
    %4684 = vmatprep.subr.mxu0 0.0
    %4685 = vmatpush2.xpose.msra.mxu0 0.0
    %4686 = vmatprep.subr.mxu0 0.0
    %4687 = vmatpush2.xpose.msra.mxu0 0.0
    %4688 = vmatprep.subr.mxu0 0.0
    %4689 = vmatpush2.xpose.msra.mxu0 0.0
    %4690 = vmatprep.subr.mxu0 0.0
    %4691 = vmatpush2.xpose.msra.mxu0 0.0
    %4692 = vmatprep.subr.mxu0 0.0
    %4693 = vmatpush2.xpose.msra.mxu0 0.0
    %4694 = vmatprep.subr.mxu0 0.0
    %4695 = vmatpush2.xpose.msra.mxu0 0.0
    %4696 = vmatprep.subr.mxu0 0.0
    %4697 = vmatpush2.xpose.msra.mxu0 0.0
    %4698 = vmatprep.subr.mxu0 0.0
    %4699 = vmatpush2.xpose.msra.mxu0 0.0
    %4700 = vmatprep.subr.mxu0 0.0
    %4701 = vmatpush2.xpose.msra.mxu0 0.0
    %4702 = vmatprep.subr.mxu0 0.0
    %4703 = vmatpush2.xpose.msra.mxu0 0.0
    %4704 = vmatprep.subr.mxu0 0.0
    %4705 = vmatpush2.xpose.msra.mxu0 0.0
    %4706 = vmatprep.subr.mxu0 0.0
    %4707 = vmatpush2.xpose.msra.mxu0 0.0
    %4708 = vmatprep.subr.mxu0 0.0
    %4709 = vmatpush2.xpose.msra.mxu0 0.0
    %4710 = vmatprep.subr.mxu0 0.0
    %4711 = vmatpush2.xpose.msra.mxu0 0.0
    %4712 = vmatprep.subr.mxu0 0.0
    %4713 = vmatpush2.xpose.msra.mxu0 0.0
    %4714 = vmatprep.subr.mxu0 0.0
    %4715 = vmatpush2.xpose.msra.mxu0 0.0
    %4716 = vmatprep.mubr.f32.mxu0 0.0
    %4717 = vmatmul.mubr.f32.gmra.mxu0 %v4647
    %v4718 = vpop.f32.mrf.mxu0
    %v4719 = vadd.f32 0.0, %v4718
    %v4720 = vpop.f32.mrf.mxu0
    %4721 = vdwg.mxu0
    %v4722 = vmul.f32 %v4719, 0.35355338
    %4724 = vrot.lane.b32.xlu0 %v407, 120
    %v4725 = vpop.permute.xlu0 %4724
    %v4727 = vadd.f32 %v4722, %v4725
    %v4728 = vsel %vm497, %v4727, -inf
    %4729 = vmax.xlane.f32.xlu0 %v4728
    %v4730 = vpop.xlane.xlu0 %4729
    %v4731 = vsub.f32 %v4727, %v4730
    %v4732 = vmul.f32 %v4731, 1.442695
    %v4733 = vpow.pop %v4732
    %v4734 = vsel %vm497, %v4733, 0.0
    %4735 = vadd.xlane.f32.xlu0 %v4734
    %v4736 = vpop.xlane.xlu0 %4735
    %v4737 = vrcp.pop %v4736
    %v4738 = vmul.f32 %v4733, %v4737
    %4739 = vrot.lane.b32.xlu0 %v3961, 96
    %v4740 = vpop.permute.xlu0 %4739
    %v4743 = vsel %vm497, %v4738, 0
    %4745 = vmatprep.subr.mxu0 0.0
    %4746 = vmatpush1.msra.mxu0 0.0
    %4747 = vmatprep.subr.mxu0 0.0
    %4748 = vmatpush1.msra.mxu0 0.0
    %4749 = vmatprep.subr.mxu0 0.0
    %4750 = vmatpush1.msra.mxu0 0.0
    %4751 = vmatprep.subr.mxu0 0.0
    %4752 = vmatpush1.msra.mxu0 0.0
    %4753 = vmatprep.subr.mxu0 0.0
    %4754 = vmatpush1.msra.mxu0 0.0
    %4755 = vmatprep.subr.mxu0 0.0
    %4756 = vmatpush1.msra.mxu0 0.0
    %4757 = vmatprep.subr.mxu0 0.0
    %4758 = vmatpush1.msra.mxu0 0.0
    %4759 = vmatprep.subr.mxu0 0.0
    %4760 = vmatpush1.msra.mxu0 0.0
    %4761 = vmatprep.subr.mxu0 0.0
    %4762 = vmatpush1.msra.mxu0 0.0
    %4763 = vmatprep.subr.mxu0 0.0
    %4764 = vmatpush1.msra.mxu0 0.0
    %4765 = vmatprep.subr.mxu0 0.0
    %4766 = vmatpush1.msra.mxu0 0.0
    %4767 = vmatprep.subr.mxu0 0.0
    %4768 = vmatpush1.msra.mxu0 0.0
    %4769 = vmatprep.subr.mxu0 0.0
    %4770 = vmatpush1.msra.mxu0 0.0
    %4771 = vmatprep.subr.mxu0 0.0
    %4772 = vmatpush1.msra.mxu0 0.0
    %4773 = vmatprep.subr.mxu0 0.0
    %4774 = vmatpush1.msra.mxu0 0.0
    %4775 = vmatprep.subr.mxu0 0.0
    %4776 = vmatpush1.msra.mxu0 %v4740
    %4777 = vmatprep.subr.mxu0 0.0
    %4778 = vmatpush2.msra.mxu0 0.0
    %4779 = vmatprep.subr.mxu0 0.0
    %4780 = vmatpush2.msra.mxu0 0.0
    %4781 = vmatprep.subr.mxu0 0.0
    %4782 = vmatpush2.msra.mxu0 0.0
    %4783 = vmatprep.subr.mxu0 0.0
    %4784 = vmatpush2.msra.mxu0 0.0
    %4785 = vmatprep.subr.mxu0 0.0
    %4786 = vmatpush2.msra.mxu0 0.0
    %4787 = vmatprep.subr.mxu0 0.0
    %4788 = vmatpush2.msra.mxu0 0.0
    %4789 = vmatprep.subr.mxu0 0.0
    %4790 = vmatpush2.msra.mxu0 0.0
    %4791 = vmatprep.subr.mxu0 0.0
    %4792 = vmatpush2.msra.mxu0 0.0
    %4793 = vmatprep.subr.mxu0 0.0
    %4794 = vmatpush2.msra.mxu0 0.0
    %4795 = vmatprep.subr.mxu0 0.0
    %4796 = vmatpush2.msra.mxu0 0.0
    %4797 = vmatprep.subr.mxu0 0.0
    %4798 = vmatpush2.msra.mxu0 0.0
    %4799 = vmatprep.subr.mxu0 0.0
    %4800 = vmatpush2.msra.mxu0 0.0
    %4801 = vmatprep.subr.mxu0 0.0
    %4802 = vmatpush2.msra.mxu0 0.0
    %4803 = vmatprep.subr.mxu0 0.0
    %4804 = vmatpush2.msra.mxu0 0.0
    %4805 = vmatprep.subr.mxu0 0.0
    %4806 = vmatpush2.msra.mxu0 0.0
    %4807 = vmatprep.subr.mxu0 0.0
    %4808 = vmatpush2.msra.mxu0 0.0
    %4809 = vmatprep.mubr.f32.mxu0 0.0
    %4810 = vmatmul.mubr.f32.gmra.mxu0 %v4743
    %v4811 = vpop.f32.mrf.mxu0
    %v4812 = vadd.f32 0.0, %v4811
    %v4813 = vpop.f32.mrf.mxu0
    %4814 = vdwg.mxu0
    %4815 = vst.msk [vmem:[#allocation2 + $0x8] sm:$0xff] %vm497, %v4812
    %4816 = vrot.lane.b32.xlu0 %v3876, 120
    %v4817 = vpop.permute.xlu0 %4816
    %4818 = vrot.lane.b32.xlu0 %v3961, 120
    %v4819 = vpop.permute.xlu0 %4818
    %v4820 = vsel %vm497, %v4817, 0
    %v4822 = vsel %vm497, %v4819, 0
    %4824 = vmatprep.subr.mxu0 0.0
    %4825 = vmatpush1.xpose.msra.mxu0 0.0
    %4826 = vmatprep.subr.mxu0 0.0
    %4827 = vmatpush1.xpose.msra.mxu0 0.0
    %4828 = vmatprep.subr.mxu0 0.0
    %4829 = vmatpush1.xpose.msra.mxu0 0.0
    %4830 = vmatprep.subr.mxu0 0.0
    %4831 = vmatpush1.xpose.msra.mxu0 0.0
    %4832 = vmatprep.subr.mxu0 0.0
    %4833 = vmatpush1.xpose.msra.mxu0 0.0
    %4834 = vmatprep.subr.mxu0 0.0
    %4835 = vmatpush1.xpose.msra.mxu0 0.0
    %4836 = vmatprep.subr.mxu0 0.0
    %4837 = vmatpush1.xpose.msra.mxu0 0.0
    %4838 = vmatprep.subr.mxu0 0.0
    %4839 = vmatpush1.xpose.msra.mxu0 0.0
    %4840 = vmatprep.subr.mxu0 0.0
    %4841 = vmatpush1.xpose.msra.mxu0 0.0
    %4842 = vmatprep.subr.mxu0 0.0
    %4843 = vmatpush1.xpose.msra.mxu0 0.0
    %4844 = vmatprep.subr.mxu0 0.0
    %4845 = vmatpush1.xpose.msra.mxu0 0.0
    %4846 = vmatprep.subr.mxu0 0.0
    %4847 = vmatpush1.xpose.msra.mxu0 0.0
    %4848 = vmatprep.subr.mxu0 0.0
    %4849 = vmatpush1.xpose.msra.mxu0 0.0
    %4850 = vmatprep.subr.mxu0 0.0
    %4851 = vmatpush1.xpose.msra.mxu0 0.0
    %4852 = vmatprep.subr.mxu0 0.0
    %4853 = vmatpush1.xpose.msra.mxu0 0.0
    %4854 = vmatprep.subr.mxu0 0.0
    %4855 = vmatpush1.xpose.msra.mxu0 %v4822
    %4856 = vmatprep.subr.mxu0 0.0
    %4857 = vmatpush2.xpose.msra.mxu0 0.0
    %4858 = vmatprep.subr.mxu0 0.0
    %4859 = vmatpush2.xpose.msra.mxu0 0.0
    %4860 = vmatprep.subr.mxu0 0.0
    %4861 = vmatpush2.xpose.msra.mxu0 0.0
    %4862 = vmatprep.subr.mxu0 0.0
    %4863 = vmatpush2.xpose.msra.mxu0 0.0
    %4864 = vmatprep.subr.mxu0 0.0
    %4865 = vmatpush2.xpose.msra.mxu0 0.0
    %4866 = vmatprep.subr.mxu0 0.0
    %4867 = vmatpush2.xpose.msra.mxu0 0.0
    %4868 = vmatprep.subr.mxu0 0.0
    %4869 = vmatpush2.xpose.msra.mxu0 0.0
    %4870 = vmatprep.subr.mxu0 0.0
    %4871 = vmatpush2.xpose.msra.mxu0 0.0
    %4872 = vmatprep.subr.mxu0 0.0
    %4873 = vmatpush2.xpose.msra.mxu0 0.0
    %4874 = vmatprep.subr.mxu0 0.0
    %4875 = vmatpush2.xpose.msra.mxu0 0.0
    %4876 = vmatprep.subr.mxu0 0.0
    %4877 = vmatpush2.xpose.msra.mxu0 0.0
    %4878 = vmatprep.subr.mxu0 0.0
    %4879 = vmatpush2.xpose.msra.mxu0 0.0
    %4880 = vmatprep.subr.mxu0 0.0
    %4881 = vmatpush2.xpose.msra.mxu0 0.0
    %4882 = vmatprep.subr.mxu0 0.0
    %4883 = vmatpush2.xpose.msra.mxu0 0.0
    %4884 = vmatprep.subr.mxu0 0.0
    %4885 = vmatpush2.xpose.msra.mxu0 0.0
    %4886 = vmatprep.subr.mxu0 0.0
    %4887 = vmatpush2.xpose.msra.mxu0 0.0
    %4888 = vmatprep.mubr.f32.mxu0 0.0
    %4889 = vmatmul.mubr.f32.gmra.mxu0 %v4820
    %v4890 = vpop.f32.mrf.mxu0
    %v4891 = vadd.f32 0.0, %v4890
    %v4892 = vpop.f32.mrf.mxu0
    %4893 = vdwg.mxu0
    %v4894 = vmul.f32 %v4891, 0.35355338
    %v4895 = vadd.f32 %v4894, %v4725
    %v4896 = vsel %vm497, %v4895, -inf
    %4897 = vmax.xlane.f32.xlu0 %v4896
    %v4898 = vpop.xlane.xlu0 %4897
    %v4899 = vsub.f32 %v4895, %v4898
    %v4900 = vmul.f32 %v4899, 1.442695
    %v4901 = vpow.pop %v4900
    %v4902 = vsel %vm497, %v4901, 0.0
    %4903 = vadd.xlane.f32.xlu0 %v4902
    %v4904 = vpop.xlane.xlu0 %4903
    %v4905 = vrcp.pop %v4904
    %v4906 = vmul.f32 %v4901, %v4905
    %4907 = vrot.lane.b32.xlu0 %v3961, 88
    %v4908 = vpop.permute.xlu0 %4907
    %v4911 = vsel %vm497, %v4906, 0
    %4913 = vmatprep.subr.mxu0 0.0
    %4914 = vmatpush1.msra.mxu0 0.0
    %4915 = vmatprep.subr.mxu0 0.0
    %4916 = vmatpush1.msra.mxu0 0.0
    %4917 = vmatprep.subr.mxu0 0.0
    %4918 = vmatpush1.msra.mxu0 0.0
    %4919 = vmatprep.subr.mxu0 0.0
    %4920 = vmatpush1.msra.mxu0 0.0
    %4921 = vmatprep.subr.mxu0 0.0
    %4922 = vmatpush1.msra.mxu0 0.0
    %4923 = vmatprep.subr.mxu0 0.0
    %4924 = vmatpush1.msra.mxu0 0.0
    %4925 = vmatprep.subr.mxu0 0.0
    %4926 = vmatpush1.msra.mxu0 0.0
    %4927 = vmatprep.subr.mxu0 0.0
    %4928 = vmatpush1.msra.mxu0 0.0
    %4929 = vmatprep.subr.mxu0 0.0
    %4930 = vmatpush1.msra.mxu0 0.0
    %4931 = vmatprep.subr.mxu0 0.0
    %4932 = vmatpush1.msra.mxu0 0.0
    %4933 = vmatprep.subr.mxu0 0.0
    %4934 = vmatpush1.msra.mxu0 0.0
    %4935 = vmatprep.subr.mxu0 0.0
    %4936 = vmatpush1.msra.mxu0 0.0
    %4937 = vmatprep.subr.mxu0 0.0
    %4938 = vmatpush1.msra.mxu0 0.0
    %4939 = vmatprep.subr.mxu0 0.0
    %4940 = vmatpush1.msra.mxu0 0.0
    %4941 = vmatprep.subr.mxu0 0.0
    %4942 = vmatpush1.msra.mxu0 0.0
    %4943 = vmatprep.subr.mxu0 0.0
    %4944 = vmatpush1.msra.mxu0 %v4908
    %4945 = vmatprep.subr.mxu0 0.0
    %4946 = vmatpush2.msra.mxu0 0.0
    %4947 = vmatprep.subr.mxu0 0.0
    %4948 = vmatpush2.msra.mxu0 0.0
    %4949 = vmatprep.subr.mxu0 0.0
    %4950 = vmatpush2.msra.mxu0 0.0
    %4951 = vmatprep.subr.mxu0 0.0
    %4952 = vmatpush2.msra.mxu0 0.0
    %4953 = vmatprep.subr.mxu0 0.0
    %4954 = vmatpush2.msra.mxu0 0.0
    %4955 = vmatprep.subr.mxu0 0.0
    %4956 = vmatpush2.msra.mxu0 0.0
    %4957 = vmatprep.subr.mxu0 0.0
    %4958 = vmatpush2.msra.mxu0 0.0
    %4959 = vmatprep.subr.mxu0 0.0
    %4960 = vmatpush2.msra.mxu0 0.0
    %4961 = vmatprep.subr.mxu0 0.0
    %4962 = vmatpush2.msra.mxu0 0.0
    %4963 = vmatprep.subr.mxu0 0.0
    %4964 = vmatpush2.msra.mxu0 0.0
    %4965 = vmatprep.subr.mxu0 0.0
    %4966 = vmatpush2.msra.mxu0 0.0
    %4967 = vmatprep.subr.mxu0 0.0
    %4968 = vmatpush2.msra.mxu0 0.0
    %4969 = vmatprep.subr.mxu0 0.0
    %4970 = vmatpush2.msra.mxu0 0.0
    %4971 = vmatprep.subr.mxu0 0.0
    %4972 = vmatpush2.msra.mxu0 0.0
    %4973 = vmatprep.subr.mxu0 0.0
    %4974 = vmatpush2.msra.mxu0 0.0
    %4975 = vmatprep.subr.mxu0 0.0
    %4976 = vmatpush2.msra.mxu0 0.0
    %4977 = vmatprep.mubr.f32.mxu0 0.0
    %4978 = vmatmul.mubr.f32.gmra.mxu0 %v4911
    %v4979 = vpop.f32.mrf.mxu0
    %v4980 = vadd.f32 0.0, %v4979
    %v4981 = vpop.f32.mrf.mxu0
    %4982 = vdwg.mxu0
    %4984 = vrot.lane.b32.xlu0 %v4980, 8
    %v4985 = vpop.permute.xlu0 %4984
    %4987 = vst.msk [vmem:[#allocation2 + $0x8] sm:$0xff] %vm833, %v4985
    %4988 = vrot.lane.b32.xlu0 %v3876, 112
    %v4989 = vpop.permute.xlu0 %4988
    %4990 = vrot.lane.b32.xlu0 %v3961, 112
    %v4991 = vpop.permute.xlu0 %4990
    %v4992 = vsel %vm497, %v4989, 0
    %v4994 = vsel %vm497, %v4991, 0
    %4996 = vmatprep.subr.mxu0 0.0
    %4997 = vmatpush1.xpose.msra.mxu0 0.0
    %4998 = vmatprep.subr.mxu0 0.0
    %4999 = vmatpush1.xpose.msra.mxu0 0.0
    %5000 = vmatprep.subr.mxu0 0.0
    %5001 = vmatpush1.xpose.msra.mxu0 0.0
    %5002 = vmatprep.subr.mxu0 0.0
    %5003 = vmatpush1.xpose.msra.mxu0 0.0
    %5004 = vmatprep.subr.mxu0 0.0
    %5005 = vmatpush1.xpose.msra.mxu0 0.0
    %5006 = vmatprep.subr.mxu0 0.0
    %5007 = vmatpush1.xpose.msra.mxu0 0.0
    %5008 = vmatprep.subr.mxu0 0.0
    %5009 = vmatpush1.xpose.msra.mxu0 0.0
    %5010 = vmatprep.subr.mxu0 0.0
    %5011 = vmatpush1.xpose.msra.mxu0 0.0
    %5012 = vmatprep.subr.mxu0 0.0
    %5013 = vmatpush1.xpose.msra.mxu0 0.0
    %5014 = vmatprep.subr.mxu0 0.0
    %5015 = vmatpush1.xpose.msra.mxu0 0.0
    %5016 = vmatprep.subr.mxu0 0.0
    %5017 = vmatpush1.xpose.msra.mxu0 0.0
    %5018 = vmatprep.subr.mxu0 0.0
    %5019 = vmatpush1.xpose.msra.mxu0 0.0
    %5020 = vmatprep.subr.mxu0 0.0
    %5021 = vmatpush1.xpose.msra.mxu0 0.0
    %5022 = vmatprep.subr.mxu0 0.0
    %5023 = vmatpush1.xpose.msra.mxu0 0.0
    %5024 = vmatprep.subr.mxu0 0.0
    %5025 = vmatpush1.xpose.msra.mxu0 0.0
    %5026 = vmatprep.subr.mxu0 0.0
    %5027 = vmatpush1.xpose.msra.mxu0 %v4994
    %5028 = vmatprep.subr.mxu0 0.0
    %5029 = vmatpush2.xpose.msra.mxu0 0.0
    %5030 = vmatprep.subr.mxu0 0.0
    %5031 = vmatpush2.xpose.msra.mxu0 0.0
    %5032 = vmatprep.subr.mxu0 0.0
    %5033 = vmatpush2.xpose.msra.mxu0 0.0
    %5034 = vmatprep.subr.mxu0 0.0
    %5035 = vmatpush2.xpose.msra.mxu0 0.0
    %5036 = vmatprep.subr.mxu0 0.0
    %5037 = vmatpush2.xpose.msra.mxu0 0.0
    %5038 = vmatprep.subr.mxu0 0.0
    %5039 = vmatpush2.xpose.msra.mxu0 0.0
    %5040 = vmatprep.subr.mxu0 0.0
    %5041 = vmatpush2.xpose.msra.mxu0 0.0
    %5042 = vmatprep.subr.mxu0 0.0
    %5043 = vmatpush2.xpose.msra.mxu0 0.0
    %5044 = vmatprep.subr.mxu0 0.0
    %5045 = vmatpush2.xpose.msra.mxu0 0.0
    %5046 = vmatprep.subr.mxu0 0.0
    %5047 = vmatpush2.xpose.msra.mxu0 0.0
    %5048 = vmatprep.subr.mxu0 0.0
    %5049 = vmatpush2.xpose.msra.mxu0 0.0
    %5050 = vmatprep.subr.mxu0 0.0
    %5051 = vmatpush2.xpose.msra.mxu0 0.0
    %5052 = vmatprep.subr.mxu0 0.0
    %5053 = vmatpush2.xpose.msra.mxu0 0.0
    %5054 = vmatprep.subr.mxu0 0.0
    %5055 = vmatpush2.xpose.msra.mxu0 0.0
    %5056 = vmatprep.subr.mxu0 0.0
    %5057 = vmatpush2.xpose.msra.mxu0 0.0
    %5058 = vmatprep.subr.mxu0 0.0
    %5059 = vmatpush2.xpose.msra.mxu0 0.0
    %5060 = vmatprep.mubr.f32.mxu0 0.0
    %5061 = vmatmul.mubr.f32.gmra.mxu0 %v4992
    %v5062 = vpop.f32.mrf.mxu0
    %v5063 = vadd.f32 0.0, %v5062
    %v5064 = vpop.f32.mrf.mxu0
    %5065 = vdwg.mxu0
    %v5066 = vmul.f32 %v5063, 0.35355338
    %v5067 = vadd.f32 %v5066, %v4725
    %v5068 = vsel %vm497, %v5067, -inf
    %5069 = vmax.xlane.f32.xlu0 %v5068
    %v5070 = vpop.xlane.xlu0 %5069
    %v5071 = vsub.f32 %v5067, %v5070
    %v5072 = vmul.f32 %v5071, 1.442695
    %v5073 = vpow.pop %v5072
    %v5074 = vsel %vm497, %v5073, 0.0
    %5075 = vadd.xlane.f32.xlu0 %v5074
    %v5076 = vpop.xlane.xlu0 %5075
    %v5077 = vrcp.pop %v5076
    %v5078 = vmul.f32 %v5073, %v5077
    %5079 = vrot.lane.b32.xlu0 %v3961, 80
    %v5080 = vpop.permute.xlu0 %5079
    %v5083 = vsel %vm497, %v5078, 0
    %5085 = vmatprep.subr.mxu0 0.0
    %5086 = vmatpush1.msra.mxu0 0.0
    %5087 = vmatprep.subr.mxu0 0.0
    %5088 = vmatpush1.msra.mxu0 0.0
    %5089 = vmatprep.subr.mxu0 0.0
    %5090 = vmatpush1.msra.mxu0 0.0
    %5091 = vmatprep.subr.mxu0 0.0
    %5092 = vmatpush1.msra.mxu0 0.0
    %5093 = vmatprep.subr.mxu0 0.0
    %5094 = vmatpush1.msra.mxu0 0.0
    %5095 = vmatprep.subr.mxu0 0.0
    %5096 = vmatpush1.msra.mxu0 0.0
    %5097 = vmatprep.subr.mxu0 0.0
    %5098 = vmatpush1.msra.mxu0 0.0
    %5099 = vmatprep.subr.mxu0 0.0
    %5100 = vmatpush1.msra.mxu0 0.0
    %5101 = vmatprep.subr.mxu0 0.0
    %5102 = vmatpush1.msra.mxu0 0.0
    %5103 = vmatprep.subr.mxu0 0.0
    %5104 = vmatpush1.msra.mxu0 0.0
    %5105 = vmatprep.subr.mxu0 0.0
    %5106 = vmatpush1.msra.mxu0 0.0
    %5107 = vmatprep.subr.mxu0 0.0
    %5108 = vmatpush1.msra.mxu0 0.0
    %5109 = vmatprep.subr.mxu0 0.0
    %5110 = vmatpush1.msra.mxu0 0.0
    %5111 = vmatprep.subr.mxu0 0.0
    %5112 = vmatpush1.msra.mxu0 0.0
    %5113 = vmatprep.subr.mxu0 0.0
    %5114 = vmatpush1.msra.mxu0 0.0
    %5115 = vmatprep.subr.mxu0 0.0
    %5116 = vmatpush1.msra.mxu0 %v5080
    %5117 = vmatprep.subr.mxu0 0.0
    %5118 = vmatpush2.msra.mxu0 0.0
    %5119 = vmatprep.subr.mxu0 0.0
    %5120 = vmatpush2.msra.mxu0 0.0
    %5121 = vmatprep.subr.mxu0 0.0
    %5122 = vmatpush2.msra.mxu0 0.0
    %5123 = vmatprep.subr.mxu0 0.0
    %5124 = vmatpush2.msra.mxu0 0.0
    %5125 = vmatprep.subr.mxu0 0.0
    %5126 = vmatpush2.msra.mxu0 0.0
    %5127 = vmatprep.subr.mxu0 0.0
    %5128 = vmatpush2.msra.mxu0 0.0
    %5129 = vmatprep.subr.mxu0 0.0
    %5130 = vmatpush2.msra.mxu0 0.0
    %5131 = vmatprep.subr.mxu0 0.0
    %5132 = vmatpush2.msra.mxu0 0.0
    %5133 = vmatprep.subr.mxu0 0.0
    %5134 = vmatpush2.msra.mxu0 0.0
    %5135 = vmatprep.subr.mxu0 0.0
    %5136 = vmatpush2.msra.mxu0 0.0
    %5137 = vmatprep.subr.mxu0 0.0
    %5138 = vmatpush2.msra.mxu0 0.0
    %5139 = vmatprep.subr.mxu0 0.0
    %5140 = vmatpush2.msra.mxu0 0.0
    %5141 = vmatprep.subr.mxu0 0.0
    %5142 = vmatpush2.msra.mxu0 0.0
    %5143 = vmatprep.subr.mxu0 0.0
    %5144 = vmatpush2.msra.mxu0 0.0
    %5145 = vmatprep.subr.mxu0 0.0
    %5146 = vmatpush2.msra.mxu0 0.0
    %5147 = vmatprep.subr.mxu0 0.0
    %5148 = vmatpush2.msra.mxu0 0.0
    %5149 = vmatprep.mubr.f32.mxu0 0.0
    %5150 = vmatmul.mubr.f32.gmra.mxu0 %v5083
    %v5151 = vpop.f32.mrf.mxu0
    %v5152 = vadd.f32 0.0, %v5151
    %v5153 = vpop.f32.mrf.mxu0
    %5154 = vdwg.mxu0
    %5156 = vrot.lane.b32.xlu0 %v5152, 16
    %v5157 = vpop.permute.xlu0 %5156
    %5159 = vst.msk [vmem:[#allocation2 + $0x8] sm:$0xff] %vm1006, %v5157
    %5160 = vrot.lane.b32.xlu0 %v3876, 104
    %v5161 = vpop.permute.xlu0 %5160
    %5162 = vrot.lane.b32.xlu0 %v3961, 104
    %v5163 = vpop.permute.xlu0 %5162
    %v5164 = vsel %vm497, %v5161, 0
    %v5166 = vsel %vm497, %v5163, 0
    %5168 = vmatprep.subr.mxu0 0.0
    %5169 = vmatpush1.xpose.msra.mxu0 0.0
    %5170 = vmatprep.subr.mxu0 0.0
    %5171 = vmatpush1.xpose.msra.mxu0 0.0
    %5172 = vmatprep.subr.mxu0 0.0
    %5173 = vmatpush1.xpose.msra.mxu0 0.0
    %5174 = vmatprep.subr.mxu0 0.0
    %5175 = vmatpush1.xpose.msra.mxu0 0.0
    %5176 = vmatprep.subr.mxu0 0.0
    %5177 = vmatpush1.xpose.msra.mxu0 0.0
    %5178 = vmatprep.subr.mxu0 0.0
    %5179 = vmatpush1.xpose.msra.mxu0 0.0
    %5180 = vmatprep.subr.mxu0 0.0
    %5181 = vmatpush1.xpose.msra.mxu0 0.0
    %5182 = vmatprep.subr.mxu0 0.0
    %5183 = vmatpush1.xpose.msra.mxu0 0.0
    %5184 = vmatprep.subr.mxu0 0.0
    %5185 = vmatpush1.xpose.msra.mxu0 0.0
    %5186 = vmatprep.subr.mxu0 0.0
    %5187 = vmatpush1.xpose.msra.mxu0 0.0
    %5188 = vmatprep.subr.mxu0 0.0
    %5189 = vmatpush1.xpose.msra.mxu0 0.0
    %5190 = vmatprep.subr.mxu0 0.0
    %5191 = vmatpush1.xpose.msra.mxu0 0.0
    %5192 = vmatprep.subr.mxu0 0.0
    %5193 = vmatpush1.xpose.msra.mxu0 0.0
    %5194 = vmatprep.subr.mxu0 0.0
    %5195 = vmatpush1.xpose.msra.mxu0 0.0
    %5196 = vmatprep.subr.mxu0 0.0
    %5197 = vmatpush1.xpose.msra.mxu0 0.0
    %5198 = vmatprep.subr.mxu0 0.0
    %5199 = vmatpush1.xpose.msra.mxu0 %v5166
    %5200 = vmatprep.subr.mxu0 0.0
    %5201 = vmatpush2.xpose.msra.mxu0 0.0
    %5202 = vmatprep.subr.mxu0 0.0
    %5203 = vmatpush2.xpose.msra.mxu0 0.0
    %5204 = vmatprep.subr.mxu0 0.0
    %5205 = vmatpush2.xpose.msra.mxu0 0.0
    %5206 = vmatprep.subr.mxu0 0.0
    %5207 = vmatpush2.xpose.msra.mxu0 0.0
    %5208 = vmatprep.subr.mxu0 0.0
    %5209 = vmatpush2.xpose.msra.mxu0 0.0
    %5210 = vmatprep.subr.mxu0 0.0
    %5211 = vmatpush2.xpose.msra.mxu0 0.0
    %5212 = vmatprep.subr.mxu0 0.0
    %5213 = vmatpush2.xpose.msra.mxu0 0.0
    %5214 = vmatprep.subr.mxu0 0.0
    %5215 = vmatpush2.xpose.msra.mxu0 0.0
    %5216 = vmatprep.subr.mxu0 0.0
    %5217 = vmatpush2.xpose.msra.mxu0 0.0
    %5218 = vmatprep.subr.mxu0 0.0
    %5219 = vmatpush2.xpose.msra.mxu0 0.0
    %5220 = vmatprep.subr.mxu0 0.0
    %5221 = vmatpush2.xpose.msra.mxu0 0.0
    %5222 = vmatprep.subr.mxu0 0.0
    %5223 = vmatpush2.xpose.msra.mxu0 0.0
    %5224 = vmatprep.subr.mxu0 0.0
    %5225 = vmatpush2.xpose.msra.mxu0 0.0
    %5226 = vmatprep.subr.mxu0 0.0
    %5227 = vmatpush2.xpose.msra.mxu0 0.0
    %5228 = vmatprep.subr.mxu0 0.0
    %5229 = vmatpush2.xpose.msra.mxu0 0.0
    %5230 = vmatprep.subr.mxu0 0.0
    %5231 = vmatpush2.xpose.msra.mxu0 0.0
    %5232 = vmatprep.mubr.f32.mxu0 0.0
    %5233 = vmatmul.mubr.f32.gmra.mxu0 %v5164
    %v5234 = vpop.f32.mrf.mxu0
    %v5235 = vadd.f32 0.0, %v5234
    %v5236 = vpop.f32.mrf.mxu0
    %5237 = vdwg.mxu0
    %v5238 = vmul.f32 %v5235, 0.35355338
    %v5239 = vadd.f32 %v5238, %v4725
    %v5240 = vsel %vm497, %v5239, -inf
    %5241 = vmax.xlane.f32.xlu0 %v5240
    %v5242 = vpop.xlane.xlu0 %5241
    %v5243 = vsub.f32 %v5239, %v5242
    %v5244 = vmul.f32 %v5243, 1.442695
    %v5245 = vpow.pop %v5244
    %v5246 = vsel %vm497, %v5245, 0.0
    %5247 = vadd.xlane.f32.xlu0 %v5246
    %v5248 = vpop.xlane.xlu0 %5247
    %v5249 = vrcp.pop %v5248
    %v5250 = vmul.f32 %v5245, %v5249
    %5251 = vrot.lane.b32.xlu0 %v3961, 72
    %v5252 = vpop.permute.xlu0 %5251
    %v5255 = vsel %vm497, %v5250, 0
    %5257 = vmatprep.subr.mxu0 0.0
    %5258 = vmatpush1.msra.mxu0 0.0
    %5259 = vmatprep.subr.mxu0 0.0
    %5260 = vmatpush1.msra.mxu0 0.0
    %5261 = vmatprep.subr.mxu0 0.0
    %5262 = vmatpush1.msra.mxu0 0.0
    %5263 = vmatprep.subr.mxu0 0.0
    %5264 = vmatpush1.msra.mxu0 0.0
    %5265 = vmatprep.subr.mxu0 0.0
    %5266 = vmatpush1.msra.mxu0 0.0
    %5267 = vmatprep.subr.mxu0 0.0
    %5268 = vmatpush1.msra.mxu0 0.0
    %5269 = vmatprep.subr.mxu0 0.0
    %5270 = vmatpush1.msra.mxu0 0.0
    %5271 = vmatprep.subr.mxu0 0.0
    %5272 = vmatpush1.msra.mxu0 0.0
    %5273 = vmatprep.subr.mxu0 0.0
    %5274 = vmatpush1.msra.mxu0 0.0
    %5275 = vmatprep.subr.mxu0 0.0
    %5276 = vmatpush1.msra.mxu0 0.0
    %5277 = vmatprep.subr.mxu0 0.0
    %5278 = vmatpush1.msra.mxu0 0.0
    %5279 = vmatprep.subr.mxu0 0.0
    %5280 = vmatpush1.msra.mxu0 0.0
    %5281 = vmatprep.subr.mxu0 0.0
    %5282 = vmatpush1.msra.mxu0 0.0
    %5283 = vmatprep.subr.mxu0 0.0
    %5284 = vmatpush1.msra.mxu0 0.0
    %5285 = vmatprep.subr.mxu0 0.0
    %5286 = vmatpush1.msra.mxu0 0.0
    %5287 = vmatprep.subr.mxu0 0.0
    %5288 = vmatpush1.msra.mxu0 %v5252
    %5289 = vmatprep.subr.mxu0 0.0
    %5290 = vmatpush2.msra.mxu0 0.0
    %5291 = vmatprep.subr.mxu0 0.0
    %5292 = vmatpush2.msra.mxu0 0.0
    %5293 = vmatprep.subr.mxu0 0.0
    %5294 = vmatpush2.msra.mxu0 0.0
    %5295 = vmatprep.subr.mxu0 0.0
    %5296 = vmatpush2.msra.mxu0 0.0
    %5297 = vmatprep.subr.mxu0 0.0
    %5298 = vmatpush2.msra.mxu0 0.0
    %5299 = vmatprep.subr.mxu0 0.0
    %5300 = vmatpush2.msra.mxu0 0.0
    %5301 = vmatprep.subr.mxu0 0.0
    %5302 = vmatpush2.msra.mxu0 0.0
    %5303 = vmatprep.subr.mxu0 0.0
    %5304 = vmatpush2.msra.mxu0 0.0
    %5305 = vmatprep.subr.mxu0 0.0
    %5306 = vmatpush2.msra.mxu0 0.0
    %5307 = vmatprep.subr.mxu0 0.0
    %5308 = vmatpush2.msra.mxu0 0.0
    %5309 = vmatprep.subr.mxu0 0.0
    %5310 = vmatpush2.msra.mxu0 0.0
    %5311 = vmatprep.subr.mxu0 0.0
    %5312 = vmatpush2.msra.mxu0 0.0
    %5313 = vmatprep.subr.mxu0 0.0
    %5314 = vmatpush2.msra.mxu0 0.0
    %5315 = vmatprep.subr.mxu0 0.0
    %5316 = vmatpush2.msra.mxu0 0.0
    %5317 = vmatprep.subr.mxu0 0.0
    %5318 = vmatpush2.msra.mxu0 0.0
    %5319 = vmatprep.subr.mxu0 0.0
    %5320 = vmatpush2.msra.mxu0 0.0
    %5321 = vmatprep.mubr.f32.mxu0 0.0
    %5322 = vmatmul.mubr.f32.gmra.mxu0 %v5255
    %v5323 = vpop.f32.mrf.mxu0
    %v5324 = vadd.f32 0.0, %v5323
    %v5325 = vpop.f32.mrf.mxu0
    %5326 = vdwg.mxu0
    %5328 = vrot.lane.b32.xlu0 %v5324, 24
    %v5329 = vpop.permute.xlu0 %5328
    %5331 = vst.msk [vmem:[#allocation2 + $0x8] sm:$0xff] %vm1179, %v5329
    %v5332 = vld [vmem:[#allocation2] sm:$0xff]
    %v5333 = vld [vmem:[#allocation2 + $0x8] sm:$0xff]
    %v5334 = vlaneseq
    %v5335 = vshrl.u32 %v5334, 7
    %v5336 = vsub.s32 0, %v5335
    %v5337 = vrot.slane %v98, %v5336
    %v5339 = vsel %vm412, %v5332, 0
    %v5342 = vsel %vm412, %v5333, 0
    %5344 = vmatprep.subr.mxu0 0.0
    %5345 = vmatpush1.msra.mxu0 0.0
    %5346 = vmatprep.subr.mxu0 0.0
    %5347 = vmatpush1.msra.mxu0 0.0
    %5348 = vmatprep.subr.mxu0 0.0
    %5349 = vmatpush1.msra.mxu0 0.0
    %5350 = vmatprep.subr.mxu0 0.0
    %5351 = vmatpush1.msra.mxu0 0.0
    %5352 = vmatprep.subr.mxu0 0.0
    %5353 = vmatpush1.msra.mxu0 0.0
    %5354 = vmatprep.subr.mxu0 0.0
    %5355 = vmatpush1.msra.mxu0 0.0
    %5356 = vmatprep.subr.mxu0 0.0
    %5357 = vmatpush1.msra.mxu0 0.0
    %5358 = vmatprep.subr.mxu0 0.0
    %5359 = vmatpush1.msra.mxu0 0.0
    %5360 = vmatprep.subr.mxu0 0.0
    %5361 = vmatpush1.msra.mxu0 0.0
    %5362 = vmatprep.subr.mxu0 0.0
    %5363 = vmatpush1.msra.mxu0 0.0
    %5364 = vmatprep.subr.mxu0 0.0
    %5365 = vmatpush1.msra.mxu0 0.0
    %5366 = vmatprep.subr.mxu0 0.0
    %5367 = vmatpush1.msra.mxu0 0.0
    %5368 = vmatprep.subr.mxu0 0.0
    %5369 = vmatpush1.msra.mxu0 %v76
    %5370 = vmatprep.subr.mxu0 0.0
    %5371 = vmatpush1.msra.mxu0 %v66
    %5372 = vmatprep.subr.mxu0 0.0
    %5373 = vmatpush1.msra.mxu0 %v56
    %5374 = vmatprep.subr.mxu0 0.0
    %5375 = vmatpush1.msra.mxu0 %v46
    %5376 = vmatprep.subr.mxu0 0.0
    %5377 = vmatpush2.msra.mxu0 0.0
    %5378 = vmatprep.subr.mxu0 0.0
    %5379 = vmatpush2.msra.mxu0 0.0
    %5380 = vmatprep.subr.mxu0 0.0
    %5381 = vmatpush2.msra.mxu0 0.0
    %5382 = vmatprep.subr.mxu0 0.0
    %5383 = vmatpush2.msra.mxu0 0.0
    %5384 = vmatprep.subr.mxu0 0.0
    %5385 = vmatpush2.msra.mxu0 0.0
    %5386 = vmatprep.subr.mxu0 0.0
    %5387 = vmatpush2.msra.mxu0 0.0
    %5388 = vmatprep.subr.mxu0 0.0
    %5389 = vmatpush2.msra.mxu0 0.0
    %5390 = vmatprep.subr.mxu0 0.0
    %5391 = vmatpush2.msra.mxu0 0.0
    %5392 = vmatprep.subr.mxu0 0.0
    %5393 = vmatpush2.msra.mxu0 0.0
    %5394 = vmatprep.subr.mxu0 0.0
    %5395 = vmatpush2.msra.mxu0 0.0
    %5396 = vmatprep.subr.mxu0 0.0
    %5397 = vmatpush2.msra.mxu0 0.0
    %5398 = vmatprep.subr.mxu0 0.0
    %5399 = vmatpush2.msra.mxu0 0.0
    %5400 = vmatprep.subr.mxu0 0.0
    %5401 = vmatpush2.msra.mxu0 0.0
    %5402 = vmatprep.subr.mxu0 0.0
    %5403 = vmatpush2.msra.mxu0 0.0
    %5404 = vmatprep.subr.mxu0 0.0
    %5405 = vmatpush2.msra.mxu0 0.0
    %5406 = vmatprep.subr.mxu0 0.0
    %5407 = vmatpush2.msra.mxu0 0.0
    %5408 = vmatprep.mubr.f32.mxu0 0.0
    %5409 = vmatmul.mubr.f32.gmra.mxu0 %v5339
    %v5410 = vpop.f32.mrf.mxu0
    %v5411 = vadd.f32 %v5337, %v5410
    %v5412 = vpop.f32.mrf.mxu0
    %5413 = vmatprep.mubr.f32.mxu0 0.0
    %5414 = vmatmul.mubr.f32.gmra.mxu0 %v5342
    %v5415 = vpop.f32.mrf.mxu0
    %v5416 = vadd.f32 %v5337, %v5415
    %v5417 = vpop.f32.mrf.mxu0
    %5418 = vdwg.mxu0
    %v5419 = vadd.f32 %v3792, %v5411
    %v5420 = vadd.f32 %v3793, %v5416
    %v5421 = vsel %vm412, %v5419, 0.0
    %5422 = vadd.xlane.f32.xlu0 %v5421
    %v5423 = vpop.xlane.xlu0 %5422
    %v5424 = vsel %vm412, %v5420, 0.0
    %5425 = vadd.xlane.f32.xlu0 %v5424
    %v5426 = vpop.xlane.xlu0 %5425
    %v5427 = vmul.f32 %v5423, %v1963
    %v5428 = vmul.f32 %v5426, %v1963
    %v5429 = vsub.f32 %v5419, %v5427
    %v5430 = vsub.f32 %v5420, %v5428
    %v5431 = vmul.f32 %v5429, %v5429
    %v5432 = vmul.f32 %v5430, %v5430
    %v5433 = vsel %vm412, %v5431, 0.0
    %5434 = vadd.xlane.f32.xlu0 %v5433
    %v5435 = vpop.xlane.xlu0 %5434
    %v5436 = vsel %vm412, %v5432, 0.0
    %5437 = vadd.xlane.f32.xlu0 %v5436
    %v5438 = vpop.xlane.xlu0 %5437
    %v5439 = vmul.f32 %v5435, %v1963
    %v5440 = vmul.f32 %v5438, %v1963
    %v5441 = vadd.f32 %v5439, 1e-05
    %v5442 = vadd.f32 %v5440, 1e-05
    %v5443 = vrsqrt.pop %v5441
    %v5444 = vrsqrt.pop %v5442
    %v5445 = vmul.f32 %v5429, %v5443
    %v5446 = vmul.f32 %v5430, %v5444
    %v5447 = vlaneseq
    %v5448 = vshrl.u32 %v5447, 7
    %v5449 = vsub.s32 7, %v5448
    %v5450 = vrot.slane %v98, %v5449
    %v5451 = vmul.f32 %v5445, %v5450
    %v5452 = vmul.f32 %v5446, %v5450
    %v5453 = vlaneseq
    %v5454 = vshrl.u32 %v5453, 7
    %v5455 = vsub.s32 4, %v5454
    %v5456 = vrot.slane %v99, %v5455
    %v5457 = vadd.f32 %v5451, %v5456
    %v5458 = vadd.f32 %v5452, %v5456
    %v5459 = vlaneseq
    %v5460 = vshrl.u32 %v5459, 7
    %v5461 = vsub.s32 1, %v5460
    %v5462 = vrot.slane %v98, %v5461
    %v5464 = vsel %vm412, %v5457, 0
    %v5467 = vsel %vm412, %v5458, 0
    %5469 = vmatprep.subr.mxu0 0.0
    %5470 = vmatpush1.msra.mxu0 0.0
    %5471 = vmatprep.subr.mxu0 0.0
    %5472 = vmatpush1.msra.mxu0 0.0
    %5473 = vmatprep.subr.mxu0 0.0
    %5474 = vmatpush1.msra.mxu0 0.0
    %5475 = vmatprep.subr.mxu0 0.0
    %5476 = vmatpush1.msra.mxu0 0.0
    %5477 = vmatprep.subr.mxu0 0.0
    %5478 = vmatpush1.msra.mxu0 0.0
    %5479 = vmatprep.subr.mxu0 0.0
    %5480 = vmatpush1.msra.mxu0 0.0
    %5481 = vmatprep.subr.mxu0 0.0
    %5482 = vmatpush1.msra.mxu0 0.0
    %5483 = vmatprep.subr.mxu0 0.0
    %5484 = vmatpush1.msra.mxu0 0.0
    %5485 = vmatprep.subr.mxu0 0.0
    %5486 = vmatpush1.msra.mxu0 0.0
    %5487 = vmatprep.subr.mxu0 0.0
    %5488 = vmatpush1.msra.mxu0 0.0
    %5489 = vmatprep.subr.mxu0 0.0
    %5490 = vmatpush1.msra.mxu0 0.0
    %5491 = vmatprep.subr.mxu0 0.0
    %5492 = vmatpush1.msra.mxu0 0.0
    %5493 = vmatprep.subr.mxu0 0.0
    %5494 = vmatpush1.msra.mxu0 %v77
    %5495 = vmatprep.subr.mxu0 0.0
    %5496 = vmatpush1.msra.mxu0 %v67
    %5497 = vmatprep.subr.mxu0 0.0
    %5498 = vmatpush1.msra.mxu0 %v57
    %5499 = vmatprep.subr.mxu0 0.0
    %5500 = vmatpush1.msra.mxu0 %v47
    %5501 = vmatprep.subr.mxu0 0.0
    %5502 = vmatpush2.msra.mxu0 0.0
    %5503 = vmatprep.subr.mxu0 0.0
    %5504 = vmatpush2.msra.mxu0 0.0
    %5505 = vmatprep.subr.mxu0 0.0
    %5506 = vmatpush2.msra.mxu0 0.0
    %5507 = vmatprep.subr.mxu0 0.0
    %5508 = vmatpush2.msra.mxu0 0.0
    %5509 = vmatprep.subr.mxu0 0.0
    %5510 = vmatpush2.msra.mxu0 0.0
    %5511 = vmatprep.subr.mxu0 0.0
    %5512 = vmatpush2.msra.mxu0 0.0
    %5513 = vmatprep.subr.mxu0 0.0
    %5514 = vmatpush2.msra.mxu0 0.0
    %5515 = vmatprep.subr.mxu0 0.0
    %5516 = vmatpush2.msra.mxu0 0.0
    %5517 = vmatprep.subr.mxu0 0.0
    %5518 = vmatpush2.msra.mxu0 0.0
    %5519 = vmatprep.subr.mxu0 0.0
    %5520 = vmatpush2.msra.mxu0 0.0
    %5521 = vmatprep.subr.mxu0 0.0
    %5522 = vmatpush2.msra.mxu0 0.0
    %5523 = vmatprep.subr.mxu0 0.0
    %5524 = vmatpush2.msra.mxu0 0.0
    %5525 = vmatprep.subr.mxu0 0.0
    %5526 = vmatpush2.msra.mxu0 0.0
    %5527 = vmatprep.subr.mxu0 0.0
    %5528 = vmatpush2.msra.mxu0 0.0
    %5529 = vmatprep.subr.mxu0 0.0
    %5530 = vmatpush2.msra.mxu0 0.0
    %5531 = vmatprep.subr.mxu0 0.0
    %5532 = vmatpush2.msra.mxu0 0.0
    %5533 = vmatprep.mubr.f32.mxu0 0.0
    %5534 = vmatmul.mubr.f32.gmra.mxu0 %v5464
    %v5535 = vpop.f32.mrf.mxu0
    %v5536 = vadd.f32 %v5462, %v5535
    %v5537 = vpop.f32.mrf.mxu0
    %5538 = vmatprep.mubr.f32.mxu0 0.0
    %5539 = vmatmul.mubr.f32.gmra.mxu0 %v5467
    %v5540 = vpop.f32.mrf.mxu0
    %v5541 = vadd.f32 %v5462, %v5540
    %v5542 = vpop.f32.mrf.mxu0
    %5543 = vdwg.mxu0
    %v5544 = vmax.f32 %v5536, 0.0
    %v5545 = vmax.f32 %v5541, 0.0
    %v5546 = vlaneseq
    %v5547 = vshrl.u32 %v5546, 7
    %v5548 = vsub.s32 2, %v5547
    %v5549 = vrot.slane %v98, %v5548
    %5558 = vrot.lane.b32.xlu0 %v89, 96
    %v5559 = vpop.permute.xlu0 %5558
    %5560 = vrot.lane.b32.xlu0 %v90, 96
    %v5561 = vpop.permute.xlu0 %5560
    %5562 = vrot.lane.b32.xlu0 %v91, 96
    %v5563 = vpop.permute.xlu0 %5562
    %5564 = vrot.lane.b32.xlu0 %v92, 96
    %v5565 = vpop.permute.xlu0 %5564
    %5566 = vrot.lane.b32.xlu0 %v93, 96
    %v5567 = vpop.permute.xlu0 %5566
    %5568 = vrot.lane.b32.xlu0 %v94, 96
    %v5569 = vpop.permute.xlu0 %5568
    %5570 = vrot.lane.b32.xlu0 %v95, 96
    %v5571 = vpop.permute.xlu0 %5570
    %5572 = vrot.lane.b32.xlu0 %v96, 96
    %v5573 = vpop.permute.xlu0 %5572
    %v5583 = vsel %vm114, %v5544, 0
    %v5586 = vsel %vm114, %v5545, 0
    %5588 = vmatprep.subr.mxu0 0.0
    %5589 = vmatpush1.msra.mxu0 0.0
    %5590 = vmatprep.subr.mxu0 0.0
    %5591 = vmatpush1.msra.mxu0 0.0
    %5592 = vmatprep.subr.mxu0 0.0
    %5593 = vmatpush1.msra.mxu0 0.0
    %5594 = vmatprep.subr.mxu0 0.0
    %5595 = vmatpush1.msra.mxu0 0.0
    %5596 = vmatprep.subr.mxu0 0.0
    %5597 = vmatpush1.msra.mxu0 0.0
    %5598 = vmatprep.subr.mxu0 0.0
    %5599 = vmatpush1.msra.mxu0 0.0
    %5600 = vmatprep.subr.mxu0 0.0
    %5601 = vmatpush1.msra.mxu0 0.0
    %5602 = vmatprep.subr.mxu0 0.0
    %5603 = vmatpush1.msra.mxu0 0.0
    %5604 = vmatprep.subr.mxu0 0.0
    %5605 = vmatpush1.msra.mxu0 %v5573
    %5606 = vmatprep.subr.mxu0 0.0
    %5607 = vmatpush1.msra.mxu0 %v5571
    %5608 = vmatprep.subr.mxu0 0.0
    %5609 = vmatpush1.msra.mxu0 %v5569
    %5610 = vmatprep.subr.mxu0 0.0
    %5611 = vmatpush1.msra.mxu0 %v5567
    %5612 = vmatprep.subr.mxu0 0.0
    %5613 = vmatpush1.msra.mxu0 %v5565
    %5614 = vmatprep.subr.mxu0 0.0
    %5615 = vmatpush1.msra.mxu0 %v5563
    %5616 = vmatprep.subr.mxu0 0.0
    %5617 = vmatpush1.msra.mxu0 %v5561
    %5618 = vmatprep.subr.mxu0 0.0
    %5619 = vmatpush1.msra.mxu0 %v5559
    %5620 = vmatprep.subr.mxu0 0.0
    %5621 = vmatpush2.msra.mxu0 0.0
    %5622 = vmatprep.subr.mxu0 0.0
    %5623 = vmatpush2.msra.mxu0 0.0
    %5624 = vmatprep.subr.mxu0 0.0
    %5625 = vmatpush2.msra.mxu0 0.0
    %5626 = vmatprep.subr.mxu0 0.0
    %5627 = vmatpush2.msra.mxu0 0.0
    %5628 = vmatprep.subr.mxu0 0.0
    %5629 = vmatpush2.msra.mxu0 0.0
    %5630 = vmatprep.subr.mxu0 0.0
    %5631 = vmatpush2.msra.mxu0 0.0
    %5632 = vmatprep.subr.mxu0 0.0
    %5633 = vmatpush2.msra.mxu0 0.0
    %5634 = vmatprep.subr.mxu0 0.0
    %5635 = vmatpush2.msra.mxu0 0.0
    %5636 = vmatprep.subr.mxu0 0.0
    %5637 = vmatpush2.msra.mxu0 0.0
    %5638 = vmatprep.subr.mxu0 0.0
    %5639 = vmatpush2.msra.mxu0 0.0
    %5640 = vmatprep.subr.mxu0 0.0
    %5641 = vmatpush2.msra.mxu0 0.0
    %5642 = vmatprep.subr.mxu0 0.0
    %5643 = vmatpush2.msra.mxu0 0.0
    %5644 = vmatprep.subr.mxu0 0.0
    %5645 = vmatpush2.msra.mxu0 0.0
    %5646 = vmatprep.subr.mxu0 0.0
    %5647 = vmatpush2.msra.mxu0 0.0
    %5648 = vmatprep.subr.mxu0 0.0
    %5649 = vmatpush2.msra.mxu0 0.0
    %5650 = vmatprep.subr.mxu0 0.0
    %5651 = vmatpush2.msra.mxu0 0.0
    %5652 = vmatprep.mubr.f32.mxu0 0.0
    %5653 = vmatmul.mubr.f32.gmra.mxu0 %v5583
    %v5654 = vpop.f32.mrf.mxu0
    %v5655 = vadd.f32 %v5549, %v5654
    %v5656 = vpop.f32.mrf.mxu0
    %5657 = vmatprep.mubr.f32.mxu0 0.0
    %5658 = vmatmul.mubr.f32.gmra.mxu0 %v5586
    %v5659 = vpop.f32.mrf.mxu0
    %v5660 = vadd.f32 %v5549, %v5659
    %v5661 = vpop.f32.mrf.mxu0
    %5662 = vdwg.mxu0
    %v5663 = vadd.f32 %v5457, %v5655
    %v5664 = vadd.f32 %v5458, %v5660
    %v5665 = vsel %vm412, %v5663, 0.0
    %5666 = vadd.xlane.f32.xlu0 %v5665
    %v5667 = vpop.xlane.xlu0 %5666
    %v5668 = vsel %vm412, %v5664, 0.0
    %5669 = vadd.xlane.f32.xlu0 %v5668
    %v5670 = vpop.xlane.xlu0 %5669
    %v5671 = vmul.f32 %v5667, %v1963
    %v5672 = vmul.f32 %v5670, %v1963
    %v5673 = vsub.f32 %v5663, %v5671
    %v5674 = vsub.f32 %v5664, %v5672
    %v5675 = vmul.f32 %v5673, %v5673
    %v5676 = vmul.f32 %v5674, %v5674
    %v5677 = vsel %vm412, %v5675, 0.0
    %5678 = vadd.xlane.f32.xlu0 %v5677
    %v5679 = vpop.xlane.xlu0 %5678
    %v5680 = vsel %vm412, %v5676, 0.0
    %5681 = vadd.xlane.f32.xlu0 %v5680
    %v5682 = vpop.xlane.xlu0 %5681
    %v5683 = vmul.f32 %v5679, %v1963
    %v5684 = vmul.f32 %v5682, %v1963
    %v5685 = vadd.f32 %v5683, 1e-05
    %v5686 = vadd.f32 %v5684, 1e-05
    %v5687 = vrsqrt.pop %v5685
    %v5688 = vrsqrt.pop %v5686
    %v5689 = vmul.f32 %v5673, %v5687
    %v5690 = vmul.f32 %v5674, %v5688
    %v5691 = vlaneseq
    %v5692 = vshrl.u32 %v5691, 7
    %v5693 = vsub.s32 0, %v5692
    %v5694 = vrot.slane %v99, %v5693
    %v5695 = vmul.f32 %v5689, %v5694
    %v5696 = vmul.f32 %v5690, %v5694
    %v5697 = vlaneseq
    %v5698 = vshrl.u32 %v5697, 7
    %v5699 = vsub.s32 5, %v5698
    %v5700 = vrot.slane %v99, %v5699
    %v5701 = vadd.f32 %v5695, %v5700
    %v5702 = vadd.f32 %v5696, %v5700
    %v5703 = vlaneseq
    %v5704 = vshrl.u32 %v5703, 7
    %v5705 = vsub.s32 3, %v5704
    %v5706 = vrot.slane %v98, %v5705
    %v5708 = vsel %vm412, %v5701, 0
    %v5711 = vsel %vm412, %v5702, 0
    %5713 = vmatprep.subr.mxu0 0.0
    %5714 = vmatpush1.msra.mxu0 0.0
    %5715 = vmatprep.subr.mxu0 0.0
    %5716 = vmatpush1.msra.mxu0 0.0
    %5717 = vmatprep.subr.mxu0 0.0
    %5718 = vmatpush1.msra.mxu0 0.0
    %5719 = vmatprep.subr.mxu0 0.0
    %5720 = vmatpush1.msra.mxu0 0.0
    %5721 = vmatprep.subr.mxu0 0.0
    %5722 = vmatpush1.msra.mxu0 0.0
    %5723 = vmatprep.subr.mxu0 0.0
    %5724 = vmatpush1.msra.mxu0 0.0
    %5725 = vmatprep.subr.mxu0 0.0
    %5726 = vmatpush1.msra.mxu0 0.0
    %5727 = vmatprep.subr.mxu0 0.0
    %5728 = vmatpush1.msra.mxu0 0.0
    %5729 = vmatprep.subr.mxu0 0.0
    %5730 = vmatpush1.msra.mxu0 0.0
    %5731 = vmatprep.subr.mxu0 0.0
    %5732 = vmatpush1.msra.mxu0 0.0
    %5733 = vmatprep.subr.mxu0 0.0
    %5734 = vmatpush1.msra.mxu0 0.0
    %5735 = vmatprep.subr.mxu0 0.0
    %5736 = vmatpush1.msra.mxu0 0.0
    %5737 = vmatprep.subr.mxu0 0.0
    %5738 = vmatpush1.msra.mxu0 %v78
    %5739 = vmatprep.subr.mxu0 0.0
    %5740 = vmatpush1.msra.mxu0 %v68
    %5741 = vmatprep.subr.mxu0 0.0
    %5742 = vmatpush1.msra.mxu0 %v58
    %5743 = vmatprep.subr.mxu0 0.0
    %5744 = vmatpush1.msra.mxu0 %v48
    %5745 = vmatprep.subr.mxu0 0.0
    %5746 = vmatpush2.msra.mxu0 0.0
    %5747 = vmatprep.subr.mxu0 0.0
    %5748 = vmatpush2.msra.mxu0 0.0
    %5749 = vmatprep.subr.mxu0 0.0
    %5750 = vmatpush2.msra.mxu0 0.0
    %5751 = vmatprep.subr.mxu0 0.0
    %5752 = vmatpush2.msra.mxu0 0.0
    %5753 = vmatprep.subr.mxu0 0.0
    %5754 = vmatpush2.msra.mxu0 0.0
    %5755 = vmatprep.subr.mxu0 0.0
    %5756 = vmatpush2.msra.mxu0 0.0
    %5757 = vmatprep.subr.mxu0 0.0
    %5758 = vmatpush2.msra.mxu0 0.0
    %5759 = vmatprep.subr.mxu0 0.0
    %5760 = vmatpush2.msra.mxu0 0.0
    %5761 = vmatprep.subr.mxu0 0.0
    %5762 = vmatpush2.msra.mxu0 0.0
    %5763 = vmatprep.subr.mxu0 0.0
    %5764 = vmatpush2.msra.mxu0 0.0
    %5765 = vmatprep.subr.mxu0 0.0
    %5766 = vmatpush2.msra.mxu0 0.0
    %5767 = vmatprep.subr.mxu0 0.0
    %5768 = vmatpush2.msra.mxu0 0.0
    %5769 = vmatprep.subr.mxu0 0.0
    %5770 = vmatpush2.msra.mxu0 0.0
    %5771 = vmatprep.subr.mxu0 0.0
    %5772 = vmatpush2.msra.mxu0 0.0
    %5773 = vmatprep.subr.mxu0 0.0
    %5774 = vmatpush2.msra.mxu0 0.0
    %5775 = vmatprep.subr.mxu0 0.0
    %5776 = vmatpush2.msra.mxu0 0.0
    %5777 = vmatprep.mubr.f32.mxu0 0.0
    %5778 = vmatmul.mubr.f32.gmra.mxu0 %v5708
    %v5779 = vpop.f32.mrf.mxu0
    %v5780 = vadd.f32 %v5706, %v5779
    %v5781 = vpop.f32.mrf.mxu0
    %5782 = vmatprep.mubr.f32.mxu0 0.0
    %5783 = vmatmul.mubr.f32.gmra.mxu0 %v5711
    %v5784 = vpop.f32.mrf.mxu0
    %v5785 = vadd.f32 %v5706, %v5784
    %v5786 = vpop.f32.mrf.mxu0
    %5787 = vdwg.mxu0
    %v5788 = vsel %vm114, %v5780, -inf
    %5789 = vmax.xlane.f32.xlu0 %v5788
    %v5790 = vpop.xlane.xlu0 %5789
    %v5791 = vsel %vm114, %v5785, -inf
    %5792 = vmax.xlane.f32.xlu0 %v5791
    %v5793 = vpop.xlane.xlu0 %5792
    %v5794 = vsub.f32 %v5780, %v5790
    %v5795 = vsub.f32 %v5785, %v5793
    %v5796 = vmul.f32 %v5794, 1.442695
    %v5797 = vpow.pop %v5796
    %v5798 = vmul.f32 %v5795, 1.442695
    %v5799 = vpow.pop %v5798
    %v5800 = vsel %vm114, %v5797, 0.0
    %5801 = vadd.xlane.f32.xlu0 %v5800
    %v5802 = vpop.xlane.xlu0 %5801
    %v5803 = vsel %vm114, %v5799, 0.0
    %5804 = vadd.xlane.f32.xlu0 %v5803
    %v5805 = vpop.xlane.xlu0 %5804
    %v5806 = vlog2.pop %v5802
    %v5807 = vmul.f32 %v5806, 0.6931472
    %v5808 = vlog2.pop %v5805
    %v5809 = vmul.f32 %v5808, 0.6931472
    %v5810 = vsub.f32 %v5794, %v5807
    %v5811 = vsub.f32 %v5795, %v5809
    %5812 = vrot.lane.b32.xlu0 %v5701, 64
    %v5813 = vpop.permute.xlu0 %5812
    %5814 = vrot.lane.b32.xlu0 %v5702, 64
    %v5815 = vpop.permute.xlu0 %5814
    %v5818 = vsel %vm114, %v5810, %v5813
    %v5819 = vsel %vm114, %v5811, %v5815
    %vm5820 = vcmask 785408
    %v5821 = vsel %vm5820, %v5818, 0.0
    %v5822 = vsel %vm5820, %v5819, 0.0
    %5823 = vst [vmem:[%s5] sm:$0xff] %v5821
    %5824 = vst [vmem:[%s5 + $0x8] sm:$0xff] %v5822
    // Predicated region
    $region26: #{transformer_forward.1} parent=1 // pred_check
      _
    $region27: #{transformer_forward.1} parent=1 // pred_check_branch
      %5826 = sbr.rel (0) target = $region29
    $region28: #{transformer_forward.1} parent=1 // pred_region
      _
    $region29: #{transformer_forward.1} parent=1 // pred_fallthru
      _
    // Predicated region
    $region30: #{transformer_forward.1} parent=1 // pred_check
      _
    $region31: #{transformer_forward.1} parent=1 // pred_check_branch
      %5828 = sbr.rel (0) target = $region33
    $region32: #{transformer_forward.1} parent=1 // pred_region
      _
    $region33: #{transformer_forward.1} parent=1 // pred_fallthru
      _
    %5829 = vsyncpa [#allocation4], 1

</llo_original>
